<compile_context>
chip_gen: v6e
topology: v6e:2x2x1
jax: 0.10.0
libtpu: 0.0.40
codegen_flags: <defaults>
</compile_context>

<pallas_src>
import jax
import jax.numpy as jnp
from jax.experimental import pallas as pl
from jax.experimental.pallas import tpu as pltpu

# ---------------- model dimensions (small, consistent with the module) ----------------
NODE_NUM = 16            # args.node_num
DEF_NUM = 3              # args.defender_num
A = DEF_NUM + 1          # positions in obs (defenders + evader)
EMB = 8                  # node embedding dim
OBS_DIM = A * EMB        # dynamic-MLP input dim (flattened obs embedding) = 32
P = 24                   # pooled_node_emb feature dim
TD = 8                   # T feature dim
HIN = P + TD             # hyper_input_dim = 32
HH = 32                  # args.hypernet_hidden_dim (hypernet hidden)
DH = 32                  # dynamic_hidden_dim (= hypernet_hidden_dim)
AD = 16                  # action_dim (actor logits)
DIN = OBS_DIM            # shared Khatri-Rao inner dim (== DH)
HEADN = 256              # fused hyper-head output width (3*HH + 2*DH + AD = 176, padded)
TB = 128                 # batch tile

assert OBS_DIM == DH == HH == DIN, "shared Khatri-Rao expansion matrices require equal dims"


# ------------------------------------ Pallas kernel -----------------------------------
def actor_kernel(obs_ref, hin_ref, embex_ref, whead_ref, eh_ref, ex_ref,
                 w1k_ref, w2k_ref, w3k_ref, out_ref):
    f32 = jnp.float32
    relu = lambda v: jnp.maximum(v, 0.0)
    tb = hin_ref.shape[0]

    # ---- fused hyper heads: one lane-dense matmul, static lane slices ----
    head = jnp.dot(hin_ref[...], whead_ref[...], preferred_element_type=f32)   # (TB, HEADN)
    z1 = relu(head[:, 0 * HH:1 * HH])                                          # (TB, HH)
    z2 = relu(head[:, 1 * HH:2 * HH])
    z3 = relu(head[:, 2 * HH:3 * HH])
    db1 = head[:, 3 * HH:3 * HH + DH]                                          # (TB, DH)
    db2 = head[:, 3 * HH + DH:3 * HH + 2 * DH]
    db3 = head[:, 3 * HH + 2 * DH:3 * HH + 2 * DH + AD]                        # (TB, AD)

    # ---- embedding lookup + Khatri-Rao x-expansion fused into one matmul ----
    idx = obs_ref[...]                                                         # (TB, A) int32
    lane = jax.lax.broadcasted_iota(jnp.int32, (tb, A * NODE_NUM), 1)
    onehot = jnp.zeros((tb, A * NODE_NUM), f32)
    for a in range(A):                                                         # A = 4, tiny
        onehot = onehot + (lane == (idx[:, a:a + 1] + a * NODE_NUM)).astype(f32)
    # emb_ex = blockdiag(emb) @ Ex, so xex[b, h*DIN + d] = obs_emb[b, d] for every h
    xex = jnp.dot(onehot, embex_ref[...], preferred_element_type=f32)          # (TB, HH*DIN)
    obs_emb = xex[:, :DIN]                                                     # Ex[:, :DIN] == I

    eh = eh_ref[...]                                                           # (HH, HH*DIN)
    ex = ex_ref[...]                                                           # (DIN, HH*DIN)

    # ---- dynamic layer 1 : h1 = relu(obs_emb @ W1_dyn[b] + db1) ----
    kr1 = jnp.dot(z1, eh, preferred_element_type=f32) * xex                    # (TB, HH*DIN)
    lhs1 = jnp.concatenate([kr1, obs_emb], axis=1)                             # (TB, HH*DIN+DIN)
    h1 = relu(jnp.dot(lhs1, w1k_ref[...], preferred_element_type=f32) + db1)   # (TB, DH)

    # ---- dynamic layer 2 ----
    kr2 = (jnp.dot(z2, eh, preferred_element_type=f32)
           * jnp.dot(h1, ex, preferred_element_type=f32))
    lhs2 = jnp.concatenate([kr2, h1], axis=1)
    h2 = relu(jnp.dot(lhs2, w2k_ref[...], preferred_element_type=f32) + db2)   # (TB, DH)

    # ---- dynamic output layer: actor logits ----
    kr3 = (jnp.dot(z3, eh, preferred_element_type=f32)
           * jnp.dot(h2, ex, preferred_element_type=f32))
    lhs3 = jnp.concatenate([kr3, h2], axis=1)
    out_ref[...] = jnp.dot(lhs3, w3k_ref[...], preferred_element_type=f32) + db3


# --------------------------------- wrapper (JAX glue) ----------------------------------
def hypernet_actor_logits(params, pooled_node_emb, T, obs, batch=True):
    if not batch:
        pooled_node_emb, T, obs = pooled_node_emb[None], T[None], obs[None]

    hin = jnp.concatenate([pooled_node_emb, T], axis=-1).astype(jnp.float32)   # (B, HIN)
    B = hin.shape[0]
    Bp = ((B + TB - 1) // TB) * TB
    obs_i = obs.astype(jnp.int32)
    if Bp != B:
        hin = jnp.pad(hin, ((0, Bp - B), (0, 0)))
        obs_i = jnp.pad(obs_i, ((0, Bp - B), (0, 0)))
    hin_aug = jnp.concatenate([hin, jnp.ones((Bp, 1), jnp.float32)], axis=1)   # (Bp, HIN+1)

    p = params
    # fused hyper-head weight: columns = [z1 | z2 | z3 | db1 | db2 | db3 | pad], last row = bias
    Wcat = jnp.concatenate([p["W1a"], p["W2a"], p["W3a"], p["Wb1"], p["Wb2"], p["Wb3"]], axis=1)
    bcat = jnp.concatenate([p["b1a"], p["b2a"], p["b3a"], p["bb1"], p["bb2"], p["bb3"]])
    whead = jnp.concatenate([Wcat, bcat[None, :]], axis=0)                     # (HIN+1, 176)
    whead = jnp.pad(whead, ((0, 0), (0, HEADN - whead.shape[1])))              # (HIN+1, HEADN)

    # constant 0/1 Khatri-Rao expansion matrices (shared across the three dynamic layers)
    j = jnp.arange(HH * DIN)
    eh = (j[None, :] // DIN == jnp.arange(HH)[:, None]).astype(jnp.float32)    # (HH, HH*DIN)
    ex = (j[None, :] % DIN == jnp.arange(DIN)[:, None]).astype(jnp.float32)    # (DIN, HH*DIN)

    # block-diagonal embedding table, pre-multiplied by the x-expansion
    emb_bd = jnp.zeros((A * NODE_NUM, OBS_DIM), jnp.float32)
    for a in range(A):
        emb_bd = emb_bd.at[a * NODE_NUM:(a + 1) * NODE_NUM, a * EMB:(a + 1) * EMB].set(p["emb"])
    emb_ex = emb_bd @ ex                                                       # (A*NODE_NUM, HH*DIN)

    # dynamic-layer generator weights with their static bias folded in as extra K rows
    w1k = jnp.concatenate([p["W1b"].reshape(HH * OBS_DIM, DH),
                           p["b1b"].reshape(OBS_DIM, DH)], axis=0)             # (1056, DH)
    w2k = jnp.concatenate([p["W2b"].reshape(HH * DH, DH),
                           p["b2b"].reshape(DH, DH)], axis=0)                  # (1056, DH)
    w3k = jnp.concatenate([p["W3b"].reshape(HH * DH, AD),
                           p["b3b"].reshape(DH, AD)], axis=0)                  # (1056, AD)

    def full(arr):
        return pl.BlockSpec(arr.shape, lambda i: (0, 0))

    logits = pl.pallas_call(
        actor_kernel,
        out_shape=jax.ShapeDtypeStruct((Bp, AD), jnp.float32),
        grid_spec=pltpu.PrefetchScalarGridSpec(
            num_scalar_prefetch=0,
            grid=(Bp // TB,),
            in_specs=[
                pl.BlockSpec((TB, A), lambda i: (i, 0)),            # obs indices
                pl.BlockSpec((TB, HIN + 1), lambda i: (i, 0)),      # hyper input (+ ones col)
                full(emb_ex), full(whead), full(eh), full(ex),
                full(w1k), full(w2k), full(w3k),
            ],
            out_specs=pl.BlockSpec((TB, AD), lambda i: (i, 0)),
        ),
        compiler_params=pltpu.CompilerParams(dimension_semantics=("parallel",)),
    )(obs_i, hin_aug, emb_ex, whead, eh, ex, w1k, w2k, w3k)

    logits = logits[:B]
    if not batch:
        logits = logits[0]
    return logits


def h_actor_forward(params, pooled_node_emb, T, obs, key, batch=True):
    """Mirrors H_Actor_With_Emb_Layer_Scratch.forward: (actions, action_log_probs)."""
    logits = hypernet_actor_logits(params, pooled_node_emb, T, obs, batch=batch)
    squeeze = False
    if logits.ndim == 1:
        logits, squeeze = logits[None], True
    log_p = jax.nn.log_softmax(logits, axis=-1)
    actions = jax.random.categorical(key, logits, axis=-1)                     # (B,)
    action_log_probs = jnp.take_along_axis(log_p, actions[:, None], axis=-1)   # (B, 1)
    actions = actions[:, None]                                                 # (B, 1)
    if squeeze:
        return actions[0], action_log_probs[0]
    return actions, action_log_probs


# ------------------------- pure-JAX reference (torch semantics) ------------------------
def reference_logits(params, pooled_node_emb, T, obs):
    hin = jnp.concatenate([pooled_node_emb, T], axis=-1).astype(jnp.float32)
    B = hin.shape[0]
    relu = lambda v: jnp.maximum(v, 0.0)
    p = params
    obs_emb = p["emb"][obs].reshape(B, -1)                                     # (B, OBS_DIM)
    z1 = relu(hin @ p["W1a"] + p["b1a"])
    z2 = relu(hin @ p["W2a"] + p["b2a"])
    z3 = relu(hin @ p["W3a"] + p["b3a"])
    w1 = (z1 @ p["W1b"] + p["b1b"]).reshape(B, OBS_DIM, DH)
    w2 = (z2 @ p["W2b"] + p["b2b"]).reshape(B, DH, DH)
    w3 = (z3 @ p["W3b"] + p["b3b"]).reshape(B, DH, AD)
    b1 = hin @ p["Wb1"] + p["bb1"]
    b2 = hin @ p["Wb2"] + p["bb2"]
    b3 = hin @ p["Wb3"] + p["bb3"]
    h1 = relu(jnp.einsum("bd,bdk->bk", obs_emb, w1) + b1)
    h2 = relu(jnp.einsum("bd,bdk->bk", h1, w2) + b2)
    return jnp.einsum("bd,bdk->bk", h2, w3) + b3                               # (B, AD)


# ------------------------------- deterministic params ----------------------------------
def init_params(key):
    ks = jax.random.split(key, 12)

    def lin(k, fan_in, fan_out):
        bound = float(fan_in) ** -0.5
        kw, kb = jax.random.split(k)
        W = jax.random.uniform(kw, (fan_in, fan_out), jnp.float32, -bound, bound)
        b = jax.random.uniform(kb, (fan_out,), jnp.float32, -bound, bound)
        return W, b

    p = {}
    p["emb"] = 0.1 * jax.random.normal(ks[0], (NODE_NUM, EMB), jnp.float32)
    p["W1a"], p["b1a"] = lin(ks[1], HIN, HH)
    p["W1b"], p["b1b"] = lin(ks[2], HH, OBS_DIM * DH)
    p["W2a"], p["b2a"] = lin(ks[3], HIN, HH)
    p["W2b"], p["b2b"] = lin(ks[4], HH, DH * DH)
    p["W3a"], p["b3a"] = lin(ks[5], HIN, HH)
    p["W3b"], p["b3b"] = lin(ks[6], HH, DH * AD)
    p["Wb1"], p["bb1"] = lin(ks[7], HIN, DH)
    p["Wb2"], p["bb2"] = lin(ks[8], HIN, DH)
    p["Wb3"], p["bb3"] = lin(ks[9], HIN, AD)
    return p


if __name__ == "__main__":
    key = jax.random.PRNGKey(0)
    kp, k1, k2, k3, k4 = jax.random.split(key, 5)

    B = 32
    params = init_params(kp)
    pooled_node_emb = jax.random.normal(k1, (B, P), jnp.float32)
    T = jax.random.normal(k2, (B, TD), jnp.float32)
    obs = jax.random.randint(k3, (B, A), 0, NODE_NUM, dtype=jnp.int32)

    # kernel path: actor logits
    logits = hypernet_actor_logits(params, pooled_node_emb, T, obs, batch=True)
    logits = jax.block_until_ready(logits)
    assert logits.shape == (B, AD), logits.shape

    # numerical check vs pure-JAX reference of the hypernet base
    ref = reference_logits(params, pooled_node_emb, T, obs)
    err = float(jnp.max(jnp.abs(logits - ref)))
    assert err < 5e-4, f"mismatch vs reference: {err}"

    # full forward (softmax -> Categorical sample -> log prob), like the torch module
    actions, action_log_probs = h_actor_forward(params, pooled_node_emb, T, obs, k4, batch=True)
    actions = jax.block_until_ready(actions)
    assert actions.shape == (B, 1), actions.shape
    assert action_log_probs.shape == (B, 1), action_log_probs.shape

    print("KERNEL_OK")
</pallas_src>

<mosaic_0001>
module attributes {stable_mosaic.version = 11 : i64} {
  func.func @actor_kernel(%arg0: i32, %arg1: memref<128x4xi32, #tpu.memory_space<vmem>>, %arg2: memref<128x33xf32, #tpu.memory_space<vmem>>, %arg3: memref<64x1024xf32, #tpu.memory_space<vmem>>, %arg4: memref<33x256xf32, #tpu.memory_space<vmem>>, %arg5: memref<32x1024xf32, #tpu.memory_space<vmem>>, %arg6: memref<32x1024xf32, #tpu.memory_space<vmem>>, %arg7: memref<1056x32xf32, #tpu.memory_space<vmem>>, %arg8: memref<1056x32xf32, #tpu.memory_space<vmem>>, %arg9: memref<1056x16xf32, #tpu.memory_space<vmem>>, %arg10: memref<128x16xf32, #tpu.memory_space<vmem>>) attributes {dimension_semantics = [#tpu.dimension_semantics<parallel>], iteration_bounds = array<i64: 1>, scalar_prefetch = 0 : i64, scratch_operands = 0 : i64, tpu.core_type = #tpu.core_type<tc>, window_params = [{transform_indices = @transform_0, window_bounds = array<i64: 128, 4>}, {transform_indices = @transform_1, window_bounds = array<i64: 128, 33>}, {pipeline_mode = #tpu.pipeline_mode<synchronous>, transform_indices = @transform_2, window_bounds = array<i64: 64, 1024>}, {pipeline_mode = #tpu.pipeline_mode<synchronous>, transform_indices = @transform_3, window_bounds = array<i64: 33, 256>}, {pipeline_mode = #tpu.pipeline_mode<synchronous>, transform_indices = @transform_4, window_bounds = array<i64: 32, 1024>}, {pipeline_mode = #tpu.pipeline_mode<synchronous>, transform_indices = @transform_5, window_bounds = array<i64: 32, 1024>}, {pipeline_mode = #tpu.pipeline_mode<synchronous>, transform_indices = @transform_6, window_bounds = array<i64: 1056, 32>}, {pipeline_mode = #tpu.pipeline_mode<synchronous>, transform_indices = @transform_7, window_bounds = array<i64: 1056, 32>}, {pipeline_mode = #tpu.pipeline_mode<synchronous>, transform_indices = @transform_8, window_bounds = array<i64: 1056, 16>}, {transform_indices = @transform_9, window_bounds = array<i64: 128, 16>}]} {
    %c0 = arith.constant 0 : index
    %c0_0 = arith.constant 0 : index
    %0 = vector.load %arg2[%c0, %c0_0] : memref<128x33xf32, #tpu.memory_space<vmem>>, vector<128x33xf32>
    %c0_1 = arith.constant 0 : index
    %c0_2 = arith.constant 0 : index
    %1 = vector.load %arg4[%c0_1, %c0_2] : memref<33x256xf32, #tpu.memory_space<vmem>>, vector<33x256xf32>
    %cst = arith.constant dense<0.000000e+00> : vector<128x256xf32>
    %2 = tpu.matmul %0, %1, %cst {dimension_numbers = #tpu.dot_dimension_numbers<[1], [0], [0], [1], [0, 0, 1, 1], [], []>} : vector<128x33xf32>, vector<33x256xf32>, vector<128x256xf32> -> vector<128x256xf32>
    %3 = vector.extract_strided_slice %2 {offsets = [0, 0], sizes = [128, 32], strides = [1, 1]} : vector<128x256xf32> to vector<128x32xf32>
    %cst_3 = arith.constant 0.000000e+00 : f32
    %4 = vector.broadcast %cst_3 : f32 to vector<128x32xf32>
    %5 = arith.maximumf %3, %4 : vector<128x32xf32>
    %6 = vector.extract_strided_slice %2 {offsets = [0, 32], sizes = [128, 32], strides = [1, 1]} : vector<128x256xf32> to vector<128x32xf32>
    %cst_4 = arith.constant 0.000000e+00 : f32
    %7 = vector.broadcast %cst_4 : f32 to vector<128x32xf32>
    %8 = arith.maximumf %6, %7 : vector<128x32xf32>
    %9 = vector.extract_strided_slice %2 {offsets = [0, 64], sizes = [128, 32], strides = [1, 1]} : vector<128x256xf32> to vector<128x32xf32>
    %cst_5 = arith.constant 0.000000e+00 : f32
    %10 = vector.broadcast %cst_5 : f32 to vector<128x32xf32>
    %11 = arith.maximumf %9, %10 : vector<128x32xf32>
    %12 = vector.extract_strided_slice %2 {offsets = [0, 96], sizes = [128, 32], strides = [1, 1]} : vector<128x256xf32> to vector<128x32xf32>
    %13 = vector.extract_strided_slice %2 {offsets = [0, 128], sizes = [128, 32], strides = [1, 1]} : vector<128x256xf32> to vector<128x32xf32>
    %14 = vector.extract_strided_slice %2 {offsets = [0, 160], sizes = [128, 16], strides = [1, 1]} : vector<128x256xf32> to vector<128x16xf32>
    %c0_6 = arith.constant 0 : index
    %c0_7 = arith.constant 0 : index
    %15 = vector.load %arg1[%c0_6, %c0_7] : memref<128x4xi32, #tpu.memory_space<vmem>>, vector<128x4xi32>
    %16 = tpu.iota {dimensions = array<i32: 1>} : vector<128x64xi32>
    %cst_8 = arith.constant 0.000000e+00 : f32
    %17 = vector.broadcast %cst_8 : f32 to vector<128x64xf32>
    %18 = vector.extract_strided_slice %15 {offsets = [0, 0], sizes = [128, 1], strides = [1, 1]} : vector<128x4xi32> to vector<128x1xi32>
    %c0_i32 = arith.constant 0 : i32
    %19 = vector.broadcast %c0_i32 : i32 to vector<128x1xi32>
    %20 = arith.addi %18, %19 : vector<128x1xi32>
    %21 = vector.broadcast %20 : vector<128x1xi32> to vector<128x64xi32>
    %22 = arith.cmpi eq, %16, %21 : vector<128x64xi32>
    %23 = arith.extui %22 : vector<128x64xi1> to vector<128x64xi32>
    %24 = arith.sitofp %23 : vector<128x64xi32> to vector<128x64xf32>
    %25 = arith.addf %17, %24 : vector<128x64xf32>
    %26 = vector.extract_strided_slice %15 {offsets = [0, 1], sizes = [128, 1], strides = [1, 1]} : vector<128x4xi32> to vector<128x1xi32>
    %c16_i32 = arith.constant 16 : i32
    %27 = vector.broadcast %c16_i32 : i32 to vector<128x1xi32>
    %28 = arith.addi %26, %27 : vector<128x1xi32>
    %29 = vector.broadcast %28 : vector<128x1xi32> to vector<128x64xi32>
    %30 = arith.cmpi eq, %16, %29 : vector<128x64xi32>
    %31 = arith.extui %30 : vector<128x64xi1> to vector<128x64xi32>
    %32 = arith.sitofp %31 : vector<128x64xi32> to vector<128x64xf32>
    %33 = arith.addf %25, %32 : vector<128x64xf32>
    %34 = vector.extract_strided_slice %15 {offsets = [0, 2], sizes = [128, 1], strides = [1, 1]} : vector<128x4xi32> to vector<128x1xi32>
    %c32_i32 = arith.constant 32 : i32
    %35 = vector.broadcast %c32_i32 : i32 to vector<128x1xi32>
    %36 = arith.addi %34, %35 : vector<128x1xi32>
    %37 = vector.broadcast %36 : vector<128x1xi32> to vector<128x64xi32>
    %38 = arith.cmpi eq, %16, %37 : vector<128x64xi32>
    %39 = arith.extui %38 : vector<128x64xi1> to vector<128x64xi32>
    %40 = arith.sitofp %39 : vector<128x64xi32> to vector<128x64xf32>
    %41 = arith.addf %33, %40 : vector<128x64xf32>
    %42 = vector.extract_strided_slice %15 {offsets = [0, 3], sizes = [128, 1], strides = [1, 1]} : vector<128x4xi32> to vector<128x1xi32>
    %c48_i32 = arith.constant 48 : i32
    %43 = vector.broadcast %c48_i32 : i32 to vector<128x1xi32>
    %44 = arith.addi %42, %43 : vector<128x1xi32>
    %45 = vector.broadcast %44 : vector<128x1xi32> to vector<128x64xi32>
    %46 = arith.cmpi eq, %16, %45 : vector<128x64xi32>
    %47 = arith.extui %46 : vector<128x64xi1> to vector<128x64xi32>
    %48 = arith.sitofp %47 : vector<128x64xi32> to vector<128x64xf32>
    %49 = arith.addf %41, %48 : vector<128x64xf32>
    %c0_9 = arith.constant 0 : index
    %c0_10 = arith.constant 0 : index
    %50 = vector.load %arg3[%c0_9, %c0_10] : memref<64x1024xf32, #tpu.memory_space<vmem>>, vector<64x1024xf32>
    %cst_11 = arith.constant dense<0.000000e+00> : vector<128x1024xf32>
    %51 = tpu.matmul %49, %50, %cst_11 {dimension_numbers = #tpu.dot_dimension_numbers<[1], [0], [0], [1], [0, 0, 1, 1], [], []>} : vector<128x64xf32>, vector<64x1024xf32>, vector<128x1024xf32> -> vector<128x1024xf32>
    %52 = vector.extract_strided_slice %51 {offsets = [0, 0], sizes = [128, 32], strides = [1, 1]} : vector<128x1024xf32> to vector<128x32xf32>
    %c0_12 = arith.constant 0 : index
    %c0_13 = arith.constant 0 : index
    %53 = vector.load %arg5[%c0_12, %c0_13] : memref<32x1024xf32, #tpu.memory_space<vmem>>, vector<32x1024xf32>
    %c0_14 = arith.constant 0 : index
    %c0_15 = arith.constant 0 : index
    %54 = vector.load %arg6[%c0_14, %c0_15] : memref<32x1024xf32, #tpu.memory_space<vmem>>, vector<32x1024xf32>
    %cst_16 = arith.constant dense<0.000000e+00> : vector<128x1024xf32>
    %55 = tpu.matmul %5, %53, %cst_16 {dimension_numbers = #tpu.dot_dimension_numbers<[1], [0], [0], [1], [0, 0, 1, 1], [], []>} : vector<128x32xf32>, vector<32x1024xf32>, vector<128x1024xf32> -> vector<128x1024xf32>
    %56 = arith.mulf %55, %51 : vector<128x1024xf32>
    %57 = tpu.concatenate %56, %52 in 1 : vector<128x1024xf32>, vector<128x32xf32> -> vector<128x1056xf32>
    %c0_17 = arith.constant 0 : index
    %c0_18 = arith.constant 0 : index
    %58 = vector.load %arg7[%c0_17, %c0_18] : memref<1056x32xf32, #tpu.memory_space<vmem>>, vector<1056x32xf32>
    %cst_19 = arith.constant dense<0.000000e+00> : vector<128x32xf32>
    %59 = tpu.matmul %57, %58, %cst_19 {dimension_numbers = #tpu.dot_dimension_numbers<[1], [0], [0], [1], [0, 0, 1, 1], [], []>} : vector<128x1056xf32>, vector<1056x32xf32>, vector<128x32xf32> -> vector<128x32xf32>
    %60 = arith.addf %59, %12 : vector<128x32xf32>
    %cst_20 = arith.constant 0.000000e+00 : f32
    %61 = vector.broadcast %cst_20 : f32 to vector<128x32xf32>
    %62 = arith.maximumf %60, %61 : vector<128x32xf32>
    %cst_21 = arith.constant dense<0.000000e+00> : vector<128x1024xf32>
    %63 = tpu.matmul %8, %53, %cst_21 {dimension_numbers = #tpu.dot_dimension_numbers<[1], [0], [0], [1], [0, 0, 1, 1], [], []>} : vector<128x32xf32>, vector<32x1024xf32>, vector<128x1024xf32> -> vector<128x1024xf32>
    %cst_22 = arith.constant dense<0.000000e+00> : vector<128x1024xf32>
    %64 = tpu.matmul %62, %54, %cst_22 {dimension_numbers = #tpu.dot_dimension_numbers<[1], [0], [0], [1], [0, 0, 1, 1], [], []>} : vector<128x32xf32>, vector<32x1024xf32>, vector<128x1024xf32> -> vector<128x1024xf32>
    %65 = arith.mulf %63, %64 : vector<128x1024xf32>
    %66 = tpu.concatenate %65, %62 in 1 : vector<128x1024xf32>, vector<128x32xf32> -> vector<128x1056xf32>
    %c0_23 = arith.constant 0 : index
    %c0_24 = arith.constant 0 : index
    %67 = vector.load %arg8[%c0_23, %c0_24] : memref<1056x32xf32, #tpu.memory_space<vmem>>, vector<1056x32xf32>
    %cst_25 = arith.constant dense<0.000000e+00> : vector<128x32xf32>
    %68 = tpu.matmul %66, %67, %cst_25 {dimension_numbers = #tpu.dot_dimension_numbers<[1], [0], [0], [1], [0, 0, 1, 1], [], []>} : vector<128x1056xf32>, vector<1056x32xf32>, vector<128x32xf32> -> vector<128x32xf32>
    %69 = arith.addf %68, %13 : vector<128x32xf32>
    %cst_26 = arith.constant 0.000000e+00 : f32
    %70 = vector.broadcast %cst_26 : f32 to vector<128x32xf32>
    %71 = arith.maximumf %69, %70 : vector<128x32xf32>
    %cst_27 = arith.constant dense<0.000000e+00> : vector<128x1024xf32>
    %72 = tpu.matmul %11, %53, %cst_27 {dimension_numbers = #tpu.dot_dimension_numbers<[1], [0], [0], [1], [0, 0, 1, 1], [], []>} : vector<128x32xf32>, vector<32x1024xf32>, vector<128x1024xf32> -> vector<128x1024xf32>
    %cst_28 = arith.constant dense<0.000000e+00> : vector<128x1024xf32>
    %73 = tpu.matmul %71, %54, %cst_28 {dimension_numbers = #tpu.dot_dimension_numbers<[1], [0], [0], [1], [0, 0, 1, 1], [], []>} : vector<128x32xf32>, vector<32x1024xf32>, vector<128x1024xf32> -> vector<128x1024xf32>
    %74 = arith.mulf %72, %73 : vector<128x1024xf32>
    %75 = tpu.concatenate %74, %71 in 1 : vector<128x1024xf32>, vector<128x32xf32> -> vector<128x1056xf32>
    %c0_29 = arith.constant 0 : index
    %c0_30 = arith.constant 0 : index
    %76 = vector.load %arg9[%c0_29, %c0_30] : memref<1056x16xf32, #tpu.memory_space<vmem>>, vector<1056x16xf32>
    %cst_31 = arith.constant dense<0.000000e+00> : vector<128x16xf32>
    %77 = tpu.matmul %75, %76, %cst_31 {dimension_numbers = #tpu.dot_dimension_numbers<[1], [0], [0], [1], [0, 0, 1, 1], [], []>} : vector<128x1056xf32>, vector<1056x16xf32>, vector<128x16xf32> -> vector<128x16xf32>
    %78 = arith.addf %77, %14 : vector<128x16xf32>
    %c0_32 = arith.constant 0 : index
    %c0_33 = arith.constant 0 : index
    %79 = vector.load %arg10[%c0_32, %c0_33] : memref<128x16xf32, #tpu.memory_space<vmem>>, vector<128x16xf32>
    tpu.vector_store %arg10[%c0_32, %c0_33], %78 {strides = array<i32>} : memref<128x16xf32, #tpu.memory_space<vmem>>, vector<128x16xf32>,
    return
  }
  func.func @transform_0(%arg0: i32) -> (i32, i32) {
    %c0_i32 = arith.constant 0 : i32
    %c0_i32_0 = arith.constant 0 : i32
    return %arg0, %c0_i32 : i32, i32
  }
  func.func @transform_1(%arg0: i32) -> (i32, i32) {
    %c0_i32 = arith.constant 0 : i32
    %c0_i32_0 = arith.constant 0 : i32
    return %arg0, %c0_i32 : i32, i32
  }
  func.func @transform_2(%arg0: i32) -> (i32, i32) {
    %c0_i32 = arith.constant 0 : i32
    %c0_i32_0 = arith.constant 0 : i32
    %c0_i32_1 = arith.constant 0 : i32
    return %c0_i32, %c0_i32_0 : i32, i32
  }
  func.func @transform_3(%arg0: i32) -> (i32, i32) {
    %c0_i32 = arith.constant 0 : i32
    %c0_i32_0 = arith.constant 0 : i32
    %c0_i32_1 = arith.constant 0 : i32
    return %c0_i32, %c0_i32_0 : i32, i32
  }
  func.func @transform_4(%arg0: i32) -> (i32, i32) {
    %c0_i32 = arith.constant 0 : i32
    %c0_i32_0 = arith.constant 0 : i32
    %c0_i32_1 = arith.constant 0 : i32
    return %c0_i32, %c0_i32_0 : i32, i32
  }
  func.func @transform_5(%arg0: i32) -> (i32, i32) {
    %c0_i32 = arith.constant 0 : i32
    %c0_i32_0 = arith.constant 0 : i32
    %c0_i32_1 = arith.constant 0 : i32
    return %c0_i32, %c0_i32_0 : i32, i32
  }
  func.func @transform_6(%arg0: i32) -> (i32, i32) {
    %c0_i32 = arith.constant 0 : i32
    %c0_i32_0 = arith.constant 0 : i32
    %c0_i32_1 = arith.constant 0 : i32
    return %c0_i32, %c0_i32_0 : i32, i32
  }
  func.func @transform_7(%arg0: i32) -> (i32, i32) {
    %c0_i32 = arith.constant 0 : i32
    %c0_i32_0 = arith.constant 0 : i32
    %c0_i32_1 = arith.constant 0 : i32
    return %c0_i32, %c0_i32_0 : i32, i32
  }
  func.func @transform_8(%arg0: i32) -> (i32, i32) {
    %c0_i32 = arith.constant 0 : i32
    %c0_i32_0 = arith.constant 0 : i32
    %c0_i32_1 = arith.constant 0 : i32
    return %c0_i32, %c0_i32_0 : i32, i32
  }
  func.func @transform_9(%arg0: i32) -> (i32, i32) {
    %c0_i32 = arith.constant 0 : i32
    %c0_i32_0 = arith.constant 0 : i32
    return %arg0, %c0_i32 : i32, i32
  }
}

</mosaic_0001>

<llo_original>
// kernel: tpu_custom_call.1
$region0: #{tpu_custom_call.1}
  #allocation0 [shape = 'u32[]', space=smem, size = 0x4, offset = 0x4, fixed_abs, tag = 'smem constant byte address 0x4 - core index']
  #allocation1 [shape = 'u32[144,128]{1,0:T(1,128)}', space=vmem, size = 0x12000, scoped, tag = 'internal scratch']
  %s0 = inlined_call_operand.vmem [shape: s32[128,4], index: 0, kind: input, shape index: {}]
  %s1 = inlined_call_operand.vmem [shape: f32[128,33], index: 1, kind: input, shape index: {}]
  %s2 = inlined_call_operand.vmem [shape: f32[64,1024], index: 2, kind: input, shape index: {}]
  %s3 = inlined_call_operand.vmem [shape: f32[33,256], index: 3, kind: input, shape index: {}]
  %s4 = inlined_call_operand.vmem [shape: f32[32,1024], index: 4, kind: input, shape index: {}]
  %s5 = inlined_call_operand.vmem [shape: f32[32,1024], index: 5, kind: input, shape index: {}]
  %s6 = inlined_call_operand.vmem [shape: f32[1056,32], index: 6, kind: input, shape index: {}]
  %s7 = inlined_call_operand.vmem [shape: f32[1056,32], index: 7, kind: input, shape index: {}]
  %s8 = inlined_call_operand.vmem [shape: f32[1056,16], index: 8, kind: input, shape index: {}]
  %s9 = inlined_call_operand.vmem [shape: f32[128,16], index: 9, kind: output, shape index: {}]
  %s10 = sld [smem:[#allocation0]]
  $region46: #{tpu_custom_call.1} parent=0
    _
  %s12 = ssub.s32 1, %s10
  %s13 = scalar_select 0, %s12, %s10
  // Predicated region
  $region2: #{tpu_custom_call.1} parent=0 // pred_check
    _
  $region3: #{tpu_custom_call.1} parent=0 // pred_check_branch
    %15 = sbr.rel (0) target = $region5
  $region4: #{tpu_custom_call.1} parent=0 // pred_region
    _
  $region5: #{tpu_custom_call.1} parent=0 // pred_fallthru
    _
  // Predicated region
  $region6: #{tpu_custom_call.1} parent=0 // pred_check
    _
  $region7: #{tpu_custom_call.1} parent=0 // pred_check_branch
    %17 = sbr.rel (0) target = $region9
  $region8: #{tpu_custom_call.1} parent=0 // pred_region
    _
  $region9: #{tpu_custom_call.1} parent=0 // pred_fallthru
    _
  // Predicated region
  $region10: #{tpu_custom_call.1} parent=0 // pred_check
    _
  $region11: #{tpu_custom_call.1} parent=0 // pred_check_branch
    %19 = sbr.rel (0) target = $region13
  $region12: #{tpu_custom_call.1} parent=0 // pred_region
    _
  $region13: #{tpu_custom_call.1} parent=0 // pred_fallthru
    _
  // Predicated region
  $region14: #{tpu_custom_call.1} parent=0 // pred_check
    _
  $region15: #{tpu_custom_call.1} parent=0 // pred_check_branch
    %21 = sbr.rel (0) target = $region17
  $region16: #{tpu_custom_call.1} parent=0 // pred_region
    _
  $region17: #{tpu_custom_call.1} parent=0 // pred_fallthru
    _
  // Predicated region
  $region18: #{tpu_custom_call.1} parent=0 // pred_check
    _
  $region19: #{tpu_custom_call.1} parent=0 // pred_check_branch
    %23 = sbr.rel (0) target = $region21
  $region20: #{tpu_custom_call.1} parent=0 // pred_region
    _
  $region21: #{tpu_custom_call.1} parent=0 // pred_fallthru
    _
  // Predicated region
  $region22: #{tpu_custom_call.1} parent=0 // pred_check
    _
  $region23: #{tpu_custom_call.1} parent=0 // pred_check_branch
    %25 = sbr.rel (0) target = $region25
  $region24: #{tpu_custom_call.1} parent=0 // pred_region
    _
  $region25: #{tpu_custom_call.1} parent=0 // pred_fallthru
    _
  // Predicated region
  $region26: #{tpu_custom_call.1} parent=0 // pred_check
    _
  $region27: #{tpu_custom_call.1} parent=0 // pred_check_branch
    %27 = sbr.rel (0) target = $region29
  $region28: #{tpu_custom_call.1} parent=0 // pred_region
    _
  $region29: #{tpu_custom_call.1} parent=0 // pred_fallthru
    _
  // Predicated region
  $region30: #{tpu_custom_call.1} parent=0 // pred_check
    _
  $region31: #{tpu_custom_call.1} parent=0 // pred_check_branch
    %29 = sbr.rel (0) target = $region33
  $region32: #{tpu_custom_call.1} parent=0 // pred_region
    _
  $region33: #{tpu_custom_call.1} parent=0 // pred_fallthru
    _
  // Predicated region
  $region34: #{tpu_custom_call.1} parent=0 // pred_check
    _
  $region35: #{tpu_custom_call.1} parent=0 // pred_check_branch
    %31 = sbr.rel (0) target = $region37
  $region36: #{tpu_custom_call.1} parent=0 // pred_region
    _
  $region37: #{tpu_custom_call.1} parent=0 // pred_fallthru
    _
  %v32 = vld [vmem:[%s1] sm:$0xff]
  %v33 = vld [vmem:[%s1 + $0x8] sm:$0xff]
  %v34 = vld [vmem:[%s1 + $0x10] sm:$0xff]
  %v35 = vld [vmem:[%s1 + $0x18] sm:$0xff]
  %v36 = vld [vmem:[%s1 + $0x20] sm:$0xff]
  %v37 = vld [vmem:[%s1 + $0x28] sm:$0xff]
  %v38 = vld [vmem:[%s1 + $0x30] sm:$0xff]
  %v39 = vld [vmem:[%s1 + $0x38] sm:$0xff]
  %v40 = vld [vmem:[%s1 + $0x40] sm:$0xff]
  %v41 = vld [vmem:[%s1 + $0x48] sm:$0xff]
  %v42 = vld [vmem:[%s1 + $0x50] sm:$0xff]
  %v43 = vld [vmem:[%s1 + $0x58] sm:$0xff]
  %v44 = vld [vmem:[%s1 + $0x60] sm:$0xff]
  %v45 = vld [vmem:[%s1 + $0x68] sm:$0xff]
  %v46 = vld [vmem:[%s1 + $0x70] sm:$0xff]
  %v47 = vld [vmem:[%s1 + $0x78] sm:$0xff]
  %v48 = vld [vmem:[%s3] sm:$0xff]
  %v49 = vld [vmem:[%s3 + $0x8] sm:$0xff]
  %v50 = vld [vmem:[%s3 + $0x10] sm:$0xff]
  %v51 = vld [vmem:[%s3 + $0x18] sm:$0xff]
  %v52 = vld [vmem:[%s3 + $0x20] sm:$0xff]
  %v53 = vld [vmem:[%s3 + $0x28] sm:$0xff]
  %v54 = vld [vmem:[%s3 + $0x30] sm:$0xff]
  %v55 = vld [vmem:[%s3 + $0x38] sm:$0xff]
  %v56 = vld [vmem:[%s3 + $0x40] sm:$0x1]
  %v57 = vld [vmem:[%s3 + $0x48] sm:$0x1]
  %vm58 = vcmask 269312
  %v60 = vsel %vm58, %v32, 0
  %v63 = vsel %vm58, %v33, 0
  %v66 = vsel %vm58, %v34, 0
  %v69 = vsel %vm58, %v35, 0
  %v72 = vsel %vm58, %v36, 0
  %v75 = vsel %vm58, %v37, 0
  %v78 = vsel %vm58, %v38, 0
  %v81 = vsel %vm58, %v39, 0
  %v84 = vsel %vm58, %v40, 0
  %v87 = vsel %vm58, %v41, 0
  %v90 = vsel %vm58, %v42, 0
  %v93 = vsel %vm58, %v43, 0
  %v96 = vsel %vm58, %v44, 0
  %v99 = vsel %vm58, %v45, 0
  %v102 = vsel %vm58, %v46, 0
  %v105 = vsel %vm58, %v47, 0
  %vm107 = vcmask 1040384
  %v109 = vsel %vm107, %v56, 0
  %v112 = vsel %vm107, %v57, 0
  %114 = vmatprep.subr.mxu0 0.0
  %115 = vmatpush1.msra.mxu0 0.0
  %116 = vmatprep.subr.mxu0 0.0
  %117 = vmatpush1.msra.mxu0 0.0
  %118 = vmatprep.subr.mxu0 0.0
  %119 = vmatpush1.msra.mxu0 0.0
  %120 = vmatprep.subr.mxu0 0.0
  %121 = vmatpush1.msra.mxu0 0.0
  %122 = vmatprep.subr.mxu0 0.0
  %123 = vmatpush1.msra.mxu0 0.0
  %124 = vmatprep.subr.mxu0 0.0
  %125 = vmatpush1.msra.mxu0 0.0
  %126 = vmatprep.subr.mxu0 0.0
  %127 = vmatpush1.msra.mxu0 0.0
  %128 = vmatprep.subr.mxu0 0.0
  %129 = vmatpush1.msra.mxu0 0.0
  %130 = vmatprep.subr.mxu0 0.0
  %131 = vmatpush1.msra.mxu0 0.0
  %132 = vmatprep.subr.mxu0 0.0
  %133 = vmatpush1.msra.mxu0 0.0
  %134 = vmatprep.subr.mxu0 0.0
  %135 = vmatpush1.msra.mxu0 0.0
  %136 = vmatprep.subr.mxu0 %v112
  %137 = vmatpush1.msra.mxu0 %v109
  %138 = vmatprep.subr.mxu0 %v55
  %139 = vmatpush1.msra.mxu0 %v54
  %140 = vmatprep.subr.mxu0 %v53
  %141 = vmatpush1.msra.mxu0 %v52
  %142 = vmatprep.subr.mxu0 %v51
  %143 = vmatpush1.msra.mxu0 %v50
  %144 = vmatprep.subr.mxu0 %v49
  %145 = vmatpush1.msra.mxu0 %v48
  %146 = vmatprep.subr.mxu0 0.0
  %147 = vmatpush2.msra.mxu0 0.0
  %148 = vmatprep.subr.mxu0 0.0
  %149 = vmatpush2.msra.mxu0 0.0
  %150 = vmatprep.subr.mxu0 0.0
  %151 = vmatpush2.msra.mxu0 0.0
  %152 = vmatprep.subr.mxu0 0.0
  %153 = vmatpush2.msra.mxu0 0.0
  %154 = vmatprep.subr.mxu0 0.0
  %155 = vmatpush2.msra.mxu0 0.0
  %156 = vmatprep.subr.mxu0 0.0
  %157 = vmatpush2.msra.mxu0 0.0
  %158 = vmatprep.subr.mxu0 0.0
  %159 = vmatpush2.msra.mxu0 0.0
  %160 = vmatprep.subr.mxu0 0.0
  %161 = vmatpush2.msra.mxu0 0.0
  %162 = vmatprep.subr.mxu0 0.0
  %163 = vmatpush2.msra.mxu0 0.0
  %164 = vmatprep.subr.mxu0 0.0
  %165 = vmatpush2.msra.mxu0 0.0
  %166 = vmatprep.subr.mxu0 0.0
  %167 = vmatpush2.msra.mxu0 0.0
  %168 = vmatprep.subr.mxu0 0.0
  %169 = vmatpush2.msra.mxu0 0.0
  %170 = vmatprep.subr.mxu0 0.0
  %171 = vmatpush2.msra.mxu0 0.0
  %172 = vmatprep.subr.mxu0 0.0
  %173 = vmatpush2.msra.mxu0 0.0
  %174 = vmatprep.subr.mxu0 0.0
  %175 = vmatpush2.msra.mxu0 0.0
  %176 = vmatprep.subr.mxu0 0.0
  %177 = vmatpush2.msra.mxu0 0.0
  %178 = vmatprep.mubr.f32.mxu0 0.0
  %179 = vmatmul.mubr.f32.gmra.mxu0 %v60
  %v180 = vpop.f32.mrf.mxu0
  %v181 = vadd.f32 0.0, %v180
  %v182 = vpop.f32.mrf.mxu0
  %v183 = vadd.f32 0.0, %v182
  %184 = vmatprep.mubr.f32.mxu0 0.0
  %185 = vmatmul.mubr.f32.gmra.mxu0 %v63
  %v186 = vpop.f32.mrf.mxu0
  %v187 = vadd.f32 0.0, %v186
  %v188 = vpop.f32.mrf.mxu0
  %v189 = vadd.f32 0.0, %v188
  %190 = vmatprep.mubr.f32.mxu0 0.0
  %191 = vmatmul.mubr.f32.gmra.mxu0 %v66
  %v192 = vpop.f32.mrf.mxu0
  %v193 = vadd.f32 0.0, %v192
  %v194 = vpop.f32.mrf.mxu0
  %v195 = vadd.f32 0.0, %v194
  %196 = vmatprep.mubr.f32.mxu0 0.0
  %197 = vmatmul.mubr.f32.gmra.mxu0 %v69
  %v198 = vpop.f32.mrf.mxu0
  %v199 = vadd.f32 0.0, %v198
  %v200 = vpop.f32.mrf.mxu0
  %v201 = vadd.f32 0.0, %v200
  %202 = vmatprep.mubr.f32.mxu0 0.0
  %203 = vmatmul.mubr.f32.gmra.mxu0 %v72
  %v204 = vpop.f32.mrf.mxu0
  %v205 = vadd.f32 0.0, %v204
  %v206 = vpop.f32.mrf.mxu0
  %v207 = vadd.f32 0.0, %v206
  %208 = vmatprep.mubr.f32.mxu0 0.0
  %209 = vmatmul.mubr.f32.gmra.mxu0 %v75
  %v210 = vpop.f32.mrf.mxu0
  %v211 = vadd.f32 0.0, %v210
  %v212 = vpop.f32.mrf.mxu0
  %v213 = vadd.f32 0.0, %v212
  %214 = vmatprep.mubr.f32.mxu0 0.0
  %215 = vmatmul.mubr.f32.gmra.mxu0 %v78
  %v216 = vpop.f32.mrf.mxu0
  %v217 = vadd.f32 0.0, %v216
  %v218 = vpop.f32.mrf.mxu0
  %v219 = vadd.f32 0.0, %v218
  %220 = vmatprep.mubr.f32.mxu0 0.0
  %221 = vmatmul.mubr.f32.gmra.mxu0 %v81
  %v222 = vpop.f32.mrf.mxu0
  %v223 = vadd.f32 0.0, %v222
  %v224 = vpop.f32.mrf.mxu0
  %v225 = vadd.f32 0.0, %v224
  %226 = vmatprep.mubr.f32.mxu0 0.0
  %227 = vmatmul.mubr.f32.gmra.mxu0 %v84
  %v228 = vpop.f32.mrf.mxu0
  %v229 = vadd.f32 0.0, %v228
  %v230 = vpop.f32.mrf.mxu0
  %v231 = vadd.f32 0.0, %v230
  %232 = vmatprep.mubr.f32.mxu0 0.0
  %233 = vmatmul.mubr.f32.gmra.mxu0 %v87
  %v234 = vpop.f32.mrf.mxu0
  %v235 = vadd.f32 0.0, %v234
  %v236 = vpop.f32.mrf.mxu0
  %v237 = vadd.f32 0.0, %v236
  %238 = vmatprep.mubr.f32.mxu0 0.0
  %239 = vmatmul.mubr.f32.gmra.mxu0 %v90
  %v240 = vpop.f32.mrf.mxu0
  %v241 = vadd.f32 0.0, %v240
  %v242 = vpop.f32.mrf.mxu0
  %v243 = vadd.f32 0.0, %v242
  %244 = vmatprep.mubr.f32.mxu0 0.0
  %245 = vmatmul.mubr.f32.gmra.mxu0 %v93
  %v246 = vpop.f32.mrf.mxu0
  %v247 = vadd.f32 0.0, %v246
  %v248 = vpop.f32.mrf.mxu0
  %v249 = vadd.f32 0.0, %v248
  %250 = vmatprep.mubr.f32.mxu0 0.0
  %251 = vmatmul.mubr.f32.gmra.mxu0 %v96
  %v252 = vpop.f32.mrf.mxu0
  %v253 = vadd.f32 0.0, %v252
  %v254 = vpop.f32.mrf.mxu0
  %v255 = vadd.f32 0.0, %v254
  %256 = vmatprep.mubr.f32.mxu0 0.0
  %257 = vmatmul.mubr.f32.gmra.mxu0 %v99
  %v258 = vpop.f32.mrf.mxu0
  %v259 = vadd.f32 0.0, %v258
  %v260 = vpop.f32.mrf.mxu0
  %v261 = vadd.f32 0.0, %v260
  %262 = vmatprep.mubr.f32.mxu0 0.0
  %263 = vmatmul.mubr.f32.gmra.mxu0 %v102
  %v264 = vpop.f32.mrf.mxu0
  %v265 = vadd.f32 0.0, %v264
  %v266 = vpop.f32.mrf.mxu0
  %v267 = vadd.f32 0.0, %v266
  %268 = vmatprep.mubr.f32.mxu0 0.0
  %269 = vmatmul.mubr.f32.gmra.mxu0 %v105
  %v270 = vpop.f32.mrf.mxu0
  %v271 = vadd.f32 0.0, %v270
  %v272 = vpop.f32.mrf.mxu0
  %v273 = vadd.f32 0.0, %v272
  %274 = vdwg.mxu0
  %v275 = vmax.f32 %v181, 0.0
  %v276 = vmax.f32 %v187, 0.0
  %v277 = vmax.f32 %v193, 0.0
  %v278 = vmax.f32 %v199, 0.0
  %v279 = vmax.f32 %v205, 0.0
  %v280 = vmax.f32 %v211, 0.0
  %v281 = vmax.f32 %v217, 0.0
  %v282 = vmax.f32 %v223, 0.0
  %v283 = vmax.f32 %v229, 0.0
  %v284 = vmax.f32 %v235, 0.0
  %v285 = vmax.f32 %v241, 0.0
  %v286 = vmax.f32 %v247, 0.0
  %v287 = vmax.f32 %v253, 0.0
  %v288 = vmax.f32 %v259, 0.0
  %v289 = vmax.f32 %v265, 0.0
  %v290 = vmax.f32 %v271, 0.0
  %v291 = vld [vmem:[%s0] sm:$0xff]
  %v292 = vld [vmem:[%s0 + $0x8] sm:$0xff]
  %v293 = vld [vmem:[%s0 + $0x10] sm:$0xff]
  %v294 = vld [vmem:[%s0 + $0x18] sm:$0xff]
  %v295 = vld [vmem:[%s0 + $0x20] sm:$0xff]
  %v296 = vld [vmem:[%s0 + $0x28] sm:$0xff]
  %v297 = vld [vmem:[%s0 + $0x30] sm:$0xff]
  %v298 = vld [vmem:[%s0 + $0x38] sm:$0xff]
  %v299 = vld [vmem:[%s0 + $0x40] sm:$0xff]
  %v300 = vld [vmem:[%s0 + $0x48] sm:$0xff]
  %v301 = vld [vmem:[%s0 + $0x50] sm:$0xff]
  %v302 = vld [vmem:[%s0 + $0x58] sm:$0xff]
  %v303 = vld [vmem:[%s0 + $0x60] sm:$0xff]
  %v304 = vld [vmem:[%s0 + $0x68] sm:$0xff]
  %v305 = vld [vmem:[%s0 + $0x70] sm:$0xff]
  %v306 = vld [vmem:[%s0 + $0x78] sm:$0xff]
  %v307 = vlaneseq
  %v308 = vand.u32 %v307, 127
  %309 = vset.pattern.permute.xlu0 0
  %310 = vperm.xlu0 %309, %v291
  %v311 = vpop.permute.xlu0 %310
  %312 = vset.pattern.permute.xlu0 0
  %313 = vperm.xlu0 %312, %v292
  %v314 = vpop.permute.xlu0 %313
  %315 = vset.pattern.permute.xlu0 0
  %316 = vperm.xlu0 %315, %v293
  %v317 = vpop.permute.xlu0 %316
  %318 = vset.pattern.permute.xlu0 0
  %319 = vperm.xlu0 %318, %v294
  %v320 = vpop.permute.xlu0 %319
  %321 = vset.pattern.permute.xlu0 0
  %322 = vperm.xlu0 %321, %v295
  %v323 = vpop.permute.xlu0 %322
  %324 = vset.pattern.permute.xlu0 0
  %325 = vperm.xlu0 %324, %v296
  %v326 = vpop.permute.xlu0 %325
  %327 = vset.pattern.permute.xlu0 0
  %328 = vperm.xlu0 %327, %v297
  %v329 = vpop.permute.xlu0 %328
  %330 = vset.pattern.permute.xlu0 0
  %331 = vperm.xlu0 %330, %v298
  %v332 = vpop.permute.xlu0 %331
  %333 = vset.pattern.permute.xlu0 0
  %334 = vperm.xlu0 %333, %v299
  %v335 = vpop.permute.xlu0 %334
  %336 = vset.pattern.permute.xlu0 0
  %337 = vperm.xlu0 %336, %v300
  %v338 = vpop.permute.xlu0 %337
  %339 = vset.pattern.permute.xlu0 0
  %340 = vperm.xlu0 %339, %v301
  %v341 = vpop.permute.xlu0 %340
  %342 = vset.pattern.permute.xlu0 0
  %343 = vperm.xlu0 %342, %v302
  %v344 = vpop.permute.xlu0 %343
  %345 = vset.pattern.permute.xlu0 0
  %346 = vperm.xlu0 %345, %v303
  %v347 = vpop.permute.xlu0 %346
  %348 = vset.pattern.permute.xlu0 0
  %349 = vperm.xlu0 %348, %v304
  %v350 = vpop.permute.xlu0 %349
  %351 = vset.pattern.permute.xlu0 0
  %352 = vperm.xlu0 %351, %v305
  %v353 = vpop.permute.xlu0 %352
  %354 = vset.pattern.permute.xlu0 0
  %355 = vperm.xlu0 %354, %v306
  %v356 = vpop.permute.xlu0 %355
  %vm357 = vcmp.eq.s32.totalorder %v308, %v311
  %vm358 = vcmp.eq.s32.totalorder %v308, %v314
  %vm359 = vcmp.eq.s32.totalorder %v308, %v317
  %vm360 = vcmp.eq.s32.totalorder %v308, %v320
  %vm361 = vcmp.eq.s32.totalorder %v308, %v323
  %vm362 = vcmp.eq.s32.totalorder %v308, %v326
  %vm363 = vcmp.eq.s32.totalorder %v308, %v329
  %vm364 = vcmp.eq.s32.totalorder %v308, %v332
  %vm365 = vcmp.eq.s32.totalorder %v308, %v335
  %vm366 = vcmp.eq.s32.totalorder %v308, %v338
  %vm367 = vcmp.eq.s32.totalorder %v308, %v341
  %vm368 = vcmp.eq.s32.totalorder %v308, %v344
  %vm369 = vcmp.eq.s32.totalorder %v308, %v347
  %vm370 = vcmp.eq.s32.totalorder %v308, %v350
  %vm371 = vcmp.eq.s32.totalorder %v308, %v353
  %vm372 = vcmp.eq.s32.totalorder %v308, %v356
  %v373 = vsel %vm357, 1, 0
  %v374 = vsel %vm358, 1, 0
  %v375 = vsel %vm359, 1, 0
  %v376 = vsel %vm360, 1, 0
  %v377 = vsel %vm361, 1, 0
  %v378 = vsel %vm362, 1, 0
  %v379 = vsel %vm363, 1, 0
  %v380 = vsel %vm364, 1, 0
  %v381 = vsel %vm365, 1, 0
  %v382 = vsel %vm366, 1, 0
  %v383 = vsel %vm367, 1, 0
  %v384 = vsel %vm368, 1, 0
  %v385 = vsel %vm369, 1, 0
  %v386 = vsel %vm370, 1, 0
  %v387 = vsel %vm371, 1, 0
  %v388 = vsel %vm372, 1, 0
  %v389 = vcvt.s32.f32 %v373
  %v390 = vcvt.s32.f32 %v374
  %v391 = vcvt.s32.f32 %v375
  %v392 = vcvt.s32.f32 %v376
  %v393 = vcvt.s32.f32 %v377
  %v394 = vcvt.s32.f32 %v378
  %v395 = vcvt.s32.f32 %v379
  %v396 = vcvt.s32.f32 %v380
  %v397 = vcvt.s32.f32 %v381
  %v398 = vcvt.s32.f32 %v382
  %v399 = vcvt.s32.f32 %v383
  %v400 = vcvt.s32.f32 %v384
  %v401 = vcvt.s32.f32 %v385
  %v402 = vcvt.s32.f32 %v386
  %v403 = vcvt.s32.f32 %v387
  %v404 = vcvt.s32.f32 %v388
  %v405 = vadd.f32 %v389, 0.0
  %v406 = vadd.f32 %v390, 0.0
  %v407 = vadd.f32 %v391, 0.0
  %v408 = vadd.f32 %v392, 0.0
  %v409 = vadd.f32 %v393, 0.0
  %v410 = vadd.f32 %v394, 0.0
  %v411 = vadd.f32 %v395, 0.0
  %v412 = vadd.f32 %v396, 0.0
  %v413 = vadd.f32 %v397, 0.0
  %v414 = vadd.f32 %v398, 0.0
  %v415 = vadd.f32 %v399, 0.0
  %v416 = vadd.f32 %v400, 0.0
  %v417 = vadd.f32 %v401, 0.0
  %v418 = vadd.f32 %v402, 0.0
  %v419 = vadd.f32 %v403, 0.0
  %v420 = vadd.f32 %v404, 0.0
  %v421 = vadd.s32 %v291, 16
  %v422 = vadd.s32 %v292, 16
  %v423 = vadd.s32 %v293, 16
  %v424 = vadd.s32 %v294, 16
  %v425 = vadd.s32 %v295, 16
  %v426 = vadd.s32 %v296, 16
  %v427 = vadd.s32 %v297, 16
  %v428 = vadd.s32 %v298, 16
  %v429 = vadd.s32 %v299, 16
  %v430 = vadd.s32 %v300, 16
  %v431 = vadd.s32 %v301, 16
  %v432 = vadd.s32 %v302, 16
  %v433 = vadd.s32 %v303, 16
  %v434 = vadd.s32 %v304, 16
  %v435 = vadd.s32 %v305, 16
  %v436 = vadd.s32 %v306, 16
  %437 = vset.pattern.permute.xlu0 1
  %438 = vperm.xlu0 %437, %v421
  %v439 = vpop.permute.xlu0 %438
  %440 = vset.pattern.permute.xlu0 1
  %441 = vperm.xlu0 %440, %v422
  %v442 = vpop.permute.xlu0 %441
  %443 = vset.pattern.permute.xlu0 1
  %444 = vperm.xlu0 %443, %v423
  %v445 = vpop.permute.xlu0 %444
  %446 = vset.pattern.permute.xlu0 1
  %447 = vperm.xlu0 %446, %v424
  %v448 = vpop.permute.xlu0 %447
  %449 = vset.pattern.permute.xlu0 1
  %450 = vperm.xlu0 %449, %v425
  %v451 = vpop.permute.xlu0 %450
  %452 = vset.pattern.permute.xlu0 1
  %453 = vperm.xlu0 %452, %v426
  %v454 = vpop.permute.xlu0 %453
  %455 = vset.pattern.permute.xlu0 1
  %456 = vperm.xlu0 %455, %v427
  %v457 = vpop.permute.xlu0 %456
  %458 = vset.pattern.permute.xlu0 1
  %459 = vperm.xlu0 %458, %v428
  %v460 = vpop.permute.xlu0 %459
  %461 = vset.pattern.permute.xlu0 1
  %462 = vperm.xlu0 %461, %v429
  %v463 = vpop.permute.xlu0 %462
  %464 = vset.pattern.permute.xlu0 1
  %465 = vperm.xlu0 %464, %v430
  %v466 = vpop.permute.xlu0 %465
  %467 = vset.pattern.permute.xlu0 1
  %468 = vperm.xlu0 %467, %v431
  %v469 = vpop.permute.xlu0 %468
  %470 = vset.pattern.permute.xlu0 1
  %471 = vperm.xlu0 %470, %v432
  %v472 = vpop.permute.xlu0 %471
  %473 = vset.pattern.permute.xlu0 1
  %474 = vperm.xlu0 %473, %v433
  %v475 = vpop.permute.xlu0 %474
  %476 = vset.pattern.permute.xlu0 1
  %477 = vperm.xlu0 %476, %v434
  %v478 = vpop.permute.xlu0 %477
  %479 = vset.pattern.permute.xlu0 1
  %480 = vperm.xlu0 %479, %v435
  %v481 = vpop.permute.xlu0 %480
  %482 = vset.pattern.permute.xlu0 1
  %483 = vperm.xlu0 %482, %v436
  %v484 = vpop.permute.xlu0 %483
  %vm485 = vcmp.eq.s32.totalorder %v308, %v439
  %vm486 = vcmp.eq.s32.totalorder %v308, %v442
  %vm487 = vcmp.eq.s32.totalorder %v308, %v445
  %vm488 = vcmp.eq.s32.totalorder %v308, %v448
  %vm489 = vcmp.eq.s32.totalorder %v308, %v451
  %vm490 = vcmp.eq.s32.totalorder %v308, %v454
  %vm491 = vcmp.eq.s32.totalorder %v308, %v457
  %vm492 = vcmp.eq.s32.totalorder %v308, %v460
  %vm493 = vcmp.eq.s32.totalorder %v308, %v463
  %vm494 = vcmp.eq.s32.totalorder %v308, %v466
  %vm495 = vcmp.eq.s32.totalorder %v308, %v469
  %vm496 = vcmp.eq.s32.totalorder %v308, %v472
  %vm497 = vcmp.eq.s32.totalorder %v308, %v475
  %vm498 = vcmp.eq.s32.totalorder %v308, %v478
  %vm499 = vcmp.eq.s32.totalorder %v308, %v481
  %vm500 = vcmp.eq.s32.totalorder %v308, %v484
  %v501 = vsel %vm485, 1, 0
  %v502 = vsel %vm486, 1, 0
  %v503 = vsel %vm487, 1, 0
  %v504 = vsel %vm488, 1, 0
  %v505 = vsel %vm489, 1, 0
  %v506 = vsel %vm490, 1, 0
  %v507 = vsel %vm491, 1, 0
  %v508 = vsel %vm492, 1, 0
  %v509 = vsel %vm493, 1, 0
  %v510 = vsel %vm494, 1, 0
  %v511 = vsel %vm495, 1, 0
  %v512 = vsel %vm496, 1, 0
  %v513 = vsel %vm497, 1, 0
  %v514 = vsel %vm498, 1, 0
  %v515 = vsel %vm499, 1, 0
  %v516 = vsel %vm500, 1, 0
  %v517 = vcvt.s32.f32 %v501
  %v518 = vcvt.s32.f32 %v502
  %v519 = vcvt.s32.f32 %v503
  %v520 = vcvt.s32.f32 %v504
  %v521 = vcvt.s32.f32 %v505
  %v522 = vcvt.s32.f32 %v506
  %v523 = vcvt.s32.f32 %v507
  %v524 = vcvt.s32.f32 %v508
  %v525 = vcvt.s32.f32 %v509
  %v526 = vcvt.s32.f32 %v510
  %v527 = vcvt.s32.f32 %v511
  %v528 = vcvt.s32.f32 %v512
  %v529 = vcvt.s32.f32 %v513
  %v530 = vcvt.s32.f32 %v514
  %v531 = vcvt.s32.f32 %v515
  %v532 = vcvt.s32.f32 %v516
  %v533 = vadd.f32 %v405, %v517
  %v534 = vadd.f32 %v406, %v518
  %v535 = vadd.f32 %v407, %v519
  %v536 = vadd.f32 %v408, %v520
  %v537 = vadd.f32 %v409, %v521
  %v538 = vadd.f32 %v410, %v522
  %v539 = vadd.f32 %v411, %v523
  %v540 = vadd.f32 %v412, %v524
  %v541 = vadd.f32 %v413, %v525
  %v542 = vadd.f32 %v414, %v526
  %v543 = vadd.f32 %v415, %v527
  %v544 = vadd.f32 %v416, %v528
  %v545 = vadd.f32 %v417, %v529
  %v546 = vadd.f32 %v418, %v530
  %v547 = vadd.f32 %v419, %v531
  %v548 = vadd.f32 %v420, %v532
  %v549 = vadd.s32 %v291, 32
  %v550 = vadd.s32 %v292, 32
  %v551 = vadd.s32 %v293, 32
  %v552 = vadd.s32 %v294, 32
  %v553 = vadd.s32 %v295, 32
  %v554 = vadd.s32 %v296, 32
  %v555 = vadd.s32 %v297, 32
  %v556 = vadd.s32 %v298, 32
  %v557 = vadd.s32 %v299, 32
  %v558 = vadd.s32 %v300, 32
  %v559 = vadd.s32 %v301, 32
  %v560 = vadd.s32 %v302, 32
  %v561 = vadd.s32 %v303, 32
  %v562 = vadd.s32 %v304, 32
  %v563 = vadd.s32 %v305, 32
  %v564 = vadd.s32 %v306, 32
  %565 = vset.pattern.permute.xlu0 2
  %566 = vperm.xlu0 %565, %v549
  %v567 = vpop.permute.xlu0 %566
  %568 = vset.pattern.permute.xlu0 2
  %569 = vperm.xlu0 %568, %v550
  %v570 = vpop.permute.xlu0 %569
  %571 = vset.pattern.permute.xlu0 2
  %572 = vperm.xlu0 %571, %v551
  %v573 = vpop.permute.xlu0 %572
  %574 = vset.pattern.permute.xlu0 2
  %575 = vperm.xlu0 %574, %v552
  %v576 = vpop.permute.xlu0 %575
  %577 = vset.pattern.permute.xlu0 2
  %578 = vperm.xlu0 %577, %v553
  %v579 = vpop.permute.xlu0 %578
  %580 = vset.pattern.permute.xlu0 2
  %581 = vperm.xlu0 %580, %v554
  %v582 = vpop.permute.xlu0 %581
  %583 = vset.pattern.permute.xlu0 2
  %584 = vperm.xlu0 %583, %v555
  %v585 = vpop.permute.xlu0 %584
  %586 = vset.pattern.permute.xlu0 2
  %587 = vperm.xlu0 %586, %v556
  %v588 = vpop.permute.xlu0 %587
  %589 = vset.pattern.permute.xlu0 2
  %590 = vperm.xlu0 %589, %v557
  %v591 = vpop.permute.xlu0 %590
  %592 = vset.pattern.permute.xlu0 2
  %593 = vperm.xlu0 %592, %v558
  %v594 = vpop.permute.xlu0 %593
  %595 = vset.pattern.permute.xlu0 2
  %596 = vperm.xlu0 %595, %v559
  %v597 = vpop.permute.xlu0 %596
  %598 = vset.pattern.permute.xlu0 2
  %599 = vperm.xlu0 %598, %v560
  %v600 = vpop.permute.xlu0 %599
  %601 = vset.pattern.permute.xlu0 2
  %602 = vperm.xlu0 %601, %v561
  %v603 = vpop.permute.xlu0 %602
  %604 = vset.pattern.permute.xlu0 2
  %605 = vperm.xlu0 %604, %v562
  %v606 = vpop.permute.xlu0 %605
  %607 = vset.pattern.permute.xlu0 2
  %608 = vperm.xlu0 %607, %v563
  %v609 = vpop.permute.xlu0 %608
  %610 = vset.pattern.permute.xlu0 2
  %611 = vperm.xlu0 %610, %v564
  %v612 = vpop.permute.xlu0 %611
  %vm613 = vcmp.eq.s32.totalorder %v308, %v567
  %vm614 = vcmp.eq.s32.totalorder %v308, %v570
  %vm615 = vcmp.eq.s32.totalorder %v308, %v573
  %vm616 = vcmp.eq.s32.totalorder %v308, %v576
  %vm617 = vcmp.eq.s32.totalorder %v308, %v579
  %vm618 = vcmp.eq.s32.totalorder %v308, %v582
  %vm619 = vcmp.eq.s32.totalorder %v308, %v585
  %vm620 = vcmp.eq.s32.totalorder %v308, %v588
  %vm621 = vcmp.eq.s32.totalorder %v308, %v591
  %vm622 = vcmp.eq.s32.totalorder %v308, %v594
  %vm623 = vcmp.eq.s32.totalorder %v308, %v597
  %vm624 = vcmp.eq.s32.totalorder %v308, %v600
  %vm625 = vcmp.eq.s32.totalorder %v308, %v603
  %vm626 = vcmp.eq.s32.totalorder %v308, %v606
  %vm627 = vcmp.eq.s32.totalorder %v308, %v609
  %vm628 = vcmp.eq.s32.totalorder %v308, %v612
  %v629 = vsel %vm613, 1, 0
  %v630 = vsel %vm614, 1, 0
  %v631 = vsel %vm615, 1, 0
  %v632 = vsel %vm616, 1, 0
  %v633 = vsel %vm617, 1, 0
  %v634 = vsel %vm618, 1, 0
  %v635 = vsel %vm619, 1, 0
  %v636 = vsel %vm620, 1, 0
  %v637 = vsel %vm621, 1, 0
  %v638 = vsel %vm622, 1, 0
  %v639 = vsel %vm623, 1, 0
  %v640 = vsel %vm624, 1, 0
  %v641 = vsel %vm625, 1, 0
  %v642 = vsel %vm626, 1, 0
  %v643 = vsel %vm627, 1, 0
  %v644 = vsel %vm628, 1, 0
  %v645 = vcvt.s32.f32 %v629
  %v646 = vcvt.s32.f32 %v630
  %v647 = vcvt.s32.f32 %v631
  %v648 = vcvt.s32.f32 %v632
  %v649 = vcvt.s32.f32 %v633
  %v650 = vcvt.s32.f32 %v634
  %v651 = vcvt.s32.f32 %v635
  %v652 = vcvt.s32.f32 %v636
  %v653 = vcvt.s32.f32 %v637
  %v654 = vcvt.s32.f32 %v638
  %v655 = vcvt.s32.f32 %v639
  %v656 = vcvt.s32.f32 %v640
  %v657 = vcvt.s32.f32 %v641
  %v658 = vcvt.s32.f32 %v642
  %v659 = vcvt.s32.f32 %v643
  %v660 = vcvt.s32.f32 %v644
  %v661 = vadd.f32 %v533, %v645
  %v662 = vadd.f32 %v534, %v646
  %v663 = vadd.f32 %v535, %v647
  %v664 = vadd.f32 %v536, %v648
  %v665 = vadd.f32 %v537, %v649
  %v666 = vadd.f32 %v538, %v650
  %v667 = vadd.f32 %v539, %v651
  %v668 = vadd.f32 %v540, %v652
  %v669 = vadd.f32 %v541, %v653
  %v670 = vadd.f32 %v542, %v654
  %v671 = vadd.f32 %v543, %v655
  %v672 = vadd.f32 %v544, %v656
  %v673 = vadd.f32 %v545, %v657
  %v674 = vadd.f32 %v546, %v658
  %v675 = vadd.f32 %v547, %v659
  %v676 = vadd.f32 %v548, %v660
  %v677 = vadd.s32 %v291, 48
  %v678 = vadd.s32 %v292, 48
  %v679 = vadd.s32 %v293, 48
  %v680 = vadd.s32 %v294, 48
  %v681 = vadd.s32 %v295, 48
  %v682 = vadd.s32 %v296, 48
  %v683 = vadd.s32 %v297, 48
  %v684 = vadd.s32 %v298, 48
  %v685 = vadd.s32 %v299, 48
  %v686 = vadd.s32 %v300, 48
  %v687 = vadd.s32 %v301, 48
  %v688 = vadd.s32 %v302, 48
  %v689 = vadd.s32 %v303, 48
  %v690 = vadd.s32 %v304, 48
  %v691 = vadd.s32 %v305, 48
  %v692 = vadd.s32 %v306, 48
  %693 = vset.pattern.permute.xlu0 3
  %694 = vperm.xlu0 %693, %v677
  %v695 = vpop.permute.xlu0 %694
  %696 = vset.pattern.permute.xlu0 3
  %697 = vperm.xlu0 %696, %v678
  %v698 = vpop.permute.xlu0 %697
  %699 = vset.pattern.permute.xlu0 3
  %700 = vperm.xlu0 %699, %v679
  %v701 = vpop.permute.xlu0 %700
  %702 = vset.pattern.permute.xlu0 3
  %703 = vperm.xlu0 %702, %v680
  %v704 = vpop.permute.xlu0 %703
  %705 = vset.pattern.permute.xlu0 3
  %706 = vperm.xlu0 %705, %v681
  %v707 = vpop.permute.xlu0 %706
  %708 = vset.pattern.permute.xlu0 3
  %709 = vperm.xlu0 %708, %v682
  %v710 = vpop.permute.xlu0 %709
  %711 = vset.pattern.permute.xlu0 3
  %712 = vperm.xlu0 %711, %v683
  %v713 = vpop.permute.xlu0 %712
  %714 = vset.pattern.permute.xlu0 3
  %715 = vperm.xlu0 %714, %v684
  %v716 = vpop.permute.xlu0 %715
  %717 = vset.pattern.permute.xlu0 3
  %718 = vperm.xlu0 %717, %v685
  %v719 = vpop.permute.xlu0 %718
  %720 = vset.pattern.permute.xlu0 3
  %721 = vperm.xlu0 %720, %v686
  %v722 = vpop.permute.xlu0 %721
  %723 = vset.pattern.permute.xlu0 3
  %724 = vperm.xlu0 %723, %v687
  %v725 = vpop.permute.xlu0 %724
  %726 = vset.pattern.permute.xlu0 3
  %727 = vperm.xlu0 %726, %v688
  %v728 = vpop.permute.xlu0 %727
  %729 = vset.pattern.permute.xlu0 3
  %730 = vperm.xlu0 %729, %v689
  %v731 = vpop.permute.xlu0 %730
  %732 = vset.pattern.permute.xlu0 3
  %733 = vperm.xlu0 %732, %v690
  %v734 = vpop.permute.xlu0 %733
  %735 = vset.pattern.permute.xlu0 3
  %736 = vperm.xlu0 %735, %v691
  %v737 = vpop.permute.xlu0 %736
  %738 = vset.pattern.permute.xlu0 3
  %739 = vperm.xlu0 %738, %v692
  %v740 = vpop.permute.xlu0 %739
  %vm741 = vcmp.eq.s32.totalorder %v308, %v695
  %vm742 = vcmp.eq.s32.totalorder %v308, %v698
  %vm743 = vcmp.eq.s32.totalorder %v308, %v701
  %vm744 = vcmp.eq.s32.totalorder %v308, %v704
  %vm745 = vcmp.eq.s32.totalorder %v308, %v707
  %vm746 = vcmp.eq.s32.totalorder %v308, %v710
  %vm747 = vcmp.eq.s32.totalorder %v308, %v713
  %vm748 = vcmp.eq.s32.totalorder %v308, %v716
  %vm749 = vcmp.eq.s32.totalorder %v308, %v719
  %vm750 = vcmp.eq.s32.totalorder %v308, %v722
  %vm751 = vcmp.eq.s32.totalorder %v308, %v725
  %vm752 = vcmp.eq.s32.totalorder %v308, %v728
  %vm753 = vcmp.eq.s32.totalorder %v308, %v731
  %vm754 = vcmp.eq.s32.totalorder %v308, %v734
  %vm755 = vcmp.eq.s32.totalorder %v308, %v737
  %vm756 = vcmp.eq.s32.totalorder %v308, %v740
  %v757 = vsel %vm741, 1, 0
  %v758 = vsel %vm742, 1, 0
  %v759 = vsel %vm743, 1, 0
  %v760 = vsel %vm744, 1, 0
  %v761 = vsel %vm745, 1, 0
  %v762 = vsel %vm746, 1, 0
  %v763 = vsel %vm747, 1, 0
  %v764 = vsel %vm748, 1, 0
  %v765 = vsel %vm749, 1, 0
  %v766 = vsel %vm750, 1, 0
  %v767 = vsel %vm751, 1, 0
  %v768 = vsel %vm752, 1, 0
  %v769 = vsel %vm753, 1, 0
  %v770 = vsel %vm754, 1, 0
  %v771 = vsel %vm755, 1, 0
  %v772 = vsel %vm756, 1, 0
  %v773 = vcvt.s32.f32 %v757
  %v774 = vcvt.s32.f32 %v758
  %v775 = vcvt.s32.f32 %v759
  %v776 = vcvt.s32.f32 %v760
  %v777 = vcvt.s32.f32 %v761
  %v778 = vcvt.s32.f32 %v762
  %v779 = vcvt.s32.f32 %v763
  %v780 = vcvt.s32.f32 %v764
  %v781 = vcvt.s32.f32 %v765
  %v782 = vcvt.s32.f32 %v766
  %v783 = vcvt.s32.f32 %v767
  %v784 = vcvt.s32.f32 %v768
  %v785 = vcvt.s32.f32 %v769
  %v786 = vcvt.s32.f32 %v770
  %v787 = vcvt.s32.f32 %v771
  %v788 = vcvt.s32.f32 %v772
  %v789 = vadd.f32 %v661, %v773
  %v790 = vadd.f32 %v662, %v774
  %v791 = vadd.f32 %v663, %v775
  %v792 = vadd.f32 %v664, %v776
  %v793 = vadd.f32 %v665, %v777
  %v794 = vadd.f32 %v666, %v778
  %v795 = vadd.f32 %v667, %v779
  %v796 = vadd.f32 %v668, %v780
  %v797 = vadd.f32 %v669, %v781
  %v798 = vadd.f32 %v670, %v782
  %v799 = vadd.f32 %v671, %v783
  %v800 = vadd.f32 %v672, %v784
  %v801 = vadd.f32 %v673, %v785
  %v802 = vadd.f32 %v674, %v786
  %v803 = vadd.f32 %v675, %v787
  %v804 = vadd.f32 %v676, %v788
  %v805 = vld [vmem:[%s2] sm:$0xff]
  %v806 = vld [vmem:[%s2 + $0x8] sm:$0xff]
  %v807 = vld [vmem:[%s2 + $0x10] sm:$0xff]
  %v808 = vld [vmem:[%s2 + $0x18] sm:$0xff]
  %v809 = vld [vmem:[%s2 + $0x20] sm:$0xff]
  %v810 = vld [vmem:[%s2 + $0x28] sm:$0xff]
  %v811 = vld [vmem:[%s2 + $0x30] sm:$0xff]
  %v812 = vld [vmem:[%s2 + $0x38] sm:$0xff]
  %v813 = vld [vmem:[%s2 + $0x40] sm:$0xff]
  %v814 = vld [vmem:[%s2 + $0x48] sm:$0xff]
  %v815 = vld [vmem:[%s2 + $0x50] sm:$0xff]
  %v816 = vld [vmem:[%s2 + $0x58] sm:$0xff]
  %v817 = vld [vmem:[%s2 + $0x60] sm:$0xff]
  %v818 = vld [vmem:[%s2 + $0x68] sm:$0xff]
  %v819 = vld [vmem:[%s2 + $0x70] sm:$0xff]
  %v820 = vld [vmem:[%s2 + $0x78] sm:$0xff]
  %v821 = vld [vmem:[%s2 + $0x80] sm:$0xff]
  %v822 = vld [vmem:[%s2 + $0x88] sm:$0xff]
  %v823 = vld [vmem:[%s2 + $0x90] sm:$0xff]
  %v824 = vld [vmem:[%s2 + $0x98] sm:$0xff]
  %v825 = vld [vmem:[%s2 + $0xa0] sm:$0xff]
  %v826 = vld [vmem:[%s2 + $0xa8] sm:$0xff]
  %v827 = vld [vmem:[%s2 + $0xb0] sm:$0xff]
  %v828 = vld [vmem:[%s2 + $0xb8] sm:$0xff]
  %v829 = vld [vmem:[%s2 + $0xc0] sm:$0xff]
  %v830 = vld [vmem:[%s2 + $0xc8] sm:$0xff]
  %v831 = vld [vmem:[%s2 + $0xd0] sm:$0xff]
  %v832 = vld [vmem:[%s2 + $0xd8] sm:$0xff]
  %v833 = vld [vmem:[%s2 + $0xe0] sm:$0xff]
  %v834 = vld [vmem:[%s2 + $0xe8] sm:$0xff]
  %v835 = vld [vmem:[%s2 + $0xf0] sm:$0xff]
  %v836 = vld [vmem:[%s2 + $0xf8] sm:$0xff]
  %v837 = vld [vmem:[%s2 + $0x100] sm:$0xff]
  %v838 = vld [vmem:[%s2 + $0x108] sm:$0xff]
  %v839 = vld [vmem:[%s2 + $0x110] sm:$0xff]
  %v840 = vld [vmem:[%s2 + $0x118] sm:$0xff]
  %v841 = vld [vmem:[%s2 + $0x120] sm:$0xff]
  %v842 = vld [vmem:[%s2 + $0x128] sm:$0xff]
  %v843 = vld [vmem:[%s2 + $0x130] sm:$0xff]
  %v844 = vld [vmem:[%s2 + $0x138] sm:$0xff]
  %v845 = vld [vmem:[%s2 + $0x140] sm:$0xff]
  %v846 = vld [vmem:[%s2 + $0x148] sm:$0xff]
  %v847 = vld [vmem:[%s2 + $0x150] sm:$0xff]
  %v848 = vld [vmem:[%s2 + $0x158] sm:$0xff]
  %v849 = vld [vmem:[%s2 + $0x160] sm:$0xff]
  %v850 = vld [vmem:[%s2 + $0x168] sm:$0xff]
  %v851 = vld [vmem:[%s2 + $0x170] sm:$0xff]
  %v852 = vld [vmem:[%s2 + $0x178] sm:$0xff]
  %v853 = vld [vmem:[%s2 + $0x180] sm:$0xff]
  %v854 = vld [vmem:[%s2 + $0x188] sm:$0xff]
  %v855 = vld [vmem:[%s2 + $0x190] sm:$0xff]
  %v856 = vld [vmem:[%s2 + $0x198] sm:$0xff]
  %v857 = vld [vmem:[%s2 + $0x1a0] sm:$0xff]
  %v858 = vld [vmem:[%s2 + $0x1a8] sm:$0xff]
  %v859 = vld [vmem:[%s2 + $0x1b0] sm:$0xff]
  %v860 = vld [vmem:[%s2 + $0x1b8] sm:$0xff]
  %v861 = vld [vmem:[%s2 + $0x1c0] sm:$0xff]
  %v862 = vld [vmem:[%s2 + $0x1c8] sm:$0xff]
  %v863 = vld [vmem:[%s2 + $0x1d0] sm:$0xff]
  %v864 = vld [vmem:[%s2 + $0x1d8] sm:$0xff]
  %v865 = vld [vmem:[%s2 + $0x1e0] sm:$0xff]
  %v866 = vld [vmem:[%s2 + $0x1e8] sm:$0xff]
  %v867 = vld [vmem:[%s2 + $0x1f0] sm:$0xff]
  %v868 = vld [vmem:[%s2 + $0x1f8] sm:$0xff]
  %vm869 = vcmask 523264
  %v871 = vsel %vm869, %v789, 0
  %v874 = vsel %vm869, %v790, 0
  %v877 = vsel %vm869, %v791, 0
  %v880 = vsel %vm869, %v792, 0
  %v883 = vsel %vm869, %v793, 0
  %v886 = vsel %vm869, %v794, 0
  %v889 = vsel %vm869, %v795, 0
  %v892 = vsel %vm869, %v796, 0
  %v895 = vsel %vm869, %v797, 0
  %v898 = vsel %vm869, %v798, 0
  %v901 = vsel %vm869, %v799, 0
  %v904 = vsel %vm869, %v800, 0
  %v907 = vsel %vm869, %v801, 0
  %v910 = vsel %vm869, %v802, 0
  %v913 = vsel %vm869, %v803, 0
  %v916 = vsel %vm869, %v804, 0
  %918 = vmatprep.subr.mxu0 0.0
  %919 = vmatpush1.msra.mxu0 0.0
  %920 = vmatprep.subr.mxu0 0.0
  %921 = vmatpush1.msra.mxu0 0.0
  %922 = vmatprep.subr.mxu0 0.0
  %923 = vmatpush1.msra.mxu0 0.0
  %924 = vmatprep.subr.mxu0 0.0
  %925 = vmatpush1.msra.mxu0 0.0
  %926 = vmatprep.subr.mxu0 0.0
  %927 = vmatpush1.msra.mxu0 0.0
  %928 = vmatprep.subr.mxu0 0.0
  %929 = vmatpush1.msra.mxu0 0.0
  %930 = vmatprep.subr.mxu0 0.0
  %931 = vmatpush1.msra.mxu0 0.0
  %932 = vmatprep.subr.mxu0 0.0
  %933 = vmatpush1.msra.mxu0 0.0
  %934 = vmatprep.subr.mxu0 %v862
  %935 = vmatpush1.msra.mxu0 %v861
  %936 = vmatprep.subr.mxu0 %v854
  %937 = vmatpush1.msra.mxu0 %v853
  %938 = vmatprep.subr.mxu0 %v846
  %939 = vmatpush1.msra.mxu0 %v845
  %940 = vmatprep.subr.mxu0 %v838
  %941 = vmatpush1.msra.mxu0 %v837
  %942 = vmatprep.subr.mxu0 %v830
  %943 = vmatpush1.msra.mxu0 %v829
  %944 = vmatprep.subr.mxu0 %v822
  %945 = vmatpush1.msra.mxu0 %v821
  %946 = vmatprep.subr.mxu0 %v814
  %947 = vmatpush1.msra.mxu0 %v813
  %948 = vmatprep.subr.mxu0 %v806
  %949 = vmatpush1.msra.mxu0 %v805
  %950 = vmatprep.subr.mxu0 0.0
  %951 = vmatpush2.msra.mxu0 0.0
  %952 = vmatprep.subr.mxu0 0.0
  %953 = vmatpush2.msra.mxu0 0.0
  %954 = vmatprep.subr.mxu0 0.0
  %955 = vmatpush2.msra.mxu0 0.0
  %956 = vmatprep.subr.mxu0 0.0
  %957 = vmatpush2.msra.mxu0 0.0
  %958 = vmatprep.subr.mxu0 0.0
  %959 = vmatpush2.msra.mxu0 0.0
  %960 = vmatprep.subr.mxu0 0.0
  %961 = vmatpush2.msra.mxu0 0.0
  %962 = vmatprep.subr.mxu0 0.0
  %963 = vmatpush2.msra.mxu0 0.0
  %964 = vmatprep.subr.mxu0 0.0
  %965 = vmatpush2.msra.mxu0 0.0
  %966 = vmatprep.subr.mxu0 0.0
  %967 = vmatpush2.msra.mxu0 0.0
  %968 = vmatprep.subr.mxu0 0.0
  %969 = vmatpush2.msra.mxu0 0.0
  %970 = vmatprep.subr.mxu0 0.0
  %971 = vmatpush2.msra.mxu0 0.0
  %972 = vmatprep.subr.mxu0 0.0
  %973 = vmatpush2.msra.mxu0 0.0
  %974 = vmatprep.subr.mxu0 0.0
  %975 = vmatpush2.msra.mxu0 0.0
  %976 = vmatprep.subr.mxu0 0.0
  %977 = vmatpush2.msra.mxu0 0.0
  %978 = vmatprep.subr.mxu0 0.0
  %979 = vmatpush2.msra.mxu0 0.0
  %980 = vmatprep.subr.mxu0 0.0
  %981 = vmatpush2.msra.mxu0 0.0
  %982 = vmatprep.mubr.f32.mxu0 0.0
  %983 = vmatmul.mubr.f32.gmra.mxu0 %v871
  %v984 = vpop.f32.mrf.mxu0
  %v985 = vadd.f32 0.0, %v984
  %v986 = vpop.f32.mrf.mxu0
  %v987 = vadd.f32 0.0, %v986
  %988 = vmatprep.mubr.f32.mxu0 0.0
  %989 = vmatmul.mubr.f32.gmra.mxu0 %v874
  %v990 = vpop.f32.mrf.mxu0
  %v991 = vadd.f32 0.0, %v990
  %v992 = vpop.f32.mrf.mxu0
  %v993 = vadd.f32 0.0, %v992
  %994 = vmatprep.mubr.f32.mxu0 0.0
  %995 = vmatmul.mubr.f32.gmra.mxu0 %v877
  %v996 = vpop.f32.mrf.mxu0
  %v997 = vadd.f32 0.0, %v996
  %v998 = vpop.f32.mrf.mxu0
  %v999 = vadd.f32 0.0, %v998
  %1000 = vmatprep.mubr.f32.mxu0 0.0
  %1001 = vmatmul.mubr.f32.gmra.mxu0 %v880
  %v1002 = vpop.f32.mrf.mxu0
  %v1003 = vadd.f32 0.0, %v1002
  %v1004 = vpop.f32.mrf.mxu0
  %v1005 = vadd.f32 0.0, %v1004
  %1006 = vmatprep.mubr.f32.mxu0 0.0
  %1007 = vmatmul.mubr.f32.gmra.mxu0 %v883
  %v1008 = vpop.f32.mrf.mxu0
  %v1009 = vadd.f32 0.0, %v1008
  %v1010 = vpop.f32.mrf.mxu0
  %v1011 = vadd.f32 0.0, %v1010
  %1012 = vmatprep.mubr.f32.mxu0 0.0
  %1013 = vmatmul.mubr.f32.gmra.mxu0 %v886
  %v1014 = vpop.f32.mrf.mxu0
  %v1015 = vadd.f32 0.0, %v1014
  %v1016 = vpop.f32.mrf.mxu0
  %v1017 = vadd.f32 0.0, %v1016
  %1018 = vmatprep.mubr.f32.mxu0 0.0
  %1019 = vmatmul.mubr.f32.gmra.mxu0 %v889
  %v1020 = vpop.f32.mrf.mxu0
  %v1021 = vadd.f32 0.0, %v1020
  %v1022 = vpop.f32.mrf.mxu0
  %v1023 = vadd.f32 0.0, %v1022
  %1024 = vmatprep.mubr.f32.mxu0 0.0
  %1025 = vmatmul.mubr.f32.gmra.mxu0 %v892
  %v1026 = vpop.f32.mrf.mxu0
  %v1027 = vadd.f32 0.0, %v1026
  %v1028 = vpop.f32.mrf.mxu0
  %v1029 = vadd.f32 0.0, %v1028
  %1030 = vmatprep.mubr.f32.mxu0 0.0
  %1031 = vmatmul.mubr.f32.gmra.mxu0 %v895
  %v1032 = vpop.f32.mrf.mxu0
  %v1033 = vadd.f32 0.0, %v1032
  %v1034 = vpop.f32.mrf.mxu0
  %v1035 = vadd.f32 0.0, %v1034
  %1036 = vmatprep.mubr.f32.mxu0 0.0
  %1037 = vmatmul.mubr.f32.gmra.mxu0 %v898
  %v1038 = vpop.f32.mrf.mxu0
  %v1039 = vadd.f32 0.0, %v1038
  %v1040 = vpop.f32.mrf.mxu0
  %v1041 = vadd.f32 0.0, %v1040
  %1042 = vmatprep.mubr.f32.mxu0 0.0
  %1043 = vmatmul.mubr.f32.gmra.mxu0 %v901
  %v1044 = vpop.f32.mrf.mxu0
  %v1045 = vadd.f32 0.0, %v1044
  %v1046 = vpop.f32.mrf.mxu0
  %v1047 = vadd.f32 0.0, %v1046
  %1048 = vmatprep.mubr.f32.mxu0 0.0
  %1049 = vmatmul.mubr.f32.gmra.mxu0 %v904
  %v1050 = vpop.f32.mrf.mxu0
  %v1051 = vadd.f32 0.0, %v1050
  %v1052 = vpop.f32.mrf.mxu0
  %v1053 = vadd.f32 0.0, %v1052
  %1054 = vmatprep.mubr.f32.mxu0 0.0
  %1055 = vmatmul.mubr.f32.gmra.mxu0 %v907
  %v1056 = vpop.f32.mrf.mxu0
  %v1057 = vadd.f32 0.0, %v1056
  %v1058 = vpop.f32.mrf.mxu0
  %v1059 = vadd.f32 0.0, %v1058
  %1060 = vmatprep.mubr.f32.mxu0 0.0
  %1061 = vmatmul.mubr.f32.gmra.mxu0 %v910
  %v1062 = vpop.f32.mrf.mxu0
  %v1063 = vadd.f32 0.0, %v1062
  %v1064 = vpop.f32.mrf.mxu0
  %v1065 = vadd.f32 0.0, %v1064
  %1066 = vmatprep.mubr.f32.mxu0 0.0
  %1067 = vmatmul.mubr.f32.gmra.mxu0 %v913
  %v1068 = vpop.f32.mrf.mxu0
  %v1069 = vadd.f32 0.0, %v1068
  %v1070 = vpop.f32.mrf.mxu0
  %v1071 = vadd.f32 0.0, %v1070
  %1072 = vmatprep.mubr.f32.mxu0 0.0
  %1073 = vmatmul.mubr.f32.gmra.mxu0 %v916
  %v1074 = vpop.f32.mrf.mxu0
  %v1075 = vadd.f32 0.0, %v1074
  %v1076 = vpop.f32.mrf.mxu0
  %v1077 = vadd.f32 0.0, %v1076
  %1078 = vdwg.mxu0
  %1079 = vmatprep.subr.mxu0 0.0
  %1080 = vmatpush1.msra.mxu0 0.0
  %1081 = vmatprep.subr.mxu0 0.0
  %1082 = vmatpush1.msra.mxu0 0.0
  %1083 = vmatprep.subr.mxu0 0.0
  %1084 = vmatpush1.msra.mxu0 0.0
  %1085 = vmatprep.subr.mxu0 0.0
  %1086 = vmatpush1.msra.mxu0 0.0
  %1087 = vmatprep.subr.mxu0 0.0
  %1088 = vmatpush1.msra.mxu0 0.0
  %1089 = vmatprep.subr.mxu0 0.0
  %1090 = vmatpush1.msra.mxu0 0.0
  %1091 = vmatprep.subr.mxu0 0.0
  %1092 = vmatpush1.msra.mxu0 0.0
  %1093 = vmatprep.subr.mxu0 0.0
  %1094 = vmatpush1.msra.mxu0 0.0
  %1095 = vmatprep.subr.mxu0 %v864
  %1096 = vmatpush1.msra.mxu0 %v863
  %1097 = vmatprep.subr.mxu0 %v856
  %1098 = vmatpush1.msra.mxu0 %v855
  %1099 = vmatprep.subr.mxu0 %v848
  %1100 = vmatpush1.msra.mxu0 %v847
  %1101 = vmatprep.subr.mxu0 %v840
  %1102 = vmatpush1.msra.mxu0 %v839
  %1103 = vmatprep.subr.mxu0 %v832
  %1104 = vmatpush1.msra.mxu0 %v831
  %1105 = vmatprep.subr.mxu0 %v824
  %1106 = vmatpush1.msra.mxu0 %v823
  %1107 = vmatprep.subr.mxu0 %v816
  %1108 = vmatpush1.msra.mxu0 %v815
  %1109 = vmatprep.subr.mxu0 %v808
  %1110 = vmatpush1.msra.mxu0 %v807
  %1111 = vmatprep.subr.mxu0 0.0
  %1112 = vmatpush2.msra.mxu0 0.0
  %1113 = vmatprep.subr.mxu0 0.0
  %1114 = vmatpush2.msra.mxu0 0.0
  %1115 = vmatprep.subr.mxu0 0.0
  %1116 = vmatpush2.msra.mxu0 0.0
  %1117 = vmatprep.subr.mxu0 0.0
  %1118 = vmatpush2.msra.mxu0 0.0
  %1119 = vmatprep.subr.mxu0 0.0
  %1120 = vmatpush2.msra.mxu0 0.0
  %1121 = vmatprep.subr.mxu0 0.0
  %1122 = vmatpush2.msra.mxu0 0.0
  %1123 = vmatprep.subr.mxu0 0.0
  %1124 = vmatpush2.msra.mxu0 0.0
  %1125 = vmatprep.subr.mxu0 0.0
  %1126 = vmatpush2.msra.mxu0 0.0
  %1127 = vmatprep.subr.mxu0 0.0
  %1128 = vmatpush2.msra.mxu0 0.0
  %1129 = vmatprep.subr.mxu0 0.0
  %1130 = vmatpush2.msra.mxu0 0.0
  %1131 = vmatprep.subr.mxu0 0.0
  %1132 = vmatpush2.msra.mxu0 0.0
  %1133 = vmatprep.subr.mxu0 0.0
  %1134 = vmatpush2.msra.mxu0 0.0
  %1135 = vmatprep.subr.mxu0 0.0
  %1136 = vmatpush2.msra.mxu0 0.0
  %1137 = vmatprep.subr.mxu0 0.0
  %1138 = vmatpush2.msra.mxu0 0.0
  %1139 = vmatprep.subr.mxu0 0.0
  %1140 = vmatpush2.msra.mxu0 0.0
  %1141 = vmatprep.subr.mxu0 0.0
  %1142 = vmatpush2.msra.mxu0 0.0
  %1143 = vmatprep.mubr.f32.mxu0 0.0
  %1144 = vmatmul.mubr.f32.gmra.mxu0 %v871
  %v1145 = vpop.f32.mrf.mxu0
  %v1146 = vadd.f32 0.0, %v1145
  %v1147 = vpop.f32.mrf.mxu0
  %v1148 = vadd.f32 0.0, %v1147
  %1149 = vmatprep.mubr.f32.mxu0 0.0
  %1150 = vmatmul.mubr.f32.gmra.mxu0 %v874
  %v1151 = vpop.f32.mrf.mxu0
  %v1152 = vadd.f32 0.0, %v1151
  %v1153 = vpop.f32.mrf.mxu0
  %v1154 = vadd.f32 0.0, %v1153
  %1155 = vmatprep.mubr.f32.mxu0 0.0
  %1156 = vmatmul.mubr.f32.gmra.mxu0 %v877
  %v1157 = vpop.f32.mrf.mxu0
  %v1158 = vadd.f32 0.0, %v1157
  %v1159 = vpop.f32.mrf.mxu0
  %v1160 = vadd.f32 0.0, %v1159
  %1161 = vmatprep.mubr.f32.mxu0 0.0
  %1162 = vmatmul.mubr.f32.gmra.mxu0 %v880
  %v1163 = vpop.f32.mrf.mxu0
  %v1164 = vadd.f32 0.0, %v1163
  %v1165 = vpop.f32.mrf.mxu0
  %v1166 = vadd.f32 0.0, %v1165
  %1167 = vmatprep.mubr.f32.mxu0 0.0
  %1168 = vmatmul.mubr.f32.gmra.mxu0 %v883
  %v1169 = vpop.f32.mrf.mxu0
  %v1170 = vadd.f32 0.0, %v1169
  %v1171 = vpop.f32.mrf.mxu0
  %v1172 = vadd.f32 0.0, %v1171
  %1173 = vmatprep.mubr.f32.mxu0 0.0
  %1174 = vmatmul.mubr.f32.gmra.mxu0 %v886
  %v1175 = vpop.f32.mrf.mxu0
  %v1176 = vadd.f32 0.0, %v1175
  %v1177 = vpop.f32.mrf.mxu0
  %v1178 = vadd.f32 0.0, %v1177
  %1179 = vmatprep.mubr.f32.mxu0 0.0
  %1180 = vmatmul.mubr.f32.gmra.mxu0 %v889
  %v1181 = vpop.f32.mrf.mxu0
  %v1182 = vadd.f32 0.0, %v1181
  %v1183 = vpop.f32.mrf.mxu0
  %v1184 = vadd.f32 0.0, %v1183
  %1185 = vmatprep.mubr.f32.mxu0 0.0
  %1186 = vmatmul.mubr.f32.gmra.mxu0 %v892
  %v1187 = vpop.f32.mrf.mxu0
  %v1188 = vadd.f32 0.0, %v1187
  %v1189 = vpop.f32.mrf.mxu0
  %v1190 = vadd.f32 0.0, %v1189
  %1191 = vmatprep.mubr.f32.mxu0 0.0
  %1192 = vmatmul.mubr.f32.gmra.mxu0 %v895
  %v1193 = vpop.f32.mrf.mxu0
  %v1194 = vadd.f32 0.0, %v1193
  %v1195 = vpop.f32.mrf.mxu0
  %v1196 = vadd.f32 0.0, %v1195
  %1197 = vmatprep.mubr.f32.mxu0 0.0
  %1198 = vmatmul.mubr.f32.gmra.mxu0 %v898
  %v1199 = vpop.f32.mrf.mxu0
  %v1200 = vadd.f32 0.0, %v1199
  %v1201 = vpop.f32.mrf.mxu0
  %v1202 = vadd.f32 0.0, %v1201
  %1203 = vmatprep.mubr.f32.mxu0 0.0
  %1204 = vmatmul.mubr.f32.gmra.mxu0 %v901
  %v1205 = vpop.f32.mrf.mxu0
  %v1206 = vadd.f32 0.0, %v1205
  %v1207 = vpop.f32.mrf.mxu0
  %v1208 = vadd.f32 0.0, %v1207
  %1209 = vmatprep.mubr.f32.mxu0 0.0
  %1210 = vmatmul.mubr.f32.gmra.mxu0 %v904
  %v1211 = vpop.f32.mrf.mxu0
  %v1212 = vadd.f32 0.0, %v1211
  %v1213 = vpop.f32.mrf.mxu0
  %v1214 = vadd.f32 0.0, %v1213
  %1215 = vmatprep.mubr.f32.mxu0 0.0
  %1216 = vmatmul.mubr.f32.gmra.mxu0 %v907
  %v1217 = vpop.f32.mrf.mxu0
  %v1218 = vadd.f32 0.0, %v1217
  %v1219 = vpop.f32.mrf.mxu0
  %v1220 = vadd.f32 0.0, %v1219
  %1221 = vmatprep.mubr.f32.mxu0 0.0
  %1222 = vmatmul.mubr.f32.gmra.mxu0 %v910
  %v1223 = vpop.f32.mrf.mxu0
  %v1224 = vadd.f32 0.0, %v1223
  %v1225 = vpop.f32.mrf.mxu0
  %v1226 = vadd.f32 0.0, %v1225
  %1227 = vmatprep.mubr.f32.mxu0 0.0
  %1228 = vmatmul.mubr.f32.gmra.mxu0 %v913
  %v1229 = vpop.f32.mrf.mxu0
  %v1230 = vadd.f32 0.0, %v1229
  %v1231 = vpop.f32.mrf.mxu0
  %v1232 = vadd.f32 0.0, %v1231
  %1233 = vmatprep.mubr.f32.mxu0 0.0
  %1234 = vmatmul.mubr.f32.gmra.mxu0 %v916
  %v1235 = vpop.f32.mrf.mxu0
  %v1236 = vadd.f32 0.0, %v1235
  %v1237 = vpop.f32.mrf.mxu0
  %v1238 = vadd.f32 0.0, %v1237
  %1239 = vdwg.mxu0
  %1240 = vmatprep.subr.mxu0 0.0
  %1241 = vmatpush1.msra.mxu0 0.0
  %1242 = vmatprep.subr.mxu0 0.0
  %1243 = vmatpush1.msra.mxu0 0.0
  %1244 = vmatprep.subr.mxu0 0.0
  %1245 = vmatpush1.msra.mxu0 0.0
  %1246 = vmatprep.subr.mxu0 0.0
  %1247 = vmatpush1.msra.mxu0 0.0
  %1248 = vmatprep.subr.mxu0 0.0
  %1249 = vmatpush1.msra.mxu0 0.0
  %1250 = vmatprep.subr.mxu0 0.0
  %1251 = vmatpush1.msra.mxu0 0.0
  %1252 = vmatprep.subr.mxu0 0.0
  %1253 = vmatpush1.msra.mxu0 0.0
  %1254 = vmatprep.subr.mxu0 0.0
  %1255 = vmatpush1.msra.mxu0 0.0
  %1256 = vmatprep.subr.mxu0 %v866
  %1257 = vmatpush1.msra.mxu0 %v865
  %1258 = vmatprep.subr.mxu0 %v858
  %1259 = vmatpush1.msra.mxu0 %v857
  %1260 = vmatprep.subr.mxu0 %v850
  %1261 = vmatpush1.msra.mxu0 %v849
  %1262 = vmatprep.subr.mxu0 %v842
  %1263 = vmatpush1.msra.mxu0 %v841
  %1264 = vmatprep.subr.mxu0 %v834
  %1265 = vmatpush1.msra.mxu0 %v833
  %1266 = vmatprep.subr.mxu0 %v826
  %1267 = vmatpush1.msra.mxu0 %v825
  %1268 = vmatprep.subr.mxu0 %v818
  %1269 = vmatpush1.msra.mxu0 %v817
  %1270 = vmatprep.subr.mxu0 %v810
  %1271 = vmatpush1.msra.mxu0 %v809
  %1272 = vmatprep.subr.mxu0 0.0
  %1273 = vmatpush2.msra.mxu0 0.0
  %1274 = vmatprep.subr.mxu0 0.0
  %1275 = vmatpush2.msra.mxu0 0.0
  %1276 = vmatprep.subr.mxu0 0.0
  %1277 = vmatpush2.msra.mxu0 0.0
  %1278 = vmatprep.subr.mxu0 0.0
  %1279 = vmatpush2.msra.mxu0 0.0
  %1280 = vmatprep.subr.mxu0 0.0
  %1281 = vmatpush2.msra.mxu0 0.0
  %1282 = vmatprep.subr.mxu0 0.0
  %1283 = vmatpush2.msra.mxu0 0.0
  %1284 = vmatprep.subr.mxu0 0.0
  %1285 = vmatpush2.msra.mxu0 0.0
  %1286 = vmatprep.subr.mxu0 0.0
  %1287 = vmatpush2.msra.mxu0 0.0
  %1288 = vmatprep.subr.mxu0 0.0
  %1289 = vmatpush2.msra.mxu0 0.0
  %1290 = vmatprep.subr.mxu0 0.0
  %1291 = vmatpush2.msra.mxu0 0.0
  %1292 = vmatprep.subr.mxu0 0.0
  %1293 = vmatpush2.msra.mxu0 0.0
  %1294 = vmatprep.subr.mxu0 0.0
  %1295 = vmatpush2.msra.mxu0 0.0
  %1296 = vmatprep.subr.mxu0 0.0
  %1297 = vmatpush2.msra.mxu0 0.0
  %1298 = vmatprep.subr.mxu0 0.0
  %1299 = vmatpush2.msra.mxu0 0.0
  %1300 = vmatprep.subr.mxu0 0.0
  %1301 = vmatpush2.msra.mxu0 0.0
  %1302 = vmatprep.subr.mxu0 0.0
  %1303 = vmatpush2.msra.mxu0 0.0
  %1304 = vmatprep.mubr.f32.mxu0 0.0
  %1305 = vmatmul.mubr.f32.gmra.mxu0 %v871
  %v1306 = vpop.f32.mrf.mxu0
  %v1307 = vadd.f32 0.0, %v1306
  %v1308 = vpop.f32.mrf.mxu0
  %v1309 = vadd.f32 0.0, %v1308
  %1310 = vmatprep.mubr.f32.mxu0 0.0
  %1311 = vmatmul.mubr.f32.gmra.mxu0 %v874
  %v1312 = vpop.f32.mrf.mxu0
  %v1313 = vadd.f32 0.0, %v1312
  %v1314 = vpop.f32.mrf.mxu0
  %v1315 = vadd.f32 0.0, %v1314
  %1316 = vmatprep.mubr.f32.mxu0 0.0
  %1317 = vmatmul.mubr.f32.gmra.mxu0 %v877
  %v1318 = vpop.f32.mrf.mxu0
  %v1319 = vadd.f32 0.0, %v1318
  %v1320 = vpop.f32.mrf.mxu0
  %v1321 = vadd.f32 0.0, %v1320
  %1322 = vmatprep.mubr.f32.mxu0 0.0
  %1323 = vmatmul.mubr.f32.gmra.mxu0 %v880
  %v1324 = vpop.f32.mrf.mxu0
  %v1325 = vadd.f32 0.0, %v1324
  %v1326 = vpop.f32.mrf.mxu0
  %v1327 = vadd.f32 0.0, %v1326
  %1328 = vmatprep.mubr.f32.mxu0 0.0
  %1329 = vmatmul.mubr.f32.gmra.mxu0 %v883
  %v1330 = vpop.f32.mrf.mxu0
  %v1331 = vadd.f32 0.0, %v1330
  %v1332 = vpop.f32.mrf.mxu0
  %v1333 = vadd.f32 0.0, %v1332
  %1334 = vmatprep.mubr.f32.mxu0 0.0
  %1335 = vmatmul.mubr.f32.gmra.mxu0 %v886
  %v1336 = vpop.f32.mrf.mxu0
  %v1337 = vadd.f32 0.0, %v1336
  %v1338 = vpop.f32.mrf.mxu0
  %v1339 = vadd.f32 0.0, %v1338
  %1340 = vmatprep.mubr.f32.mxu0 0.0
  %1341 = vmatmul.mubr.f32.gmra.mxu0 %v889
  %v1342 = vpop.f32.mrf.mxu0
  %v1343 = vadd.f32 0.0, %v1342
  %v1344 = vpop.f32.mrf.mxu0
  %v1345 = vadd.f32 0.0, %v1344
  %1346 = vmatprep.mubr.f32.mxu0 0.0
  %1347 = vmatmul.mubr.f32.gmra.mxu0 %v892
  %v1348 = vpop.f32.mrf.mxu0
  %v1349 = vadd.f32 0.0, %v1348
  %v1350 = vpop.f32.mrf.mxu0
  %v1351 = vadd.f32 0.0, %v1350
  %1352 = vmatprep.mubr.f32.mxu0 0.0
  %1353 = vmatmul.mubr.f32.gmra.mxu0 %v895
  %v1354 = vpop.f32.mrf.mxu0
  %v1355 = vadd.f32 0.0, %v1354
  %v1356 = vpop.f32.mrf.mxu0
  %v1357 = vadd.f32 0.0, %v1356
  %1358 = vmatprep.mubr.f32.mxu0 0.0
  %1359 = vmatmul.mubr.f32.gmra.mxu0 %v898
  %v1360 = vpop.f32.mrf.mxu0
  %v1361 = vadd.f32 0.0, %v1360
  %v1362 = vpop.f32.mrf.mxu0
  %v1363 = vadd.f32 0.0, %v1362
  %1364 = vmatprep.mubr.f32.mxu0 0.0
  %1365 = vmatmul.mubr.f32.gmra.mxu0 %v901
  %v1366 = vpop.f32.mrf.mxu0
  %v1367 = vadd.f32 0.0, %v1366
  %v1368 = vpop.f32.mrf.mxu0
  %v1369 = vadd.f32 0.0, %v1368
  %1370 = vmatprep.mubr.f32.mxu0 0.0
  %1371 = vmatmul.mubr.f32.gmra.mxu0 %v904
  %v1372 = vpop.f32.mrf.mxu0
  %v1373 = vadd.f32 0.0, %v1372
  %v1374 = vpop.f32.mrf.mxu0
  %v1375 = vadd.f32 0.0, %v1374
  %1376 = vmatprep.mubr.f32.mxu0 0.0
  %1377 = vmatmul.mubr.f32.gmra.mxu0 %v907
  %v1378 = vpop.f32.mrf.mxu0
  %v1379 = vadd.f32 0.0, %v1378
  %v1380 = vpop.f32.mrf.mxu0
  %v1381 = vadd.f32 0.0, %v1380
  %1382 = vmatprep.mubr.f32.mxu0 0.0
  %1383 = vmatmul.mubr.f32.gmra.mxu0 %v910
  %v1384 = vpop.f32.mrf.mxu0
  %v1385 = vadd.f32 0.0, %v1384
  %v1386 = vpop.f32.mrf.mxu0
  %v1387 = vadd.f32 0.0, %v1386
  %1388 = vmatprep.mubr.f32.mxu0 0.0
  %1389 = vmatmul.mubr.f32.gmra.mxu0 %v913
  %v1390 = vpop.f32.mrf.mxu0
  %v1391 = vadd.f32 0.0, %v1390
  %v1392 = vpop.f32.mrf.mxu0
  %v1393 = vadd.f32 0.0, %v1392
  %1394 = vmatprep.mubr.f32.mxu0 0.0
  %1395 = vmatmul.mubr.f32.gmra.mxu0 %v916
  %v1396 = vpop.f32.mrf.mxu0
  %v1397 = vadd.f32 0.0, %v1396
  %v1398 = vpop.f32.mrf.mxu0
  %v1399 = vadd.f32 0.0, %v1398
  %1400 = vdwg.mxu0
  %1401 = vmatprep.subr.mxu0 0.0
  %1402 = vmatpush1.msra.mxu0 0.0
  %1403 = vmatprep.subr.mxu0 0.0
  %1404 = vmatpush1.msra.mxu0 0.0
  %1405 = vmatprep.subr.mxu0 0.0
  %1406 = vmatpush1.msra.mxu0 0.0
  %1407 = vmatprep.subr.mxu0 0.0
  %1408 = vmatpush1.msra.mxu0 0.0
  %1409 = vmatprep.subr.mxu0 0.0
  %1410 = vmatpush1.msra.mxu0 0.0
  %1411 = vmatprep.subr.mxu0 0.0
  %1412 = vmatpush1.msra.mxu0 0.0
  %1413 = vmatprep.subr.mxu0 0.0
  %1414 = vmatpush1.msra.mxu0 0.0
  %1415 = vmatprep.subr.mxu0 0.0
  %1416 = vmatpush1.msra.mxu0 0.0
  %1417 = vmatprep.subr.mxu0 %v868
  %1418 = vmatpush1.msra.mxu0 %v867
  %1419 = vmatprep.subr.mxu0 %v860
  %1420 = vmatpush1.msra.mxu0 %v859
  %1421 = vmatprep.subr.mxu0 %v852
  %1422 = vmatpush1.msra.mxu0 %v851
  %1423 = vmatprep.subr.mxu0 %v844
  %1424 = vmatpush1.msra.mxu0 %v843
  %1425 = vmatprep.subr.mxu0 %v836
  %1426 = vmatpush1.msra.mxu0 %v835
  %1427 = vmatprep.subr.mxu0 %v828
  %1428 = vmatpush1.msra.mxu0 %v827
  %1429 = vmatprep.subr.mxu0 %v820
  %1430 = vmatpush1.msra.mxu0 %v819
  %1431 = vmatprep.subr.mxu0 %v812
  %1432 = vmatpush1.msra.mxu0 %v811
  %1433 = vmatprep.subr.mxu0 0.0
  %1434 = vmatpush2.msra.mxu0 0.0
  %1435 = vmatprep.subr.mxu0 0.0
  %1436 = vmatpush2.msra.mxu0 0.0
  %1437 = vmatprep.subr.mxu0 0.0
  %1438 = vmatpush2.msra.mxu0 0.0
  %1439 = vmatprep.subr.mxu0 0.0
  %1440 = vmatpush2.msra.mxu0 0.0
  %1441 = vmatprep.subr.mxu0 0.0
  %1442 = vmatpush2.msra.mxu0 0.0
  %1443 = vmatprep.subr.mxu0 0.0
  %1444 = vmatpush2.msra.mxu0 0.0
  %1445 = vmatprep.subr.mxu0 0.0
  %1446 = vmatpush2.msra.mxu0 0.0
  %1447 = vmatprep.subr.mxu0 0.0
  %1448 = vmatpush2.msra.mxu0 0.0
  %1449 = vmatprep.subr.mxu0 0.0
  %1450 = vmatpush2.msra.mxu0 0.0
  %1451 = vmatprep.subr.mxu0 0.0
  %1452 = vmatpush2.msra.mxu0 0.0
  %1453 = vmatprep.subr.mxu0 0.0
  %1454 = vmatpush2.msra.mxu0 0.0
  %1455 = vmatprep.subr.mxu0 0.0
  %1456 = vmatpush2.msra.mxu0 0.0
  %1457 = vmatprep.subr.mxu0 0.0
  %1458 = vmatpush2.msra.mxu0 0.0
  %1459 = vmatprep.subr.mxu0 0.0
  %1460 = vmatpush2.msra.mxu0 0.0
  %1461 = vmatprep.subr.mxu0 0.0
  %1462 = vmatpush2.msra.mxu0 0.0
  %1463 = vmatprep.subr.mxu0 0.0
  %1464 = vmatpush2.msra.mxu0 0.0
  %1465 = vmatprep.mubr.f32.mxu0 0.0
  %1466 = vmatmul.mubr.f32.gmra.mxu0 %v871
  %v1467 = vpop.f32.mrf.mxu0
  %v1468 = vadd.f32 0.0, %v1467
  %v1469 = vpop.f32.mrf.mxu0
  %v1470 = vadd.f32 0.0, %v1469
  %1471 = vmatprep.mubr.f32.mxu0 0.0
  %1472 = vmatmul.mubr.f32.gmra.mxu0 %v874
  %v1473 = vpop.f32.mrf.mxu0
  %v1474 = vadd.f32 0.0, %v1473
  %v1475 = vpop.f32.mrf.mxu0
  %v1476 = vadd.f32 0.0, %v1475
  %1477 = vmatprep.mubr.f32.mxu0 0.0
  %1478 = vmatmul.mubr.f32.gmra.mxu0 %v877
  %v1479 = vpop.f32.mrf.mxu0
  %v1480 = vadd.f32 0.0, %v1479
  %v1481 = vpop.f32.mrf.mxu0
  %v1482 = vadd.f32 0.0, %v1481
  %1483 = vmatprep.mubr.f32.mxu0 0.0
  %1484 = vmatmul.mubr.f32.gmra.mxu0 %v880
  %v1485 = vpop.f32.mrf.mxu0
  %v1486 = vadd.f32 0.0, %v1485
  %v1487 = vpop.f32.mrf.mxu0
  %v1488 = vadd.f32 0.0, %v1487
  %1489 = vmatprep.mubr.f32.mxu0 0.0
  %1490 = vmatmul.mubr.f32.gmra.mxu0 %v883
  %v1491 = vpop.f32.mrf.mxu0
  %v1492 = vadd.f32 0.0, %v1491
  %v1493 = vpop.f32.mrf.mxu0
  %v1494 = vadd.f32 0.0, %v1493
  %1495 = vmatprep.mubr.f32.mxu0 0.0
  %1496 = vmatmul.mubr.f32.gmra.mxu0 %v886
  %v1497 = vpop.f32.mrf.mxu0
  %v1498 = vadd.f32 0.0, %v1497
  %v1499 = vpop.f32.mrf.mxu0
  %v1500 = vadd.f32 0.0, %v1499
  %1501 = vmatprep.mubr.f32.mxu0 0.0
  %1502 = vmatmul.mubr.f32.gmra.mxu0 %v889
  %v1503 = vpop.f32.mrf.mxu0
  %v1504 = vadd.f32 0.0, %v1503
  %v1505 = vpop.f32.mrf.mxu0
  %v1506 = vadd.f32 0.0, %v1505
  %1507 = vmatprep.mubr.f32.mxu0 0.0
  %1508 = vmatmul.mubr.f32.gmra.mxu0 %v892
  %v1509 = vpop.f32.mrf.mxu0
  %v1510 = vadd.f32 0.0, %v1509
  %v1511 = vpop.f32.mrf.mxu0
  %v1512 = vadd.f32 0.0, %v1511
  %1513 = vmatprep.mubr.f32.mxu0 0.0
  %1514 = vmatmul.mubr.f32.gmra.mxu0 %v895
  %v1515 = vpop.f32.mrf.mxu0
  %v1516 = vadd.f32 0.0, %v1515
  %v1517 = vpop.f32.mrf.mxu0
  %v1518 = vadd.f32 0.0, %v1517
  %1519 = vmatprep.mubr.f32.mxu0 0.0
  %1520 = vmatmul.mubr.f32.gmra.mxu0 %v898
  %v1521 = vpop.f32.mrf.mxu0
  %v1522 = vadd.f32 0.0, %v1521
  %v1523 = vpop.f32.mrf.mxu0
  %v1524 = vadd.f32 0.0, %v1523
  %1525 = vmatprep.mubr.f32.mxu0 0.0
  %1526 = vmatmul.mubr.f32.gmra.mxu0 %v901
  %v1527 = vpop.f32.mrf.mxu0
  %v1528 = vadd.f32 0.0, %v1527
  %v1529 = vpop.f32.mrf.mxu0
  %v1530 = vadd.f32 0.0, %v1529
  %1531 = vmatprep.mubr.f32.mxu0 0.0
  %1532 = vmatmul.mubr.f32.gmra.mxu0 %v904
  %v1533 = vpop.f32.mrf.mxu0
  %v1534 = vadd.f32 0.0, %v1533
  %v1535 = vpop.f32.mrf.mxu0
  %v1536 = vadd.f32 0.0, %v1535
  %1537 = vmatprep.mubr.f32.mxu0 0.0
  %1538 = vmatmul.mubr.f32.gmra.mxu0 %v907
  %v1539 = vpop.f32.mrf.mxu0
  %v1540 = vadd.f32 0.0, %v1539
  %v1541 = vpop.f32.mrf.mxu0
  %v1542 = vadd.f32 0.0, %v1541
  %1543 = vmatprep.mubr.f32.mxu0 0.0
  %1544 = vmatmul.mubr.f32.gmra.mxu0 %v910
  %v1545 = vpop.f32.mrf.mxu0
  %v1546 = vadd.f32 0.0, %v1545
  %v1547 = vpop.f32.mrf.mxu0
  %v1548 = vadd.f32 0.0, %v1547
  %1549 = vmatprep.mubr.f32.mxu0 0.0
  %1550 = vmatmul.mubr.f32.gmra.mxu0 %v913
  %v1551 = vpop.f32.mrf.mxu0
  %v1552 = vadd.f32 0.0, %v1551
  %v1553 = vpop.f32.mrf.mxu0
  %v1554 = vadd.f32 0.0, %v1553
  %1555 = vmatprep.mubr.f32.mxu0 0.0
  %1556 = vmatmul.mubr.f32.gmra.mxu0 %v916
  %v1557 = vpop.f32.mrf.mxu0
  %v1558 = vadd.f32 0.0, %v1557
  %v1559 = vpop.f32.mrf.mxu0
  %v1560 = vadd.f32 0.0, %v1559
  %1561 = vdwg.mxu0
  %v1562 = vld [vmem:[%s4] sm:$0xff]
  %v1563 = vld [vmem:[%s4 + $0x8] sm:$0xff]
  %v1564 = vld [vmem:[%s4 + $0x10] sm:$0xff]
  %v1565 = vld [vmem:[%s4 + $0x18] sm:$0xff]
  %v1566 = vld [vmem:[%s4 + $0x20] sm:$0xff]
  %v1567 = vld [vmem:[%s4 + $0x28] sm:$0xff]
  %v1568 = vld [vmem:[%s4 + $0x30] sm:$0xff]
  %v1569 = vld [vmem:[%s4 + $0x38] sm:$0xff]
  %v1570 = vld [vmem:[%s4 + $0x40] sm:$0xff]
  %v1571 = vld [vmem:[%s4 + $0x48] sm:$0xff]
  %v1572 = vld [vmem:[%s4 + $0x50] sm:$0xff]
  %v1573 = vld [vmem:[%s4 + $0x58] sm:$0xff]
  %v1574 = vld [vmem:[%s4 + $0x60] sm:$0xff]
  %v1575 = vld [vmem:[%s4 + $0x68] sm:$0xff]
  %v1576 = vld [vmem:[%s4 + $0x70] sm:$0xff]
  %v1577 = vld [vmem:[%s4 + $0x78] sm:$0xff]
  %v1578 = vld [vmem:[%s4 + $0x80] sm:$0xff]
  %v1579 = vld [vmem:[%s4 + $0x88] sm:$0xff]
  %v1580 = vld [vmem:[%s4 + $0x90] sm:$0xff]
  %v1581 = vld [vmem:[%s4 + $0x98] sm:$0xff]
  %v1582 = vld [vmem:[%s4 + $0xa0] sm:$0xff]
  %v1583 = vld [vmem:[%s4 + $0xa8] sm:$0xff]
  %v1584 = vld [vmem:[%s4 + $0xb0] sm:$0xff]
  %v1585 = vld [vmem:[%s4 + $0xb8] sm:$0xff]
  %v1586 = vld [vmem:[%s4 + $0xc0] sm:$0xff]
  %v1587 = vld [vmem:[%s4 + $0xc8] sm:$0xff]
  %v1588 = vld [vmem:[%s4 + $0xd0] sm:$0xff]
  %v1589 = vld [vmem:[%s4 + $0xd8] sm:$0xff]
  %v1590 = vld [vmem:[%s4 + $0xe0] sm:$0xff]
  %v1591 = vld [vmem:[%s4 + $0xe8] sm:$0xff]
  %v1592 = vld [vmem:[%s4 + $0xf0] sm:$0xff]
  %v1593 = vld [vmem:[%s4 + $0xf8] sm:$0xff]
  %v1594 = vld [vmem:[%s5] sm:$0xff]
  %v1595 = vld [vmem:[%s5 + $0x8] sm:$0xff]
  %v1596 = vld [vmem:[%s5 + $0x10] sm:$0xff]
  %v1597 = vld [vmem:[%s5 + $0x18] sm:$0xff]
  %v1598 = vld [vmem:[%s5 + $0x20] sm:$0xff]
  %v1599 = vld [vmem:[%s5 + $0x28] sm:$0xff]
  %v1600 = vld [vmem:[%s5 + $0x30] sm:$0xff]
  %v1601 = vld [vmem:[%s5 + $0x38] sm:$0xff]
  %v1602 = vld [vmem:[%s5 + $0x40] sm:$0xff]
  %v1603 = vld [vmem:[%s5 + $0x48] sm:$0xff]
  %v1604 = vld [vmem:[%s5 + $0x50] sm:$0xff]
  %v1605 = vld [vmem:[%s5 + $0x58] sm:$0xff]
  %v1606 = vld [vmem:[%s5 + $0x60] sm:$0xff]
  %v1607 = vld [vmem:[%s5 + $0x68] sm:$0xff]
  %v1608 = vld [vmem:[%s5 + $0x70] sm:$0xff]
  %v1609 = vld [vmem:[%s5 + $0x78] sm:$0xff]
  %v1610 = vld [vmem:[%s5 + $0x80] sm:$0xff]
  %v1611 = vld [vmem:[%s5 + $0x88] sm:$0xff]
  %v1612 = vld [vmem:[%s5 + $0x90] sm:$0xff]
  %v1613 = vld [vmem:[%s5 + $0x98] sm:$0xff]
  %v1614 = vld [vmem:[%s5 + $0xa0] sm:$0xff]
  %v1615 = vld [vmem:[%s5 + $0xa8] sm:$0xff]
  %v1616 = vld [vmem:[%s5 + $0xb0] sm:$0xff]
  %v1617 = vld [vmem:[%s5 + $0xb8] sm:$0xff]
  %v1618 = vld [vmem:[%s5 + $0xc0] sm:$0xff]
  %v1619 = vld [vmem:[%s5 + $0xc8] sm:$0xff]
  %v1620 = vld [vmem:[%s5 + $0xd0] sm:$0xff]
  %v1621 = vld [vmem:[%s5 + $0xd8] sm:$0xff]
  %v1622 = vld [vmem:[%s5 + $0xe0] sm:$0xff]
  %v1623 = vld [vmem:[%s5 + $0xe8] sm:$0xff]
  %v1624 = vld [vmem:[%s5 + $0xf0] sm:$0xff]
  %v1625 = vld [vmem:[%s5 + $0xf8] sm:$0xff]
  %vm1626 = vcmask 261120
  %v1628 = vsel %vm1626, %v275, 0
  %v1631 = vsel %vm1626, %v276, 0
  %v1634 = vsel %vm1626, %v277, 0
  %v1637 = vsel %vm1626, %v278, 0
  %v1640 = vsel %vm1626, %v279, 0
  %v1643 = vsel %vm1626, %v280, 0
  %v1646 = vsel %vm1626, %v281, 0
  %v1649 = vsel %vm1626, %v282, 0
  %v1652 = vsel %vm1626, %v283, 0
  %v1655 = vsel %vm1626, %v284, 0
  %v1658 = vsel %vm1626, %v285, 0
  %v1661 = vsel %vm1626, %v286, 0
  %v1664 = vsel %vm1626, %v287, 0
  %v1667 = vsel %vm1626, %v288, 0
  %v1670 = vsel %vm1626, %v289, 0
  %v1673 = vsel %vm1626, %v290, 0
  %1675 = vmatprep.subr.mxu0 0.0
  %1676 = vmatpush1.msra.mxu0 0.0
  %1677 = vmatprep.subr.mxu0 0.0
  %1678 = vmatpush1.msra.mxu0 0.0
  %1679 = vmatprep.subr.mxu0 0.0
  %1680 = vmatpush1.msra.mxu0 0.0
  %1681 = vmatprep.subr.mxu0 0.0
  %1682 = vmatpush1.msra.mxu0 0.0
  %1683 = vmatprep.subr.mxu0 0.0
  %1684 = vmatpush1.msra.mxu0 0.0
  %1685 = vmatprep.subr.mxu0 0.0
  %1686 = vmatpush1.msra.mxu0 0.0
  %1687 = vmatprep.subr.mxu0 0.0
  %1688 = vmatpush1.msra.mxu0 0.0
  %1689 = vmatprep.subr.mxu0 0.0
  %1690 = vmatpush1.msra.mxu0 0.0
  %1691 = vmatprep.subr.mxu0 0.0
  %1692 = vmatpush1.msra.mxu0 0.0
  %1693 = vmatprep.subr.mxu0 0.0
  %1694 = vmatpush1.msra.mxu0 0.0
  %1695 = vmatprep.subr.mxu0 0.0
  %1696 = vmatpush1.msra.mxu0 0.0
  %1697 = vmatprep.subr.mxu0 0.0
  %1698 = vmatpush1.msra.mxu0 0.0
  %1699 = vmatprep.subr.mxu0 %v1587
  %1700 = vmatpush1.msra.mxu0 %v1586
  %1701 = vmatprep.subr.mxu0 %v1579
  %1702 = vmatpush1.msra.mxu0 %v1578
  %1703 = vmatprep.subr.mxu0 %v1571
  %1704 = vmatpush1.msra.mxu0 %v1570
  %1705 = vmatprep.subr.mxu0 %v1563
  %1706 = vmatpush1.msra.mxu0 %v1562
  %1707 = vmatprep.subr.mxu0 0.0
  %1708 = vmatpush2.msra.mxu0 0.0
  %1709 = vmatprep.subr.mxu0 0.0
  %1710 = vmatpush2.msra.mxu0 0.0
  %1711 = vmatprep.subr.mxu0 0.0
  %1712 = vmatpush2.msra.mxu0 0.0
  %1713 = vmatprep.subr.mxu0 0.0
  %1714 = vmatpush2.msra.mxu0 0.0
  %1715 = vmatprep.subr.mxu0 0.0
  %1716 = vmatpush2.msra.mxu0 0.0
  %1717 = vmatprep.subr.mxu0 0.0
  %1718 = vmatpush2.msra.mxu0 0.0
  %1719 = vmatprep.subr.mxu0 0.0
  %1720 = vmatpush2.msra.mxu0 0.0
  %1721 = vmatprep.subr.mxu0 0.0
  %1722 = vmatpush2.msra.mxu0 0.0
  %1723 = vmatprep.subr.mxu0 0.0
  %1724 = vmatpush2.msra.mxu0 0.0
  %1725 = vmatprep.subr.mxu0 0.0
  %1726 = vmatpush2.msra.mxu0 0.0
  %1727 = vmatprep.subr.mxu0 0.0
  %1728 = vmatpush2.msra.mxu0 0.0
  %1729 = vmatprep.subr.mxu0 0.0
  %1730 = vmatpush2.msra.mxu0 0.0
  %1731 = vmatprep.subr.mxu0 0.0
  %1732 = vmatpush2.msra.mxu0 0.0
  %1733 = vmatprep.subr.mxu0 0.0
  %1734 = vmatpush2.msra.mxu0 0.0
  %1735 = vmatprep.subr.mxu0 0.0
  %1736 = vmatpush2.msra.mxu0 0.0
  %1737 = vmatprep.subr.mxu0 0.0
  %1738 = vmatpush2.msra.mxu0 0.0
  %1739 = vmatprep.mubr.f32.mxu0 0.0
  %1740 = vmatmul.mubr.f32.gmra.mxu0 %v1628
  %v1741 = vpop.f32.mrf.mxu0
  %v1742 = vadd.f32 0.0, %v1741
  %v1743 = vpop.f32.mrf.mxu0
  %v1744 = vadd.f32 0.0, %v1743
  %1745 = vmatprep.mubr.f32.mxu0 0.0
  %1746 = vmatmul.mubr.f32.gmra.mxu0 %v1631
  %v1747 = vpop.f32.mrf.mxu0
  %v1748 = vadd.f32 0.0, %v1747
  %v1749 = vpop.f32.mrf.mxu0
  %v1750 = vadd.f32 0.0, %v1749
  %1751 = vmatprep.mubr.f32.mxu0 0.0
  %1752 = vmatmul.mubr.f32.gmra.mxu0 %v1634
  %v1753 = vpop.f32.mrf.mxu0
  %v1754 = vadd.f32 0.0, %v1753
  %v1755 = vpop.f32.mrf.mxu0
  %v1756 = vadd.f32 0.0, %v1755
  %1757 = vmatprep.mubr.f32.mxu0 0.0
  %1758 = vmatmul.mubr.f32.gmra.mxu0 %v1637
  %v1759 = vpop.f32.mrf.mxu0
  %v1760 = vadd.f32 0.0, %v1759
  %v1761 = vpop.f32.mrf.mxu0
  %v1762 = vadd.f32 0.0, %v1761
  %1763 = vmatprep.mubr.f32.mxu0 0.0
  %1764 = vmatmul.mubr.f32.gmra.mxu0 %v1640
  %v1765 = vpop.f32.mrf.mxu0
  %v1766 = vadd.f32 0.0, %v1765
  %v1767 = vpop.f32.mrf.mxu0
  %v1768 = vadd.f32 0.0, %v1767
  %1769 = vmatprep.mubr.f32.mxu0 0.0
  %1770 = vmatmul.mubr.f32.gmra.mxu0 %v1643
  %v1771 = vpop.f32.mrf.mxu0
  %v1772 = vadd.f32 0.0, %v1771
  %v1773 = vpop.f32.mrf.mxu0
  %v1774 = vadd.f32 0.0, %v1773
  %1775 = vmatprep.mubr.f32.mxu0 0.0
  %1776 = vmatmul.mubr.f32.gmra.mxu0 %v1646
  %v1777 = vpop.f32.mrf.mxu0
  %v1778 = vadd.f32 0.0, %v1777
  %v1779 = vpop.f32.mrf.mxu0
  %v1780 = vadd.f32 0.0, %v1779
  %1781 = vmatprep.mubr.f32.mxu0 0.0
  %1782 = vmatmul.mubr.f32.gmra.mxu0 %v1649
  %v1783 = vpop.f32.mrf.mxu0
  %v1784 = vadd.f32 0.0, %v1783
  %v1785 = vpop.f32.mrf.mxu0
  %v1786 = vadd.f32 0.0, %v1785
  %1787 = vmatprep.mubr.f32.mxu0 0.0
  %1788 = vmatmul.mubr.f32.gmra.mxu0 %v1652
  %v1789 = vpop.f32.mrf.mxu0
  %v1790 = vadd.f32 0.0, %v1789
  %v1791 = vpop.f32.mrf.mxu0
  %v1792 = vadd.f32 0.0, %v1791
  %1793 = vmatprep.mubr.f32.mxu0 0.0
  %1794 = vmatmul.mubr.f32.gmra.mxu0 %v1655
  %v1795 = vpop.f32.mrf.mxu0
  %v1796 = vadd.f32 0.0, %v1795
  %v1797 = vpop.f32.mrf.mxu0
  %v1798 = vadd.f32 0.0, %v1797
  %1799 = vmatprep.mubr.f32.mxu0 0.0
  %1800 = vmatmul.mubr.f32.gmra.mxu0 %v1658
  %v1801 = vpop.f32.mrf.mxu0
  %v1802 = vadd.f32 0.0, %v1801
  %v1803 = vpop.f32.mrf.mxu0
  %v1804 = vadd.f32 0.0, %v1803
  %1805 = vmatprep.mubr.f32.mxu0 0.0
  %1806 = vmatmul.mubr.f32.gmra.mxu0 %v1661
  %v1807 = vpop.f32.mrf.mxu0
  %v1808 = vadd.f32 0.0, %v1807
  %v1809 = vpop.f32.mrf.mxu0
  %v1810 = vadd.f32 0.0, %v1809
  %1811 = vmatprep.mubr.f32.mxu0 0.0
  %1812 = vmatmul.mubr.f32.gmra.mxu0 %v1664
  %v1813 = vpop.f32.mrf.mxu0
  %v1814 = vadd.f32 0.0, %v1813
  %v1815 = vpop.f32.mrf.mxu0
  %v1816 = vadd.f32 0.0, %v1815
  %1817 = vmatprep.mubr.f32.mxu0 0.0
  %1818 = vmatmul.mubr.f32.gmra.mxu0 %v1667
  %v1819 = vpop.f32.mrf.mxu0
  %v1820 = vadd.f32 0.0, %v1819
  %v1821 = vpop.f32.mrf.mxu0
  %v1822 = vadd.f32 0.0, %v1821
  %1823 = vmatprep.mubr.f32.mxu0 0.0
  %1824 = vmatmul.mubr.f32.gmra.mxu0 %v1670
  %v1825 = vpop.f32.mrf.mxu0
  %v1826 = vadd.f32 0.0, %v1825
  %v1827 = vpop.f32.mrf.mxu0
  %v1828 = vadd.f32 0.0, %v1827
  %1829 = vmatprep.mubr.f32.mxu0 0.0
  %1830 = vmatmul.mubr.f32.gmra.mxu0 %v1673
  %v1831 = vpop.f32.mrf.mxu0
  %v1832 = vadd.f32 0.0, %v1831
  %v1833 = vpop.f32.mrf.mxu0
  %v1834 = vadd.f32 0.0, %v1833
  %1835 = vdwg.mxu0
  %1836 = vmatprep.subr.mxu0 0.0
  %1837 = vmatpush1.msra.mxu0 0.0
  %1838 = vmatprep.subr.mxu0 0.0
  %1839 = vmatpush1.msra.mxu0 0.0
  %1840 = vmatprep.subr.mxu0 0.0
  %1841 = vmatpush1.msra.mxu0 0.0
  %1842 = vmatprep.subr.mxu0 0.0
  %1843 = vmatpush1.msra.mxu0 0.0
  %1844 = vmatprep.subr.mxu0 0.0
  %1845 = vmatpush1.msra.mxu0 0.0
  %1846 = vmatprep.subr.mxu0 0.0
  %1847 = vmatpush1.msra.mxu0 0.0
  %1848 = vmatprep.subr.mxu0 0.0
  %1849 = vmatpush1.msra.mxu0 0.0
  %1850 = vmatprep.subr.mxu0 0.0
  %1851 = vmatpush1.msra.mxu0 0.0
  %1852 = vmatprep.subr.mxu0 0.0
  %1853 = vmatpush1.msra.mxu0 0.0
  %1854 = vmatprep.subr.mxu0 0.0
  %1855 = vmatpush1.msra.mxu0 0.0
  %1856 = vmatprep.subr.mxu0 0.0
  %1857 = vmatpush1.msra.mxu0 0.0
  %1858 = vmatprep.subr.mxu0 0.0
  %1859 = vmatpush1.msra.mxu0 0.0
  %1860 = vmatprep.subr.mxu0 %v1589
  %1861 = vmatpush1.msra.mxu0 %v1588
  %1862 = vmatprep.subr.mxu0 %v1581
  %1863 = vmatpush1.msra.mxu0 %v1580
  %1864 = vmatprep.subr.mxu0 %v1573
  %1865 = vmatpush1.msra.mxu0 %v1572
  %1866 = vmatprep.subr.mxu0 %v1565
  %1867 = vmatpush1.msra.mxu0 %v1564
  %1868 = vmatprep.subr.mxu0 0.0
  %1869 = vmatpush2.msra.mxu0 0.0
  %1870 = vmatprep.subr.mxu0 0.0
  %1871 = vmatpush2.msra.mxu0 0.0
  %1872 = vmatprep.subr.mxu0 0.0
  %1873 = vmatpush2.msra.mxu0 0.0
  %1874 = vmatprep.subr.mxu0 0.0
  %1875 = vmatpush2.msra.mxu0 0.0
  %1876 = vmatprep.subr.mxu0 0.0
  %1877 = vmatpush2.msra.mxu0 0.0
  %1878 = vmatprep.subr.mxu0 0.0
  %1879 = vmatpush2.msra.mxu0 0.0
  %1880 = vmatprep.subr.mxu0 0.0
  %1881 = vmatpush2.msra.mxu0 0.0
  %1882 = vmatprep.subr.mxu0 0.0
  %1883 = vmatpush2.msra.mxu0 0.0
  %1884 = vmatprep.subr.mxu0 0.0
  %1885 = vmatpush2.msra.mxu0 0.0
  %1886 = vmatprep.subr.mxu0 0.0
  %1887 = vmatpush2.msra.mxu0 0.0
  %1888 = vmatprep.subr.mxu0 0.0
  %1889 = vmatpush2.msra.mxu0 0.0
  %1890 = vmatprep.subr.mxu0 0.0
  %1891 = vmatpush2.msra.mxu0 0.0
  %1892 = vmatprep.subr.mxu0 0.0
  %1893 = vmatpush2.msra.mxu0 0.0
  %1894 = vmatprep.subr.mxu0 0.0
  %1895 = vmatpush2.msra.mxu0 0.0
  %1896 = vmatprep.subr.mxu0 0.0
  %1897 = vmatpush2.msra.mxu0 0.0
  %1898 = vmatprep.subr.mxu0 0.0
  %1899 = vmatpush2.msra.mxu0 0.0
  %1900 = vmatprep.mubr.f32.mxu0 0.0
  %1901 = vmatmul.mubr.f32.gmra.mxu0 %v1628
  %v1902 = vpop.f32.mrf.mxu0
  %v1903 = vadd.f32 0.0, %v1902
  %v1904 = vpop.f32.mrf.mxu0
  %v1905 = vadd.f32 0.0, %v1904
  %1906 = vmatprep.mubr.f32.mxu0 0.0
  %1907 = vmatmul.mubr.f32.gmra.mxu0 %v1631
  %v1908 = vpop.f32.mrf.mxu0
  %v1909 = vadd.f32 0.0, %v1908
  %v1910 = vpop.f32.mrf.mxu0
  %v1911 = vadd.f32 0.0, %v1910
  %1912 = vmatprep.mubr.f32.mxu0 0.0
  %1913 = vmatmul.mubr.f32.gmra.mxu0 %v1634
  %v1914 = vpop.f32.mrf.mxu0
  %v1915 = vadd.f32 0.0, %v1914
  %v1916 = vpop.f32.mrf.mxu0
  %v1917 = vadd.f32 0.0, %v1916
  %1918 = vmatprep.mubr.f32.mxu0 0.0
  %1919 = vmatmul.mubr.f32.gmra.mxu0 %v1637
  %v1920 = vpop.f32.mrf.mxu0
  %v1921 = vadd.f32 0.0, %v1920
  %v1922 = vpop.f32.mrf.mxu0
  %v1923 = vadd.f32 0.0, %v1922
  %1924 = vmatprep.mubr.f32.mxu0 0.0
  %1925 = vmatmul.mubr.f32.gmra.mxu0 %v1640
  %v1926 = vpop.f32.mrf.mxu0
  %v1927 = vadd.f32 0.0, %v1926
  %v1928 = vpop.f32.mrf.mxu0
  %v1929 = vadd.f32 0.0, %v1928
  %1930 = vmatprep.mubr.f32.mxu0 0.0
  %1931 = vmatmul.mubr.f32.gmra.mxu0 %v1643
  %v1932 = vpop.f32.mrf.mxu0
  %v1933 = vadd.f32 0.0, %v1932
  %v1934 = vpop.f32.mrf.mxu0
  %v1935 = vadd.f32 0.0, %v1934
  %1936 = vmatprep.mubr.f32.mxu0 0.0
  %1937 = vmatmul.mubr.f32.gmra.mxu0 %v1646
  %v1938 = vpop.f32.mrf.mxu0
  %v1939 = vadd.f32 0.0, %v1938
  %v1940 = vpop.f32.mrf.mxu0
  %v1941 = vadd.f32 0.0, %v1940
  %1942 = vmatprep.mubr.f32.mxu0 0.0
  %1943 = vmatmul.mubr.f32.gmra.mxu0 %v1649
  %v1944 = vpop.f32.mrf.mxu0
  %v1945 = vadd.f32 0.0, %v1944
  %v1946 = vpop.f32.mrf.mxu0
  %v1947 = vadd.f32 0.0, %v1946
  %1948 = vmatprep.mubr.f32.mxu0 0.0
  %1949 = vmatmul.mubr.f32.gmra.mxu0 %v1652
  %v1950 = vpop.f32.mrf.mxu0
  %v1951 = vadd.f32 0.0, %v1950
  %v1952 = vpop.f32.mrf.mxu0
  %v1953 = vadd.f32 0.0, %v1952
  %1954 = vmatprep.mubr.f32.mxu0 0.0
  %1955 = vmatmul.mubr.f32.gmra.mxu0 %v1655
  %v1956 = vpop.f32.mrf.mxu0
  %v1957 = vadd.f32 0.0, %v1956
  %v1958 = vpop.f32.mrf.mxu0
  %v1959 = vadd.f32 0.0, %v1958
  %1960 = vmatprep.mubr.f32.mxu0 0.0
  %1961 = vmatmul.mubr.f32.gmra.mxu0 %v1658
  %v1962 = vpop.f32.mrf.mxu0
  %v1963 = vadd.f32 0.0, %v1962
  %v1964 = vpop.f32.mrf.mxu0
  %v1965 = vadd.f32 0.0, %v1964
  %1966 = vmatprep.mubr.f32.mxu0 0.0
  %1967 = vmatmul.mubr.f32.gmra.mxu0 %v1661
  %v1968 = vpop.f32.mrf.mxu0
  %v1969 = vadd.f32 0.0, %v1968
  %v1970 = vpop.f32.mrf.mxu0
  %v1971 = vadd.f32 0.0, %v1970
  %1972 = vmatprep.mubr.f32.mxu0 0.0
  %1973 = vmatmul.mubr.f32.gmra.mxu0 %v1664
  %v1974 = vpop.f32.mrf.mxu0
  %v1975 = vadd.f32 0.0, %v1974
  %v1976 = vpop.f32.mrf.mxu0
  %v1977 = vadd.f32 0.0, %v1976
  %1978 = vmatprep.mubr.f32.mxu0 0.0
  %1979 = vmatmul.mubr.f32.gmra.mxu0 %v1667
  %v1980 = vpop.f32.mrf.mxu0
  %v1981 = vadd.f32 0.0, %v1980
  %v1982 = vpop.f32.mrf.mxu0
  %v1983 = vadd.f32 0.0, %v1982
  %1984 = vmatprep.mubr.f32.mxu0 0.0
  %1985 = vmatmul.mubr.f32.gmra.mxu0 %v1670
  %v1986 = vpop.f32.mrf.mxu0
  %v1987 = vadd.f32 0.0, %v1986
  %v1988 = vpop.f32.mrf.mxu0
  %v1989 = vadd.f32 0.0, %v1988
  %1990 = vmatprep.mubr.f32.mxu0 0.0
  %1991 = vmatmul.mubr.f32.gmra.mxu0 %v1673
  %v1992 = vpop.f32.mrf.mxu0
  %v1993 = vadd.f32 0.0, %v1992
  %v1994 = vpop.f32.mrf.mxu0
  %v1995 = vadd.f32 0.0, %v1994
  %1996 = vdwg.mxu0
  %1997 = vmatprep.subr.mxu0 0.0
  %1998 = vmatpush1.msra.mxu0 0.0
  %1999 = vmatprep.subr.mxu0 0.0
  %2000 = vmatpush1.msra.mxu0 0.0
  %2001 = vmatprep.subr.mxu0 0.0
  %2002 = vmatpush1.msra.mxu0 0.0
  %2003 = vmatprep.subr.mxu0 0.0
  %2004 = vmatpush1.msra.mxu0 0.0
  %2005 = vmatprep.subr.mxu0 0.0
  %2006 = vmatpush1.msra.mxu0 0.0
  %2007 = vmatprep.subr.mxu0 0.0
  %2008 = vmatpush1.msra.mxu0 0.0
  %2009 = vmatprep.subr.mxu0 0.0
  %2010 = vmatpush1.msra.mxu0 0.0
  %2011 = vmatprep.subr.mxu0 0.0
  %2012 = vmatpush1.msra.mxu0 0.0
  %2013 = vmatprep.subr.mxu0 0.0
  %2014 = vmatpush1.msra.mxu0 0.0
  %2015 = vmatprep.subr.mxu0 0.0
  %2016 = vmatpush1.msra.mxu0 0.0
  %2017 = vmatprep.subr.mxu0 0.0
  %2018 = vmatpush1.msra.mxu0 0.0
  %2019 = vmatprep.subr.mxu0 0.0
  %2020 = vmatpush1.msra.mxu0 0.0
  %2021 = vmatprep.subr.mxu0 %v1591
  %2022 = vmatpush1.msra.mxu0 %v1590
  %2023 = vmatprep.subr.mxu0 %v1583
  %2024 = vmatpush1.msra.mxu0 %v1582
  %2025 = vmatprep.subr.mxu0 %v1575
  %2026 = vmatpush1.msra.mxu0 %v1574
  %2027 = vmatprep.subr.mxu0 %v1567
  %2028 = vmatpush1.msra.mxu0 %v1566
  %2029 = vmatprep.subr.mxu0 0.0
  %2030 = vmatpush2.msra.mxu0 0.0
  %2031 = vmatprep.subr.mxu0 0.0
  %2032 = vmatpush2.msra.mxu0 0.0
  %2033 = vmatprep.subr.mxu0 0.0
  %2034 = vmatpush2.msra.mxu0 0.0
  %2035 = vmatprep.subr.mxu0 0.0
  %2036 = vmatpush2.msra.mxu0 0.0
  %2037 = vmatprep.subr.mxu0 0.0
  %2038 = vmatpush2.msra.mxu0 0.0
  %2039 = vmatprep.subr.mxu0 0.0
  %2040 = vmatpush2.msra.mxu0 0.0
  %2041 = vmatprep.subr.mxu0 0.0
  %2042 = vmatpush2.msra.mxu0 0.0
  %2043 = vmatprep.subr.mxu0 0.0
  %2044 = vmatpush2.msra.mxu0 0.0
  %2045 = vmatprep.subr.mxu0 0.0
  %2046 = vmatpush2.msra.mxu0 0.0
  %2047 = vmatprep.subr.mxu0 0.0
  %2048 = vmatpush2.msra.mxu0 0.0
  %2049 = vmatprep.subr.mxu0 0.0
  %2050 = vmatpush2.msra.mxu0 0.0
  %2051 = vmatprep.subr.mxu0 0.0
  %2052 = vmatpush2.msra.mxu0 0.0
  %2053 = vmatprep.subr.mxu0 0.0
  %2054 = vmatpush2.msra.mxu0 0.0
  %2055 = vmatprep.subr.mxu0 0.0
  %2056 = vmatpush2.msra.mxu0 0.0
  %2057 = vmatprep.subr.mxu0 0.0
  %2058 = vmatpush2.msra.mxu0 0.0
  %2059 = vmatprep.subr.mxu0 0.0
  %2060 = vmatpush2.msra.mxu0 0.0
  %2061 = vmatprep.mubr.f32.mxu0 0.0
  %2062 = vmatmul.mubr.f32.gmra.mxu0 %v1628
  %v2063 = vpop.f32.mrf.mxu0
  %v2064 = vadd.f32 0.0, %v2063
  %v2065 = vpop.f32.mrf.mxu0
  %v2066 = vadd.f32 0.0, %v2065
  %2067 = vmatprep.mubr.f32.mxu0 0.0
  %2068 = vmatmul.mubr.f32.gmra.mxu0 %v1631
  %v2069 = vpop.f32.mrf.mxu0
  %v2070 = vadd.f32 0.0, %v2069
  %v2071 = vpop.f32.mrf.mxu0
  %v2072 = vadd.f32 0.0, %v2071
  %2073 = vmatprep.mubr.f32.mxu0 0.0
  %2074 = vmatmul.mubr.f32.gmra.mxu0 %v1634
  %v2075 = vpop.f32.mrf.mxu0
  %v2076 = vadd.f32 0.0, %v2075
  %v2077 = vpop.f32.mrf.mxu0
  %v2078 = vadd.f32 0.0, %v2077
  %2079 = vmatprep.mubr.f32.mxu0 0.0
  %2080 = vmatmul.mubr.f32.gmra.mxu0 %v1637
  %v2081 = vpop.f32.mrf.mxu0
  %v2082 = vadd.f32 0.0, %v2081
  %v2083 = vpop.f32.mrf.mxu0
  %v2084 = vadd.f32 0.0, %v2083
  %2085 = vmatprep.mubr.f32.mxu0 0.0
  %2086 = vmatmul.mubr.f32.gmra.mxu0 %v1640
  %v2087 = vpop.f32.mrf.mxu0
  %v2088 = vadd.f32 0.0, %v2087
  %v2089 = vpop.f32.mrf.mxu0
  %v2090 = vadd.f32 0.0, %v2089
  %2091 = vmatprep.mubr.f32.mxu0 0.0
  %2092 = vmatmul.mubr.f32.gmra.mxu0 %v1643
  %v2093 = vpop.f32.mrf.mxu0
  %v2094 = vadd.f32 0.0, %v2093
  %v2095 = vpop.f32.mrf.mxu0
  %v2096 = vadd.f32 0.0, %v2095
  %2097 = vmatprep.mubr.f32.mxu0 0.0
  %2098 = vmatmul.mubr.f32.gmra.mxu0 %v1646
  %v2099 = vpop.f32.mrf.mxu0
  %v2100 = vadd.f32 0.0, %v2099
  %v2101 = vpop.f32.mrf.mxu0
  %v2102 = vadd.f32 0.0, %v2101
  %2103 = vmatprep.mubr.f32.mxu0 0.0
  %2104 = vmatmul.mubr.f32.gmra.mxu0 %v1649
  %v2105 = vpop.f32.mrf.mxu0
  %v2106 = vadd.f32 0.0, %v2105
  %v2107 = vpop.f32.mrf.mxu0
  %v2108 = vadd.f32 0.0, %v2107
  %2109 = vmatprep.mubr.f32.mxu0 0.0
  %2110 = vmatmul.mubr.f32.gmra.mxu0 %v1652
  %v2111 = vpop.f32.mrf.mxu0
  %v2112 = vadd.f32 0.0, %v2111
  %v2113 = vpop.f32.mrf.mxu0
  %v2114 = vadd.f32 0.0, %v2113
  %2115 = vmatprep.mubr.f32.mxu0 0.0
  %2116 = vmatmul.mubr.f32.gmra.mxu0 %v1655
  %v2117 = vpop.f32.mrf.mxu0
  %v2118 = vadd.f32 0.0, %v2117
  %v2119 = vpop.f32.mrf.mxu0
  %v2120 = vadd.f32 0.0, %v2119
  %2121 = vmatprep.mubr.f32.mxu0 0.0
  %2122 = vmatmul.mubr.f32.gmra.mxu0 %v1658
  %v2123 = vpop.f32.mrf.mxu0
  %v2124 = vadd.f32 0.0, %v2123
  %v2125 = vpop.f32.mrf.mxu0
  %v2126 = vadd.f32 0.0, %v2125
  %2127 = vmatprep.mubr.f32.mxu0 0.0
  %2128 = vmatmul.mubr.f32.gmra.mxu0 %v1661
  %v2129 = vpop.f32.mrf.mxu0
  %v2130 = vadd.f32 0.0, %v2129
  %v2131 = vpop.f32.mrf.mxu0
  %v2132 = vadd.f32 0.0, %v2131
  %2133 = vmatprep.mubr.f32.mxu0 0.0
  %2134 = vmatmul.mubr.f32.gmra.mxu0 %v1664
  %v2135 = vpop.f32.mrf.mxu0
  %v2136 = vadd.f32 0.0, %v2135
  %v2137 = vpop.f32.mrf.mxu0
  %v2138 = vadd.f32 0.0, %v2137
  %2139 = vmatprep.mubr.f32.mxu0 0.0
  %2140 = vmatmul.mubr.f32.gmra.mxu0 %v1667
  %v2141 = vpop.f32.mrf.mxu0
  %v2142 = vadd.f32 0.0, %v2141
  %v2143 = vpop.f32.mrf.mxu0
  %v2144 = vadd.f32 0.0, %v2143
  %2145 = vmatprep.mubr.f32.mxu0 0.0
  %2146 = vmatmul.mubr.f32.gmra.mxu0 %v1670
  %v2147 = vpop.f32.mrf.mxu0
  %v2148 = vadd.f32 0.0, %v2147
  %v2149 = vpop.f32.mrf.mxu0
  %v2150 = vadd.f32 0.0, %v2149
  %2151 = vmatprep.mubr.f32.mxu0 0.0
  %2152 = vmatmul.mubr.f32.gmra.mxu0 %v1673
  %v2153 = vpop.f32.mrf.mxu0
  %v2154 = vadd.f32 0.0, %v2153
  %v2155 = vpop.f32.mrf.mxu0
  %v2156 = vadd.f32 0.0, %v2155
  %2157 = vdwg.mxu0
  %2158 = vmatprep.subr.mxu0 0.0
  %2159 = vmatpush1.msra.mxu0 0.0
  %2160 = vmatprep.subr.mxu0 0.0
  %2161 = vmatpush1.msra.mxu0 0.0
  %2162 = vmatprep.subr.mxu0 0.0
  %2163 = vmatpush1.msra.mxu0 0.0
  %2164 = vmatprep.subr.mxu0 0.0
  %2165 = vmatpush1.msra.mxu0 0.0
  %2166 = vmatprep.subr.mxu0 0.0
  %2167 = vmatpush1.msra.mxu0 0.0
  %2168 = vmatprep.subr.mxu0 0.0
  %2169 = vmatpush1.msra.mxu0 0.0
  %2170 = vmatprep.subr.mxu0 0.0
  %2171 = vmatpush1.msra.mxu0 0.0
  %2172 = vmatprep.subr.mxu0 0.0
  %2173 = vmatpush1.msra.mxu0 0.0
  %2174 = vmatprep.subr.mxu0 0.0
  %2175 = vmatpush1.msra.mxu0 0.0
  %2176 = vmatprep.subr.mxu0 0.0
  %2177 = vmatpush1.msra.mxu0 0.0
  %2178 = vmatprep.subr.mxu0 0.0
  %2179 = vmatpush1.msra.mxu0 0.0
  %2180 = vmatprep.subr.mxu0 0.0
  %2181 = vmatpush1.msra.mxu0 0.0
  %2182 = vmatprep.subr.mxu0 %v1593
  %2183 = vmatpush1.msra.mxu0 %v1592
  %2184 = vmatprep.subr.mxu0 %v1585
  %2185 = vmatpush1.msra.mxu0 %v1584
  %2186 = vmatprep.subr.mxu0 %v1577
  %2187 = vmatpush1.msra.mxu0 %v1576
  %2188 = vmatprep.subr.mxu0 %v1569
  %2189 = vmatpush1.msra.mxu0 %v1568
  %2190 = vmatprep.subr.mxu0 0.0
  %2191 = vmatpush2.msra.mxu0 0.0
  %2192 = vmatprep.subr.mxu0 0.0
  %2193 = vmatpush2.msra.mxu0 0.0
  %2194 = vmatprep.subr.mxu0 0.0
  %2195 = vmatpush2.msra.mxu0 0.0
  %2196 = vmatprep.subr.mxu0 0.0
  %2197 = vmatpush2.msra.mxu0 0.0
  %2198 = vmatprep.subr.mxu0 0.0
  %2199 = vmatpush2.msra.mxu0 0.0
  %2200 = vmatprep.subr.mxu0 0.0
  %2201 = vmatpush2.msra.mxu0 0.0
  %2202 = vmatprep.subr.mxu0 0.0
  %2203 = vmatpush2.msra.mxu0 0.0
  %2204 = vmatprep.subr.mxu0 0.0
  %2205 = vmatpush2.msra.mxu0 0.0
  %2206 = vmatprep.subr.mxu0 0.0
  %2207 = vmatpush2.msra.mxu0 0.0
  %2208 = vmatprep.subr.mxu0 0.0
  %2209 = vmatpush2.msra.mxu0 0.0
  %2210 = vmatprep.subr.mxu0 0.0
  %2211 = vmatpush2.msra.mxu0 0.0
  %2212 = vmatprep.subr.mxu0 0.0
  %2213 = vmatpush2.msra.mxu0 0.0
  %2214 = vmatprep.subr.mxu0 0.0
  %2215 = vmatpush2.msra.mxu0 0.0
  %2216 = vmatprep.subr.mxu0 0.0
  %2217 = vmatpush2.msra.mxu0 0.0
  %2218 = vmatprep.subr.mxu0 0.0
  %2219 = vmatpush2.msra.mxu0 0.0
  %2220 = vmatprep.subr.mxu0 0.0
  %2221 = vmatpush2.msra.mxu0 0.0
  %2222 = vmatprep.mubr.f32.mxu0 0.0
  %2223 = vmatmul.mubr.f32.gmra.mxu0 %v1628
  %v2224 = vpop.f32.mrf.mxu0
  %v2225 = vadd.f32 0.0, %v2224
  %v2226 = vpop.f32.mrf.mxu0
  %v2227 = vadd.f32 0.0, %v2226
  %2228 = vmatprep.mubr.f32.mxu0 0.0
  %2229 = vmatmul.mubr.f32.gmra.mxu0 %v1631
  %v2230 = vpop.f32.mrf.mxu0
  %v2231 = vadd.f32 0.0, %v2230
  %v2232 = vpop.f32.mrf.mxu0
  %v2233 = vadd.f32 0.0, %v2232
  %2234 = vmatprep.mubr.f32.mxu0 0.0
  %2235 = vmatmul.mubr.f32.gmra.mxu0 %v1634
  %v2236 = vpop.f32.mrf.mxu0
  %v2237 = vadd.f32 0.0, %v2236
  %v2238 = vpop.f32.mrf.mxu0
  %v2239 = vadd.f32 0.0, %v2238
  %2240 = vmatprep.mubr.f32.mxu0 0.0
  %2241 = vmatmul.mubr.f32.gmra.mxu0 %v1637
  %v2242 = vpop.f32.mrf.mxu0
  %v2243 = vadd.f32 0.0, %v2242
  %v2244 = vpop.f32.mrf.mxu0
  %v2245 = vadd.f32 0.0, %v2244
  %2246 = vmatprep.mubr.f32.mxu0 0.0
  %2247 = vmatmul.mubr.f32.gmra.mxu0 %v1640
  %v2248 = vpop.f32.mrf.mxu0
  %v2249 = vadd.f32 0.0, %v2248
  %v2250 = vpop.f32.mrf.mxu0
  %v2251 = vadd.f32 0.0, %v2250
  %2252 = vmatprep.mubr.f32.mxu0 0.0
  %2253 = vmatmul.mubr.f32.gmra.mxu0 %v1643
  %v2254 = vpop.f32.mrf.mxu0
  %v2255 = vadd.f32 0.0, %v2254
  %v2256 = vpop.f32.mrf.mxu0
  %v2257 = vadd.f32 0.0, %v2256
  %2258 = vmatprep.mubr.f32.mxu0 0.0
  %2259 = vmatmul.mubr.f32.gmra.mxu0 %v1646
  %v2260 = vpop.f32.mrf.mxu0
  %v2261 = vadd.f32 0.0, %v2260
  %v2262 = vpop.f32.mrf.mxu0
  %v2263 = vadd.f32 0.0, %v2262
  %2264 = vmatprep.mubr.f32.mxu0 0.0
  %2265 = vmatmul.mubr.f32.gmra.mxu0 %v1649
  %v2266 = vpop.f32.mrf.mxu0
  %v2267 = vadd.f32 0.0, %v2266
  %v2268 = vpop.f32.mrf.mxu0
  %v2269 = vadd.f32 0.0, %v2268
  %2270 = vmatprep.mubr.f32.mxu0 0.0
  %2271 = vmatmul.mubr.f32.gmra.mxu0 %v1652
  %v2272 = vpop.f32.mrf.mxu0
  %v2273 = vadd.f32 0.0, %v2272
  %v2274 = vpop.f32.mrf.mxu0
  %v2275 = vadd.f32 0.0, %v2274
  %2276 = vmatprep.mubr.f32.mxu0 0.0
  %2277 = vmatmul.mubr.f32.gmra.mxu0 %v1655
  %v2278 = vpop.f32.mrf.mxu0
  %v2279 = vadd.f32 0.0, %v2278
  %v2280 = vpop.f32.mrf.mxu0
  %v2281 = vadd.f32 0.0, %v2280
  %2282 = vmatprep.mubr.f32.mxu0 0.0
  %2283 = vmatmul.mubr.f32.gmra.mxu0 %v1658
  %v2284 = vpop.f32.mrf.mxu0
  %v2285 = vadd.f32 0.0, %v2284
  %v2286 = vpop.f32.mrf.mxu0
  %v2287 = vadd.f32 0.0, %v2286
  %2288 = vmatprep.mubr.f32.mxu0 0.0
  %2289 = vmatmul.mubr.f32.gmra.mxu0 %v1661
  %v2290 = vpop.f32.mrf.mxu0
  %v2291 = vadd.f32 0.0, %v2290
  %v2292 = vpop.f32.mrf.mxu0
  %v2293 = vadd.f32 0.0, %v2292
  %2294 = vmatprep.mubr.f32.mxu0 0.0
  %2295 = vmatmul.mubr.f32.gmra.mxu0 %v1664
  %v2296 = vpop.f32.mrf.mxu0
  %v2297 = vadd.f32 0.0, %v2296
  %v2298 = vpop.f32.mrf.mxu0
  %v2299 = vadd.f32 0.0, %v2298
  %2300 = vmatprep.mubr.f32.mxu0 0.0
  %2301 = vmatmul.mubr.f32.gmra.mxu0 %v1667
  %v2302 = vpop.f32.mrf.mxu0
  %v2303 = vadd.f32 0.0, %v2302
  %v2304 = vpop.f32.mrf.mxu0
  %v2305 = vadd.f32 0.0, %v2304
  %2306 = vmatprep.mubr.f32.mxu0 0.0
  %2307 = vmatmul.mubr.f32.gmra.mxu0 %v1670
  %v2308 = vpop.f32.mrf.mxu0
  %v2309 = vadd.f32 0.0, %v2308
  %v2310 = vpop.f32.mrf.mxu0
  %v2311 = vadd.f32 0.0, %v2310
  %2312 = vmatprep.mubr.f32.mxu0 0.0
  %2313 = vmatmul.mubr.f32.gmra.mxu0 %v1673
  %v2314 = vpop.f32.mrf.mxu0
  %v2315 = vadd.f32 0.0, %v2314
  %v2316 = vpop.f32.mrf.mxu0
  %v2317 = vadd.f32 0.0, %v2316
  %2318 = vdwg.mxu0
  %v2319 = vmul.f32 %v1742, %v985
  %v2320 = vmul.f32 %v1744, %v987
  %v2321 = vmul.f32 %v1903, %v1146
  %v2322 = vmul.f32 %v1905, %v1148
  %v2323 = vmul.f32 %v2064, %v1307
  %v2324 = vmul.f32 %v2066, %v1309
  %v2325 = vmul.f32 %v2225, %v1468
  %v2326 = vmul.f32 %v2227, %v1470
  %v2327 = vmul.f32 %v1748, %v991
  %v2328 = vmul.f32 %v1750, %v993
  %v2329 = vmul.f32 %v1909, %v1152
  %v2330 = vmul.f32 %v1911, %v1154
  %v2331 = vmul.f32 %v2070, %v1313
  %v2332 = vmul.f32 %v2072, %v1315
  %v2333 = vmul.f32 %v2231, %v1474
  %v2334 = vmul.f32 %v2233, %v1476
  %v2335 = vmul.f32 %v1754, %v997
  %v2336 = vmul.f32 %v1756, %v999
  %v2337 = vmul.f32 %v1915, %v1158
  %v2338 = vmul.f32 %v1917, %v1160
  %v2339 = vmul.f32 %v2076, %v1319
  %v2340 = vmul.f32 %v2078, %v1321
  %v2341 = vmul.f32 %v2237, %v1480
  %v2342 = vmul.f32 %v2239, %v1482
  %v2343 = vmul.f32 %v1760, %v1003
  %v2344 = vmul.f32 %v1762, %v1005
  %v2345 = vmul.f32 %v1921, %v1164
  %v2346 = vmul.f32 %v1923, %v1166
  %v2347 = vmul.f32 %v2082, %v1325
  %v2348 = vmul.f32 %v2084, %v1327
  %v2349 = vmul.f32 %v2243, %v1486
  %v2350 = vmul.f32 %v2245, %v1488
  %v2351 = vmul.f32 %v1766, %v1009
  %v2352 = vmul.f32 %v1768, %v1011
  %v2353 = vmul.f32 %v1927, %v1170
  %v2354 = vmul.f32 %v1929, %v1172
  %v2355 = vmul.f32 %v2088, %v1331
  %v2356 = vmul.f32 %v2090, %v1333
  %v2357 = vmul.f32 %v2249, %v1492
  %v2358 = vmul.f32 %v2251, %v1494
  %v2359 = vmul.f32 %v1772, %v1015
  %v2360 = vmul.f32 %v1774, %v1017
  %v2361 = vmul.f32 %v1933, %v1176
  %v2362 = vmul.f32 %v1935, %v1178
  %v2363 = vmul.f32 %v2094, %v1337
  %v2364 = vmul.f32 %v2096, %v1339
  %v2365 = vmul.f32 %v2255, %v1498
  %v2366 = vmul.f32 %v2257, %v1500
  %v2367 = vmul.f32 %v1778, %v1021
  %v2368 = vmul.f32 %v1780, %v1023
  %v2369 = vmul.f32 %v1939, %v1182
  %v2370 = vmul.f32 %v1941, %v1184
  %v2371 = vmul.f32 %v2100, %v1343
  %v2372 = vmul.f32 %v2102, %v1345
  %v2373 = vmul.f32 %v2261, %v1504
  %v2374 = vmul.f32 %v2263, %v1506
  %v2375 = vmul.f32 %v1784, %v1027
  %v2376 = vmul.f32 %v1786, %v1029
  %v2377 = vmul.f32 %v1945, %v1188
  %v2378 = vmul.f32 %v1947, %v1190
  %v2379 = vmul.f32 %v2106, %v1349
  %v2380 = vmul.f32 %v2108, %v1351
  %v2381 = vmul.f32 %v2267, %v1510
  %v2382 = vmul.f32 %v2269, %v1512
  %v2383 = vmul.f32 %v1790, %v1033
  %v2384 = vmul.f32 %v1792, %v1035
  %v2385 = vmul.f32 %v1951, %v1194
  %v2386 = vmul.f32 %v1953, %v1196
  %v2387 = vmul.f32 %v2112, %v1355
  %v2388 = vmul.f32 %v2114, %v1357
  %v2389 = vmul.f32 %v2273, %v1516
  %v2390 = vmul.f32 %v2275, %v1518
  %v2391 = vmul.f32 %v1796, %v1039
  %v2392 = vmul.f32 %v1798, %v1041
  %v2393 = vmul.f32 %v1957, %v1200
  %v2394 = vmul.f32 %v1959, %v1202
  %v2395 = vmul.f32 %v2118, %v1361
  %v2396 = vmul.f32 %v2120, %v1363
  %v2397 = vmul.f32 %v2279, %v1522
  %v2398 = vmul.f32 %v2281, %v1524
  %v2399 = vmul.f32 %v1802, %v1045
  %v2400 = vmul.f32 %v1804, %v1047
  %v2401 = vmul.f32 %v1963, %v1206
  %v2402 = vmul.f32 %v1965, %v1208
  %v2403 = vmul.f32 %v2124, %v1367
  %v2404 = vmul.f32 %v2126, %v1369
  %v2405 = vmul.f32 %v2285, %v1528
  %v2406 = vmul.f32 %v2287, %v1530
  %v2407 = vmul.f32 %v1808, %v1051
  %v2408 = vmul.f32 %v1810, %v1053
  %v2409 = vmul.f32 %v1969, %v1212
  %v2410 = vmul.f32 %v1971, %v1214
  %v2411 = vmul.f32 %v2130, %v1373
  %v2412 = vmul.f32 %v2132, %v1375
  %v2413 = vmul.f32 %v2291, %v1534
  %v2414 = vmul.f32 %v2293, %v1536
  %v2415 = vmul.f32 %v1814, %v1057
  %v2416 = vmul.f32 %v1816, %v1059
  %v2417 = vmul.f32 %v1975, %v1218
  %v2418 = vmul.f32 %v1977, %v1220
  %v2419 = vmul.f32 %v2136, %v1379
  %v2420 = vmul.f32 %v2138, %v1381
  %v2421 = vmul.f32 %v2297, %v1540
  %v2422 = vmul.f32 %v2299, %v1542
  %v2423 = vmul.f32 %v1820, %v1063
  %v2424 = vmul.f32 %v1822, %v1065
  %v2425 = vmul.f32 %v1981, %v1224
  %v2426 = vmul.f32 %v1983, %v1226
  %v2427 = vmul.f32 %v2142, %v1385
  %v2428 = vmul.f32 %v2144, %v1387
  %v2429 = vmul.f32 %v2303, %v1546
  %v2430 = vmul.f32 %v2305, %v1548
  %v2431 = vmul.f32 %v1826, %v1069
  %v2432 = vmul.f32 %v1828, %v1071
  %v2433 = vmul.f32 %v1987, %v1230
  %v2434 = vmul.f32 %v1989, %v1232
  %v2435 = vmul.f32 %v2148, %v1391
  %v2436 = vmul.f32 %v2150, %v1393
  %v2437 = vmul.f32 %v2309, %v1552
  %v2438 = vmul.f32 %v2311, %v1554
  %v2439 = vmul.f32 %v1832, %v1075
  %v2440 = vmul.f32 %v1834, %v1077
  %v2441 = vmul.f32 %v1993, %v1236
  %v2442 = vmul.f32 %v1995, %v1238
  %v2443 = vmul.f32 %v2154, %v1397
  %v2444 = vmul.f32 %v2156, %v1399
  %v2445 = vmul.f32 %v2315, %v1558
  %v2446 = vmul.f32 %v2317, %v1560
  %v2447 = vld [vmem:[%s6] sm:$0xff]
  %v2448 = vld [vmem:[%s6 + $0x8] sm:$0xff]
  %v2449 = vld [vmem:[%s6 + $0x10] sm:$0xff]
  %v2450 = vld [vmem:[%s6 + $0x18] sm:$0xff]
  %v2451 = vld [vmem:[%s6 + $0x20] sm:$0xff]
  %v2452 = vld [vmem:[%s6 + $0x28] sm:$0xff]
  %v2453 = vld [vmem:[%s6 + $0x30] sm:$0xff]
  %v2454 = vld [vmem:[%s6 + $0x38] sm:$0xff]
  %v2455 = vld [vmem:[%s6 + $0x40] sm:$0xff]
  %v2456 = vld [vmem:[%s6 + $0x48] sm:$0xff]
  %v2457 = vld [vmem:[%s6 + $0x50] sm:$0xff]
  %v2458 = vld [vmem:[%s6 + $0x58] sm:$0xff]
  %v2459 = vld [vmem:[%s6 + $0x60] sm:$0xff]
  %v2460 = vld [vmem:[%s6 + $0x68] sm:$0xff]
  %v2461 = vld [vmem:[%s6 + $0x70] sm:$0xff]
  %v2462 = vld [vmem:[%s6 + $0x78] sm:$0xff]
  %v2463 = vld [vmem:[%s6 + $0x80] sm:$0xff]
  %v2464 = vld [vmem:[%s6 + $0x88] sm:$0xff]
  %v2465 = vld [vmem:[%s6 + $0x90] sm:$0xff]
  %v2466 = vld [vmem:[%s6 + $0x98] sm:$0xff]
  %v2467 = vld [vmem:[%s6 + $0xa0] sm:$0xff]
  %v2468 = vld [vmem:[%s6 + $0xa8] sm:$0xff]
  %v2469 = vld [vmem:[%s6 + $0xb0] sm:$0xff]
  %v2470 = vld [vmem:[%s6 + $0xb8] sm:$0xff]
  %v2471 = vld [vmem:[%s6 + $0xc0] sm:$0xff]
  %v2472 = vld [vmem:[%s6 + $0xc8] sm:$0xff]
  %v2473 = vld [vmem:[%s6 + $0xd0] sm:$0xff]
  %v2474 = vld [vmem:[%s6 + $0xd8] sm:$0xff]
  %v2475 = vld [vmem:[%s6 + $0xe0] sm:$0xff]
  %v2476 = vld [vmem:[%s6 + $0xe8] sm:$0xff]
  %v2477 = vld [vmem:[%s6 + $0xf0] sm:$0xff]
  %v2478 = vld [vmem:[%s6 + $0xf8] sm:$0xff]
  %v2479 = vld [vmem:[%s6 + $0x100] sm:$0xff]
  %v2480 = vld [vmem:[%s6 + $0x108] sm:$0xff]
  %v2481 = vld [vmem:[%s6 + $0x110] sm:$0xff]
  %v2482 = vld [vmem:[%s6 + $0x118] sm:$0xff]
  %v2483 = vld [vmem:[%s6 + $0x120] sm:$0xff]
  %v2484 = vld [vmem:[%s6 + $0x128] sm:$0xff]
  %v2485 = vld [vmem:[%s6 + $0x130] sm:$0xff]
  %v2486 = vld [vmem:[%s6 + $0x138] sm:$0xff]
  %v2487 = vld [vmem:[%s6 + $0x140] sm:$0xff]
  %v2488 = vld [vmem:[%s6 + $0x148] sm:$0xff]
  %v2489 = vld [vmem:[%s6 + $0x150] sm:$0xff]
  %v2490 = vld [vmem:[%s6 + $0x158] sm:$0xff]
  %v2491 = vld [vmem:[%s6 + $0x160] sm:$0xff]
  %v2492 = vld [vmem:[%s6 + $0x168] sm:$0xff]
  %v2493 = vld [vmem:[%s6 + $0x170] sm:$0xff]
  %v2494 = vld [vmem:[%s6 + $0x178] sm:$0xff]
  %v2495 = vld [vmem:[%s6 + $0x180] sm:$0xff]
  %v2496 = vld [vmem:[%s6 + $0x188] sm:$0xff]
  %v2497 = vld [vmem:[%s6 + $0x190] sm:$0xff]
  %v2498 = vld [vmem:[%s6 + $0x198] sm:$0xff]
  %v2499 = vld [vmem:[%s6 + $0x1a0] sm:$0xff]
  %v2500 = vld [vmem:[%s6 + $0x1a8] sm:$0xff]
  %v2501 = vld [vmem:[%s6 + $0x1b0] sm:$0xff]
  %v2502 = vld [vmem:[%s6 + $0x1b8] sm:$0xff]
  %v2503 = vld [vmem:[%s6 + $0x1c0] sm:$0xff]
  %v2504 = vld [vmem:[%s6 + $0x1c8] sm:$0xff]
  %v2505 = vld [vmem:[%s6 + $0x1d0] sm:$0xff]
  %v2506 = vld [vmem:[%s6 + $0x1d8] sm:$0xff]
  %v2507 = vld [vmem:[%s6 + $0x1e0] sm:$0xff]
  %v2508 = vld [vmem:[%s6 + $0x1e8] sm:$0xff]
  %v2509 = vld [vmem:[%s6 + $0x1f0] sm:$0xff]
  %v2510 = vld [vmem:[%s6 + $0x1f8] sm:$0xff]
  %v2511 = vld [vmem:[%s6 + $0x200] sm:$0xff]
  %v2512 = vld [vmem:[%s6 + $0x208] sm:$0xff]
  %v2513 = vld [vmem:[%s6 + $0x210] sm:$0xff]
  %v2514 = vld [vmem:[%s6 + $0x218] sm:$0xff]
  %v2515 = vld [vmem:[%s6 + $0x220] sm:$0xff]
  %v2516 = vld [vmem:[%s6 + $0x228] sm:$0xff]
  %v2517 = vld [vmem:[%s6 + $0x230] sm:$0xff]
  %v2518 = vld [vmem:[%s6 + $0x238] sm:$0xff]
  %v2519 = vld [vmem:[%s6 + $0x240] sm:$0xff]
  %v2520 = vld [vmem:[%s6 + $0x248] sm:$0xff]
  %v2521 = vld [vmem:[%s6 + $0x250] sm:$0xff]
  %v2522 = vld [vmem:[%s6 + $0x258] sm:$0xff]
  %v2523 = vld [vmem:[%s6 + $0x260] sm:$0xff]
  %v2524 = vld [vmem:[%s6 + $0x268] sm:$0xff]
  %v2525 = vld [vmem:[%s6 + $0x270] sm:$0xff]
  %v2526 = vld [vmem:[%s6 + $0x278] sm:$0xff]
  %v2527 = vld [vmem:[%s6 + $0x280] sm:$0xff]
  %v2528 = vld [vmem:[%s6 + $0x288] sm:$0xff]
  %v2529 = vld [vmem:[%s6 + $0x290] sm:$0xff]
  %v2530 = vld [vmem:[%s6 + $0x298] sm:$0xff]
  %v2531 = vld [vmem:[%s6 + $0x2a0] sm:$0xff]
  %v2532 = vld [vmem:[%s6 + $0x2a8] sm:$0xff]
  %v2533 = vld [vmem:[%s6 + $0x2b0] sm:$0xff]
  %v2534 = vld [vmem:[%s6 + $0x2b8] sm:$0xff]
  %v2535 = vld [vmem:[%s6 + $0x2c0] sm:$0xff]
  %v2536 = vld [vmem:[%s6 + $0x2c8] sm:$0xff]
  %v2537 = vld [vmem:[%s6 + $0x2d0] sm:$0xff]
  %v2538 = vld [vmem:[%s6 + $0x2d8] sm:$0xff]
  %v2539 = vld [vmem:[%s6 + $0x2e0] sm:$0xff]
  %v2540 = vld [vmem:[%s6 + $0x2e8] sm:$0xff]
  %v2541 = vld [vmem:[%s6 + $0x2f0] sm:$0xff]
  %v2542 = vld [vmem:[%s6 + $0x2f8] sm:$0xff]
  %v2543 = vld [vmem:[%s6 + $0x300] sm:$0xff]
  %v2544 = vld [vmem:[%s6 + $0x308] sm:$0xff]
  %v2545 = vld [vmem:[%s6 + $0x310] sm:$0xff]
  %v2546 = vld [vmem:[%s6 + $0x318] sm:$0xff]
  %v2547 = vld [vmem:[%s6 + $0x320] sm:$0xff]
  %v2548 = vld [vmem:[%s6 + $0x328] sm:$0xff]
  %v2549 = vld [vmem:[%s6 + $0x330] sm:$0xff]
  %v2550 = vld [vmem:[%s6 + $0x338] sm:$0xff]
  %v2551 = vld [vmem:[%s6 + $0x340] sm:$0xff]
  %v2552 = vld [vmem:[%s6 + $0x348] sm:$0xff]
  %v2553 = vld [vmem:[%s6 + $0x350] sm:$0xff]
  %v2554 = vld [vmem:[%s6 + $0x358] sm:$0xff]
  %v2555 = vld [vmem:[%s6 + $0x360] sm:$0xff]
  %v2556 = vld [vmem:[%s6 + $0x368] sm:$0xff]
  %v2557 = vld [vmem:[%s6 + $0x370] sm:$0xff]
  %v2558 = vld [vmem:[%s6 + $0x378] sm:$0xff]
  %v2559 = vld [vmem:[%s6 + $0x380] sm:$0xff]
  %v2560 = vld [vmem:[%s6 + $0x388] sm:$0xff]
  %v2561 = vld [vmem:[%s6 + $0x390] sm:$0xff]
  %v2562 = vld [vmem:[%s6 + $0x398] sm:$0xff]
  %v2563 = vld [vmem:[%s6 + $0x3a0] sm:$0xff]
  %v2564 = vld [vmem:[%s6 + $0x3a8] sm:$0xff]
  %v2565 = vld [vmem:[%s6 + $0x3b0] sm:$0xff]
  %v2566 = vld [vmem:[%s6 + $0x3b8] sm:$0xff]
  %v2567 = vld [vmem:[%s6 + $0x3c0] sm:$0xff]
  %v2568 = vld [vmem:[%s6 + $0x3c8] sm:$0xff]
  %v2569 = vld [vmem:[%s6 + $0x3d0] sm:$0xff]
  %v2570 = vld [vmem:[%s6 + $0x3d8] sm:$0xff]
  %v2571 = vld [vmem:[%s6 + $0x3e0] sm:$0xff]
  %v2572 = vld [vmem:[%s6 + $0x3e8] sm:$0xff]
  %v2573 = vld [vmem:[%s6 + $0x3f0] sm:$0xff]
  %v2574 = vld [vmem:[%s6 + $0x3f8] sm:$0xff]
  %v2575 = vld [vmem:[%s6 + $0x400] sm:$0xff]
  %v2576 = vld [vmem:[%s6 + $0x408] sm:$0xff]
  %v2577 = vld [vmem:[%s6 + $0x410] sm:$0xff]
  %v2578 = vld [vmem:[%s6 + $0x418] sm:$0xff]
  %2595 = vrot.lane.b32.xlu0 %v181, 32
  %v2596 = vpop.permute.xlu0 %2595
  %2597 = vrot.lane.b32.xlu0 %v187, 32
  %v2598 = vpop.permute.xlu0 %2597
  %2599 = vrot.lane.b32.xlu0 %v193, 32
  %v2600 = vpop.permute.xlu0 %2599
  %2601 = vrot.lane.b32.xlu0 %v199, 32
  %v2602 = vpop.permute.xlu0 %2601
  %2603 = vrot.lane.b32.xlu0 %v205, 32
  %v2604 = vpop.permute.xlu0 %2603
  %2605 = vrot.lane.b32.xlu0 %v211, 32
  %v2606 = vpop.permute.xlu0 %2605
  %2607 = vrot.lane.b32.xlu0 %v217, 32
  %v2608 = vpop.permute.xlu0 %2607
  %2609 = vrot.lane.b32.xlu0 %v223, 32
  %v2610 = vpop.permute.xlu0 %2609
  %2611 = vrot.lane.b32.xlu0 %v229, 32
  %v2612 = vpop.permute.xlu0 %2611
  %2613 = vrot.lane.b32.xlu0 %v235, 32
  %v2614 = vpop.permute.xlu0 %2613
  %2615 = vrot.lane.b32.xlu0 %v241, 32
  %v2616 = vpop.permute.xlu0 %2615
  %2617 = vrot.lane.b32.xlu0 %v247, 32
  %v2618 = vpop.permute.xlu0 %2617
  %2619 = vrot.lane.b32.xlu0 %v253, 32
  %v2620 = vpop.permute.xlu0 %2619
  %2621 = vrot.lane.b32.xlu0 %v259, 32
  %v2622 = vpop.permute.xlu0 %2621
  %2623 = vrot.lane.b32.xlu0 %v265, 32
  %v2624 = vpop.permute.xlu0 %2623
  %2625 = vrot.lane.b32.xlu0 %v271, 32
  %v2626 = vpop.permute.xlu0 %2625
  %v2644 = vsel %vm1626, %v985, 0
  %v2647 = vsel %vm1626, %v991, 0
  %v2650 = vsel %vm1626, %v997, 0
  %v2653 = vsel %vm1626, %v1003, 0
  %v2656 = vsel %vm1626, %v1009, 0
  %v2659 = vsel %vm1626, %v1015, 0
  %v2662 = vsel %vm1626, %v1021, 0
  %v2665 = vsel %vm1626, %v1027, 0
  %v2668 = vsel %vm1626, %v1033, 0
  %v2671 = vsel %vm1626, %v1039, 0
  %v2674 = vsel %vm1626, %v1045, 0
  %v2677 = vsel %vm1626, %v1051, 0
  %v2680 = vsel %vm1626, %v1057, 0
  %v2683 = vsel %vm1626, %v1063, 0
  %v2686 = vsel %vm1626, %v1069, 0
  %v2689 = vsel %vm1626, %v1075, 0
  %2691 = vmatprep.subr.mxu0 0.0
  %2692 = vmatpush1.msra.mxu0 %v2462
  %2693 = vmatprep.subr.mxu0 0.0
  %2694 = vmatpush1.msra.mxu0 %v2461
  %2695 = vmatprep.subr.mxu0 0.0
  %2696 = vmatpush1.msra.mxu0 %v2460
  %2697 = vmatprep.subr.mxu0 0.0
  %2698 = vmatpush1.msra.mxu0 %v2459
  %2699 = vmatprep.subr.mxu0 0.0
  %2700 = vmatpush1.msra.mxu0 %v2458
  %2701 = vmatprep.subr.mxu0 0.0
  %2702 = vmatpush1.msra.mxu0 %v2457
  %2703 = vmatprep.subr.mxu0 0.0
  %2704 = vmatpush1.msra.mxu0 %v2456
  %2705 = vmatprep.subr.mxu0 0.0
  %2706 = vmatpush1.msra.mxu0 %v2455
  %2707 = vmatprep.subr.mxu0 0.0
  %2708 = vmatpush1.msra.mxu0 %v2454
  %2709 = vmatprep.subr.mxu0 0.0
  %2710 = vmatpush1.msra.mxu0 %v2453
  %2711 = vmatprep.subr.mxu0 0.0
  %2712 = vmatpush1.msra.mxu0 %v2452
  %2713 = vmatprep.subr.mxu0 0.0
  %2714 = vmatpush1.msra.mxu0 %v2451
  %2715 = vmatprep.subr.mxu0 0.0
  %2716 = vmatpush1.msra.mxu0 %v2450
  %2717 = vmatprep.subr.mxu0 0.0
  %2718 = vmatpush1.msra.mxu0 %v2449
  %2719 = vmatprep.subr.mxu0 0.0
  %2720 = vmatpush1.msra.mxu0 %v2448
  %2721 = vmatprep.subr.mxu0 0.0
  %2722 = vmatpush1.msra.mxu0 %v2447
  %2723 = vmatprep.subr.mxu0 0.0
  %2724 = vmatpush2.msra.mxu0 %v2478
  %2725 = vmatprep.subr.mxu0 0.0
  %2726 = vmatpush2.msra.mxu0 %v2477
  %2727 = vmatprep.subr.mxu0 0.0
  %2728 = vmatpush2.msra.mxu0 %v2476
  %2729 = vmatprep.subr.mxu0 0.0
  %2730 = vmatpush2.msra.mxu0 %v2475
  %2731 = vmatprep.subr.mxu0 0.0
  %2732 = vmatpush2.msra.mxu0 %v2474
  %2733 = vmatprep.subr.mxu0 0.0
  %2734 = vmatpush2.msra.mxu0 %v2473
  %2735 = vmatprep.subr.mxu0 0.0
  %2736 = vmatpush2.msra.mxu0 %v2472
  %2737 = vmatprep.subr.mxu0 0.0
  %2738 = vmatpush2.msra.mxu0 %v2471
  %2739 = vmatprep.subr.mxu0 0.0
  %2740 = vmatpush2.msra.mxu0 %v2470
  %2741 = vmatprep.subr.mxu0 0.0
  %2742 = vmatpush2.msra.mxu0 %v2469
  %2743 = vmatprep.subr.mxu0 0.0
  %2744 = vmatpush2.msra.mxu0 %v2468
  %2745 = vmatprep.subr.mxu0 0.0
  %2746 = vmatpush2.msra.mxu0 %v2467
  %2747 = vmatprep.subr.mxu0 0.0
  %2748 = vmatpush2.msra.mxu0 %v2466
  %2749 = vmatprep.subr.mxu0 0.0
  %2750 = vmatpush2.msra.mxu0 %v2465
  %2751 = vmatprep.subr.mxu0 0.0
  %2752 = vmatpush2.msra.mxu0 %v2464
  %2753 = vmatprep.subr.mxu0 0.0
  %2754 = vmatpush2.msra.mxu0 %v2463
  %2755 = vmatprep.mubr.f32.mxu0 %v2320
  %2756 = vmatmul.mubr.f32.gmra.mxu0 %v2319
  %v2757 = vpop.f32.mrf.mxu0
  %v2758 = vadd.f32 %v2596, %v2757
  %v2759 = vpop.f32.mrf.mxu0
  %2760 = vmatprep.mubr.f32.mxu0 %v2328
  %2761 = vmatmul.mubr.f32.gmra.mxu0 %v2327
  %v2762 = vpop.f32.mrf.mxu0
  %v2763 = vadd.f32 %v2598, %v2762
  %v2764 = vpop.f32.mrf.mxu0
  %2765 = vmatprep.mubr.f32.mxu0 %v2336
  %2766 = vmatmul.mubr.f32.gmra.mxu0 %v2335
  %v2767 = vpop.f32.mrf.mxu0
  %v2768 = vadd.f32 %v2600, %v2767
  %v2769 = vpop.f32.mrf.mxu0
  %2770 = vmatprep.mubr.f32.mxu0 %v2344
  %2771 = vmatmul.mubr.f32.gmra.mxu0 %v2343
  %v2772 = vpop.f32.mrf.mxu0
  %v2773 = vadd.f32 %v2602, %v2772
  %v2774 = vpop.f32.mrf.mxu0
  %2775 = vmatprep.mubr.f32.mxu0 %v2352
  %2776 = vmatmul.mubr.f32.gmra.mxu0 %v2351
  %v2777 = vpop.f32.mrf.mxu0
  %v2778 = vadd.f32 %v2604, %v2777
  %v2779 = vpop.f32.mrf.mxu0
  %2780 = vmatprep.mubr.f32.mxu0 %v2360
  %2781 = vmatmul.mubr.f32.gmra.mxu0 %v2359
  %v2782 = vpop.f32.mrf.mxu0
  %v2783 = vadd.f32 %v2606, %v2782
  %v2784 = vpop.f32.mrf.mxu0
  %2785 = vmatprep.mubr.f32.mxu0 %v2368
  %2786 = vmatmul.mubr.f32.gmra.mxu0 %v2367
  %v2787 = vpop.f32.mrf.mxu0
  %v2788 = vadd.f32 %v2608, %v2787
  %v2789 = vpop.f32.mrf.mxu0
  %2790 = vmatprep.mubr.f32.mxu0 %v2376
  %2791 = vmatmul.mubr.f32.gmra.mxu0 %v2375
  %v2792 = vpop.f32.mrf.mxu0
  %v2793 = vadd.f32 %v2610, %v2792
  %v2794 = vpop.f32.mrf.mxu0
  %2795 = vmatprep.mubr.f32.mxu0 %v2384
  %2796 = vmatmul.mubr.f32.gmra.mxu0 %v2383
  %v2797 = vpop.f32.mrf.mxu0
  %v2798 = vadd.f32 %v2612, %v2797
  %v2799 = vpop.f32.mrf.mxu0
  %2800 = vmatprep.mubr.f32.mxu0 %v2392
  %2801 = vmatmul.mubr.f32.gmra.mxu0 %v2391
  %v2802 = vpop.f32.mrf.mxu0
  %v2803 = vadd.f32 %v2614, %v2802
  %v2804 = vpop.f32.mrf.mxu0
  %2805 = vmatprep.mubr.f32.mxu0 %v2400
  %2806 = vmatmul.mubr.f32.gmra.mxu0 %v2399
  %v2807 = vpop.f32.mrf.mxu0
  %v2808 = vadd.f32 %v2616, %v2807
  %v2809 = vpop.f32.mrf.mxu0
  %2810 = vmatprep.mubr.f32.mxu0 %v2408
  %2811 = vmatmul.mubr.f32.gmra.mxu0 %v2407
  %v2812 = vpop.f32.mrf.mxu0
  %v2813 = vadd.f32 %v2618, %v2812
  %v2814 = vpop.f32.mrf.mxu0
  %2815 = vmatprep.mubr.f32.mxu0 %v2416
  %2816 = vmatmul.mubr.f32.gmra.mxu0 %v2415
  %v2817 = vpop.f32.mrf.mxu0
  %v2818 = vadd.f32 %v2620, %v2817
  %v2819 = vpop.f32.mrf.mxu0
  %2820 = vmatprep.mubr.f32.mxu0 %v2424
  %2821 = vmatmul.mubr.f32.gmra.mxu0 %v2423
  %v2822 = vpop.f32.mrf.mxu0
  %v2823 = vadd.f32 %v2622, %v2822
  %v2824 = vpop.f32.mrf.mxu0
  %2825 = vmatprep.mubr.f32.mxu0 %v2432
  %2826 = vmatmul.mubr.f32.gmra.mxu0 %v2431
  %v2827 = vpop.f32.mrf.mxu0
  %v2828 = vadd.f32 %v2624, %v2827
  %v2829 = vpop.f32.mrf.mxu0
  %2830 = vmatprep.mubr.f32.mxu0 %v2440
  %2831 = vmatmul.mubr.f32.gmra.mxu0 %v2439
  %v2832 = vpop.f32.mrf.mxu0
  %v2833 = vadd.f32 %v2626, %v2832
  %v2834 = vpop.f32.mrf.mxu0
  %2835 = vdwg.mxu0
  %2836 = vmatprep.subr.mxu0 0.0
  %2837 = vmatpush1.msra.mxu0 %v2494
  %2838 = vmatprep.subr.mxu0 0.0
  %2839 = vmatpush1.msra.mxu0 %v2493
  %2840 = vmatprep.subr.mxu0 0.0
  %2841 = vmatpush1.msra.mxu0 %v2492
  %2842 = vmatprep.subr.mxu0 0.0
  %2843 = vmatpush1.msra.mxu0 %v2491
  %2844 = vmatprep.subr.mxu0 0.0
  %2845 = vmatpush1.msra.mxu0 %v2490
  %2846 = vmatprep.subr.mxu0 0.0
  %2847 = vmatpush1.msra.mxu0 %v2489
  %2848 = vmatprep.subr.mxu0 0.0
  %2849 = vmatpush1.msra.mxu0 %v2488
  %2850 = vmatprep.subr.mxu0 0.0
  %2851 = vmatpush1.msra.mxu0 %v2487
  %2852 = vmatprep.subr.mxu0 0.0
  %2853 = vmatpush1.msra.mxu0 %v2486
  %2854 = vmatprep.subr.mxu0 0.0
  %2855 = vmatpush1.msra.mxu0 %v2485
  %2856 = vmatprep.subr.mxu0 0.0
  %2857 = vmatpush1.msra.mxu0 %v2484
  %2858 = vmatprep.subr.mxu0 0.0
  %2859 = vmatpush1.msra.mxu0 %v2483
  %2860 = vmatprep.subr.mxu0 0.0
  %2861 = vmatpush1.msra.mxu0 %v2482
  %2862 = vmatprep.subr.mxu0 0.0
  %2863 = vmatpush1.msra.mxu0 %v2481
  %2864 = vmatprep.subr.mxu0 0.0
  %2865 = vmatpush1.msra.mxu0 %v2480
  %2866 = vmatprep.subr.mxu0 0.0
  %2867 = vmatpush1.msra.mxu0 %v2479
  %2868 = vmatprep.subr.mxu0 0.0
  %2869 = vmatpush2.msra.mxu0 %v2510
  %2870 = vmatprep.subr.mxu0 0.0
  %2871 = vmatpush2.msra.mxu0 %v2509
  %2872 = vmatprep.subr.mxu0 0.0
  %2873 = vmatpush2.msra.mxu0 %v2508
  %2874 = vmatprep.subr.mxu0 0.0
  %2875 = vmatpush2.msra.mxu0 %v2507
  %2876 = vmatprep.subr.mxu0 0.0
  %2877 = vmatpush2.msra.mxu0 %v2506
  %2878 = vmatprep.subr.mxu0 0.0
  %2879 = vmatpush2.msra.mxu0 %v2505
  %2880 = vmatprep.subr.mxu0 0.0
  %2881 = vmatpush2.msra.mxu0 %v2504
  %2882 = vmatprep.subr.mxu0 0.0
  %2883 = vmatpush2.msra.mxu0 %v2503
  %2884 = vmatprep.subr.mxu0 0.0
  %2885 = vmatpush2.msra.mxu0 %v2502
  %2886 = vmatprep.subr.mxu0 0.0
  %2887 = vmatpush2.msra.mxu0 %v2501
  %2888 = vmatprep.subr.mxu0 0.0
  %2889 = vmatpush2.msra.mxu0 %v2500
  %2890 = vmatprep.subr.mxu0 0.0
  %2891 = vmatpush2.msra.mxu0 %v2499
  %2892 = vmatprep.subr.mxu0 0.0
  %2893 = vmatpush2.msra.mxu0 %v2498
  %2894 = vmatprep.subr.mxu0 0.0
  %2895 = vmatpush2.msra.mxu0 %v2497
  %2896 = vmatprep.subr.mxu0 0.0
  %2897 = vmatpush2.msra.mxu0 %v2496
  %2898 = vmatprep.subr.mxu0 0.0
  %2899 = vmatpush2.msra.mxu0 %v2495
  %2900 = vmatprep.mubr.f32.mxu0 %v2322
  %2901 = vmatmul.mubr.f32.gmra.mxu0 %v2321
  %v2902 = vpop.f32.mrf.mxu0
  %v2903 = vadd.f32 %v2758, %v2902
  %v2904 = vpop.f32.mrf.mxu0
  %2905 = vmatprep.mubr.f32.mxu0 %v2330
  %2906 = vmatmul.mubr.f32.gmra.mxu0 %v2329
  %v2907 = vpop.f32.mrf.mxu0
  %v2908 = vadd.f32 %v2763, %v2907
  %v2909 = vpop.f32.mrf.mxu0
  %2910 = vmatprep.mubr.f32.mxu0 %v2338
  %2911 = vmatmul.mubr.f32.gmra.mxu0 %v2337
  %v2912 = vpop.f32.mrf.mxu0
  %v2913 = vadd.f32 %v2768, %v2912
  %v2914 = vpop.f32.mrf.mxu0
  %2915 = vmatprep.mubr.f32.mxu0 %v2346
  %2916 = vmatmul.mubr.f32.gmra.mxu0 %v2345
  %v2917 = vpop.f32.mrf.mxu0
  %v2918 = vadd.f32 %v2773, %v2917
  %v2919 = vpop.f32.mrf.mxu0
  %2920 = vmatprep.mubr.f32.mxu0 %v2354
  %2921 = vmatmul.mubr.f32.gmra.mxu0 %v2353
  %v2922 = vpop.f32.mrf.mxu0
  %v2923 = vadd.f32 %v2778, %v2922
  %v2924 = vpop.f32.mrf.mxu0
  %2925 = vmatprep.mubr.f32.mxu0 %v2362
  %2926 = vmatmul.mubr.f32.gmra.mxu0 %v2361
  %v2927 = vpop.f32.mrf.mxu0
  %v2928 = vadd.f32 %v2783, %v2927
  %v2929 = vpop.f32.mrf.mxu0
  %2930 = vmatprep.mubr.f32.mxu0 %v2370
  %2931 = vmatmul.mubr.f32.gmra.mxu0 %v2369
  %v2932 = vpop.f32.mrf.mxu0
  %v2933 = vadd.f32 %v2788, %v2932
  %v2934 = vpop.f32.mrf.mxu0
  %2935 = vmatprep.mubr.f32.mxu0 %v2378
  %2936 = vmatmul.mubr.f32.gmra.mxu0 %v2377
  %v2937 = vpop.f32.mrf.mxu0
  %v2938 = vadd.f32 %v2793, %v2937
  %v2939 = vpop.f32.mrf.mxu0
  %2940 = vmatprep.mubr.f32.mxu0 %v2386
  %2941 = vmatmul.mubr.f32.gmra.mxu0 %v2385
  %v2942 = vpop.f32.mrf.mxu0
  %v2943 = vadd.f32 %v2798, %v2942
  %v2944 = vpop.f32.mrf.mxu0
  %2945 = vmatprep.mubr.f32.mxu0 %v2394
  %2946 = vmatmul.mubr.f32.gmra.mxu0 %v2393
  %v2947 = vpop.f32.mrf.mxu0
  %v2948 = vadd.f32 %v2803, %v2947
  %v2949 = vpop.f32.mrf.mxu0
  %2950 = vmatprep.mubr.f32.mxu0 %v2402
  %2951 = vmatmul.mubr.f32.gmra.mxu0 %v2401
  %v2952 = vpop.f32.mrf.mxu0
  %v2953 = vadd.f32 %v2808, %v2952
  %v2954 = vpop.f32.mrf.mxu0
  %2955 = vmatprep.mubr.f32.mxu0 %v2410
  %2956 = vmatmul.mubr.f32.gmra.mxu0 %v2409
  %v2957 = vpop.f32.mrf.mxu0
  %v2958 = vadd.f32 %v2813, %v2957
  %v2959 = vpop.f32.mrf.mxu0
  %2960 = vmatprep.mubr.f32.mxu0 %v2418
  %2961 = vmatmul.mubr.f32.gmra.mxu0 %v2417
  %v2962 = vpop.f32.mrf.mxu0
  %v2963 = vadd.f32 %v2818, %v2962
  %v2964 = vpop.f32.mrf.mxu0
  %2965 = vmatprep.mubr.f32.mxu0 %v2426
  %2966 = vmatmul.mubr.f32.gmra.mxu0 %v2425
  %v2967 = vpop.f32.mrf.mxu0
  %v2968 = vadd.f32 %v2823, %v2967
  %v2969 = vpop.f32.mrf.mxu0
  %2970 = vmatprep.mubr.f32.mxu0 %v2434
  %2971 = vmatmul.mubr.f32.gmra.mxu0 %v2433
  %v2972 = vpop.f32.mrf.mxu0
  %v2973 = vadd.f32 %v2828, %v2972
  %v2974 = vpop.f32.mrf.mxu0
  %2975 = vmatprep.mubr.f32.mxu0 %v2442
  %2976 = vmatmul.mubr.f32.gmra.mxu0 %v2441
  %v2977 = vpop.f32.mrf.mxu0
  %v2978 = vadd.f32 %v2833, %v2977
  %v2979 = vpop.f32.mrf.mxu0
  %2980 = vdwg.mxu0
  %2981 = vmatprep.subr.mxu0 0.0
  %2982 = vmatpush1.msra.mxu0 %v2526
  %2983 = vmatprep.subr.mxu0 0.0
  %2984 = vmatpush1.msra.mxu0 %v2525
  %2985 = vmatprep.subr.mxu0 0.0
  %2986 = vmatpush1.msra.mxu0 %v2524
  %2987 = vmatprep.subr.mxu0 0.0
  %2988 = vmatpush1.msra.mxu0 %v2523
  %2989 = vmatprep.subr.mxu0 0.0
  %2990 = vmatpush1.msra.mxu0 %v2522
  %2991 = vmatprep.subr.mxu0 0.0
  %2992 = vmatpush1.msra.mxu0 %v2521
  %2993 = vmatprep.subr.mxu0 0.0
  %2994 = vmatpush1.msra.mxu0 %v2520
  %2995 = vmatprep.subr.mxu0 0.0
  %2996 = vmatpush1.msra.mxu0 %v2519
  %2997 = vmatprep.subr.mxu0 0.0
  %2998 = vmatpush1.msra.mxu0 %v2518
  %2999 = vmatprep.subr.mxu0 0.0
  %3000 = vmatpush1.msra.mxu0 %v2517
  %3001 = vmatprep.subr.mxu0 0.0
  %3002 = vmatpush1.msra.mxu0 %v2516
  %3003 = vmatprep.subr.mxu0 0.0
  %3004 = vmatpush1.msra.mxu0 %v2515
  %3005 = vmatprep.subr.mxu0 0.0
  %3006 = vmatpush1.msra.mxu0 %v2514
  %3007 = vmatprep.subr.mxu0 0.0
  %3008 = vmatpush1.msra.mxu0 %v2513
  %3009 = vmatprep.subr.mxu0 0.0
  %3010 = vmatpush1.msra.mxu0 %v2512
  %3011 = vmatprep.subr.mxu0 0.0
  %3012 = vmatpush1.msra.mxu0 %v2511
  %3013 = vmatprep.subr.mxu0 0.0
  %3014 = vmatpush2.msra.mxu0 %v2542
  %3015 = vmatprep.subr.mxu0 0.0
  %3016 = vmatpush2.msra.mxu0 %v2541
  %3017 = vmatprep.subr.mxu0 0.0
  %3018 = vmatpush2.msra.mxu0 %v2540
  %3019 = vmatprep.subr.mxu0 0.0
  %3020 = vmatpush2.msra.mxu0 %v2539
  %3021 = vmatprep.subr.mxu0 0.0
  %3022 = vmatpush2.msra.mxu0 %v2538
  %3023 = vmatprep.subr.mxu0 0.0
  %3024 = vmatpush2.msra.mxu0 %v2537
  %3025 = vmatprep.subr.mxu0 0.0
  %3026 = vmatpush2.msra.mxu0 %v2536
  %3027 = vmatprep.subr.mxu0 0.0
  %3028 = vmatpush2.msra.mxu0 %v2535
  %3029 = vmatprep.subr.mxu0 0.0
  %3030 = vmatpush2.msra.mxu0 %v2534
  %3031 = vmatprep.subr.mxu0 0.0
  %3032 = vmatpush2.msra.mxu0 %v2533
  %3033 = vmatprep.subr.mxu0 0.0
  %3034 = vmatpush2.msra.mxu0 %v2532
  %3035 = vmatprep.subr.mxu0 0.0
  %3036 = vmatpush2.msra.mxu0 %v2531
  %3037 = vmatprep.subr.mxu0 0.0
  %3038 = vmatpush2.msra.mxu0 %v2530
  %3039 = vmatprep.subr.mxu0 0.0
  %3040 = vmatpush2.msra.mxu0 %v2529
  %3041 = vmatprep.subr.mxu0 0.0
  %3042 = vmatpush2.msra.mxu0 %v2528
  %3043 = vmatprep.subr.mxu0 0.0
  %3044 = vmatpush2.msra.mxu0 %v2527
  %3045 = vmatprep.mubr.f32.mxu0 %v2324
  %3046 = vmatmul.mubr.f32.gmra.mxu0 %v2323
  %v3047 = vpop.f32.mrf.mxu0
  %v3048 = vadd.f32 %v2903, %v3047
  %v3049 = vpop.f32.mrf.mxu0
  %3050 = vmatprep.mubr.f32.mxu0 %v2332
  %3051 = vmatmul.mubr.f32.gmra.mxu0 %v2331
  %v3052 = vpop.f32.mrf.mxu0
  %v3053 = vadd.f32 %v2908, %v3052
  %v3054 = vpop.f32.mrf.mxu0
  %3055 = vmatprep.mubr.f32.mxu0 %v2340
  %3056 = vmatmul.mubr.f32.gmra.mxu0 %v2339
  %v3057 = vpop.f32.mrf.mxu0
  %v3058 = vadd.f32 %v2913, %v3057
  %v3059 = vpop.f32.mrf.mxu0
  %3060 = vmatprep.mubr.f32.mxu0 %v2348
  %3061 = vmatmul.mubr.f32.gmra.mxu0 %v2347
  %v3062 = vpop.f32.mrf.mxu0
  %v3063 = vadd.f32 %v2918, %v3062
  %v3064 = vpop.f32.mrf.mxu0
  %3065 = vmatprep.mubr.f32.mxu0 %v2356
  %3066 = vmatmul.mubr.f32.gmra.mxu0 %v2355
  %v3067 = vpop.f32.mrf.mxu0
  %v3068 = vadd.f32 %v2923, %v3067
  %v3069 = vpop.f32.mrf.mxu0
  %3070 = vmatprep.mubr.f32.mxu0 %v2364
  %3071 = vmatmul.mubr.f32.gmra.mxu0 %v2363
  %v3072 = vpop.f32.mrf.mxu0
  %v3073 = vadd.f32 %v2928, %v3072
  %v3074 = vpop.f32.mrf.mxu0
  %3075 = vmatprep.mubr.f32.mxu0 %v2372
  %3076 = vmatmul.mubr.f32.gmra.mxu0 %v2371
  %v3077 = vpop.f32.mrf.mxu0
  %v3078 = vadd.f32 %v2933, %v3077
  %v3079 = vpop.f32.mrf.mxu0
  %3080 = vmatprep.mubr.f32.mxu0 %v2380
  %3081 = vmatmul.mubr.f32.gmra.mxu0 %v2379
  %v3082 = vpop.f32.mrf.mxu0
  %v3083 = vadd.f32 %v2938, %v3082
  %v3084 = vpop.f32.mrf.mxu0
  %3085 = vmatprep.mubr.f32.mxu0 %v2388
  %3086 = vmatmul.mubr.f32.gmra.mxu0 %v2387
  %v3087 = vpop.f32.mrf.mxu0
  %v3088 = vadd.f32 %v2943, %v3087
  %v3089 = vpop.f32.mrf.mxu0
  %3090 = vmatprep.mubr.f32.mxu0 %v2396
  %3091 = vmatmul.mubr.f32.gmra.mxu0 %v2395
  %v3092 = vpop.f32.mrf.mxu0
  %v3093 = vadd.f32 %v2948, %v3092
  %v3094 = vpop.f32.mrf.mxu0
  %3095 = vmatprep.mubr.f32.mxu0 %v2404
  %3096 = vmatmul.mubr.f32.gmra.mxu0 %v2403
  %v3097 = vpop.f32.mrf.mxu0
  %v3098 = vadd.f32 %v2953, %v3097
  %v3099 = vpop.f32.mrf.mxu0
  %3100 = vmatprep.mubr.f32.mxu0 %v2412
  %3101 = vmatmul.mubr.f32.gmra.mxu0 %v2411
  %v3102 = vpop.f32.mrf.mxu0
  %v3103 = vadd.f32 %v2958, %v3102
  %v3104 = vpop.f32.mrf.mxu0
  %3105 = vmatprep.mubr.f32.mxu0 %v2420
  %3106 = vmatmul.mubr.f32.gmra.mxu0 %v2419
  %v3107 = vpop.f32.mrf.mxu0
  %v3108 = vadd.f32 %v2963, %v3107
  %v3109 = vpop.f32.mrf.mxu0
  %3110 = vmatprep.mubr.f32.mxu0 %v2428
  %3111 = vmatmul.mubr.f32.gmra.mxu0 %v2427
  %v3112 = vpop.f32.mrf.mxu0
  %v3113 = vadd.f32 %v2968, %v3112
  %v3114 = vpop.f32.mrf.mxu0
  %3115 = vmatprep.mubr.f32.mxu0 %v2436
  %3116 = vmatmul.mubr.f32.gmra.mxu0 %v2435
  %v3117 = vpop.f32.mrf.mxu0
  %v3118 = vadd.f32 %v2973, %v3117
  %v3119 = vpop.f32.mrf.mxu0
  %3120 = vmatprep.mubr.f32.mxu0 %v2444
  %3121 = vmatmul.mubr.f32.gmra.mxu0 %v2443
  %v3122 = vpop.f32.mrf.mxu0
  %v3123 = vadd.f32 %v2978, %v3122
  %v3124 = vpop.f32.mrf.mxu0
  %3125 = vdwg.mxu0
  %3126 = vmatprep.subr.mxu0 0.0
  %3127 = vmatpush1.msra.mxu0 %v2558
  %3128 = vmatprep.subr.mxu0 0.0
  %3129 = vmatpush1.msra.mxu0 %v2557
  %3130 = vmatprep.subr.mxu0 0.0
  %3131 = vmatpush1.msra.mxu0 %v2556
  %3132 = vmatprep.subr.mxu0 0.0
  %3133 = vmatpush1.msra.mxu0 %v2555
  %3134 = vmatprep.subr.mxu0 0.0
  %3135 = vmatpush1.msra.mxu0 %v2554
  %3136 = vmatprep.subr.mxu0 0.0
  %3137 = vmatpush1.msra.mxu0 %v2553
  %3138 = vmatprep.subr.mxu0 0.0
  %3139 = vmatpush1.msra.mxu0 %v2552
  %3140 = vmatprep.subr.mxu0 0.0
  %3141 = vmatpush1.msra.mxu0 %v2551
  %3142 = vmatprep.subr.mxu0 0.0
  %3143 = vmatpush1.msra.mxu0 %v2550
  %3144 = vmatprep.subr.mxu0 0.0
  %3145 = vmatpush1.msra.mxu0 %v2549
  %3146 = vmatprep.subr.mxu0 0.0
  %3147 = vmatpush1.msra.mxu0 %v2548
  %3148 = vmatprep.subr.mxu0 0.0
  %3149 = vmatpush1.msra.mxu0 %v2547
  %3150 = vmatprep.subr.mxu0 0.0
  %3151 = vmatpush1.msra.mxu0 %v2546
  %3152 = vmatprep.subr.mxu0 0.0
  %3153 = vmatpush1.msra.mxu0 %v2545
  %3154 = vmatprep.subr.mxu0 0.0
  %3155 = vmatpush1.msra.mxu0 %v2544
  %3156 = vmatprep.subr.mxu0 0.0
  %3157 = vmatpush1.msra.mxu0 %v2543
  %3158 = vmatprep.subr.mxu0 0.0
  %3159 = vmatpush2.msra.mxu0 %v2574
  %3160 = vmatprep.subr.mxu0 0.0
  %3161 = vmatpush2.msra.mxu0 %v2573
  %3162 = vmatprep.subr.mxu0 0.0
  %3163 = vmatpush2.msra.mxu0 %v2572
  %3164 = vmatprep.subr.mxu0 0.0
  %3165 = vmatpush2.msra.mxu0 %v2571
  %3166 = vmatprep.subr.mxu0 0.0
  %3167 = vmatpush2.msra.mxu0 %v2570
  %3168 = vmatprep.subr.mxu0 0.0
  %3169 = vmatpush2.msra.mxu0 %v2569
  %3170 = vmatprep.subr.mxu0 0.0
  %3171 = vmatpush2.msra.mxu0 %v2568
  %3172 = vmatprep.subr.mxu0 0.0
  %3173 = vmatpush2.msra.mxu0 %v2567
  %3174 = vmatprep.subr.mxu0 0.0
  %3175 = vmatpush2.msra.mxu0 %v2566
  %3176 = vmatprep.subr.mxu0 0.0
  %3177 = vmatpush2.msra.mxu0 %v2565
  %3178 = vmatprep.subr.mxu0 0.0
  %3179 = vmatpush2.msra.mxu0 %v2564
  %3180 = vmatprep.subr.mxu0 0.0
  %3181 = vmatpush2.msra.mxu0 %v2563
  %3182 = vmatprep.subr.mxu0 0.0
  %3183 = vmatpush2.msra.mxu0 %v2562
  %3184 = vmatprep.subr.mxu0 0.0
  %3185 = vmatpush2.msra.mxu0 %v2561
  %3186 = vmatprep.subr.mxu0 0.0
  %3187 = vmatpush2.msra.mxu0 %v2560
  %3188 = vmatprep.subr.mxu0 0.0
  %3189 = vmatpush2.msra.mxu0 %v2559
  %3190 = vmatprep.mubr.f32.mxu0 %v2326
  %3191 = vmatmul.mubr.f32.gmra.mxu0 %v2325
  %v3192 = vpop.f32.mrf.mxu0
  %v3193 = vadd.f32 %v3048, %v3192
  %v3194 = vpop.f32.mrf.mxu0
  %3195 = vmatprep.mubr.f32.mxu0 %v2334
  %3196 = vmatmul.mubr.f32.gmra.mxu0 %v2333
  %v3197 = vpop.f32.mrf.mxu0
  %v3198 = vadd.f32 %v3053, %v3197
  %v3199 = vpop.f32.mrf.mxu0
  %3200 = vmatprep.mubr.f32.mxu0 %v2342
  %3201 = vmatmul.mubr.f32.gmra.mxu0 %v2341
  %v3202 = vpop.f32.mrf.mxu0
  %v3203 = vadd.f32 %v3058, %v3202
  %v3204 = vpop.f32.mrf.mxu0
  %3205 = vmatprep.mubr.f32.mxu0 %v2350
  %3206 = vmatmul.mubr.f32.gmra.mxu0 %v2349
  %v3207 = vpop.f32.mrf.mxu0
  %v3208 = vadd.f32 %v3063, %v3207
  %v3209 = vpop.f32.mrf.mxu0
  %3210 = vmatprep.mubr.f32.mxu0 %v2358
  %3211 = vmatmul.mubr.f32.gmra.mxu0 %v2357
  %v3212 = vpop.f32.mrf.mxu0
  %v3213 = vadd.f32 %v3068, %v3212
  %v3214 = vpop.f32.mrf.mxu0
  %3215 = vmatprep.mubr.f32.mxu0 %v2366
  %3216 = vmatmul.mubr.f32.gmra.mxu0 %v2365
  %v3217 = vpop.f32.mrf.mxu0
  %v3218 = vadd.f32 %v3073, %v3217
  %v3219 = vpop.f32.mrf.mxu0
  %3220 = vmatprep.mubr.f32.mxu0 %v2374
  %3221 = vmatmul.mubr.f32.gmra.mxu0 %v2373
  %v3222 = vpop.f32.mrf.mxu0
  %v3223 = vadd.f32 %v3078, %v3222
  %v3224 = vpop.f32.mrf.mxu0
  %3225 = vmatprep.mubr.f32.mxu0 %v2382
  %3226 = vmatmul.mubr.f32.gmra.mxu0 %v2381
  %v3227 = vpop.f32.mrf.mxu0
  %v3228 = vadd.f32 %v3083, %v3227
  %v3229 = vpop.f32.mrf.mxu0
  %3230 = vmatprep.mubr.f32.mxu0 %v2390
  %3231 = vmatmul.mubr.f32.gmra.mxu0 %v2389
  %v3232 = vpop.f32.mrf.mxu0
  %v3233 = vadd.f32 %v3088, %v3232
  %v3234 = vpop.f32.mrf.mxu0
  %3235 = vmatprep.mubr.f32.mxu0 %v2398
  %3236 = vmatmul.mubr.f32.gmra.mxu0 %v2397
  %v3237 = vpop.f32.mrf.mxu0
  %v3238 = vadd.f32 %v3093, %v3237
  %v3239 = vpop.f32.mrf.mxu0
  %3240 = vmatprep.mubr.f32.mxu0 %v2406
  %3241 = vmatmul.mubr.f32.gmra.mxu0 %v2405
  %v3242 = vpop.f32.mrf.mxu0
  %v3243 = vadd.f32 %v3098, %v3242
  %v3244 = vpop.f32.mrf.mxu0
  %3245 = vmatprep.mubr.f32.mxu0 %v2414
  %3246 = vmatmul.mubr.f32.gmra.mxu0 %v2413
  %v3247 = vpop.f32.mrf.mxu0
  %v3248 = vadd.f32 %v3103, %v3247
  %v3249 = vpop.f32.mrf.mxu0
  %3250 = vmatprep.mubr.f32.mxu0 %v2422
  %3251 = vmatmul.mubr.f32.gmra.mxu0 %v2421
  %v3252 = vpop.f32.mrf.mxu0
  %v3253 = vadd.f32 %v3108, %v3252
  %v3254 = vpop.f32.mrf.mxu0
  %3255 = vmatprep.mubr.f32.mxu0 %v2430
  %3256 = vmatmul.mubr.f32.gmra.mxu0 %v2429
  %v3257 = vpop.f32.mrf.mxu0
  %v3258 = vadd.f32 %v3113, %v3257
  %v3259 = vpop.f32.mrf.mxu0
  %3260 = vmatprep.mubr.f32.mxu0 %v2438
  %3261 = vmatmul.mubr.f32.gmra.mxu0 %v2437
  %v3262 = vpop.f32.mrf.mxu0
  %v3263 = vadd.f32 %v3118, %v3262
  %v3264 = vpop.f32.mrf.mxu0
  %3265 = vmatprep.mubr.f32.mxu0 %v2446
  %3266 = vmatmul.mubr.f32.gmra.mxu0 %v2445
  %v3267 = vpop.f32.mrf.mxu0
  %v3268 = vadd.f32 %v3123, %v3267
  %v3269 = vpop.f32.mrf.mxu0
  %3270 = vdwg.mxu0
  %3271 = vmatprep.subr.mxu0 0.0
  %3272 = vmatpush1.msra.mxu0 0.0
  %3273 = vmatprep.subr.mxu0 0.0
  %3274 = vmatpush1.msra.mxu0 0.0
  %3275 = vmatprep.subr.mxu0 0.0
  %3276 = vmatpush1.msra.mxu0 0.0
  %3277 = vmatprep.subr.mxu0 0.0
  %3278 = vmatpush1.msra.mxu0 0.0
  %3279 = vmatprep.subr.mxu0 0.0
  %3280 = vmatpush1.msra.mxu0 0.0
  %3281 = vmatprep.subr.mxu0 0.0
  %3282 = vmatpush1.msra.mxu0 0.0
  %3283 = vmatprep.subr.mxu0 0.0
  %3284 = vmatpush1.msra.mxu0 0.0
  %3285 = vmatprep.subr.mxu0 0.0
  %3286 = vmatpush1.msra.mxu0 0.0
  %3287 = vmatprep.subr.mxu0 0.0
  %3288 = vmatpush1.msra.mxu0 0.0
  %3289 = vmatprep.subr.mxu0 0.0
  %3290 = vmatpush1.msra.mxu0 0.0
  %3291 = vmatprep.subr.mxu0 0.0
  %3292 = vmatpush1.msra.mxu0 0.0
  %3293 = vmatprep.subr.mxu0 0.0
  %3294 = vmatpush1.msra.mxu0 0.0
  %3295 = vmatprep.subr.mxu0 0.0
  %3296 = vmatpush1.msra.mxu0 %v2578
  %3297 = vmatprep.subr.mxu0 0.0
  %3298 = vmatpush1.msra.mxu0 %v2577
  %3299 = vmatprep.subr.mxu0 0.0
  %3300 = vmatpush1.msra.mxu0 %v2576
  %3301 = vmatprep.subr.mxu0 0.0
  %3302 = vmatpush1.msra.mxu0 %v2575
  %3303 = vmatprep.subr.mxu0 0.0
  %3304 = vmatpush2.msra.mxu0 0.0
  %3305 = vmatprep.subr.mxu0 0.0
  %3306 = vmatpush2.msra.mxu0 0.0
  %3307 = vmatprep.subr.mxu0 0.0
  %3308 = vmatpush2.msra.mxu0 0.0
  %3309 = vmatprep.subr.mxu0 0.0
  %3310 = vmatpush2.msra.mxu0 0.0
  %3311 = vmatprep.subr.mxu0 0.0
  %3312 = vmatpush2.msra.mxu0 0.0
  %3313 = vmatprep.subr.mxu0 0.0
  %3314 = vmatpush2.msra.mxu0 0.0
  %3315 = vmatprep.subr.mxu0 0.0
  %3316 = vmatpush2.msra.mxu0 0.0
  %3317 = vmatprep.subr.mxu0 0.0
  %3318 = vmatpush2.msra.mxu0 0.0
  %3319 = vmatprep.subr.mxu0 0.0
  %3320 = vmatpush2.msra.mxu0 0.0
  %3321 = vmatprep.subr.mxu0 0.0
  %3322 = vmatpush2.msra.mxu0 0.0
  %3323 = vmatprep.subr.mxu0 0.0
  %3324 = vmatpush2.msra.mxu0 0.0
  %3325 = vmatprep.subr.mxu0 0.0
  %3326 = vmatpush2.msra.mxu0 0.0
  %3327 = vmatprep.subr.mxu0 0.0
  %3328 = vmatpush2.msra.mxu0 0.0
  %3329 = vmatprep.subr.mxu0 0.0
  %3330 = vmatpush2.msra.mxu0 0.0
  %3331 = vmatprep.subr.mxu0 0.0
  %3332 = vmatpush2.msra.mxu0 0.0
  %3333 = vmatprep.subr.mxu0 0.0
  %3334 = vmatpush2.msra.mxu0 0.0
  %3335 = vmatprep.mubr.f32.mxu0 0.0
  %3336 = vmatmul.mubr.f32.gmra.mxu0 %v2644
  %v3337 = vpop.f32.mrf.mxu0
  %v3338 = vadd.f32 %v3193, %v3337
  %v3339 = vpop.f32.mrf.mxu0
  %3340 = vmatprep.mubr.f32.mxu0 0.0
  %3341 = vmatmul.mubr.f32.gmra.mxu0 %v2647
  %v3342 = vpop.f32.mrf.mxu0
  %v3343 = vadd.f32 %v3198, %v3342
  %v3344 = vpop.f32.mrf.mxu0
  %3345 = vmatprep.mubr.f32.mxu0 0.0
  %3346 = vmatmul.mubr.f32.gmra.mxu0 %v2650
  %v3347 = vpop.f32.mrf.mxu0
  %v3348 = vadd.f32 %v3203, %v3347
  %v3349 = vpop.f32.mrf.mxu0
  %3350 = vmatprep.mubr.f32.mxu0 0.0
  %3351 = vmatmul.mubr.f32.gmra.mxu0 %v2653
  %v3352 = vpop.f32.mrf.mxu0
  %v3353 = vadd.f32 %v3208, %v3352
  %v3354 = vpop.f32.mrf.mxu0
  %3355 = vmatprep.mubr.f32.mxu0 0.0
  %3356 = vmatmul.mubr.f32.gmra.mxu0 %v2656
  %v3357 = vpop.f32.mrf.mxu0
  %v3358 = vadd.f32 %v3213, %v3357
  %v3359 = vpop.f32.mrf.mxu0
  %3360 = vmatprep.mubr.f32.mxu0 0.0
  %3361 = vmatmul.mubr.f32.gmra.mxu0 %v2659
  %v3362 = vpop.f32.mrf.mxu0
  %v3363 = vadd.f32 %v3218, %v3362
  %v3364 = vpop.f32.mrf.mxu0
  %3365 = vmatprep.mubr.f32.mxu0 0.0
  %3366 = vmatmul.mubr.f32.gmra.mxu0 %v2662
  %v3367 = vpop.f32.mrf.mxu0
  %v3368 = vadd.f32 %v3223, %v3367
  %v3369 = vpop.f32.mrf.mxu0
  %3370 = vmatprep.mubr.f32.mxu0 0.0
  %3371 = vmatmul.mubr.f32.gmra.mxu0 %v2665
  %v3372 = vpop.f32.mrf.mxu0
  %v3373 = vadd.f32 %v3228, %v3372
  %v3374 = vpop.f32.mrf.mxu0
  %3375 = vmatprep.mubr.f32.mxu0 0.0
  %3376 = vmatmul.mubr.f32.gmra.mxu0 %v2668
  %v3377 = vpop.f32.mrf.mxu0
  %v3378 = vadd.f32 %v3233, %v3377
  %v3379 = vpop.f32.mrf.mxu0
  %3380 = vmatprep.mubr.f32.mxu0 0.0
  %3381 = vmatmul.mubr.f32.gmra.mxu0 %v2671
  %v3382 = vpop.f32.mrf.mxu0
  %v3383 = vadd.f32 %v3238, %v3382
  %v3384 = vpop.f32.mrf.mxu0
  %3385 = vmatprep.mubr.f32.mxu0 0.0
  %3386 = vmatmul.mubr.f32.gmra.mxu0 %v2674
  %v3387 = vpop.f32.mrf.mxu0
  %v3388 = vadd.f32 %v3243, %v3387
  %v3389 = vpop.f32.mrf.mxu0
  %3390 = vmatprep.mubr.f32.mxu0 0.0
  %3391 = vmatmul.mubr.f32.gmra.mxu0 %v2677
  %v3392 = vpop.f32.mrf.mxu0
  %v3393 = vadd.f32 %v3248, %v3392
  %v3394 = vpop.f32.mrf.mxu0
  %3395 = vmatprep.mubr.f32.mxu0 0.0
  %3396 = vmatmul.mubr.f32.gmra.mxu0 %v2680
  %v3397 = vpop.f32.mrf.mxu0
  %v3398 = vadd.f32 %v3253, %v3397
  %v3399 = vpop.f32.mrf.mxu0
  %3400 = vmatprep.mubr.f32.mxu0 0.0
  %3401 = vmatmul.mubr.f32.gmra.mxu0 %v2683
  %v3402 = vpop.f32.mrf.mxu0
  %v3403 = vadd.f32 %v3258, %v3402
  %v3404 = vpop.f32.mrf.mxu0
  %3405 = vmatprep.mubr.f32.mxu0 0.0
  %3406 = vmatmul.mubr.f32.gmra.mxu0 %v2686
  %v3407 = vpop.f32.mrf.mxu0
  %v3408 = vadd.f32 %v3263, %v3407
  %v3409 = vpop.f32.mrf.mxu0
  %3410 = vmatprep.mubr.f32.mxu0 0.0
  %3411 = vmatmul.mubr.f32.gmra.mxu0 %v2689
  %v3412 = vpop.f32.mrf.mxu0
  %v3413 = vadd.f32 %v3268, %v3412
  %v3414 = vpop.f32.mrf.mxu0
  %3415 = vdwg.mxu0
  %v3416 = vmax.f32 %v3338, 0.0
  %v3417 = vmax.f32 %v3343, 0.0
  %v3418 = vmax.f32 %v3348, 0.0
  %v3419 = vmax.f32 %v3353, 0.0
  %v3420 = vmax.f32 %v3358, 0.0
  %v3421 = vmax.f32 %v3363, 0.0
  %v3422 = vmax.f32 %v3368, 0.0
  %v3423 = vmax.f32 %v3373, 0.0
  %v3424 = vmax.f32 %v3378, 0.0
  %v3425 = vmax.f32 %v3383, 0.0
  %v3426 = vmax.f32 %v3388, 0.0
  %v3427 = vmax.f32 %v3393, 0.0
  %v3428 = vmax.f32 %v3398, 0.0
  %v3429 = vmax.f32 %v3403, 0.0
  %v3430 = vmax.f32 %v3408, 0.0
  %v3431 = vmax.f32 %v3413, 0.0
  %3432 = vrot.lane.b32.xlu0 %v275, 96
  %v3433 = vpop.permute.xlu0 %3432
  %3434 = vrot.lane.b32.xlu0 %v276, 96
  %v3435 = vpop.permute.xlu0 %3434
  %3436 = vrot.lane.b32.xlu0 %v277, 96
  %v3437 = vpop.permute.xlu0 %3436
  %3438 = vrot.lane.b32.xlu0 %v278, 96
  %v3439 = vpop.permute.xlu0 %3438
  %3440 = vrot.lane.b32.xlu0 %v279, 96
  %v3441 = vpop.permute.xlu0 %3440
  %3442 = vrot.lane.b32.xlu0 %v280, 96
  %v3443 = vpop.permute.xlu0 %3442
  %3444 = vrot.lane.b32.xlu0 %v281, 96
  %v3445 = vpop.permute.xlu0 %3444
  %3446 = vrot.lane.b32.xlu0 %v282, 96
  %v3447 = vpop.permute.xlu0 %3446
  %3448 = vrot.lane.b32.xlu0 %v283, 96
  %v3449 = vpop.permute.xlu0 %3448
  %3450 = vrot.lane.b32.xlu0 %v284, 96
  %v3451 = vpop.permute.xlu0 %3450
  %3452 = vrot.lane.b32.xlu0 %v285, 96
  %v3453 = vpop.permute.xlu0 %3452
  %3454 = vrot.lane.b32.xlu0 %v286, 96
  %v3455 = vpop.permute.xlu0 %3454
  %3456 = vrot.lane.b32.xlu0 %v287, 96
  %v3457 = vpop.permute.xlu0 %3456
  %3458 = vrot.lane.b32.xlu0 %v288, 96
  %v3459 = vpop.permute.xlu0 %3458
  %3460 = vrot.lane.b32.xlu0 %v289, 96
  %v3461 = vpop.permute.xlu0 %3460
  %3462 = vrot.lane.b32.xlu0 %v290, 96
  %v3463 = vpop.permute.xlu0 %3462
  %v3464 = vsel %vm1626, %v3433, 0
  %v3466 = vsel %vm1626, %v3435, 0
  %v3468 = vsel %vm1626, %v3437, 0
  %v3470 = vsel %vm1626, %v3439, 0
  %v3472 = vsel %vm1626, %v3441, 0
  %v3474 = vsel %vm1626, %v3443, 0
  %v3476 = vsel %vm1626, %v3445, 0
  %v3478 = vsel %vm1626, %v3447, 0
  %v3480 = vsel %vm1626, %v3449, 0
  %v3482 = vsel %vm1626, %v3451, 0
  %v3484 = vsel %vm1626, %v3453, 0
  %v3486 = vsel %vm1626, %v3455, 0
  %v3488 = vsel %vm1626, %v3457, 0
  %v3490 = vsel %vm1626, %v3459, 0
  %v3492 = vsel %vm1626, %v3461, 0
  %v3494 = vsel %vm1626, %v3463, 0
  %3496 = vmatprep.subr.mxu0 0.0
  %3497 = vmatpush1.msra.mxu0 0.0
  %3498 = vmatprep.subr.mxu0 0.0
  %3499 = vmatpush1.msra.mxu0 0.0
  %3500 = vmatprep.subr.mxu0 0.0
  %3501 = vmatpush1.msra.mxu0 0.0
  %3502 = vmatprep.subr.mxu0 0.0
  %3503 = vmatpush1.msra.mxu0 0.0
  %3504 = vmatprep.subr.mxu0 0.0
  %3505 = vmatpush1.msra.mxu0 0.0
  %3506 = vmatprep.subr.mxu0 0.0
  %3507 = vmatpush1.msra.mxu0 0.0
  %3508 = vmatprep.subr.mxu0 0.0
  %3509 = vmatpush1.msra.mxu0 0.0
  %3510 = vmatprep.subr.mxu0 0.0
  %3511 = vmatpush1.msra.mxu0 0.0
  %3512 = vmatprep.subr.mxu0 0.0
  %3513 = vmatpush1.msra.mxu0 0.0
  %3514 = vmatprep.subr.mxu0 0.0
  %3515 = vmatpush1.msra.mxu0 0.0
  %3516 = vmatprep.subr.mxu0 0.0
  %3517 = vmatpush1.msra.mxu0 0.0
  %3518 = vmatprep.subr.mxu0 0.0
  %3519 = vmatpush1.msra.mxu0 0.0
  %3520 = vmatprep.subr.mxu0 %v1587
  %3521 = vmatpush1.msra.mxu0 %v1586
  %3522 = vmatprep.subr.mxu0 %v1579
  %3523 = vmatpush1.msra.mxu0 %v1578
  %3524 = vmatprep.subr.mxu0 %v1571
  %3525 = vmatpush1.msra.mxu0 %v1570
  %3526 = vmatprep.subr.mxu0 %v1563
  %3527 = vmatpush1.msra.mxu0 %v1562
  %3528 = vmatprep.subr.mxu0 0.0
  %3529 = vmatpush2.msra.mxu0 0.0
  %3530 = vmatprep.subr.mxu0 0.0
  %3531 = vmatpush2.msra.mxu0 0.0
  %3532 = vmatprep.subr.mxu0 0.0
  %3533 = vmatpush2.msra.mxu0 0.0
  %3534 = vmatprep.subr.mxu0 0.0
  %3535 = vmatpush2.msra.mxu0 0.0
  %3536 = vmatprep.subr.mxu0 0.0
  %3537 = vmatpush2.msra.mxu0 0.0
  %3538 = vmatprep.subr.mxu0 0.0
  %3539 = vmatpush2.msra.mxu0 0.0
  %3540 = vmatprep.subr.mxu0 0.0
  %3541 = vmatpush2.msra.mxu0 0.0
  %3542 = vmatprep.subr.mxu0 0.0
  %3543 = vmatpush2.msra.mxu0 0.0
  %3544 = vmatprep.subr.mxu0 0.0
  %3545 = vmatpush2.msra.mxu0 0.0
  %3546 = vmatprep.subr.mxu0 0.0
  %3547 = vmatpush2.msra.mxu0 0.0
  %3548 = vmatprep.subr.mxu0 0.0
  %3549 = vmatpush2.msra.mxu0 0.0
  %3550 = vmatprep.subr.mxu0 0.0
  %3551 = vmatpush2.msra.mxu0 0.0
  %3552 = vmatprep.subr.mxu0 0.0
  %3553 = vmatpush2.msra.mxu0 0.0
  %3554 = vmatprep.subr.mxu0 0.0
  %3555 = vmatpush2.msra.mxu0 0.0
  %3556 = vmatprep.subr.mxu0 0.0
  %3557 = vmatpush2.msra.mxu0 0.0
  %3558 = vmatprep.subr.mxu0 0.0
  %3559 = vmatpush2.msra.mxu0 0.0
  %3560 = vmatprep.mubr.f32.mxu0 0.0
  %3561 = vmatmul.mubr.f32.gmra.mxu0 %v3464
  %v3562 = vpop.f32.mrf.mxu0
  %v3563 = vadd.f32 0.0, %v3562
  %v3564 = vpop.f32.mrf.mxu0
  %v3565 = vadd.f32 0.0, %v3564
  %3566 = vmatprep.mubr.f32.mxu0 0.0
  %3567 = vmatmul.mubr.f32.gmra.mxu0 %v3466
  %v3568 = vpop.f32.mrf.mxu0
  %v3569 = vadd.f32 0.0, %v3568
  %v3570 = vpop.f32.mrf.mxu0
  %v3571 = vadd.f32 0.0, %v3570
  %3572 = vmatprep.mubr.f32.mxu0 0.0
  %3573 = vmatmul.mubr.f32.gmra.mxu0 %v3468
  %v3574 = vpop.f32.mrf.mxu0
  %v3575 = vadd.f32 0.0, %v3574
  %v3576 = vpop.f32.mrf.mxu0
  %v3577 = vadd.f32 0.0, %v3576
  %3578 = vmatprep.mubr.f32.mxu0 0.0
  %3579 = vmatmul.mubr.f32.gmra.mxu0 %v3470
  %v3580 = vpop.f32.mrf.mxu0
  %v3581 = vadd.f32 0.0, %v3580
  %v3582 = vpop.f32.mrf.mxu0
  %v3583 = vadd.f32 0.0, %v3582
  %3584 = vmatprep.mubr.f32.mxu0 0.0
  %3585 = vmatmul.mubr.f32.gmra.mxu0 %v3472
  %v3586 = vpop.f32.mrf.mxu0
  %v3587 = vadd.f32 0.0, %v3586
  %v3588 = vpop.f32.mrf.mxu0
  %v3589 = vadd.f32 0.0, %v3588
  %3590 = vmatprep.mubr.f32.mxu0 0.0
  %3591 = vmatmul.mubr.f32.gmra.mxu0 %v3474
  %v3592 = vpop.f32.mrf.mxu0
  %v3593 = vadd.f32 0.0, %v3592
  %v3594 = vpop.f32.mrf.mxu0
  %v3595 = vadd.f32 0.0, %v3594
  %3596 = vmatprep.mubr.f32.mxu0 0.0
  %3597 = vmatmul.mubr.f32.gmra.mxu0 %v3476
  %v3598 = vpop.f32.mrf.mxu0
  %v3599 = vadd.f32 0.0, %v3598
  %v3600 = vpop.f32.mrf.mxu0
  %v3601 = vadd.f32 0.0, %v3600
  %3602 = vmatprep.mubr.f32.mxu0 0.0
  %3603 = vmatmul.mubr.f32.gmra.mxu0 %v3478
  %v3604 = vpop.f32.mrf.mxu0
  %v3605 = vadd.f32 0.0, %v3604
  %v3606 = vpop.f32.mrf.mxu0
  %v3607 = vadd.f32 0.0, %v3606
  %3608 = vmatprep.mubr.f32.mxu0 0.0
  %3609 = vmatmul.mubr.f32.gmra.mxu0 %v3480
  %v3610 = vpop.f32.mrf.mxu0
  %v3611 = vadd.f32 0.0, %v3610
  %v3612 = vpop.f32.mrf.mxu0
  %v3613 = vadd.f32 0.0, %v3612
  %3614 = vmatprep.mubr.f32.mxu0 0.0
  %3615 = vmatmul.mubr.f32.gmra.mxu0 %v3482
  %v3616 = vpop.f32.mrf.mxu0
  %v3617 = vadd.f32 0.0, %v3616
  %v3618 = vpop.f32.mrf.mxu0
  %v3619 = vadd.f32 0.0, %v3618
  %3620 = vmatprep.mubr.f32.mxu0 0.0
  %3621 = vmatmul.mubr.f32.gmra.mxu0 %v3484
  %v3622 = vpop.f32.mrf.mxu0
  %v3623 = vadd.f32 0.0, %v3622
  %v3624 = vpop.f32.mrf.mxu0
  %v3625 = vadd.f32 0.0, %v3624
  %3626 = vmatprep.mubr.f32.mxu0 0.0
  %3627 = vmatmul.mubr.f32.gmra.mxu0 %v3486
  %v3628 = vpop.f32.mrf.mxu0
  %v3629 = vadd.f32 0.0, %v3628
  %v3630 = vpop.f32.mrf.mxu0
  %v3631 = vadd.f32 0.0, %v3630
  %3632 = vmatprep.mubr.f32.mxu0 0.0
  %3633 = vmatmul.mubr.f32.gmra.mxu0 %v3488
  %v3634 = vpop.f32.mrf.mxu0
  %v3635 = vadd.f32 0.0, %v3634
  %v3636 = vpop.f32.mrf.mxu0
  %v3637 = vadd.f32 0.0, %v3636
  %3638 = vmatprep.mubr.f32.mxu0 0.0
  %3639 = vmatmul.mubr.f32.gmra.mxu0 %v3490
  %v3640 = vpop.f32.mrf.mxu0
  %v3641 = vadd.f32 0.0, %v3640
  %v3642 = vpop.f32.mrf.mxu0
  %v3643 = vadd.f32 0.0, %v3642
  %3644 = vmatprep.mubr.f32.mxu0 0.0
  %3645 = vmatmul.mubr.f32.gmra.mxu0 %v3492
  %v3646 = vpop.f32.mrf.mxu0
  %v3647 = vadd.f32 0.0, %v3646
  %v3648 = vpop.f32.mrf.mxu0
  %v3649 = vadd.f32 0.0, %v3648
  %3650 = vmatprep.mubr.f32.mxu0 0.0
  %3651 = vmatmul.mubr.f32.gmra.mxu0 %v3494
  %v3652 = vpop.f32.mrf.mxu0
  %v3653 = vadd.f32 0.0, %v3652
  %v3654 = vpop.f32.mrf.mxu0
  %v3655 = vadd.f32 0.0, %v3654
  %3656 = vdwg.mxu0
  %3657 = vmatprep.subr.mxu0 0.0
  %3658 = vmatpush1.msra.mxu0 0.0
  %3659 = vmatprep.subr.mxu0 0.0
  %3660 = vmatpush1.msra.mxu0 0.0
  %3661 = vmatprep.subr.mxu0 0.0
  %3662 = vmatpush1.msra.mxu0 0.0
  %3663 = vmatprep.subr.mxu0 0.0
  %3664 = vmatpush1.msra.mxu0 0.0
  %3665 = vmatprep.subr.mxu0 0.0
  %3666 = vmatpush1.msra.mxu0 0.0
  %3667 = vmatprep.subr.mxu0 0.0
  %3668 = vmatpush1.msra.mxu0 0.0
  %3669 = vmatprep.subr.mxu0 0.0
  %3670 = vmatpush1.msra.mxu0 0.0
  %3671 = vmatprep.subr.mxu0 0.0
  %3672 = vmatpush1.msra.mxu0 0.0
  %3673 = vmatprep.subr.mxu0 0.0
  %3674 = vmatpush1.msra.mxu0 0.0
  %3675 = vmatprep.subr.mxu0 0.0
  %3676 = vmatpush1.msra.mxu0 0.0
  %3677 = vmatprep.subr.mxu0 0.0
  %3678 = vmatpush1.msra.mxu0 0.0
  %3679 = vmatprep.subr.mxu0 0.0
  %3680 = vmatpush1.msra.mxu0 0.0
  %3681 = vmatprep.subr.mxu0 %v1589
  %3682 = vmatpush1.msra.mxu0 %v1588
  %3683 = vmatprep.subr.mxu0 %v1581
  %3684 = vmatpush1.msra.mxu0 %v1580
  %3685 = vmatprep.subr.mxu0 %v1573
  %3686 = vmatpush1.msra.mxu0 %v1572
  %3687 = vmatprep.subr.mxu0 %v1565
  %3688 = vmatpush1.msra.mxu0 %v1564
  %3689 = vmatprep.subr.mxu0 0.0
  %3690 = vmatpush2.msra.mxu0 0.0
  %3691 = vmatprep.subr.mxu0 0.0
  %3692 = vmatpush2.msra.mxu0 0.0
  %3693 = vmatprep.subr.mxu0 0.0
  %3694 = vmatpush2.msra.mxu0 0.0
  %3695 = vmatprep.subr.mxu0 0.0
  %3696 = vmatpush2.msra.mxu0 0.0
  %3697 = vmatprep.subr.mxu0 0.0
  %3698 = vmatpush2.msra.mxu0 0.0
  %3699 = vmatprep.subr.mxu0 0.0
  %3700 = vmatpush2.msra.mxu0 0.0
  %3701 = vmatprep.subr.mxu0 0.0
  %3702 = vmatpush2.msra.mxu0 0.0
  %3703 = vmatprep.subr.mxu0 0.0
  %3704 = vmatpush2.msra.mxu0 0.0
  %3705 = vmatprep.subr.mxu0 0.0
  %3706 = vmatpush2.msra.mxu0 0.0
  %3707 = vmatprep.subr.mxu0 0.0
  %3708 = vmatpush2.msra.mxu0 0.0
  %3709 = vmatprep.subr.mxu0 0.0
  %3710 = vmatpush2.msra.mxu0 0.0
  %3711 = vmatprep.subr.mxu0 0.0
  %3712 = vmatpush2.msra.mxu0 0.0
  %3713 = vmatprep.subr.mxu0 0.0
  %3714 = vmatpush2.msra.mxu0 0.0
  %3715 = vmatprep.subr.mxu0 0.0
  %3716 = vmatpush2.msra.mxu0 0.0
  %3717 = vmatprep.subr.mxu0 0.0
  %3718 = vmatpush2.msra.mxu0 0.0
  %3719 = vmatprep.subr.mxu0 0.0
  %3720 = vmatpush2.msra.mxu0 0.0
  %3721 = vmatprep.mubr.f32.mxu0 0.0
  %3722 = vmatmul.mubr.f32.gmra.mxu0 %v3464
  %v3723 = vpop.f32.mrf.mxu0
  %v3724 = vadd.f32 0.0, %v3723
  %v3725 = vpop.f32.mrf.mxu0
  %v3726 = vadd.f32 0.0, %v3725
  %3727 = vmatprep.mubr.f32.mxu0 0.0
  %3728 = vmatmul.mubr.f32.gmra.mxu0 %v3466
  %v3729 = vpop.f32.mrf.mxu0
  %v3730 = vadd.f32 0.0, %v3729
  %v3731 = vpop.f32.mrf.mxu0
  %v3732 = vadd.f32 0.0, %v3731
  %3733 = vmatprep.mubr.f32.mxu0 0.0
  %3734 = vmatmul.mubr.f32.gmra.mxu0 %v3468
  %v3735 = vpop.f32.mrf.mxu0
  %v3736 = vadd.f32 0.0, %v3735
  %v3737 = vpop.f32.mrf.mxu0
  %v3738 = vadd.f32 0.0, %v3737
  %3739 = vmatprep.mubr.f32.mxu0 0.0
  %3740 = vmatmul.mubr.f32.gmra.mxu0 %v3470
  %v3741 = vpop.f32.mrf.mxu0
  %v3742 = vadd.f32 0.0, %v3741
  %v3743 = vpop.f32.mrf.mxu0
  %v3744 = vadd.f32 0.0, %v3743
  %3745 = vmatprep.mubr.f32.mxu0 0.0
  %3746 = vmatmul.mubr.f32.gmra.mxu0 %v3472
  %v3747 = vpop.f32.mrf.mxu0
  %v3748 = vadd.f32 0.0, %v3747
  %v3749 = vpop.f32.mrf.mxu0
  %v3750 = vadd.f32 0.0, %v3749
  %3751 = vmatprep.mubr.f32.mxu0 0.0
  %3752 = vmatmul.mubr.f32.gmra.mxu0 %v3474
  %v3753 = vpop.f32.mrf.mxu0
  %v3754 = vadd.f32 0.0, %v3753
  %v3755 = vpop.f32.mrf.mxu0
  %v3756 = vadd.f32 0.0, %v3755
  %3757 = vmatprep.mubr.f32.mxu0 0.0
  %3758 = vmatmul.mubr.f32.gmra.mxu0 %v3476
  %v3759 = vpop.f32.mrf.mxu0
  %v3760 = vadd.f32 0.0, %v3759
  %v3761 = vpop.f32.mrf.mxu0
  %v3762 = vadd.f32 0.0, %v3761
  %3763 = vmatprep.mubr.f32.mxu0 0.0
  %3764 = vmatmul.mubr.f32.gmra.mxu0 %v3478
  %v3765 = vpop.f32.mrf.mxu0
  %v3766 = vadd.f32 0.0, %v3765
  %v3767 = vpop.f32.mrf.mxu0
  %v3768 = vadd.f32 0.0, %v3767
  %3769 = vmatprep.mubr.f32.mxu0 0.0
  %3770 = vmatmul.mubr.f32.gmra.mxu0 %v3480
  %v3771 = vpop.f32.mrf.mxu0
  %v3772 = vadd.f32 0.0, %v3771
  %v3773 = vpop.f32.mrf.mxu0
  %v3774 = vadd.f32 0.0, %v3773
  %3775 = vmatprep.mubr.f32.mxu0 0.0
  %3776 = vmatmul.mubr.f32.gmra.mxu0 %v3482
  %v3777 = vpop.f32.mrf.mxu0
  %v3778 = vadd.f32 0.0, %v3777
  %v3779 = vpop.f32.mrf.mxu0
  %v3780 = vadd.f32 0.0, %v3779
  %3781 = vmatprep.mubr.f32.mxu0 0.0
  %3782 = vmatmul.mubr.f32.gmra.mxu0 %v3484
  %v3783 = vpop.f32.mrf.mxu0
  %v3784 = vadd.f32 0.0, %v3783
  %v3785 = vpop.f32.mrf.mxu0
  %v3786 = vadd.f32 0.0, %v3785
  %3787 = vmatprep.mubr.f32.mxu0 0.0
  %3788 = vmatmul.mubr.f32.gmra.mxu0 %v3486
  %v3789 = vpop.f32.mrf.mxu0
  %v3790 = vadd.f32 0.0, %v3789
  %v3791 = vpop.f32.mrf.mxu0
  %v3792 = vadd.f32 0.0, %v3791
  %3793 = vmatprep.mubr.f32.mxu0 0.0
  %3794 = vmatmul.mubr.f32.gmra.mxu0 %v3488
  %v3795 = vpop.f32.mrf.mxu0
  %v3796 = vadd.f32 0.0, %v3795
  %v3797 = vpop.f32.mrf.mxu0
  %v3798 = vadd.f32 0.0, %v3797
  %3799 = vmatprep.mubr.f32.mxu0 0.0
  %3800 = vmatmul.mubr.f32.gmra.mxu0 %v3490
  %v3801 = vpop.f32.mrf.mxu0
  %v3802 = vadd.f32 0.0, %v3801
  %v3803 = vpop.f32.mrf.mxu0
  %v3804 = vadd.f32 0.0, %v3803
  %3805 = vmatprep.mubr.f32.mxu0 0.0
  %3806 = vmatmul.mubr.f32.gmra.mxu0 %v3492
  %v3807 = vpop.f32.mrf.mxu0
  %v3808 = vadd.f32 0.0, %v3807
  %v3809 = vpop.f32.mrf.mxu0
  %v3810 = vadd.f32 0.0, %v3809
  %3811 = vmatprep.mubr.f32.mxu0 0.0
  %3812 = vmatmul.mubr.f32.gmra.mxu0 %v3494
  %v3813 = vpop.f32.mrf.mxu0
  %v3814 = vadd.f32 0.0, %v3813
  %v3815 = vpop.f32.mrf.mxu0
  %v3816 = vadd.f32 0.0, %v3815
  %3817 = vdwg.mxu0
  %3818 = vmatprep.subr.mxu0 0.0
  %3819 = vmatpush1.msra.mxu0 0.0
  %3820 = vmatprep.subr.mxu0 0.0
  %3821 = vmatpush1.msra.mxu0 0.0
  %3822 = vmatprep.subr.mxu0 0.0
  %3823 = vmatpush1.msra.mxu0 0.0
  %3824 = vmatprep.subr.mxu0 0.0
  %3825 = vmatpush1.msra.mxu0 0.0
  %3826 = vmatprep.subr.mxu0 0.0
  %3827 = vmatpush1.msra.mxu0 0.0
  %3828 = vmatprep.subr.mxu0 0.0
  %3829 = vmatpush1.msra.mxu0 0.0
  %3830 = vmatprep.subr.mxu0 0.0
  %3831 = vmatpush1.msra.mxu0 0.0
  %3832 = vmatprep.subr.mxu0 0.0
  %3833 = vmatpush1.msra.mxu0 0.0
  %3834 = vmatprep.subr.mxu0 0.0
  %3835 = vmatpush1.msra.mxu0 0.0
  %3836 = vmatprep.subr.mxu0 0.0
  %3837 = vmatpush1.msra.mxu0 0.0
  %3838 = vmatprep.subr.mxu0 0.0
  %3839 = vmatpush1.msra.mxu0 0.0
  %3840 = vmatprep.subr.mxu0 0.0
  %3841 = vmatpush1.msra.mxu0 0.0
  %3842 = vmatprep.subr.mxu0 %v1591
  %3843 = vmatpush1.msra.mxu0 %v1590
  %3844 = vmatprep.subr.mxu0 %v1583
  %3845 = vmatpush1.msra.mxu0 %v1582
  %3846 = vmatprep.subr.mxu0 %v1575
  %3847 = vmatpush1.msra.mxu0 %v1574
  %3848 = vmatprep.subr.mxu0 %v1567
  %3849 = vmatpush1.msra.mxu0 %v1566
  %3850 = vmatprep.subr.mxu0 0.0
  %3851 = vmatpush2.msra.mxu0 0.0
  %3852 = vmatprep.subr.mxu0 0.0
  %3853 = vmatpush2.msra.mxu0 0.0
  %3854 = vmatprep.subr.mxu0 0.0
  %3855 = vmatpush2.msra.mxu0 0.0
  %3856 = vmatprep.subr.mxu0 0.0
  %3857 = vmatpush2.msra.mxu0 0.0
  %3858 = vmatprep.subr.mxu0 0.0
  %3859 = vmatpush2.msra.mxu0 0.0
  %3860 = vmatprep.subr.mxu0 0.0
  %3861 = vmatpush2.msra.mxu0 0.0
  %3862 = vmatprep.subr.mxu0 0.0
  %3863 = vmatpush2.msra.mxu0 0.0
  %3864 = vmatprep.subr.mxu0 0.0
  %3865 = vmatpush2.msra.mxu0 0.0
  %3866 = vmatprep.subr.mxu0 0.0
  %3867 = vmatpush2.msra.mxu0 0.0
  %3868 = vmatprep.subr.mxu0 0.0
  %3869 = vmatpush2.msra.mxu0 0.0
  %3870 = vmatprep.subr.mxu0 0.0
  %3871 = vmatpush2.msra.mxu0 0.0
  %3872 = vmatprep.subr.mxu0 0.0
  %3873 = vmatpush2.msra.mxu0 0.0
  %3874 = vmatprep.subr.mxu0 0.0
  %3875 = vmatpush2.msra.mxu0 0.0
  %3876 = vmatprep.subr.mxu0 0.0
  %3877 = vmatpush2.msra.mxu0 0.0
  %3878 = vmatprep.subr.mxu0 0.0
  %3879 = vmatpush2.msra.mxu0 0.0
  %3880 = vmatprep.subr.mxu0 0.0
  %3881 = vmatpush2.msra.mxu0 0.0
  %3882 = vmatprep.mubr.f32.mxu0 0.0
  %3883 = vmatmul.mubr.f32.gmra.mxu0 %v3464
  %v3884 = vpop.f32.mrf.mxu0
  %v3885 = vadd.f32 0.0, %v3884
  %v3886 = vpop.f32.mrf.mxu0
  %v3887 = vadd.f32 0.0, %v3886
  %3888 = vmatprep.mubr.f32.mxu0 0.0
  %3889 = vmatmul.mubr.f32.gmra.mxu0 %v3466
  %v3890 = vpop.f32.mrf.mxu0
  %v3891 = vadd.f32 0.0, %v3890
  %v3892 = vpop.f32.mrf.mxu0
  %v3893 = vadd.f32 0.0, %v3892
  %3894 = vmatprep.mubr.f32.mxu0 0.0
  %3895 = vmatmul.mubr.f32.gmra.mxu0 %v3468
  %v3896 = vpop.f32.mrf.mxu0
  %v3897 = vadd.f32 0.0, %v3896
  %v3898 = vpop.f32.mrf.mxu0
  %v3899 = vadd.f32 0.0, %v3898
  %3900 = vmatprep.mubr.f32.mxu0 0.0
  %3901 = vmatmul.mubr.f32.gmra.mxu0 %v3470
  %v3902 = vpop.f32.mrf.mxu0
  %v3903 = vadd.f32 0.0, %v3902
  %v3904 = vpop.f32.mrf.mxu0
  %v3905 = vadd.f32 0.0, %v3904
  %3906 = vmatprep.mubr.f32.mxu0 0.0
  %3907 = vmatmul.mubr.f32.gmra.mxu0 %v3472
  %v3908 = vpop.f32.mrf.mxu0
  %v3909 = vadd.f32 0.0, %v3908
  %v3910 = vpop.f32.mrf.mxu0
  %v3911 = vadd.f32 0.0, %v3910
  %3912 = vmatprep.mubr.f32.mxu0 0.0
  %3913 = vmatmul.mubr.f32.gmra.mxu0 %v3474
  %v3914 = vpop.f32.mrf.mxu0
  %v3915 = vadd.f32 0.0, %v3914
  %v3916 = vpop.f32.mrf.mxu0
  %v3917 = vadd.f32 0.0, %v3916
  %3918 = vmatprep.mubr.f32.mxu0 0.0
  %3919 = vmatmul.mubr.f32.gmra.mxu0 %v3476
  %v3920 = vpop.f32.mrf.mxu0
  %v3921 = vadd.f32 0.0, %v3920
  %v3922 = vpop.f32.mrf.mxu0
  %v3923 = vadd.f32 0.0, %v3922
  %3924 = vmatprep.mubr.f32.mxu0 0.0
  %3925 = vmatmul.mubr.f32.gmra.mxu0 %v3478
  %v3926 = vpop.f32.mrf.mxu0
  %v3927 = vadd.f32 0.0, %v3926
  %v3928 = vpop.f32.mrf.mxu0
  %v3929 = vadd.f32 0.0, %v3928
  %3930 = vmatprep.mubr.f32.mxu0 0.0
  %3931 = vmatmul.mubr.f32.gmra.mxu0 %v3480
  %v3932 = vpop.f32.mrf.mxu0
  %v3933 = vadd.f32 0.0, %v3932
  %v3934 = vpop.f32.mrf.mxu0
  %v3935 = vadd.f32 0.0, %v3934
  %3936 = vmatprep.mubr.f32.mxu0 0.0
  %3937 = vmatmul.mubr.f32.gmra.mxu0 %v3482
  %v3938 = vpop.f32.mrf.mxu0
  %v3939 = vadd.f32 0.0, %v3938
  %v3940 = vpop.f32.mrf.mxu0
  %v3941 = vadd.f32 0.0, %v3940
  %3942 = vmatprep.mubr.f32.mxu0 0.0
  %3943 = vmatmul.mubr.f32.gmra.mxu0 %v3484
  %v3944 = vpop.f32.mrf.mxu0
  %v3945 = vadd.f32 0.0, %v3944
  %v3946 = vpop.f32.mrf.mxu0
  %v3947 = vadd.f32 0.0, %v3946
  %3948 = vmatprep.mubr.f32.mxu0 0.0
  %3949 = vmatmul.mubr.f32.gmra.mxu0 %v3486
  %v3950 = vpop.f32.mrf.mxu0
  %v3951 = vadd.f32 0.0, %v3950
  %v3952 = vpop.f32.mrf.mxu0
  %v3953 = vadd.f32 0.0, %v3952
  %3954 = vmatprep.mubr.f32.mxu0 0.0
  %3955 = vmatmul.mubr.f32.gmra.mxu0 %v3488
  %v3956 = vpop.f32.mrf.mxu0
  %v3957 = vadd.f32 0.0, %v3956
  %v3958 = vpop.f32.mrf.mxu0
  %v3959 = vadd.f32 0.0, %v3958
  %3960 = vmatprep.mubr.f32.mxu0 0.0
  %3961 = vmatmul.mubr.f32.gmra.mxu0 %v3490
  %v3962 = vpop.f32.mrf.mxu0
  %v3963 = vadd.f32 0.0, %v3962
  %v3964 = vpop.f32.mrf.mxu0
  %v3965 = vadd.f32 0.0, %v3964
  %3966 = vmatprep.mubr.f32.mxu0 0.0
  %3967 = vmatmul.mubr.f32.gmra.mxu0 %v3492
  %v3968 = vpop.f32.mrf.mxu0
  %v3969 = vadd.f32 0.0, %v3968
  %v3970 = vpop.f32.mrf.mxu0
  %v3971 = vadd.f32 0.0, %v3970
  %3972 = vmatprep.mubr.f32.mxu0 0.0
  %3973 = vmatmul.mubr.f32.gmra.mxu0 %v3494
  %v3974 = vpop.f32.mrf.mxu0
  %v3975 = vadd.f32 0.0, %v3974
  %v3976 = vpop.f32.mrf.mxu0
  %v3977 = vadd.f32 0.0, %v3976
  %3978 = vdwg.mxu0
  %3979 = vmatprep.subr.mxu0 0.0
  %3980 = vmatpush1.msra.mxu0 0.0
  %3981 = vmatprep.subr.mxu0 0.0
  %3982 = vmatpush1.msra.mxu0 0.0
  %3983 = vmatprep.subr.mxu0 0.0
  %3984 = vmatpush1.msra.mxu0 0.0
  %3985 = vmatprep.subr.mxu0 0.0
  %3986 = vmatpush1.msra.mxu0 0.0
  %3987 = vmatprep.subr.mxu0 0.0
  %3988 = vmatpush1.msra.mxu0 0.0
  %3989 = vmatprep.subr.mxu0 0.0
  %3990 = vmatpush1.msra.mxu0 0.0
  %3991 = vmatprep.subr.mxu0 0.0
  %3992 = vmatpush1.msra.mxu0 0.0
  %3993 = vmatprep.subr.mxu0 0.0
  %3994 = vmatpush1.msra.mxu0 0.0
  %3995 = vmatprep.subr.mxu0 0.0
  %3996 = vmatpush1.msra.mxu0 0.0
  %3997 = vmatprep.subr.mxu0 0.0
  %3998 = vmatpush1.msra.mxu0 0.0
  %3999 = vmatprep.subr.mxu0 0.0
  %4000 = vmatpush1.msra.mxu0 0.0
  %4001 = vmatprep.subr.mxu0 0.0
  %4002 = vmatpush1.msra.mxu0 0.0
  %4003 = vmatprep.subr.mxu0 %v1593
  %4004 = vmatpush1.msra.mxu0 %v1592
  %4005 = vmatprep.subr.mxu0 %v1585
  %4006 = vmatpush1.msra.mxu0 %v1584
  %4007 = vmatprep.subr.mxu0 %v1577
  %4008 = vmatpush1.msra.mxu0 %v1576
  %4009 = vmatprep.subr.mxu0 %v1569
  %4010 = vmatpush1.msra.mxu0 %v1568
  %4011 = vmatprep.subr.mxu0 0.0
  %4012 = vmatpush2.msra.mxu0 0.0
  %4013 = vmatprep.subr.mxu0 0.0
  %4014 = vmatpush2.msra.mxu0 0.0
  %4015 = vmatprep.subr.mxu0 0.0
  %4016 = vmatpush2.msra.mxu0 0.0
  %4017 = vmatprep.subr.mxu0 0.0
  %4018 = vmatpush2.msra.mxu0 0.0
  %4019 = vmatprep.subr.mxu0 0.0
  %4020 = vmatpush2.msra.mxu0 0.0
  %4021 = vmatprep.subr.mxu0 0.0
  %4022 = vmatpush2.msra.mxu0 0.0
  %4023 = vmatprep.subr.mxu0 0.0
  %4024 = vmatpush2.msra.mxu0 0.0
  %4025 = vmatprep.subr.mxu0 0.0
  %4026 = vmatpush2.msra.mxu0 0.0
  %4027 = vmatprep.subr.mxu0 0.0
  %4028 = vmatpush2.msra.mxu0 0.0
  %4029 = vmatprep.subr.mxu0 0.0
  %4030 = vmatpush2.msra.mxu0 0.0
  %4031 = vmatprep.subr.mxu0 0.0
  %4032 = vmatpush2.msra.mxu0 0.0
  %4033 = vmatprep.subr.mxu0 0.0
  %4034 = vmatpush2.msra.mxu0 0.0
  %4035 = vmatprep.subr.mxu0 0.0
  %4036 = vmatpush2.msra.mxu0 0.0
  %4037 = vmatprep.subr.mxu0 0.0
  %4038 = vmatpush2.msra.mxu0 0.0
  %4039 = vmatprep.subr.mxu0 0.0
  %4040 = vmatpush2.msra.mxu0 0.0
  %4041 = vmatprep.subr.mxu0 0.0
  %4042 = vmatpush2.msra.mxu0 0.0
  %4043 = vmatprep.mubr.f32.mxu0 0.0
  %4044 = vmatmul.mubr.f32.gmra.mxu0 %v3464
  %v4045 = vpop.f32.mrf.mxu0
  %v4046 = vadd.f32 0.0, %v4045
  %v4047 = vpop.f32.mrf.mxu0
  %v4048 = vadd.f32 0.0, %v4047
  %4049 = vmatprep.mubr.f32.mxu0 0.0
  %4050 = vmatmul.mubr.f32.gmra.mxu0 %v3466
  %v4051 = vpop.f32.mrf.mxu0
  %v4052 = vadd.f32 0.0, %v4051
  %v4053 = vpop.f32.mrf.mxu0
  %v4054 = vadd.f32 0.0, %v4053
  %4055 = vmatprep.mubr.f32.mxu0 0.0
  %4056 = vmatmul.mubr.f32.gmra.mxu0 %v3468
  %v4057 = vpop.f32.mrf.mxu0
  %v4058 = vadd.f32 0.0, %v4057
  %v4059 = vpop.f32.mrf.mxu0
  %v4060 = vadd.f32 0.0, %v4059
  %4061 = vmatprep.mubr.f32.mxu0 0.0
  %4062 = vmatmul.mubr.f32.gmra.mxu0 %v3470
  %v4063 = vpop.f32.mrf.mxu0
  %v4064 = vadd.f32 0.0, %v4063
  %v4065 = vpop.f32.mrf.mxu0
  %v4066 = vadd.f32 0.0, %v4065
  %4067 = vmatprep.mubr.f32.mxu0 0.0
  %4068 = vmatmul.mubr.f32.gmra.mxu0 %v3472
  %v4069 = vpop.f32.mrf.mxu0
  %v4070 = vadd.f32 0.0, %v4069
  %v4071 = vpop.f32.mrf.mxu0
  %v4072 = vadd.f32 0.0, %v4071
  %4073 = vmatprep.mubr.f32.mxu0 0.0
  %4074 = vmatmul.mubr.f32.gmra.mxu0 %v3474
  %v4075 = vpop.f32.mrf.mxu0
  %v4076 = vadd.f32 0.0, %v4075
  %v4077 = vpop.f32.mrf.mxu0
  %v4078 = vadd.f32 0.0, %v4077
  %4079 = vmatprep.mubr.f32.mxu0 0.0
  %4080 = vmatmul.mubr.f32.gmra.mxu0 %v3476
  %v4081 = vpop.f32.mrf.mxu0
  %v4082 = vadd.f32 0.0, %v4081
  %v4083 = vpop.f32.mrf.mxu0
  %v4084 = vadd.f32 0.0, %v4083
  %4085 = vmatprep.mubr.f32.mxu0 0.0
  %4086 = vmatmul.mubr.f32.gmra.mxu0 %v3478
  %v4087 = vpop.f32.mrf.mxu0
  %v4088 = vadd.f32 0.0, %v4087
  %v4089 = vpop.f32.mrf.mxu0
  %v4090 = vadd.f32 0.0, %v4089
  %4091 = vmatprep.mubr.f32.mxu0 0.0
  %4092 = vmatmul.mubr.f32.gmra.mxu0 %v3480
  %v4093 = vpop.f32.mrf.mxu0
  %v4094 = vadd.f32 0.0, %v4093
  %v4095 = vpop.f32.mrf.mxu0
  %v4096 = vadd.f32 0.0, %v4095
  %4097 = vmatprep.mubr.f32.mxu0 0.0
  %4098 = vmatmul.mubr.f32.gmra.mxu0 %v3482
  %v4099 = vpop.f32.mrf.mxu0
  %v4100 = vadd.f32 0.0, %v4099
  %v4101 = vpop.f32.mrf.mxu0
  %v4102 = vadd.f32 0.0, %v4101
  %4103 = vmatprep.mubr.f32.mxu0 0.0
  %4104 = vmatmul.mubr.f32.gmra.mxu0 %v3484
  %v4105 = vpop.f32.mrf.mxu0
  %v4106 = vadd.f32 0.0, %v4105
  %v4107 = vpop.f32.mrf.mxu0
  %v4108 = vadd.f32 0.0, %v4107
  %4109 = vmatprep.mubr.f32.mxu0 0.0
  %4110 = vmatmul.mubr.f32.gmra.mxu0 %v3486
  %v4111 = vpop.f32.mrf.mxu0
  %v4112 = vadd.f32 0.0, %v4111
  %v4113 = vpop.f32.mrf.mxu0
  %v4114 = vadd.f32 0.0, %v4113
  %4115 = vmatprep.mubr.f32.mxu0 0.0
  %4116 = vmatmul.mubr.f32.gmra.mxu0 %v3488
  %v4117 = vpop.f32.mrf.mxu0
  %v4118 = vadd.f32 0.0, %v4117
  %v4119 = vpop.f32.mrf.mxu0
  %v4120 = vadd.f32 0.0, %v4119
  %4121 = vmatprep.mubr.f32.mxu0 0.0
  %4122 = vmatmul.mubr.f32.gmra.mxu0 %v3490
  %v4123 = vpop.f32.mrf.mxu0
  %v4124 = vadd.f32 0.0, %v4123
  %v4125 = vpop.f32.mrf.mxu0
  %v4126 = vadd.f32 0.0, %v4125
  %4127 = vmatprep.mubr.f32.mxu0 0.0
  %4128 = vmatmul.mubr.f32.gmra.mxu0 %v3492
  %v4129 = vpop.f32.mrf.mxu0
  %v4130 = vadd.f32 0.0, %v4129
  %v4131 = vpop.f32.mrf.mxu0
  %v4132 = vadd.f32 0.0, %v4131
  %4133 = vmatprep.mubr.f32.mxu0 0.0
  %4134 = vmatmul.mubr.f32.gmra.mxu0 %v3494
  %v4135 = vpop.f32.mrf.mxu0
  %v4136 = vadd.f32 0.0, %v4135
  %v4137 = vpop.f32.mrf.mxu0
  %v4138 = vadd.f32 0.0, %v4137
  %4139 = vdwg.mxu0
  %v4141 = vsel %vm1626, %v3416, 0
  %v4144 = vsel %vm1626, %v3417, 0
  %v4147 = vsel %vm1626, %v3418, 0
  %v4150 = vsel %vm1626, %v3419, 0
  %v4153 = vsel %vm1626, %v3420, 0
  %v4156 = vsel %vm1626, %v3421, 0
  %v4159 = vsel %vm1626, %v3422, 0
  %v4162 = vsel %vm1626, %v3423, 0
  %v4165 = vsel %vm1626, %v3424, 0
  %v4168 = vsel %vm1626, %v3425, 0
  %v4171 = vsel %vm1626, %v3426, 0
  %v4174 = vsel %vm1626, %v3427, 0
  %v4177 = vsel %vm1626, %v3428, 0
  %v4180 = vsel %vm1626, %v3429, 0
  %v4183 = vsel %vm1626, %v3430, 0
  %v4186 = vsel %vm1626, %v3431, 0
  %4188 = vmatprep.subr.mxu0 0.0
  %4189 = vmatpush1.msra.mxu0 0.0
  %4190 = vmatprep.subr.mxu0 0.0
  %4191 = vmatpush1.msra.mxu0 0.0
  %4192 = vmatprep.subr.mxu0 0.0
  %4193 = vmatpush1.msra.mxu0 0.0
  %4194 = vmatprep.subr.mxu0 0.0
  %4195 = vmatpush1.msra.mxu0 0.0
  %4196 = vmatprep.subr.mxu0 0.0
  %4197 = vmatpush1.msra.mxu0 0.0
  %4198 = vmatprep.subr.mxu0 0.0
  %4199 = vmatpush1.msra.mxu0 0.0
  %4200 = vmatprep.subr.mxu0 0.0
  %4201 = vmatpush1.msra.mxu0 0.0
  %4202 = vmatprep.subr.mxu0 0.0
  %4203 = vmatpush1.msra.mxu0 0.0
  %4204 = vmatprep.subr.mxu0 0.0
  %4205 = vmatpush1.msra.mxu0 0.0
  %4206 = vmatprep.subr.mxu0 0.0
  %4207 = vmatpush1.msra.mxu0 0.0
  %4208 = vmatprep.subr.mxu0 0.0
  %4209 = vmatpush1.msra.mxu0 0.0
  %4210 = vmatprep.subr.mxu0 0.0
  %4211 = vmatpush1.msra.mxu0 0.0
  %4212 = vmatprep.subr.mxu0 %v1619
  %4213 = vmatpush1.msra.mxu0 %v1618
  %4214 = vmatprep.subr.mxu0 %v1611
  %4215 = vmatpush1.msra.mxu0 %v1610
  %4216 = vmatprep.subr.mxu0 %v1603
  %4217 = vmatpush1.msra.mxu0 %v1602
  %4218 = vmatprep.subr.mxu0 %v1595
  %4219 = vmatpush1.msra.mxu0 %v1594
  %4220 = vmatprep.subr.mxu0 0.0
  %4221 = vmatpush2.msra.mxu0 0.0
  %4222 = vmatprep.subr.mxu0 0.0
  %4223 = vmatpush2.msra.mxu0 0.0
  %4224 = vmatprep.subr.mxu0 0.0
  %4225 = vmatpush2.msra.mxu0 0.0
  %4226 = vmatprep.subr.mxu0 0.0
  %4227 = vmatpush2.msra.mxu0 0.0
  %4228 = vmatprep.subr.mxu0 0.0
  %4229 = vmatpush2.msra.mxu0 0.0
  %4230 = vmatprep.subr.mxu0 0.0
  %4231 = vmatpush2.msra.mxu0 0.0
  %4232 = vmatprep.subr.mxu0 0.0
  %4233 = vmatpush2.msra.mxu0 0.0
  %4234 = vmatprep.subr.mxu0 0.0
  %4235 = vmatpush2.msra.mxu0 0.0
  %4236 = vmatprep.subr.mxu0 0.0
  %4237 = vmatpush2.msra.mxu0 0.0
  %4238 = vmatprep.subr.mxu0 0.0
  %4239 = vmatpush2.msra.mxu0 0.0
  %4240 = vmatprep.subr.mxu0 0.0
  %4241 = vmatpush2.msra.mxu0 0.0
  %4242 = vmatprep.subr.mxu0 0.0
  %4243 = vmatpush2.msra.mxu0 0.0
  %4244 = vmatprep.subr.mxu0 0.0
  %4245 = vmatpush2.msra.mxu0 0.0
  %4246 = vmatprep.subr.mxu0 0.0
  %4247 = vmatpush2.msra.mxu0 0.0
  %4248 = vmatprep.subr.mxu0 0.0
  %4249 = vmatpush2.msra.mxu0 0.0
  %4250 = vmatprep.subr.mxu0 0.0
  %4251 = vmatpush2.msra.mxu0 0.0
  %4252 = vmatprep.mubr.f32.mxu0 0.0
  %4253 = vmatmul.mubr.f32.gmra.mxu0 %v4141
  %v4254 = vpop.f32.mrf.mxu0
  %v4255 = vadd.f32 0.0, %v4254
  %v4256 = vpop.f32.mrf.mxu0
  %v4257 = vadd.f32 0.0, %v4256
  %4258 = vmatprep.mubr.f32.mxu0 0.0
  %4259 = vmatmul.mubr.f32.gmra.mxu0 %v4144
  %v4260 = vpop.f32.mrf.mxu0
  %v4261 = vadd.f32 0.0, %v4260
  %v4262 = vpop.f32.mrf.mxu0
  %v4263 = vadd.f32 0.0, %v4262
  %4264 = vmatprep.mubr.f32.mxu0 0.0
  %4265 = vmatmul.mubr.f32.gmra.mxu0 %v4147
  %v4266 = vpop.f32.mrf.mxu0
  %v4267 = vadd.f32 0.0, %v4266
  %v4268 = vpop.f32.mrf.mxu0
  %v4269 = vadd.f32 0.0, %v4268
  %4270 = vmatprep.mubr.f32.mxu0 0.0
  %4271 = vmatmul.mubr.f32.gmra.mxu0 %v4150
  %v4272 = vpop.f32.mrf.mxu0
  %v4273 = vadd.f32 0.0, %v4272
  %v4274 = vpop.f32.mrf.mxu0
  %v4275 = vadd.f32 0.0, %v4274
  %4276 = vmatprep.mubr.f32.mxu0 0.0
  %4277 = vmatmul.mubr.f32.gmra.mxu0 %v4153
  %v4278 = vpop.f32.mrf.mxu0
  %v4279 = vadd.f32 0.0, %v4278
  %v4280 = vpop.f32.mrf.mxu0
  %v4281 = vadd.f32 0.0, %v4280
  %4282 = vmatprep.mubr.f32.mxu0 0.0
  %4283 = vmatmul.mubr.f32.gmra.mxu0 %v4156
  %v4284 = vpop.f32.mrf.mxu0
  %v4285 = vadd.f32 0.0, %v4284
  %v4286 = vpop.f32.mrf.mxu0
  %v4287 = vadd.f32 0.0, %v4286
  %4288 = vmatprep.mubr.f32.mxu0 0.0
  %4289 = vmatmul.mubr.f32.gmra.mxu0 %v4159
  %v4290 = vpop.f32.mrf.mxu0
  %v4291 = vadd.f32 0.0, %v4290
  %v4292 = vpop.f32.mrf.mxu0
  %v4293 = vadd.f32 0.0, %v4292
  %4294 = vmatprep.mubr.f32.mxu0 0.0
  %4295 = vmatmul.mubr.f32.gmra.mxu0 %v4162
  %v4296 = vpop.f32.mrf.mxu0
  %v4297 = vadd.f32 0.0, %v4296
  %v4298 = vpop.f32.mrf.mxu0
  %v4299 = vadd.f32 0.0, %v4298
  %4300 = vmatprep.mubr.f32.mxu0 0.0
  %4301 = vmatmul.mubr.f32.gmra.mxu0 %v4165
  %v4302 = vpop.f32.mrf.mxu0
  %v4303 = vadd.f32 0.0, %v4302
  %v4304 = vpop.f32.mrf.mxu0
  %v4305 = vadd.f32 0.0, %v4304
  %4306 = vmatprep.mubr.f32.mxu0 0.0
  %4307 = vmatmul.mubr.f32.gmra.mxu0 %v4168
  %v4308 = vpop.f32.mrf.mxu0
  %v4309 = vadd.f32 0.0, %v4308
  %v4310 = vpop.f32.mrf.mxu0
  %v4311 = vadd.f32 0.0, %v4310
  %4312 = vmatprep.mubr.f32.mxu0 0.0
  %4313 = vmatmul.mubr.f32.gmra.mxu0 %v4171
  %v4314 = vpop.f32.mrf.mxu0
  %v4315 = vadd.f32 0.0, %v4314
  %v4316 = vpop.f32.mrf.mxu0
  %v4317 = vadd.f32 0.0, %v4316
  %4318 = vmatprep.mubr.f32.mxu0 0.0
  %4319 = vmatmul.mubr.f32.gmra.mxu0 %v4174
  %v4320 = vpop.f32.mrf.mxu0
  %v4321 = vadd.f32 0.0, %v4320
  %v4322 = vpop.f32.mrf.mxu0
  %v4323 = vadd.f32 0.0, %v4322
  %4324 = vmatprep.mubr.f32.mxu0 0.0
  %4325 = vmatmul.mubr.f32.gmra.mxu0 %v4177
  %v4326 = vpop.f32.mrf.mxu0
  %v4327 = vadd.f32 0.0, %v4326
  %v4328 = vpop.f32.mrf.mxu0
  %v4329 = vadd.f32 0.0, %v4328
  %4330 = vmatprep.mubr.f32.mxu0 0.0
  %4331 = vmatmul.mubr.f32.gmra.mxu0 %v4180
  %v4332 = vpop.f32.mrf.mxu0
  %v4333 = vadd.f32 0.0, %v4332
  %v4334 = vpop.f32.mrf.mxu0
  %v4335 = vadd.f32 0.0, %v4334
  %4336 = vmatprep.mubr.f32.mxu0 0.0
  %4337 = vmatmul.mubr.f32.gmra.mxu0 %v4183
  %v4338 = vpop.f32.mrf.mxu0
  %v4339 = vadd.f32 0.0, %v4338
  %v4340 = vpop.f32.mrf.mxu0
  %v4341 = vadd.f32 0.0, %v4340
  %4342 = vmatprep.mubr.f32.mxu0 0.0
  %4343 = vmatmul.mubr.f32.gmra.mxu0 %v4186
  %v4344 = vpop.f32.mrf.mxu0
  %v4345 = vadd.f32 0.0, %v4344
  %v4346 = vpop.f32.mrf.mxu0
  %v4347 = vadd.f32 0.0, %v4346
  %4348 = vdwg.mxu0
  %4349 = vmatprep.subr.mxu0 0.0
  %4350 = vmatpush1.msra.mxu0 0.0
  %4351 = vmatprep.subr.mxu0 0.0
  %4352 = vmatpush1.msra.mxu0 0.0
  %4353 = vmatprep.subr.mxu0 0.0
  %4354 = vmatpush1.msra.mxu0 0.0
  %4355 = vmatprep.subr.mxu0 0.0
  %4356 = vmatpush1.msra.mxu0 0.0
  %4357 = vmatprep.subr.mxu0 0.0
  %4358 = vmatpush1.msra.mxu0 0.0
  %4359 = vmatprep.subr.mxu0 0.0
  %4360 = vmatpush1.msra.mxu0 0.0
  %4361 = vmatprep.subr.mxu0 0.0
  %4362 = vmatpush1.msra.mxu0 0.0
  %4363 = vmatprep.subr.mxu0 0.0
  %4364 = vmatpush1.msra.mxu0 0.0
  %4365 = vmatprep.subr.mxu0 0.0
  %4366 = vmatpush1.msra.mxu0 0.0
  %4367 = vmatprep.subr.mxu0 0.0
  %4368 = vmatpush1.msra.mxu0 0.0
  %4369 = vmatprep.subr.mxu0 0.0
  %4370 = vmatpush1.msra.mxu0 0.0
  %4371 = vmatprep.subr.mxu0 0.0
  %4372 = vmatpush1.msra.mxu0 0.0
  %4373 = vmatprep.subr.mxu0 %v1621
  %4374 = vmatpush1.msra.mxu0 %v1620
  %4375 = vmatprep.subr.mxu0 %v1613
  %4376 = vmatpush1.msra.mxu0 %v1612
  %4377 = vmatprep.subr.mxu0 %v1605
  %4378 = vmatpush1.msra.mxu0 %v1604
  %4379 = vmatprep.subr.mxu0 %v1597
  %4380 = vmatpush1.msra.mxu0 %v1596
  %4381 = vmatprep.subr.mxu0 0.0
  %4382 = vmatpush2.msra.mxu0 0.0
  %4383 = vmatprep.subr.mxu0 0.0
  %4384 = vmatpush2.msra.mxu0 0.0
  %4385 = vmatprep.subr.mxu0 0.0
  %4386 = vmatpush2.msra.mxu0 0.0
  %4387 = vmatprep.subr.mxu0 0.0
  %4388 = vmatpush2.msra.mxu0 0.0
  %4389 = vmatprep.subr.mxu0 0.0
  %4390 = vmatpush2.msra.mxu0 0.0
  %4391 = vmatprep.subr.mxu0 0.0
  %4392 = vmatpush2.msra.mxu0 0.0
  %4393 = vmatprep.subr.mxu0 0.0
  %4394 = vmatpush2.msra.mxu0 0.0
  %4395 = vmatprep.subr.mxu0 0.0
  %4396 = vmatpush2.msra.mxu0 0.0
  %4397 = vmatprep.subr.mxu0 0.0
  %4398 = vmatpush2.msra.mxu0 0.0
  %4399 = vmatprep.subr.mxu0 0.0
  %4400 = vmatpush2.msra.mxu0 0.0
  %4401 = vmatprep.subr.mxu0 0.0
  %4402 = vmatpush2.msra.mxu0 0.0
  %4403 = vmatprep.subr.mxu0 0.0
  %4404 = vmatpush2.msra.mxu0 0.0
  %4405 = vmatprep.subr.mxu0 0.0
  %4406 = vmatpush2.msra.mxu0 0.0
  %4407 = vmatprep.subr.mxu0 0.0
  %4408 = vmatpush2.msra.mxu0 0.0
  %4409 = vmatprep.subr.mxu0 0.0
  %4410 = vmatpush2.msra.mxu0 0.0
  %4411 = vmatprep.subr.mxu0 0.0
  %4412 = vmatpush2.msra.mxu0 0.0
  %4413 = vmatprep.mubr.f32.mxu0 0.0
  %4414 = vmatmul.mubr.f32.gmra.mxu0 %v4141
  %v4415 = vpop.f32.mrf.mxu0
  %v4416 = vadd.f32 0.0, %v4415
  %v4417 = vpop.f32.mrf.mxu0
  %v4418 = vadd.f32 0.0, %v4417
  %4419 = vmatprep.mubr.f32.mxu0 0.0
  %4420 = vmatmul.mubr.f32.gmra.mxu0 %v4144
  %v4421 = vpop.f32.mrf.mxu0
  %v4422 = vadd.f32 0.0, %v4421
  %v4423 = vpop.f32.mrf.mxu0
  %v4424 = vadd.f32 0.0, %v4423
  %4425 = vmatprep.mubr.f32.mxu0 0.0
  %4426 = vmatmul.mubr.f32.gmra.mxu0 %v4147
  %v4427 = vpop.f32.mrf.mxu0
  %v4428 = vadd.f32 0.0, %v4427
  %v4429 = vpop.f32.mrf.mxu0
  %v4430 = vadd.f32 0.0, %v4429
  %4431 = vmatprep.mubr.f32.mxu0 0.0
  %4432 = vmatmul.mubr.f32.gmra.mxu0 %v4150
  %v4433 = vpop.f32.mrf.mxu0
  %v4434 = vadd.f32 0.0, %v4433
  %v4435 = vpop.f32.mrf.mxu0
  %v4436 = vadd.f32 0.0, %v4435
  %4437 = vmatprep.mubr.f32.mxu0 0.0
  %4438 = vmatmul.mubr.f32.gmra.mxu0 %v4153
  %v4439 = vpop.f32.mrf.mxu0
  %v4440 = vadd.f32 0.0, %v4439
  %v4441 = vpop.f32.mrf.mxu0
  %v4442 = vadd.f32 0.0, %v4441
  %4443 = vmatprep.mubr.f32.mxu0 0.0
  %4444 = vmatmul.mubr.f32.gmra.mxu0 %v4156
  %v4445 = vpop.f32.mrf.mxu0
  %v4446 = vadd.f32 0.0, %v4445
  %v4447 = vpop.f32.mrf.mxu0
  %v4448 = vadd.f32 0.0, %v4447
  %4449 = vmatprep.mubr.f32.mxu0 0.0
  %4450 = vmatmul.mubr.f32.gmra.mxu0 %v4159
  %v4451 = vpop.f32.mrf.mxu0
  %v4452 = vadd.f32 0.0, %v4451
  %v4453 = vpop.f32.mrf.mxu0
  %v4454 = vadd.f32 0.0, %v4453
  %4455 = vmatprep.mubr.f32.mxu0 0.0
  %4456 = vmatmul.mubr.f32.gmra.mxu0 %v4162
  %v4457 = vpop.f32.mrf.mxu0
  %v4458 = vadd.f32 0.0, %v4457
  %v4459 = vpop.f32.mrf.mxu0
  %v4460 = vadd.f32 0.0, %v4459
  %4461 = vmatprep.mubr.f32.mxu0 0.0
  %4462 = vmatmul.mubr.f32.gmra.mxu0 %v4165
  %v4463 = vpop.f32.mrf.mxu0
  %v4464 = vadd.f32 0.0, %v4463
  %v4465 = vpop.f32.mrf.mxu0
  %v4466 = vadd.f32 0.0, %v4465
  %4467 = vmatprep.mubr.f32.mxu0 0.0
  %4468 = vmatmul.mubr.f32.gmra.mxu0 %v4168
  %v4469 = vpop.f32.mrf.mxu0
  %v4470 = vadd.f32 0.0, %v4469
  %v4471 = vpop.f32.mrf.mxu0
  %v4472 = vadd.f32 0.0, %v4471
  %4473 = vmatprep.mubr.f32.mxu0 0.0
  %4474 = vmatmul.mubr.f32.gmra.mxu0 %v4171
  %v4475 = vpop.f32.mrf.mxu0
  %v4476 = vadd.f32 0.0, %v4475
  %v4477 = vpop.f32.mrf.mxu0
  %v4478 = vadd.f32 0.0, %v4477
  %4479 = vmatprep.mubr.f32.mxu0 0.0
  %4480 = vmatmul.mubr.f32.gmra.mxu0 %v4174
  %v4481 = vpop.f32.mrf.mxu0
  %v4482 = vadd.f32 0.0, %v4481
  %v4483 = vpop.f32.mrf.mxu0
  %v4484 = vadd.f32 0.0, %v4483
  %4485 = vmatprep.mubr.f32.mxu0 0.0
  %4486 = vmatmul.mubr.f32.gmra.mxu0 %v4177
  %v4487 = vpop.f32.mrf.mxu0
  %v4488 = vadd.f32 0.0, %v4487
  %v4489 = vpop.f32.mrf.mxu0
  %v4490 = vadd.f32 0.0, %v4489
  %4491 = vmatprep.mubr.f32.mxu0 0.0
  %4492 = vmatmul.mubr.f32.gmra.mxu0 %v4180
  %v4493 = vpop.f32.mrf.mxu0
  %v4494 = vadd.f32 0.0, %v4493
  %v4495 = vpop.f32.mrf.mxu0
  %v4496 = vadd.f32 0.0, %v4495
  %4497 = vmatprep.mubr.f32.mxu0 0.0
  %4498 = vmatmul.mubr.f32.gmra.mxu0 %v4183
  %v4499 = vpop.f32.mrf.mxu0
  %v4500 = vadd.f32 0.0, %v4499
  %v4501 = vpop.f32.mrf.mxu0
  %v4502 = vadd.f32 0.0, %v4501
  %4503 = vmatprep.mubr.f32.mxu0 0.0
  %4504 = vmatmul.mubr.f32.gmra.mxu0 %v4186
  %v4505 = vpop.f32.mrf.mxu0
  %v4506 = vadd.f32 0.0, %v4505
  %v4507 = vpop.f32.mrf.mxu0
  %v4508 = vadd.f32 0.0, %v4507
  %4509 = vdwg.mxu0
  %4510 = vmatprep.subr.mxu0 0.0
  %4511 = vmatpush1.msra.mxu0 0.0
  %4512 = vmatprep.subr.mxu0 0.0
  %4513 = vmatpush1.msra.mxu0 0.0
  %4514 = vmatprep.subr.mxu0 0.0
  %4515 = vmatpush1.msra.mxu0 0.0
  %4516 = vmatprep.subr.mxu0 0.0
  %4517 = vmatpush1.msra.mxu0 0.0
  %4518 = vmatprep.subr.mxu0 0.0
  %4519 = vmatpush1.msra.mxu0 0.0
  %4520 = vmatprep.subr.mxu0 0.0
  %4521 = vmatpush1.msra.mxu0 0.0
  %4522 = vmatprep.subr.mxu0 0.0
  %4523 = vmatpush1.msra.mxu0 0.0
  %4524 = vmatprep.subr.mxu0 0.0
  %4525 = vmatpush1.msra.mxu0 0.0
  %4526 = vmatprep.subr.mxu0 0.0
  %4527 = vmatpush1.msra.mxu0 0.0
  %4528 = vmatprep.subr.mxu0 0.0
  %4529 = vmatpush1.msra.mxu0 0.0
  %4530 = vmatprep.subr.mxu0 0.0
  %4531 = vmatpush1.msra.mxu0 0.0
  %4532 = vmatprep.subr.mxu0 0.0
  %4533 = vmatpush1.msra.mxu0 0.0
  %4534 = vmatprep.subr.mxu0 %v1623
  %4535 = vmatpush1.msra.mxu0 %v1622
  %4536 = vmatprep.subr.mxu0 %v1615
  %4537 = vmatpush1.msra.mxu0 %v1614
  %4538 = vmatprep.subr.mxu0 %v1607
  %4539 = vmatpush1.msra.mxu0 %v1606
  %4540 = vmatprep.subr.mxu0 %v1599
  %4541 = vmatpush1.msra.mxu0 %v1598
  %4542 = vmatprep.subr.mxu0 0.0
  %4543 = vmatpush2.msra.mxu0 0.0
  %4544 = vmatprep.subr.mxu0 0.0
  %4545 = vmatpush2.msra.mxu0 0.0
  %4546 = vmatprep.subr.mxu0 0.0
  %4547 = vmatpush2.msra.mxu0 0.0
  %4548 = vmatprep.subr.mxu0 0.0
  %4549 = vmatpush2.msra.mxu0 0.0
  %4550 = vmatprep.subr.mxu0 0.0
  %4551 = vmatpush2.msra.mxu0 0.0
  %4552 = vmatprep.subr.mxu0 0.0
  %4553 = vmatpush2.msra.mxu0 0.0
  %4554 = vmatprep.subr.mxu0 0.0
  %4555 = vmatpush2.msra.mxu0 0.0
  %4556 = vmatprep.subr.mxu0 0.0
  %4557 = vmatpush2.msra.mxu0 0.0
  %4558 = vmatprep.subr.mxu0 0.0
  %4559 = vmatpush2.msra.mxu0 0.0
  %4560 = vmatprep.subr.mxu0 0.0
  %4561 = vmatpush2.msra.mxu0 0.0
  %4562 = vmatprep.subr.mxu0 0.0
  %4563 = vmatpush2.msra.mxu0 0.0
  %4564 = vmatprep.subr.mxu0 0.0
  %4565 = vmatpush2.msra.mxu0 0.0
  %4566 = vmatprep.subr.mxu0 0.0
  %4567 = vmatpush2.msra.mxu0 0.0
  %4568 = vmatprep.subr.mxu0 0.0
  %4569 = vmatpush2.msra.mxu0 0.0
  %4570 = vmatprep.subr.mxu0 0.0
  %4571 = vmatpush2.msra.mxu0 0.0
  %4572 = vmatprep.subr.mxu0 0.0
  %4573 = vmatpush2.msra.mxu0 0.0
  %4574 = vmatprep.mubr.f32.mxu0 0.0
  %4575 = vmatmul.mubr.f32.gmra.mxu0 %v4141
  %v4576 = vpop.f32.mrf.mxu0
  %v4577 = vadd.f32 0.0, %v4576
  %v4578 = vpop.f32.mrf.mxu0
  %v4579 = vadd.f32 0.0, %v4578
  %4580 = vmatprep.mubr.f32.mxu0 0.0
  %4581 = vmatmul.mubr.f32.gmra.mxu0 %v4144
  %v4582 = vpop.f32.mrf.mxu0
  %v4583 = vadd.f32 0.0, %v4582
  %v4584 = vpop.f32.mrf.mxu0
  %v4585 = vadd.f32 0.0, %v4584
  %4586 = vmatprep.mubr.f32.mxu0 0.0
  %4587 = vmatmul.mubr.f32.gmra.mxu0 %v4147
  %v4588 = vpop.f32.mrf.mxu0
  %v4589 = vadd.f32 0.0, %v4588
  %v4590 = vpop.f32.mrf.mxu0
  %v4591 = vadd.f32 0.0, %v4590
  %4592 = vmatprep.mubr.f32.mxu0 0.0
  %4593 = vmatmul.mubr.f32.gmra.mxu0 %v4150
  %v4594 = vpop.f32.mrf.mxu0
  %v4595 = vadd.f32 0.0, %v4594
  %v4596 = vpop.f32.mrf.mxu0
  %v4597 = vadd.f32 0.0, %v4596
  %4598 = vmatprep.mubr.f32.mxu0 0.0
  %4599 = vmatmul.mubr.f32.gmra.mxu0 %v4153
  %v4600 = vpop.f32.mrf.mxu0
  %v4601 = vadd.f32 0.0, %v4600
  %v4602 = vpop.f32.mrf.mxu0
  %v4603 = vadd.f32 0.0, %v4602
  %4604 = vmatprep.mubr.f32.mxu0 0.0
  %4605 = vmatmul.mubr.f32.gmra.mxu0 %v4156
  %v4606 = vpop.f32.mrf.mxu0
  %v4607 = vadd.f32 0.0, %v4606
  %v4608 = vpop.f32.mrf.mxu0
  %v4609 = vadd.f32 0.0, %v4608
  %4610 = vmatprep.mubr.f32.mxu0 0.0
  %4611 = vmatmul.mubr.f32.gmra.mxu0 %v4159
  %v4612 = vpop.f32.mrf.mxu0
  %v4613 = vadd.f32 0.0, %v4612
  %v4614 = vpop.f32.mrf.mxu0
  %v4615 = vadd.f32 0.0, %v4614
  %4616 = vmatprep.mubr.f32.mxu0 0.0
  %4617 = vmatmul.mubr.f32.gmra.mxu0 %v4162
  %v4618 = vpop.f32.mrf.mxu0
  %v4619 = vadd.f32 0.0, %v4618
  %v4620 = vpop.f32.mrf.mxu0
  %v4621 = vadd.f32 0.0, %v4620
  %4622 = vmatprep.mubr.f32.mxu0 0.0
  %4623 = vmatmul.mubr.f32.gmra.mxu0 %v4165
  %v4624 = vpop.f32.mrf.mxu0
  %v4625 = vadd.f32 0.0, %v4624
  %v4626 = vpop.f32.mrf.mxu0
  %v4627 = vadd.f32 0.0, %v4626
  %4628 = vmatprep.mubr.f32.mxu0 0.0
  %4629 = vmatmul.mubr.f32.gmra.mxu0 %v4168
  %v4630 = vpop.f32.mrf.mxu0
  %v4631 = vadd.f32 0.0, %v4630
  %v4632 = vpop.f32.mrf.mxu0
  %v4633 = vadd.f32 0.0, %v4632
  %4634 = vmatprep.mubr.f32.mxu0 0.0
  %4635 = vmatmul.mubr.f32.gmra.mxu0 %v4171
  %v4636 = vpop.f32.mrf.mxu0
  %v4637 = vadd.f32 0.0, %v4636
  %v4638 = vpop.f32.mrf.mxu0
  %v4639 = vadd.f32 0.0, %v4638
  %4640 = vmatprep.mubr.f32.mxu0 0.0
  %4641 = vmatmul.mubr.f32.gmra.mxu0 %v4174
  %v4642 = vpop.f32.mrf.mxu0
  %v4643 = vadd.f32 0.0, %v4642
  %v4644 = vpop.f32.mrf.mxu0
  %v4645 = vadd.f32 0.0, %v4644
  %4646 = vmatprep.mubr.f32.mxu0 0.0
  %4647 = vmatmul.mubr.f32.gmra.mxu0 %v4177
  %v4648 = vpop.f32.mrf.mxu0
  %v4649 = vadd.f32 0.0, %v4648
  %v4650 = vpop.f32.mrf.mxu0
  %v4651 = vadd.f32 0.0, %v4650
  %4652 = vmatprep.mubr.f32.mxu0 0.0
  %4653 = vmatmul.mubr.f32.gmra.mxu0 %v4180
  %v4654 = vpop.f32.mrf.mxu0
  %v4655 = vadd.f32 0.0, %v4654
  %v4656 = vpop.f32.mrf.mxu0
  %v4657 = vadd.f32 0.0, %v4656
  %4658 = vmatprep.mubr.f32.mxu0 0.0
  %4659 = vmatmul.mubr.f32.gmra.mxu0 %v4183
  %v4660 = vpop.f32.mrf.mxu0
  %v4661 = vadd.f32 0.0, %v4660
  %v4662 = vpop.f32.mrf.mxu0
  %v4663 = vadd.f32 0.0, %v4662
  %4664 = vmatprep.mubr.f32.mxu0 0.0
  %4665 = vmatmul.mubr.f32.gmra.mxu0 %v4186
  %v4666 = vpop.f32.mrf.mxu0
  %v4667 = vadd.f32 0.0, %v4666
  %v4668 = vpop.f32.mrf.mxu0
  %v4669 = vadd.f32 0.0, %v4668
  %4670 = vdwg.mxu0
  %4671 = vmatprep.subr.mxu0 0.0
  %4672 = vmatpush1.msra.mxu0 0.0
  %4673 = vmatprep.subr.mxu0 0.0
  %4674 = vmatpush1.msra.mxu0 0.0
  %4675 = vmatprep.subr.mxu0 0.0
  %4676 = vmatpush1.msra.mxu0 0.0
  %4677 = vmatprep.subr.mxu0 0.0
  %4678 = vmatpush1.msra.mxu0 0.0
  %4679 = vmatprep.subr.mxu0 0.0
  %4680 = vmatpush1.msra.mxu0 0.0
  %4681 = vmatprep.subr.mxu0 0.0
  %4682 = vmatpush1.msra.mxu0 0.0
  %4683 = vmatprep.subr.mxu0 0.0
  %4684 = vmatpush1.msra.mxu0 0.0
  %4685 = vmatprep.subr.mxu0 0.0
  %4686 = vmatpush1.msra.mxu0 0.0
  %4687 = vmatprep.subr.mxu0 0.0
  %4688 = vmatpush1.msra.mxu0 0.0
  %4689 = vmatprep.subr.mxu0 0.0
  %4690 = vmatpush1.msra.mxu0 0.0
  %4691 = vmatprep.subr.mxu0 0.0
  %4692 = vmatpush1.msra.mxu0 0.0
  %4693 = vmatprep.subr.mxu0 0.0
  %4694 = vmatpush1.msra.mxu0 0.0
  %4695 = vmatprep.subr.mxu0 %v1625
  %4696 = vmatpush1.msra.mxu0 %v1624
  %4697 = vmatprep.subr.mxu0 %v1617
  %4698 = vmatpush1.msra.mxu0 %v1616
  %4699 = vmatprep.subr.mxu0 %v1609
  %4700 = vmatpush1.msra.mxu0 %v1608
  %4701 = vmatprep.subr.mxu0 %v1601
  %4702 = vmatpush1.msra.mxu0 %v1600
  %4703 = vmatprep.subr.mxu0 0.0
  %4704 = vmatpush2.msra.mxu0 0.0
  %4705 = vmatprep.subr.mxu0 0.0
  %4706 = vmatpush2.msra.mxu0 0.0
  %4707 = vmatprep.subr.mxu0 0.0
  %4708 = vmatpush2.msra.mxu0 0.0
  %4709 = vmatprep.subr.mxu0 0.0
  %4710 = vmatpush2.msra.mxu0 0.0
  %4711 = vmatprep.subr.mxu0 0.0
  %4712 = vmatpush2.msra.mxu0 0.0
  %4713 = vmatprep.subr.mxu0 0.0
  %4714 = vmatpush2.msra.mxu0 0.0
  %4715 = vmatprep.subr.mxu0 0.0
  %4716 = vmatpush2.msra.mxu0 0.0
  %4717 = vmatprep.subr.mxu0 0.0
  %4718 = vmatpush2.msra.mxu0 0.0
  %4719 = vmatprep.subr.mxu0 0.0
  %4720 = vmatpush2.msra.mxu0 0.0
  %4721 = vmatprep.subr.mxu0 0.0
  %4722 = vmatpush2.msra.mxu0 0.0
  %4723 = vmatprep.subr.mxu0 0.0
  %4724 = vmatpush2.msra.mxu0 0.0
  %4725 = vmatprep.subr.mxu0 0.0
  %4726 = vmatpush2.msra.mxu0 0.0
  %4727 = vmatprep.subr.mxu0 0.0
  %4728 = vmatpush2.msra.mxu0 0.0
  %4729 = vmatprep.subr.mxu0 0.0
  %4730 = vmatpush2.msra.mxu0 0.0
  %4731 = vmatprep.subr.mxu0 0.0
  %4732 = vmatpush2.msra.mxu0 0.0
  %4733 = vmatprep.subr.mxu0 0.0
  %4734 = vmatpush2.msra.mxu0 0.0
  %4735 = vmatprep.mubr.f32.mxu0 0.0
  %4736 = vmatmul.mubr.f32.gmra.mxu0 %v4141
  %v4737 = vpop.f32.mrf.mxu0
  %v4738 = vadd.f32 0.0, %v4737
  %v4739 = vpop.f32.mrf.mxu0
  %v4740 = vadd.f32 0.0, %v4739
  %4741 = vmatprep.mubr.f32.mxu0 0.0
  %4742 = vmatmul.mubr.f32.gmra.mxu0 %v4144
  %v4743 = vpop.f32.mrf.mxu0
  %v4744 = vadd.f32 0.0, %v4743
  %v4745 = vpop.f32.mrf.mxu0
  %v4746 = vadd.f32 0.0, %v4745
  %4747 = vmatprep.mubr.f32.mxu0 0.0
  %4748 = vmatmul.mubr.f32.gmra.mxu0 %v4147
  %v4749 = vpop.f32.mrf.mxu0
  %v4750 = vadd.f32 0.0, %v4749
  %v4751 = vpop.f32.mrf.mxu0
  %v4752 = vadd.f32 0.0, %v4751
  %4753 = vmatprep.mubr.f32.mxu0 0.0
  %4754 = vmatmul.mubr.f32.gmra.mxu0 %v4150
  %v4755 = vpop.f32.mrf.mxu0
  %v4756 = vadd.f32 0.0, %v4755
  %v4757 = vpop.f32.mrf.mxu0
  %v4758 = vadd.f32 0.0, %v4757
  %4759 = vmatprep.mubr.f32.mxu0 0.0
  %4760 = vmatmul.mubr.f32.gmra.mxu0 %v4153
  %v4761 = vpop.f32.mrf.mxu0
  %v4762 = vadd.f32 0.0, %v4761
  %v4763 = vpop.f32.mrf.mxu0
  %v4764 = vadd.f32 0.0, %v4763
  %4765 = vmatprep.mubr.f32.mxu0 0.0
  %4766 = vmatmul.mubr.f32.gmra.mxu0 %v4156
  %v4767 = vpop.f32.mrf.mxu0
  %v4768 = vadd.f32 0.0, %v4767
  %v4769 = vpop.f32.mrf.mxu0
  %v4770 = vadd.f32 0.0, %v4769
  %4771 = vmatprep.mubr.f32.mxu0 0.0
  %4772 = vmatmul.mubr.f32.gmra.mxu0 %v4159
  %v4773 = vpop.f32.mrf.mxu0
  %v4774 = vadd.f32 0.0, %v4773
  %v4775 = vpop.f32.mrf.mxu0
  %v4776 = vadd.f32 0.0, %v4775
  %4777 = vmatprep.mubr.f32.mxu0 0.0
  %4778 = vmatmul.mubr.f32.gmra.mxu0 %v4162
  %v4779 = vpop.f32.mrf.mxu0
  %v4780 = vadd.f32 0.0, %v4779
  %v4781 = vpop.f32.mrf.mxu0
  %v4782 = vadd.f32 0.0, %v4781
  %4783 = vmatprep.mubr.f32.mxu0 0.0
  %4784 = vmatmul.mubr.f32.gmra.mxu0 %v4165
  %v4785 = vpop.f32.mrf.mxu0
  %v4786 = vadd.f32 0.0, %v4785
  %v4787 = vpop.f32.mrf.mxu0
  %v4788 = vadd.f32 0.0, %v4787
  %4789 = vmatprep.mubr.f32.mxu0 0.0
  %4790 = vmatmul.mubr.f32.gmra.mxu0 %v4168
  %v4791 = vpop.f32.mrf.mxu0
  %v4792 = vadd.f32 0.0, %v4791
  %v4793 = vpop.f32.mrf.mxu0
  %v4794 = vadd.f32 0.0, %v4793
  %4795 = vmatprep.mubr.f32.mxu0 0.0
  %4796 = vmatmul.mubr.f32.gmra.mxu0 %v4171
  %v4797 = vpop.f32.mrf.mxu0
  %v4798 = vadd.f32 0.0, %v4797
  %v4799 = vpop.f32.mrf.mxu0
  %v4800 = vadd.f32 0.0, %v4799
  %4801 = vmatprep.mubr.f32.mxu0 0.0
  %4802 = vmatmul.mubr.f32.gmra.mxu0 %v4174
  %v4803 = vpop.f32.mrf.mxu0
  %v4804 = vadd.f32 0.0, %v4803
  %v4805 = vpop.f32.mrf.mxu0
  %v4806 = vadd.f32 0.0, %v4805
  %4807 = vmatprep.mubr.f32.mxu0 0.0
  %4808 = vmatmul.mubr.f32.gmra.mxu0 %v4177
  %v4809 = vpop.f32.mrf.mxu0
  %v4810 = vadd.f32 0.0, %v4809
  %v4811 = vpop.f32.mrf.mxu0
  %v4812 = vadd.f32 0.0, %v4811
  %4813 = vmatprep.mubr.f32.mxu0 0.0
  %4814 = vmatmul.mubr.f32.gmra.mxu0 %v4180
  %v4815 = vpop.f32.mrf.mxu0
  %v4816 = vadd.f32 0.0, %v4815
  %v4817 = vpop.f32.mrf.mxu0
  %v4818 = vadd.f32 0.0, %v4817
  %4819 = vmatprep.mubr.f32.mxu0 0.0
  %4820 = vmatmul.mubr.f32.gmra.mxu0 %v4183
  %v4821 = vpop.f32.mrf.mxu0
  %v4822 = vadd.f32 0.0, %v4821
  %v4823 = vpop.f32.mrf.mxu0
  %v4824 = vadd.f32 0.0, %v4823
  %4825 = vmatprep.mubr.f32.mxu0 0.0
  %4826 = vmatmul.mubr.f32.gmra.mxu0 %v4186
  %v4827 = vpop.f32.mrf.mxu0
  %v4828 = vadd.f32 0.0, %v4827
  %v4829 = vpop.f32.mrf.mxu0
  %v4830 = vadd.f32 0.0, %v4829
  %4831 = vdwg.mxu0
  %v4832 = vmul.f32 %v3563, %v4255
  %v4833 = vmul.f32 %v3565, %v4257
  %v4834 = vmul.f32 %v3724, %v4416
  %v4835 = vmul.f32 %v3726, %v4418
  %v4836 = vmul.f32 %v3885, %v4577
  %v4837 = vmul.f32 %v3887, %v4579
  %v4838 = vmul.f32 %v4046, %v4738
  %v4839 = vmul.f32 %v4048, %v4740
  %v4840 = vmul.f32 %v3569, %v4261
  %v4841 = vmul.f32 %v3571, %v4263
  %v4842 = vmul.f32 %v3730, %v4422
  %v4843 = vmul.f32 %v3732, %v4424
  %v4844 = vmul.f32 %v3891, %v4583
  %v4845 = vmul.f32 %v3893, %v4585
  %v4846 = vmul.f32 %v4052, %v4744
  %v4847 = vmul.f32 %v4054, %v4746
  %v4848 = vmul.f32 %v3575, %v4267
  %v4849 = vmul.f32 %v3577, %v4269
  %v4850 = vmul.f32 %v3736, %v4428
  %v4851 = vmul.f32 %v3738, %v4430
  %v4852 = vmul.f32 %v3897, %v4589
  %v4853 = vmul.f32 %v3899, %v4591
  %v4854 = vmul.f32 %v4058, %v4750
  %v4855 = vmul.f32 %v4060, %v4752
  %v4856 = vmul.f32 %v3581, %v4273
  %v4857 = vmul.f32 %v3583, %v4275
  %v4858 = vmul.f32 %v3742, %v4434
  %v4859 = vmul.f32 %v3744, %v4436
  %v4860 = vmul.f32 %v3903, %v4595
  %v4861 = vmul.f32 %v3905, %v4597
  %v4862 = vmul.f32 %v4064, %v4756
  %v4863 = vmul.f32 %v4066, %v4758
  %v4864 = vmul.f32 %v3587, %v4279
  %v4865 = vmul.f32 %v3589, %v4281
  %v4866 = vmul.f32 %v3748, %v4440
  %v4867 = vmul.f32 %v3750, %v4442
  %v4868 = vmul.f32 %v3909, %v4601
  %v4869 = vmul.f32 %v3911, %v4603
  %v4870 = vmul.f32 %v4070, %v4762
  %v4871 = vmul.f32 %v4072, %v4764
  %v4872 = vmul.f32 %v3593, %v4285
  %v4873 = vmul.f32 %v3595, %v4287
  %v4874 = vmul.f32 %v3754, %v4446
  %v4875 = vmul.f32 %v3756, %v4448
  %v4876 = vmul.f32 %v3915, %v4607
  %v4877 = vmul.f32 %v3917, %v4609
  %v4878 = vmul.f32 %v4076, %v4768
  %v4879 = vmul.f32 %v4078, %v4770
  %v4880 = vmul.f32 %v3599, %v4291
  %v4881 = vmul.f32 %v3601, %v4293
  %v4882 = vmul.f32 %v3760, %v4452
  %v4883 = vmul.f32 %v3762, %v4454
  %v4884 = vmul.f32 %v3921, %v4613
  %v4885 = vmul.f32 %v3923, %v4615
  %v4886 = vmul.f32 %v4082, %v4774
  %v4887 = vmul.f32 %v4084, %v4776
  %v4888 = vmul.f32 %v3605, %v4297
  %v4889 = vmul.f32 %v3607, %v4299
  %v4890 = vmul.f32 %v3766, %v4458
  %v4891 = vmul.f32 %v3768, %v4460
  %v4892 = vmul.f32 %v3927, %v4619
  %v4893 = vmul.f32 %v3929, %v4621
  %v4894 = vmul.f32 %v4088, %v4780
  %v4895 = vmul.f32 %v4090, %v4782
  %v4896 = vmul.f32 %v3611, %v4303
  %v4897 = vmul.f32 %v3613, %v4305
  %v4898 = vmul.f32 %v3772, %v4464
  %v4899 = vmul.f32 %v3774, %v4466
  %v4900 = vmul.f32 %v3933, %v4625
  %v4901 = vmul.f32 %v3935, %v4627
  %v4902 = vmul.f32 %v4094, %v4786
  %v4903 = vmul.f32 %v4096, %v4788
  %v4904 = vmul.f32 %v3617, %v4309
  %v4905 = vmul.f32 %v3619, %v4311
  %v4906 = vmul.f32 %v3778, %v4470
  %v4907 = vmul.f32 %v3780, %v4472
  %v4908 = vmul.f32 %v3939, %v4631
  %v4909 = vmul.f32 %v3941, %v4633
  %v4910 = vmul.f32 %v4100, %v4792
  %v4911 = vmul.f32 %v4102, %v4794
  %v4912 = vmul.f32 %v3623, %v4315
  %v4913 = vmul.f32 %v3625, %v4317
  %v4914 = vmul.f32 %v3784, %v4476
  %v4915 = vmul.f32 %v3786, %v4478
  %v4916 = vmul.f32 %v3945, %v4637
  %v4917 = vmul.f32 %v3947, %v4639
  %v4918 = vmul.f32 %v4106, %v4798
  %v4919 = vmul.f32 %v4108, %v4800
  %v4920 = vmul.f32 %v3629, %v4321
  %v4921 = vmul.f32 %v3631, %v4323
  %v4922 = vmul.f32 %v3790, %v4482
  %v4923 = vmul.f32 %v3792, %v4484
  %v4924 = vmul.f32 %v3951, %v4643
  %v4925 = vmul.f32 %v3953, %v4645
  %v4926 = vmul.f32 %v4112, %v4804
  %v4927 = vmul.f32 %v4114, %v4806
  %v4928 = vmul.f32 %v3635, %v4327
  %v4929 = vmul.f32 %v3637, %v4329
  %v4930 = vmul.f32 %v3796, %v4488
  %v4931 = vmul.f32 %v3798, %v4490
  %v4932 = vmul.f32 %v3957, %v4649
  %v4933 = vmul.f32 %v3959, %v4651
  %v4934 = vmul.f32 %v4118, %v4810
  %v4935 = vmul.f32 %v4120, %v4812
  %v4936 = vmul.f32 %v3641, %v4333
  %v4937 = vmul.f32 %v3643, %v4335
  %v4938 = vmul.f32 %v3802, %v4494
  %v4939 = vmul.f32 %v3804, %v4496
  %v4940 = vmul.f32 %v3963, %v4655
  %v4941 = vmul.f32 %v3965, %v4657
  %v4942 = vmul.f32 %v4124, %v4816
  %v4943 = vmul.f32 %v4126, %v4818
  %v4944 = vmul.f32 %v3647, %v4339
  %v4945 = vmul.f32 %v3649, %v4341
  %v4946 = vmul.f32 %v3808, %v4500
  %v4947 = vmul.f32 %v3810, %v4502
  %v4948 = vmul.f32 %v3969, %v4661
  %v4949 = vmul.f32 %v3971, %v4663
  %v4950 = vmul.f32 %v4130, %v4822
  %v4951 = vmul.f32 %v4132, %v4824
  %v4952 = vmul.f32 %v3653, %v4345
  %v4953 = vmul.f32 %v3655, %v4347
  %v4954 = vmul.f32 %v3814, %v4506
  %v4955 = vmul.f32 %v3816, %v4508
  %v4956 = vmul.f32 %v3975, %v4667
  %v4957 = vmul.f32 %v3977, %v4669
  %v4958 = vmul.f32 %v4136, %v4828
  %v4959 = vmul.f32 %v4138, %v4830
  %v4960 = vld [vmem:[%s7] sm:$0xff]
  %v4961 = vld [vmem:[%s7 + $0x8] sm:$0xff]
  %v4962 = vld [vmem:[%s7 + $0x10] sm:$0xff]
  %v4963 = vld [vmem:[%s7 + $0x18] sm:$0xff]
  %v4964 = vld [vmem:[%s7 + $0x20] sm:$0xff]
  %v4965 = vld [vmem:[%s7 + $0x28] sm:$0xff]
  %v4966 = vld [vmem:[%s7 + $0x30] sm:$0xff]
  %v4967 = vld [vmem:[%s7 + $0x38] sm:$0xff]
  %v4968 = vld [vmem:[%s7 + $0x40] sm:$0xff]
  %v4969 = vld [vmem:[%s7 + $0x48] sm:$0xff]
  %v4970 = vld [vmem:[%s7 + $0x50] sm:$0xff]
  %v4971 = vld [vmem:[%s7 + $0x58] sm:$0xff]
  %v4972 = vld [vmem:[%s7 + $0x60] sm:$0xff]
  %v4973 = vld [vmem:[%s7 + $0x68] sm:$0xff]
  %v4974 = vld [vmem:[%s7 + $0x70] sm:$0xff]
  %v4975 = vld [vmem:[%s7 + $0x78] sm:$0xff]
  %v4976 = vld [vmem:[%s7 + $0x80] sm:$0xff]
  %v4977 = vld [vmem:[%s7 + $0x88] sm:$0xff]
  %v4978 = vld [vmem:[%s7 + $0x90] sm:$0xff]
  %v4979 = vld [vmem:[%s7 + $0x98] sm:$0xff]
  %v4980 = vld [vmem:[%s7 + $0xa0] sm:$0xff]
  %v4981 = vld [vmem:[%s7 + $0xa8] sm:$0xff]
  %v4982 = vld [vmem:[%s7 + $0xb0] sm:$0xff]
  %v4983 = vld [vmem:[%s7 + $0xb8] sm:$0xff]
  %v4984 = vld [vmem:[%s7 + $0xc0] sm:$0xff]
  %v4985 = vld [vmem:[%s7 + $0xc8] sm:$0xff]
  %v4986 = vld [vmem:[%s7 + $0xd0] sm:$0xff]
  %v4987 = vld [vmem:[%s7 + $0xd8] sm:$0xff]
  %v4988 = vld [vmem:[%s7 + $0xe0] sm:$0xff]
  %v4989 = vld [vmem:[%s7 + $0xe8] sm:$0xff]
  %v4990 = vld [vmem:[%s7 + $0xf0] sm:$0xff]
  %v4991 = vld [vmem:[%s7 + $0xf8] sm:$0xff]
  %v4992 = vld [vmem:[%s7 + $0x100] sm:$0xff]
  %v4993 = vld [vmem:[%s7 + $0x108] sm:$0xff]
  %v4994 = vld [vmem:[%s7 + $0x110] sm:$0xff]
  %v4995 = vld [vmem:[%s7 + $0x118] sm:$0xff]
  %v4996 = vld [vmem:[%s7 + $0x120] sm:$0xff]
  %v4997 = vld [vmem:[%s7 + $0x128] sm:$0xff]
  %v4998 = vld [vmem:[%s7 + $0x130] sm:$0xff]
  %v4999 = vld [vmem:[%s7 + $0x138] sm:$0xff]
  %v5000 = vld [vmem:[%s7 + $0x140] sm:$0xff]
  %v5001 = vld [vmem:[%s7 + $0x148] sm:$0xff]
  %v5002 = vld [vmem:[%s7 + $0x150] sm:$0xff]
  %v5003 = vld [vmem:[%s7 + $0x158] sm:$0xff]
  %v5004 = vld [vmem:[%s7 + $0x160] sm:$0xff]
  %v5005 = vld [vmem:[%s7 + $0x168] sm:$0xff]
  %v5006 = vld [vmem:[%s7 + $0x170] sm:$0xff]
  %v5007 = vld [vmem:[%s7 + $0x178] sm:$0xff]
  %v5008 = vld [vmem:[%s7 + $0x180] sm:$0xff]
  %v5009 = vld [vmem:[%s7 + $0x188] sm:$0xff]
  %v5010 = vld [vmem:[%s7 + $0x190] sm:$0xff]
  %v5011 = vld [vmem:[%s7 + $0x198] sm:$0xff]
  %v5012 = vld [vmem:[%s7 + $0x1a0] sm:$0xff]
  %v5013 = vld [vmem:[%s7 + $0x1a8] sm:$0xff]
  %v5014 = vld [vmem:[%s7 + $0x1b0] sm:$0xff]
  %v5015 = vld [vmem:[%s7 + $0x1b8] sm:$0xff]
  %v5016 = vld [vmem:[%s7 + $0x1c0] sm:$0xff]
  %v5017 = vld [vmem:[%s7 + $0x1c8] sm:$0xff]
  %v5018 = vld [vmem:[%s7 + $0x1d0] sm:$0xff]
  %v5019 = vld [vmem:[%s7 + $0x1d8] sm:$0xff]
  %v5020 = vld [vmem:[%s7 + $0x1e0] sm:$0xff]
  %v5021 = vld [vmem:[%s7 + $0x1e8] sm:$0xff]
  %v5022 = vld [vmem:[%s7 + $0x1f0] sm:$0xff]
  %v5023 = vld [vmem:[%s7 + $0x1f8] sm:$0xff]
  %v5024 = vld [vmem:[%s7 + $0x200] sm:$0xff]
  %v5025 = vld [vmem:[%s7 + $0x208] sm:$0xff]
  %v5026 = vld [vmem:[%s7 + $0x210] sm:$0xff]
  %v5027 = vld [vmem:[%s7 + $0x218] sm:$0xff]
  %v5028 = vld [vmem:[%s7 + $0x220] sm:$0xff]
  %v5029 = vld [vmem:[%s7 + $0x228] sm:$0xff]
  %v5030 = vld [vmem:[%s7 + $0x230] sm:$0xff]
  %v5031 = vld [vmem:[%s7 + $0x238] sm:$0xff]
  %v5032 = vld [vmem:[%s7 + $0x240] sm:$0xff]
  %v5033 = vld [vmem:[%s7 + $0x248] sm:$0xff]
  %v5034 = vld [vmem:[%s7 + $0x250] sm:$0xff]
  %v5035 = vld [vmem:[%s7 + $0x258] sm:$0xff]
  %v5036 = vld [vmem:[%s7 + $0x260] sm:$0xff]
  %v5037 = vld [vmem:[%s7 + $0x268] sm:$0xff]
  %v5038 = vld [vmem:[%s7 + $0x270] sm:$0xff]
  %v5039 = vld [vmem:[%s7 + $0x278] sm:$0xff]
  %v5040 = vld [vmem:[%s7 + $0x280] sm:$0xff]
  %v5041 = vld [vmem:[%s7 + $0x288] sm:$0xff]
  %v5042 = vld [vmem:[%s7 + $0x290] sm:$0xff]
  %v5043 = vld [vmem:[%s7 + $0x298] sm:$0xff]
  %v5044 = vld [vmem:[%s7 + $0x2a0] sm:$0xff]
  %v5045 = vld [vmem:[%s7 + $0x2a8] sm:$0xff]
  %v5046 = vld [vmem:[%s7 + $0x2b0] sm:$0xff]
  %v5047 = vld [vmem:[%s7 + $0x2b8] sm:$0xff]
  %v5048 = vld [vmem:[%s7 + $0x2c0] sm:$0xff]
  %v5049 = vld [vmem:[%s7 + $0x2c8] sm:$0xff]
  %v5050 = vld [vmem:[%s7 + $0x2d0] sm:$0xff]
  %v5051 = vld [vmem:[%s7 + $0x2d8] sm:$0xff]
  %v5052 = vld [vmem:[%s7 + $0x2e0] sm:$0xff]
  %v5053 = vld [vmem:[%s7 + $0x2e8] sm:$0xff]
  %v5054 = vld [vmem:[%s7 + $0x2f0] sm:$0xff]
  %v5055 = vld [vmem:[%s7 + $0x2f8] sm:$0xff]
  %v5056 = vld [vmem:[%s7 + $0x300] sm:$0xff]
  %v5057 = vld [vmem:[%s7 + $0x308] sm:$0xff]
  %v5058 = vld [vmem:[%s7 + $0x310] sm:$0xff]
  %v5059 = vld [vmem:[%s7 + $0x318] sm:$0xff]
  %v5060 = vld [vmem:[%s7 + $0x320] sm:$0xff]
  %v5061 = vld [vmem:[%s7 + $0x328] sm:$0xff]
  %v5062 = vld [vmem:[%s7 + $0x330] sm:$0xff]
  %v5063 = vld [vmem:[%s7 + $0x338] sm:$0xff]
  %v5064 = vld [vmem:[%s7 + $0x340] sm:$0xff]
  %v5065 = vld [vmem:[%s7 + $0x348] sm:$0xff]
  %v5066 = vld [vmem:[%s7 + $0x350] sm:$0xff]
  %v5067 = vld [vmem:[%s7 + $0x358] sm:$0xff]
  %v5068 = vld [vmem:[%s7 + $0x360] sm:$0xff]
  %v5069 = vld [vmem:[%s7 + $0x368] sm:$0xff]
  %v5070 = vld [vmem:[%s7 + $0x370] sm:$0xff]
  %v5071 = vld [vmem:[%s7 + $0x378] sm:$0xff]
  %v5072 = vld [vmem:[%s7 + $0x380] sm:$0xff]
  %v5073 = vld [vmem:[%s7 + $0x388] sm:$0xff]
  %v5074 = vld [vmem:[%s7 + $0x390] sm:$0xff]
  %v5075 = vld [vmem:[%s7 + $0x398] sm:$0xff]
  %v5076 = vld [vmem:[%s7 + $0x3a0] sm:$0xff]
  %v5077 = vld [vmem:[%s7 + $0x3a8] sm:$0xff]
  %v5078 = vld [vmem:[%s7 + $0x3b0] sm:$0xff]
  %v5079 = vld [vmem:[%s7 + $0x3b8] sm:$0xff]
  %v5080 = vld [vmem:[%s7 + $0x3c0] sm:$0xff]
  %v5081 = vld [vmem:[%s7 + $0x3c8] sm:$0xff]
  %v5082 = vld [vmem:[%s7 + $0x3d0] sm:$0xff]
  %v5083 = vld [vmem:[%s7 + $0x3d8] sm:$0xff]
  %v5084 = vld [vmem:[%s7 + $0x3e0] sm:$0xff]
  %v5085 = vld [vmem:[%s7 + $0x3e8] sm:$0xff]
  %v5086 = vld [vmem:[%s7 + $0x3f0] sm:$0xff]
  %v5087 = vld [vmem:[%s7 + $0x3f8] sm:$0xff]
  %v5088 = vld [vmem:[%s7 + $0x400] sm:$0xff]
  %v5089 = vld [vmem:[%s7 + $0x408] sm:$0xff]
  %v5090 = vld [vmem:[%s7 + $0x410] sm:$0xff]
  %v5091 = vld [vmem:[%s7 + $0x418] sm:$0xff]
  %5092 = vmatprep.subr.mxu0 0.0
  %5093 = vmatpush1.msra.mxu0 %v4975
  %5094 = vmatprep.subr.mxu0 0.0
  %5095 = vmatpush1.msra.mxu0 %v4974
  %5096 = vmatprep.subr.mxu0 0.0
  %5097 = vmatpush1.msra.mxu0 %v4973
  %5098 = vmatprep.subr.mxu0 0.0
  %5099 = vmatpush1.msra.mxu0 %v4972
  %5100 = vmatprep.subr.mxu0 0.0
  %5101 = vmatpush1.msra.mxu0 %v4971
  %5102 = vmatprep.subr.mxu0 0.0
  %5103 = vmatpush1.msra.mxu0 %v4970
  %5104 = vmatprep.subr.mxu0 0.0
  %5105 = vmatpush1.msra.mxu0 %v4969
  %5106 = vmatprep.subr.mxu0 0.0
  %5107 = vmatpush1.msra.mxu0 %v4968
  %5108 = vmatprep.subr.mxu0 0.0
  %5109 = vmatpush1.msra.mxu0 %v4967
  %5110 = vmatprep.subr.mxu0 0.0
  %5111 = vmatpush1.msra.mxu0 %v4966
  %5112 = vmatprep.subr.mxu0 0.0
  %5113 = vmatpush1.msra.mxu0 %v4965
  %5114 = vmatprep.subr.mxu0 0.0
  %5115 = vmatpush1.msra.mxu0 %v4964
  %5116 = vmatprep.subr.mxu0 0.0
  %5117 = vmatpush1.msra.mxu0 %v4963
  %5118 = vmatprep.subr.mxu0 0.0
  %5119 = vmatpush1.msra.mxu0 %v4962
  %5120 = vmatprep.subr.mxu0 0.0
  %5121 = vmatpush1.msra.mxu0 %v4961
  %5122 = vmatprep.subr.mxu0 0.0
  %5123 = vmatpush1.msra.mxu0 %v4960
  %5124 = vmatprep.subr.mxu0 0.0
  %5125 = vmatpush2.msra.mxu0 %v4991
  %5126 = vmatprep.subr.mxu0 0.0
  %5127 = vmatpush2.msra.mxu0 %v4990
  %5128 = vmatprep.subr.mxu0 0.0
  %5129 = vmatpush2.msra.mxu0 %v4989
  %5130 = vmatprep.subr.mxu0 0.0
  %5131 = vmatpush2.msra.mxu0 %v4988
  %5132 = vmatprep.subr.mxu0 0.0
  %5133 = vmatpush2.msra.mxu0 %v4987
  %5134 = vmatprep.subr.mxu0 0.0
  %5135 = vmatpush2.msra.mxu0 %v4986
  %5136 = vmatprep.subr.mxu0 0.0
  %5137 = vmatpush2.msra.mxu0 %v4985
  %5138 = vmatprep.subr.mxu0 0.0
  %5139 = vmatpush2.msra.mxu0 %v4984
  %5140 = vmatprep.subr.mxu0 0.0
  %5141 = vmatpush2.msra.mxu0 %v4983
  %5142 = vmatprep.subr.mxu0 0.0
  %5143 = vmatpush2.msra.mxu0 %v4982
  %5144 = vmatprep.subr.mxu0 0.0
  %5145 = vmatpush2.msra.mxu0 %v4981
  %5146 = vmatprep.subr.mxu0 0.0
  %5147 = vmatpush2.msra.mxu0 %v4980
  %5148 = vmatprep.subr.mxu0 0.0
  %5149 = vmatpush2.msra.mxu0 %v4979
  %5150 = vmatprep.subr.mxu0 0.0
  %5151 = vmatpush2.msra.mxu0 %v4978
  %5152 = vmatprep.subr.mxu0 0.0
  %5153 = vmatpush2.msra.mxu0 %v4977
  %5154 = vmatprep.subr.mxu0 0.0
  %5155 = vmatpush2.msra.mxu0 %v4976
  %5156 = vmatprep.mubr.f32.mxu0 %v4833
  %5157 = vmatmul.mubr.f32.gmra.mxu0 %v4832
  %v5158 = vpop.f32.mrf.mxu0
  %v5159 = vadd.f32 %v183, %v5158
  %v5160 = vpop.f32.mrf.mxu0
  %5161 = vmatprep.mubr.f32.mxu0 %v4841
  %5162 = vmatmul.mubr.f32.gmra.mxu0 %v4840
  %v5163 = vpop.f32.mrf.mxu0
  %v5164 = vadd.f32 %v189, %v5163
  %v5165 = vpop.f32.mrf.mxu0
  %5166 = vmatprep.mubr.f32.mxu0 %v4849
  %5167 = vmatmul.mubr.f32.gmra.mxu0 %v4848
  %v5168 = vpop.f32.mrf.mxu0
  %v5169 = vadd.f32 %v195, %v5168
  %v5170 = vpop.f32.mrf.mxu0
  %5171 = vmatprep.mubr.f32.mxu0 %v4857
  %5172 = vmatmul.mubr.f32.gmra.mxu0 %v4856
  %v5173 = vpop.f32.mrf.mxu0
  %v5174 = vadd.f32 %v201, %v5173
  %v5175 = vpop.f32.mrf.mxu0
  %5176 = vmatprep.mubr.f32.mxu0 %v4865
  %5177 = vmatmul.mubr.f32.gmra.mxu0 %v4864
  %v5178 = vpop.f32.mrf.mxu0
  %v5179 = vadd.f32 %v207, %v5178
  %v5180 = vpop.f32.mrf.mxu0
  %5181 = vmatprep.mubr.f32.mxu0 %v4873
  %5182 = vmatmul.mubr.f32.gmra.mxu0 %v4872
  %v5183 = vpop.f32.mrf.mxu0
  %v5184 = vadd.f32 %v213, %v5183
  %v5185 = vpop.f32.mrf.mxu0
  %5186 = vmatprep.mubr.f32.mxu0 %v4881
  %5187 = vmatmul.mubr.f32.gmra.mxu0 %v4880
  %v5188 = vpop.f32.mrf.mxu0
  %v5189 = vadd.f32 %v219, %v5188
  %v5190 = vpop.f32.mrf.mxu0
  %5191 = vmatprep.mubr.f32.mxu0 %v4889
  %5192 = vmatmul.mubr.f32.gmra.mxu0 %v4888
  %v5193 = vpop.f32.mrf.mxu0
  %v5194 = vadd.f32 %v225, %v5193
  %v5195 = vpop.f32.mrf.mxu0
  %5196 = vmatprep.mubr.f32.mxu0 %v4897
  %5197 = vmatmul.mubr.f32.gmra.mxu0 %v4896
  %v5198 = vpop.f32.mrf.mxu0
  %v5199 = vadd.f32 %v231, %v5198
  %v5200 = vpop.f32.mrf.mxu0
  %5201 = vmatprep.mubr.f32.mxu0 %v4905
  %5202 = vmatmul.mubr.f32.gmra.mxu0 %v4904
  %v5203 = vpop.f32.mrf.mxu0
  %v5204 = vadd.f32 %v237, %v5203
  %v5205 = vpop.f32.mrf.mxu0
  %5206 = vmatprep.mubr.f32.mxu0 %v4913
  %5207 = vmatmul.mubr.f32.gmra.mxu0 %v4912
  %v5208 = vpop.f32.mrf.mxu0
  %v5209 = vadd.f32 %v243, %v5208
  %v5210 = vpop.f32.mrf.mxu0
  %5211 = vmatprep.mubr.f32.mxu0 %v4921
  %5212 = vmatmul.mubr.f32.gmra.mxu0 %v4920
  %v5213 = vpop.f32.mrf.mxu0
  %v5214 = vadd.f32 %v249, %v5213
  %v5215 = vpop.f32.mrf.mxu0
  %5216 = vmatprep.mubr.f32.mxu0 %v4929
  %5217 = vmatmul.mubr.f32.gmra.mxu0 %v4928
  %v5218 = vpop.f32.mrf.mxu0
  %v5219 = vadd.f32 %v255, %v5218
  %v5220 = vpop.f32.mrf.mxu0
  %5221 = vmatprep.mubr.f32.mxu0 %v4937
  %5222 = vmatmul.mubr.f32.gmra.mxu0 %v4936
  %v5223 = vpop.f32.mrf.mxu0
  %v5224 = vadd.f32 %v261, %v5223
  %v5225 = vpop.f32.mrf.mxu0
  %5226 = vmatprep.mubr.f32.mxu0 %v4945
  %5227 = vmatmul.mubr.f32.gmra.mxu0 %v4944
  %v5228 = vpop.f32.mrf.mxu0
  %v5229 = vadd.f32 %v267, %v5228
  %v5230 = vpop.f32.mrf.mxu0
  %5231 = vmatprep.mubr.f32.mxu0 %v4953
  %5232 = vmatmul.mubr.f32.gmra.mxu0 %v4952
  %v5233 = vpop.f32.mrf.mxu0
  %v5234 = vadd.f32 %v273, %v5233
  %v5235 = vpop.f32.mrf.mxu0
  %5236 = vdwg.mxu0
  %5237 = vmatprep.subr.mxu0 0.0
  %5238 = vmatpush1.msra.mxu0 %v5007
  %5239 = vmatprep.subr.mxu0 0.0
  %5240 = vmatpush1.msra.mxu0 %v5006
  %5241 = vmatprep.subr.mxu0 0.0
  %5242 = vmatpush1.msra.mxu0 %v5005
  %5243 = vmatprep.subr.mxu0 0.0
  %5244 = vmatpush1.msra.mxu0 %v5004
  %5245 = vmatprep.subr.mxu0 0.0
  %5246 = vmatpush1.msra.mxu0 %v5003
  %5247 = vmatprep.subr.mxu0 0.0
  %5248 = vmatpush1.msra.mxu0 %v5002
  %5249 = vmatprep.subr.mxu0 0.0
  %5250 = vmatpush1.msra.mxu0 %v5001
  %5251 = vmatprep.subr.mxu0 0.0
  %5252 = vmatpush1.msra.mxu0 %v5000
  %5253 = vmatprep.subr.mxu0 0.0
  %5254 = vmatpush1.msra.mxu0 %v4999
  %5255 = vmatprep.subr.mxu0 0.0
  %5256 = vmatpush1.msra.mxu0 %v4998
  %5257 = vmatprep.subr.mxu0 0.0
  %5258 = vmatpush1.msra.mxu0 %v4997
  %5259 = vmatprep.subr.mxu0 0.0
  %5260 = vmatpush1.msra.mxu0 %v4996
  %5261 = vmatprep.subr.mxu0 0.0
  %5262 = vmatpush1.msra.mxu0 %v4995
  %5263 = vmatprep.subr.mxu0 0.0
  %5264 = vmatpush1.msra.mxu0 %v4994
  %5265 = vmatprep.subr.mxu0 0.0
  %5266 = vmatpush1.msra.mxu0 %v4993
  %5267 = vmatprep.subr.mxu0 0.0
  %5268 = vmatpush1.msra.mxu0 %v4992
  %5269 = vmatprep.subr.mxu0 0.0
  %5270 = vmatpush2.msra.mxu0 %v5023
  %5271 = vmatprep.subr.mxu0 0.0
  %5272 = vmatpush2.msra.mxu0 %v5022
  %5273 = vmatprep.subr.mxu0 0.0
  %5274 = vmatpush2.msra.mxu0 %v5021
  %5275 = vmatprep.subr.mxu0 0.0
  %5276 = vmatpush2.msra.mxu0 %v5020
  %5277 = vmatprep.subr.mxu0 0.0
  %5278 = vmatpush2.msra.mxu0 %v5019
  %5279 = vmatprep.subr.mxu0 0.0
  %5280 = vmatpush2.msra.mxu0 %v5018
  %5281 = vmatprep.subr.mxu0 0.0
  %5282 = vmatpush2.msra.mxu0 %v5017
  %5283 = vmatprep.subr.mxu0 0.0
  %5284 = vmatpush2.msra.mxu0 %v5016
  %5285 = vmatprep.subr.mxu0 0.0
  %5286 = vmatpush2.msra.mxu0 %v5015
  %5287 = vmatprep.subr.mxu0 0.0
  %5288 = vmatpush2.msra.mxu0 %v5014
  %5289 = vmatprep.subr.mxu0 0.0
  %5290 = vmatpush2.msra.mxu0 %v5013
  %5291 = vmatprep.subr.mxu0 0.0
  %5292 = vmatpush2.msra.mxu0 %v5012
  %5293 = vmatprep.subr.mxu0 0.0
  %5294 = vmatpush2.msra.mxu0 %v5011
  %5295 = vmatprep.subr.mxu0 0.0
  %5296 = vmatpush2.msra.mxu0 %v5010
  %5297 = vmatprep.subr.mxu0 0.0
  %5298 = vmatpush2.msra.mxu0 %v5009
  %5299 = vmatprep.subr.mxu0 0.0
  %5300 = vmatpush2.msra.mxu0 %v5008
  %5301 = vmatprep.mubr.f32.mxu0 %v4835
  %5302 = vmatmul.mubr.f32.gmra.mxu0 %v4834
  %v5303 = vpop.f32.mrf.mxu0
  %v5304 = vadd.f32 %v5159, %v5303
  %v5305 = vpop.f32.mrf.mxu0
  %5306 = vmatprep.mubr.f32.mxu0 %v4843
  %5307 = vmatmul.mubr.f32.gmra.mxu0 %v4842
  %v5308 = vpop.f32.mrf.mxu0
  %v5309 = vadd.f32 %v5164, %v5308
  %v5310 = vpop.f32.mrf.mxu0
  %5311 = vmatprep.mubr.f32.mxu0 %v4851
  %5312 = vmatmul.mubr.f32.gmra.mxu0 %v4850
  %v5313 = vpop.f32.mrf.mxu0
  %v5314 = vadd.f32 %v5169, %v5313
  %v5315 = vpop.f32.mrf.mxu0
  %5316 = vmatprep.mubr.f32.mxu0 %v4859
  %5317 = vmatmul.mubr.f32.gmra.mxu0 %v4858
  %v5318 = vpop.f32.mrf.mxu0
  %v5319 = vadd.f32 %v5174, %v5318
  %v5320 = vpop.f32.mrf.mxu0
  %5321 = vmatprep.mubr.f32.mxu0 %v4867
  %5322 = vmatmul.mubr.f32.gmra.mxu0 %v4866
  %v5323 = vpop.f32.mrf.mxu0
  %v5324 = vadd.f32 %v5179, %v5323
  %v5325 = vpop.f32.mrf.mxu0
  %5326 = vmatprep.mubr.f32.mxu0 %v4875
  %5327 = vmatmul.mubr.f32.gmra.mxu0 %v4874
  %v5328 = vpop.f32.mrf.mxu0
  %v5329 = vadd.f32 %v5184, %v5328
  %v5330 = vpop.f32.mrf.mxu0
  %5331 = vmatprep.mubr.f32.mxu0 %v4883
  %5332 = vmatmul.mubr.f32.gmra.mxu0 %v4882
  %v5333 = vpop.f32.mrf.mxu0
  %v5334 = vadd.f32 %v5189, %v5333
  %v5335 = vpop.f32.mrf.mxu0
  %5336 = vmatprep.mubr.f32.mxu0 %v4891
  %5337 = vmatmul.mubr.f32.gmra.mxu0 %v4890
  %v5338 = vpop.f32.mrf.mxu0
  %v5339 = vadd.f32 %v5194, %v5338
  %v5340 = vpop.f32.mrf.mxu0
  %5341 = vmatprep.mubr.f32.mxu0 %v4899
  %5342 = vmatmul.mubr.f32.gmra.mxu0 %v4898
  %v5343 = vpop.f32.mrf.mxu0
  %v5344 = vadd.f32 %v5199, %v5343
  %v5345 = vpop.f32.mrf.mxu0
  %5346 = vmatprep.mubr.f32.mxu0 %v4907
  %5347 = vmatmul.mubr.f32.gmra.mxu0 %v4906
  %v5348 = vpop.f32.mrf.mxu0
  %v5349 = vadd.f32 %v5204, %v5348
  %v5350 = vpop.f32.mrf.mxu0
  %5351 = vmatprep.mubr.f32.mxu0 %v4915
  %5352 = vmatmul.mubr.f32.gmra.mxu0 %v4914
  %v5353 = vpop.f32.mrf.mxu0
  %v5354 = vadd.f32 %v5209, %v5353
  %v5355 = vpop.f32.mrf.mxu0
  %5356 = vmatprep.mubr.f32.mxu0 %v4923
  %5357 = vmatmul.mubr.f32.gmra.mxu0 %v4922
  %v5358 = vpop.f32.mrf.mxu0
  %v5359 = vadd.f32 %v5214, %v5358
  %v5360 = vpop.f32.mrf.mxu0
  %5361 = vmatprep.mubr.f32.mxu0 %v4931
  %5362 = vmatmul.mubr.f32.gmra.mxu0 %v4930
  %v5363 = vpop.f32.mrf.mxu0
  %v5364 = vadd.f32 %v5219, %v5363
  %v5365 = vpop.f32.mrf.mxu0
  %5366 = vmatprep.mubr.f32.mxu0 %v4939
  %5367 = vmatmul.mubr.f32.gmra.mxu0 %v4938
  %v5368 = vpop.f32.mrf.mxu0
  %v5369 = vadd.f32 %v5224, %v5368
  %v5370 = vpop.f32.mrf.mxu0
  %5371 = vmatprep.mubr.f32.mxu0 %v4947
  %5372 = vmatmul.mubr.f32.gmra.mxu0 %v4946
  %v5373 = vpop.f32.mrf.mxu0
  %v5374 = vadd.f32 %v5229, %v5373
  %v5375 = vpop.f32.mrf.mxu0
  %5376 = vmatprep.mubr.f32.mxu0 %v4955
  %5377 = vmatmul.mubr.f32.gmra.mxu0 %v4954
  %v5378 = vpop.f32.mrf.mxu0
  %v5379 = vadd.f32 %v5234, %v5378
  %v5380 = vpop.f32.mrf.mxu0
  %5381 = vdwg.mxu0
  %5382 = vmatprep.subr.mxu0 0.0
  %5383 = vmatpush1.msra.mxu0 %v5039
  %5384 = vmatprep.subr.mxu0 0.0
  %5385 = vmatpush1.msra.mxu0 %v5038
  %5386 = vmatprep.subr.mxu0 0.0
  %5387 = vmatpush1.msra.mxu0 %v5037
  %5388 = vmatprep.subr.mxu0 0.0
  %5389 = vmatpush1.msra.mxu0 %v5036
  %5390 = vmatprep.subr.mxu0 0.0
  %5391 = vmatpush1.msra.mxu0 %v5035
  %5392 = vmatprep.subr.mxu0 0.0
  %5393 = vmatpush1.msra.mxu0 %v5034
  %5394 = vmatprep.subr.mxu0 0.0
  %5395 = vmatpush1.msra.mxu0 %v5033
  %5396 = vmatprep.subr.mxu0 0.0
  %5397 = vmatpush1.msra.mxu0 %v5032
  %5398 = vmatprep.subr.mxu0 0.0
  %5399 = vmatpush1.msra.mxu0 %v5031
  %5400 = vmatprep.subr.mxu0 0.0
  %5401 = vmatpush1.msra.mxu0 %v5030
  %5402 = vmatprep.subr.mxu0 0.0
  %5403 = vmatpush1.msra.mxu0 %v5029
  %5404 = vmatprep.subr.mxu0 0.0
  %5405 = vmatpush1.msra.mxu0 %v5028
  %5406 = vmatprep.subr.mxu0 0.0
  %5407 = vmatpush1.msra.mxu0 %v5027
  %5408 = vmatprep.subr.mxu0 0.0
  %5409 = vmatpush1.msra.mxu0 %v5026
  %5410 = vmatprep.subr.mxu0 0.0
  %5411 = vmatpush1.msra.mxu0 %v5025
  %5412 = vmatprep.subr.mxu0 0.0
  %5413 = vmatpush1.msra.mxu0 %v5024
  %5414 = vmatprep.subr.mxu0 0.0
  %5415 = vmatpush2.msra.mxu0 %v5055
  %5416 = vmatprep.subr.mxu0 0.0
  %5417 = vmatpush2.msra.mxu0 %v5054
  %5418 = vmatprep.subr.mxu0 0.0
  %5419 = vmatpush2.msra.mxu0 %v5053
  %5420 = vmatprep.subr.mxu0 0.0
  %5421 = vmatpush2.msra.mxu0 %v5052
  %5422 = vmatprep.subr.mxu0 0.0
  %5423 = vmatpush2.msra.mxu0 %v5051
  %5424 = vmatprep.subr.mxu0 0.0
  %5425 = vmatpush2.msra.mxu0 %v5050
  %5426 = vmatprep.subr.mxu0 0.0
  %5427 = vmatpush2.msra.mxu0 %v5049
  %5428 = vmatprep.subr.mxu0 0.0
  %5429 = vmatpush2.msra.mxu0 %v5048
  %5430 = vmatprep.subr.mxu0 0.0
  %5431 = vmatpush2.msra.mxu0 %v5047
  %5432 = vmatprep.subr.mxu0 0.0
  %5433 = vmatpush2.msra.mxu0 %v5046
  %5434 = vmatprep.subr.mxu0 0.0
  %5435 = vmatpush2.msra.mxu0 %v5045
  %5436 = vmatprep.subr.mxu0 0.0
  %5437 = vmatpush2.msra.mxu0 %v5044
  %5438 = vmatprep.subr.mxu0 0.0
  %5439 = vmatpush2.msra.mxu0 %v5043
  %5440 = vmatprep.subr.mxu0 0.0
  %5441 = vmatpush2.msra.mxu0 %v5042
  %5442 = vmatprep.subr.mxu0 0.0
  %5443 = vmatpush2.msra.mxu0 %v5041
  %5444 = vmatprep.subr.mxu0 0.0
  %5445 = vmatpush2.msra.mxu0 %v5040
  %5446 = vmatprep.mubr.f32.mxu0 %v4837
  %5447 = vmatmul.mubr.f32.gmra.mxu0 %v4836
  %v5448 = vpop.f32.mrf.mxu0
  %v5449 = vadd.f32 %v5304, %v5448
  %v5450 = vpop.f32.mrf.mxu0
  %5451 = vmatprep.mubr.f32.mxu0 %v4845
  %5452 = vmatmul.mubr.f32.gmra.mxu0 %v4844
  %v5453 = vpop.f32.mrf.mxu0
  %v5454 = vadd.f32 %v5309, %v5453
  %v5455 = vpop.f32.mrf.mxu0
  %5456 = vmatprep.mubr.f32.mxu0 %v4853
  %5457 = vmatmul.mubr.f32.gmra.mxu0 %v4852
  %v5458 = vpop.f32.mrf.mxu0
  %v5459 = vadd.f32 %v5314, %v5458
  %v5460 = vpop.f32.mrf.mxu0
  %5461 = vmatprep.mubr.f32.mxu0 %v4861
  %5462 = vmatmul.mubr.f32.gmra.mxu0 %v4860
  %v5463 = vpop.f32.mrf.mxu0
  %v5464 = vadd.f32 %v5319, %v5463
  %v5465 = vpop.f32.mrf.mxu0
  %5466 = vmatprep.mubr.f32.mxu0 %v4869
  %5467 = vmatmul.mubr.f32.gmra.mxu0 %v4868
  %v5468 = vpop.f32.mrf.mxu0
  %v5469 = vadd.f32 %v5324, %v5468
  %v5470 = vpop.f32.mrf.mxu0
  %5471 = vmatprep.mubr.f32.mxu0 %v4877
  %5472 = vmatmul.mubr.f32.gmra.mxu0 %v4876
  %v5473 = vpop.f32.mrf.mxu0
  %v5474 = vadd.f32 %v5329, %v5473
  %v5475 = vpop.f32.mrf.mxu0
  %5476 = vmatprep.mubr.f32.mxu0 %v4885
  %5477 = vmatmul.mubr.f32.gmra.mxu0 %v4884
  %v5478 = vpop.f32.mrf.mxu0
  %v5479 = vadd.f32 %v5334, %v5478
  %v5480 = vpop.f32.mrf.mxu0
  %5481 = vmatprep.mubr.f32.mxu0 %v4893
  %5482 = vmatmul.mubr.f32.gmra.mxu0 %v4892
  %v5483 = vpop.f32.mrf.mxu0
  %v5484 = vadd.f32 %v5339, %v5483
  %v5485 = vpop.f32.mrf.mxu0
  %5486 = vmatprep.mubr.f32.mxu0 %v4901
  %5487 = vmatmul.mubr.f32.gmra.mxu0 %v4900
  %v5488 = vpop.f32.mrf.mxu0
  %v5489 = vadd.f32 %v5344, %v5488
  %v5490 = vpop.f32.mrf.mxu0
  %5491 = vmatprep.mubr.f32.mxu0 %v4909
  %5492 = vmatmul.mubr.f32.gmra.mxu0 %v4908
  %v5493 = vpop.f32.mrf.mxu0
  %v5494 = vadd.f32 %v5349, %v5493
  %v5495 = vpop.f32.mrf.mxu0
  %5496 = vmatprep.mubr.f32.mxu0 %v4917
  %5497 = vmatmul.mubr.f32.gmra.mxu0 %v4916
  %v5498 = vpop.f32.mrf.mxu0
  %v5499 = vadd.f32 %v5354, %v5498
  %v5500 = vpop.f32.mrf.mxu0
  %5501 = vmatprep.mubr.f32.mxu0 %v4925
  %5502 = vmatmul.mubr.f32.gmra.mxu0 %v4924
  %v5503 = vpop.f32.mrf.mxu0
  %v5504 = vadd.f32 %v5359, %v5503
  %v5505 = vpop.f32.mrf.mxu0
  %5506 = vmatprep.mubr.f32.mxu0 %v4933
  %5507 = vmatmul.mubr.f32.gmra.mxu0 %v4932
  %v5508 = vpop.f32.mrf.mxu0
  %v5509 = vadd.f32 %v5364, %v5508
  %v5510 = vpop.f32.mrf.mxu0
  %5511 = vmatprep.mubr.f32.mxu0 %v4941
  %5512 = vmatmul.mubr.f32.gmra.mxu0 %v4940
  %v5513 = vpop.f32.mrf.mxu0
  %v5514 = vadd.f32 %v5369, %v5513
  %v5515 = vpop.f32.mrf.mxu0
  %5516 = vmatprep.mubr.f32.mxu0 %v4949
  %5517 = vmatmul.mubr.f32.gmra.mxu0 %v4948
  %v5518 = vpop.f32.mrf.mxu0
  %v5519 = vadd.f32 %v5374, %v5518
  %v5520 = vpop.f32.mrf.mxu0
  %5521 = vmatprep.mubr.f32.mxu0 %v4957
  %5522 = vmatmul.mubr.f32.gmra.mxu0 %v4956
  %v5523 = vpop.f32.mrf.mxu0
  %v5524 = vadd.f32 %v5379, %v5523
  %v5525 = vpop.f32.mrf.mxu0
  %5526 = vdwg.mxu0
  %5527 = vmatprep.subr.mxu0 0.0
  %5528 = vmatpush1.msra.mxu0 %v5071
  %5529 = vmatprep.subr.mxu0 0.0
  %5530 = vmatpush1.msra.mxu0 %v5070
  %5531 = vmatprep.subr.mxu0 0.0
  %5532 = vmatpush1.msra.mxu0 %v5069
  %5533 = vmatprep.subr.mxu0 0.0
  %5534 = vmatpush1.msra.mxu0 %v5068
  %5535 = vmatprep.subr.mxu0 0.0
  %5536 = vmatpush1.msra.mxu0 %v5067
  %5537 = vmatprep.subr.mxu0 0.0
  %5538 = vmatpush1.msra.mxu0 %v5066
  %5539 = vmatprep.subr.mxu0 0.0
  %5540 = vmatpush1.msra.mxu0 %v5065
  %5541 = vmatprep.subr.mxu0 0.0
  %5542 = vmatpush1.msra.mxu0 %v5064
  %5543 = vmatprep.subr.mxu0 0.0
  %5544 = vmatpush1.msra.mxu0 %v5063
  %5545 = vmatprep.subr.mxu0 0.0
  %5546 = vmatpush1.msra.mxu0 %v5062
  %5547 = vmatprep.subr.mxu0 0.0
  %5548 = vmatpush1.msra.mxu0 %v5061
  %5549 = vmatprep.subr.mxu0 0.0
  %5550 = vmatpush1.msra.mxu0 %v5060
  %5551 = vmatprep.subr.mxu0 0.0
  %5552 = vmatpush1.msra.mxu0 %v5059
  %5553 = vmatprep.subr.mxu0 0.0
  %5554 = vmatpush1.msra.mxu0 %v5058
  %5555 = vmatprep.subr.mxu0 0.0
  %5556 = vmatpush1.msra.mxu0 %v5057
  %5557 = vmatprep.subr.mxu0 0.0
  %5558 = vmatpush1.msra.mxu0 %v5056
  %5559 = vmatprep.subr.mxu0 0.0
  %5560 = vmatpush2.msra.mxu0 %v5087
  %5561 = vmatprep.subr.mxu0 0.0
  %5562 = vmatpush2.msra.mxu0 %v5086
  %5563 = vmatprep.subr.mxu0 0.0
  %5564 = vmatpush2.msra.mxu0 %v5085
  %5565 = vmatprep.subr.mxu0 0.0
  %5566 = vmatpush2.msra.mxu0 %v5084
  %5567 = vmatprep.subr.mxu0 0.0
  %5568 = vmatpush2.msra.mxu0 %v5083
  %5569 = vmatprep.subr.mxu0 0.0
  %5570 = vmatpush2.msra.mxu0 %v5082
  %5571 = vmatprep.subr.mxu0 0.0
  %5572 = vmatpush2.msra.mxu0 %v5081
  %5573 = vmatprep.subr.mxu0 0.0
  %5574 = vmatpush2.msra.mxu0 %v5080
  %5575 = vmatprep.subr.mxu0 0.0
  %5576 = vmatpush2.msra.mxu0 %v5079
  %5577 = vmatprep.subr.mxu0 0.0
  %5578 = vmatpush2.msra.mxu0 %v5078
  %5579 = vmatprep.subr.mxu0 0.0
  %5580 = vmatpush2.msra.mxu0 %v5077
  %5581 = vmatprep.subr.mxu0 0.0
  %5582 = vmatpush2.msra.mxu0 %v5076
  %5583 = vmatprep.subr.mxu0 0.0
  %5584 = vmatpush2.msra.mxu0 %v5075
  %5585 = vmatprep.subr.mxu0 0.0
  %5586 = vmatpush2.msra.mxu0 %v5074
  %5587 = vmatprep.subr.mxu0 0.0
  %5588 = vmatpush2.msra.mxu0 %v5073
  %5589 = vmatprep.subr.mxu0 0.0
  %5590 = vmatpush2.msra.mxu0 %v5072
  %5591 = vmatprep.mubr.f32.mxu0 %v4839
  %5592 = vmatmul.mubr.f32.gmra.mxu0 %v4838
  %v5593 = vpop.f32.mrf.mxu0
  %v5594 = vadd.f32 %v5449, %v5593
  %v5595 = vpop.f32.mrf.mxu0
  %5596 = vmatprep.mubr.f32.mxu0 %v4847
  %5597 = vmatmul.mubr.f32.gmra.mxu0 %v4846
  %v5598 = vpop.f32.mrf.mxu0
  %v5599 = vadd.f32 %v5454, %v5598
  %v5600 = vpop.f32.mrf.mxu0
  %5601 = vmatprep.mubr.f32.mxu0 %v4855
  %5602 = vmatmul.mubr.f32.gmra.mxu0 %v4854
  %v5603 = vpop.f32.mrf.mxu0
  %v5604 = vadd.f32 %v5459, %v5603
  %v5605 = vpop.f32.mrf.mxu0
  %5606 = vmatprep.mubr.f32.mxu0 %v4863
  %5607 = vmatmul.mubr.f32.gmra.mxu0 %v4862
  %v5608 = vpop.f32.mrf.mxu0
  %v5609 = vadd.f32 %v5464, %v5608
  %v5610 = vpop.f32.mrf.mxu0
  %5611 = vmatprep.mubr.f32.mxu0 %v4871
  %5612 = vmatmul.mubr.f32.gmra.mxu0 %v4870
  %v5613 = vpop.f32.mrf.mxu0
  %v5614 = vadd.f32 %v5469, %v5613
  %v5615 = vpop.f32.mrf.mxu0
  %5616 = vmatprep.mubr.f32.mxu0 %v4879
  %5617 = vmatmul.mubr.f32.gmra.mxu0 %v4878
  %v5618 = vpop.f32.mrf.mxu0
  %v5619 = vadd.f32 %v5474, %v5618
  %v5620 = vpop.f32.mrf.mxu0
  %5621 = vmatprep.mubr.f32.mxu0 %v4887
  %5622 = vmatmul.mubr.f32.gmra.mxu0 %v4886
  %v5623 = vpop.f32.mrf.mxu0
  %v5624 = vadd.f32 %v5479, %v5623
  %v5625 = vpop.f32.mrf.mxu0
  %5626 = vmatprep.mubr.f32.mxu0 %v4895
  %5627 = vmatmul.mubr.f32.gmra.mxu0 %v4894
  %v5628 = vpop.f32.mrf.mxu0
  %v5629 = vadd.f32 %v5484, %v5628
  %v5630 = vpop.f32.mrf.mxu0
  %5631 = vmatprep.mubr.f32.mxu0 %v4903
  %5632 = vmatmul.mubr.f32.gmra.mxu0 %v4902
  %v5633 = vpop.f32.mrf.mxu0
  %v5634 = vadd.f32 %v5489, %v5633
  %v5635 = vpop.f32.mrf.mxu0
  %5636 = vmatprep.mubr.f32.mxu0 %v4911
  %5637 = vmatmul.mubr.f32.gmra.mxu0 %v4910
  %v5638 = vpop.f32.mrf.mxu0
  %v5639 = vadd.f32 %v5494, %v5638
  %v5640 = vpop.f32.mrf.mxu0
  %5641 = vmatprep.mubr.f32.mxu0 %v4919
  %5642 = vmatmul.mubr.f32.gmra.mxu0 %v4918
  %v5643 = vpop.f32.mrf.mxu0
  %v5644 = vadd.f32 %v5499, %v5643
  %v5645 = vpop.f32.mrf.mxu0
  %5646 = vmatprep.mubr.f32.mxu0 %v4927
  %5647 = vmatmul.mubr.f32.gmra.mxu0 %v4926
  %v5648 = vpop.f32.mrf.mxu0
  %v5649 = vadd.f32 %v5504, %v5648
  %v5650 = vpop.f32.mrf.mxu0
  %5651 = vmatprep.mubr.f32.mxu0 %v4935
  %5652 = vmatmul.mubr.f32.gmra.mxu0 %v4934
  %v5653 = vpop.f32.mrf.mxu0
  %v5654 = vadd.f32 %v5509, %v5653
  %v5655 = vpop.f32.mrf.mxu0
  %5656 = vmatprep.mubr.f32.mxu0 %v4943
  %5657 = vmatmul.mubr.f32.gmra.mxu0 %v4942
  %v5658 = vpop.f32.mrf.mxu0
  %v5659 = vadd.f32 %v5514, %v5658
  %v5660 = vpop.f32.mrf.mxu0
  %5661 = vmatprep.mubr.f32.mxu0 %v4951
  %5662 = vmatmul.mubr.f32.gmra.mxu0 %v4950
  %v5663 = vpop.f32.mrf.mxu0
  %v5664 = vadd.f32 %v5519, %v5663
  %v5665 = vpop.f32.mrf.mxu0
  %5666 = vmatprep.mubr.f32.mxu0 %v4959
  %5667 = vmatmul.mubr.f32.gmra.mxu0 %v4958
  %v5668 = vpop.f32.mrf.mxu0
  %v5669 = vadd.f32 %v5524, %v5668
  %v5670 = vpop.f32.mrf.mxu0
  %5671 = vdwg.mxu0
  %5672 = vmatprep.subr.mxu0 0.0
  %5673 = vmatpush1.msra.mxu0 0.0
  %5674 = vmatprep.subr.mxu0 0.0
  %5675 = vmatpush1.msra.mxu0 0.0
  %5676 = vmatprep.subr.mxu0 0.0
  %5677 = vmatpush1.msra.mxu0 0.0
  %5678 = vmatprep.subr.mxu0 0.0
  %5679 = vmatpush1.msra.mxu0 0.0
  %5680 = vmatprep.subr.mxu0 0.0
  %5681 = vmatpush1.msra.mxu0 0.0
  %5682 = vmatprep.subr.mxu0 0.0
  %5683 = vmatpush1.msra.mxu0 0.0
  %5684 = vmatprep.subr.mxu0 0.0
  %5685 = vmatpush1.msra.mxu0 0.0
  %5686 = vmatprep.subr.mxu0 0.0
  %5687 = vmatpush1.msra.mxu0 0.0
  %5688 = vmatprep.subr.mxu0 0.0
  %5689 = vmatpush1.msra.mxu0 0.0
  %5690 = vmatprep.subr.mxu0 0.0
  %5691 = vmatpush1.msra.mxu0 0.0
  %5692 = vmatprep.subr.mxu0 0.0
  %5693 = vmatpush1.msra.mxu0 0.0
  %5694 = vmatprep.subr.mxu0 0.0
  %5695 = vmatpush1.msra.mxu0 0.0
  %5696 = vmatprep.subr.mxu0 0.0
  %5697 = vmatpush1.msra.mxu0 %v5091
  %5698 = vmatprep.subr.mxu0 0.0
  %5699 = vmatpush1.msra.mxu0 %v5090
  %5700 = vmatprep.subr.mxu0 0.0
  %5701 = vmatpush1.msra.mxu0 %v5089
  %5702 = vmatprep.subr.mxu0 0.0
  %5703 = vmatpush1.msra.mxu0 %v5088
  %5704 = vmatprep.subr.mxu0 0.0
  %5705 = vmatpush2.msra.mxu0 0.0
  %5706 = vmatprep.subr.mxu0 0.0
  %5707 = vmatpush2.msra.mxu0 0.0
  %5708 = vmatprep.subr.mxu0 0.0
  %5709 = vmatpush2.msra.mxu0 0.0
  %5710 = vmatprep.subr.mxu0 0.0
  %5711 = vmatpush2.msra.mxu0 0.0
  %5712 = vmatprep.subr.mxu0 0.0
  %5713 = vmatpush2.msra.mxu0 0.0
  %5714 = vmatprep.subr.mxu0 0.0
  %5715 = vmatpush2.msra.mxu0 0.0
  %5716 = vmatprep.subr.mxu0 0.0
  %5717 = vmatpush2.msra.mxu0 0.0
  %5718 = vmatprep.subr.mxu0 0.0
  %5719 = vmatpush2.msra.mxu0 0.0
  %5720 = vmatprep.subr.mxu0 0.0
  %5721 = vmatpush2.msra.mxu0 0.0
  %5722 = vmatprep.subr.mxu0 0.0
  %5723 = vmatpush2.msra.mxu0 0.0
  %5724 = vmatprep.subr.mxu0 0.0
  %5725 = vmatpush2.msra.mxu0 0.0
  %5726 = vmatprep.subr.mxu0 0.0
  %5727 = vmatpush2.msra.mxu0 0.0
  %5728 = vmatprep.subr.mxu0 0.0
  %5729 = vmatpush2.msra.mxu0 0.0
  %5730 = vmatprep.subr.mxu0 0.0
  %5731 = vmatpush2.msra.mxu0 0.0
  %5732 = vmatprep.subr.mxu0 0.0
  %5733 = vmatpush2.msra.mxu0 0.0
  %5734 = vmatprep.subr.mxu0 0.0
  %5735 = vmatpush2.msra.mxu0 0.0
  %5736 = vmatprep.mubr.f32.mxu0 0.0
  %5737 = vmatmul.mubr.f32.gmra.mxu0 %v4141
  %v5738 = vpop.f32.mrf.mxu0
  %v5739 = vadd.f32 %v5594, %v5738
  %v5740 = vpop.f32.mrf.mxu0
  %5741 = vmatprep.mubr.f32.mxu0 0.0
  %5742 = vmatmul.mubr.f32.gmra.mxu0 %v4144
  %v5743 = vpop.f32.mrf.mxu0
  %v5744 = vadd.f32 %v5599, %v5743
  %v5745 = vpop.f32.mrf.mxu0
  %5746 = vmatprep.mubr.f32.mxu0 0.0
  %5747 = vmatmul.mubr.f32.gmra.mxu0 %v4147
  %v5748 = vpop.f32.mrf.mxu0
  %v5749 = vadd.f32 %v5604, %v5748
  %v5750 = vpop.f32.mrf.mxu0
  %5751 = vmatprep.mubr.f32.mxu0 0.0
  %5752 = vmatmul.mubr.f32.gmra.mxu0 %v4150
  %v5753 = vpop.f32.mrf.mxu0
  %v5754 = vadd.f32 %v5609, %v5753
  %v5755 = vpop.f32.mrf.mxu0
  %5756 = vmatprep.mubr.f32.mxu0 0.0
  %5757 = vmatmul.mubr.f32.gmra.mxu0 %v4153
  %v5758 = vpop.f32.mrf.mxu0
  %v5759 = vadd.f32 %v5614, %v5758
  %v5760 = vpop.f32.mrf.mxu0
  %5761 = vmatprep.mubr.f32.mxu0 0.0
  %5762 = vmatmul.mubr.f32.gmra.mxu0 %v4156
  %v5763 = vpop.f32.mrf.mxu0
  %v5764 = vadd.f32 %v5619, %v5763
  %v5765 = vpop.f32.mrf.mxu0
  %5766 = vmatprep.mubr.f32.mxu0 0.0
  %5767 = vmatmul.mubr.f32.gmra.mxu0 %v4159
  %v5768 = vpop.f32.mrf.mxu0
  %v5769 = vadd.f32 %v5624, %v5768
  %v5770 = vpop.f32.mrf.mxu0
  %5771 = vmatprep.mubr.f32.mxu0 0.0
  %5772 = vmatmul.mubr.f32.gmra.mxu0 %v4162
  %v5773 = vpop.f32.mrf.mxu0
  %v5774 = vadd.f32 %v5629, %v5773
  %v5775 = vpop.f32.mrf.mxu0
  %5776 = vmatprep.mubr.f32.mxu0 0.0
  %5777 = vmatmul.mubr.f32.gmra.mxu0 %v4165
  %v5778 = vpop.f32.mrf.mxu0
  %v5779 = vadd.f32 %v5634, %v5778
  %v5780 = vpop.f32.mrf.mxu0
  %5781 = vmatprep.mubr.f32.mxu0 0.0
  %5782 = vmatmul.mubr.f32.gmra.mxu0 %v4168
  %v5783 = vpop.f32.mrf.mxu0
  %v5784 = vadd.f32 %v5639, %v5783
  %v5785 = vpop.f32.mrf.mxu0
  %5786 = vmatprep.mubr.f32.mxu0 0.0
  %5787 = vmatmul.mubr.f32.gmra.mxu0 %v4171
  %v5788 = vpop.f32.mrf.mxu0
  %v5789 = vadd.f32 %v5644, %v5788
  %v5790 = vpop.f32.mrf.mxu0
  %5791 = vmatprep.mubr.f32.mxu0 0.0
  %5792 = vmatmul.mubr.f32.gmra.mxu0 %v4174
  %v5793 = vpop.f32.mrf.mxu0
  %v5794 = vadd.f32 %v5649, %v5793
  %v5795 = vpop.f32.mrf.mxu0
  %5796 = vmatprep.mubr.f32.mxu0 0.0
  %5797 = vmatmul.mubr.f32.gmra.mxu0 %v4177
  %v5798 = vpop.f32.mrf.mxu0
  %v5799 = vadd.f32 %v5654, %v5798
  %v5800 = vpop.f32.mrf.mxu0
  %5801 = vmatprep.mubr.f32.mxu0 0.0
  %5802 = vmatmul.mubr.f32.gmra.mxu0 %v4180
  %v5803 = vpop.f32.mrf.mxu0
  %v5804 = vadd.f32 %v5659, %v5803
  %v5805 = vpop.f32.mrf.mxu0
  %5806 = vmatprep.mubr.f32.mxu0 0.0
  %5807 = vmatmul.mubr.f32.gmra.mxu0 %v4183
  %v5808 = vpop.f32.mrf.mxu0
  %v5809 = vadd.f32 %v5664, %v5808
  %v5810 = vpop.f32.mrf.mxu0
  %5811 = vmatprep.mubr.f32.mxu0 0.0
  %5812 = vmatmul.mubr.f32.gmra.mxu0 %v4186
  %v5813 = vpop.f32.mrf.mxu0
  %v5814 = vadd.f32 %v5669, %v5813
  %v5815 = vpop.f32.mrf.mxu0
  %5816 = vdwg.mxu0
  %v5817 = vmax.f32 %v5739, 0.0
  %v5818 = vmax.f32 %v5744, 0.0
  %v5819 = vmax.f32 %v5749, 0.0
  %v5820 = vmax.f32 %v5754, 0.0
  %v5821 = vmax.f32 %v5759, 0.0
  %v5822 = vmax.f32 %v5764, 0.0
  %v5823 = vmax.f32 %v5769, 0.0
  %v5824 = vmax.f32 %v5774, 0.0
  %v5825 = vmax.f32 %v5779, 0.0
  %v5826 = vmax.f32 %v5784, 0.0
  %v5827 = vmax.f32 %v5789, 0.0
  %v5828 = vmax.f32 %v5794, 0.0
  %v5829 = vmax.f32 %v5799, 0.0
  %v5830 = vmax.f32 %v5804, 0.0
  %v5831 = vmax.f32 %v5809, 0.0
  %v5832 = vmax.f32 %v5814, 0.0
  %5833 = vrot.lane.b32.xlu0 %v275, 64
  %v5834 = vpop.permute.xlu0 %5833
  %5835 = vrot.lane.b32.xlu0 %v276, 64
  %v5836 = vpop.permute.xlu0 %5835
  %5837 = vrot.lane.b32.xlu0 %v277, 64
  %v5838 = vpop.permute.xlu0 %5837
  %5839 = vrot.lane.b32.xlu0 %v278, 64
  %v5840 = vpop.permute.xlu0 %5839
  %5841 = vrot.lane.b32.xlu0 %v279, 64
  %v5842 = vpop.permute.xlu0 %5841
  %5843 = vrot.lane.b32.xlu0 %v280, 64
  %v5844 = vpop.permute.xlu0 %5843
  %5845 = vrot.lane.b32.xlu0 %v281, 64
  %v5846 = vpop.permute.xlu0 %5845
  %5847 = vrot.lane.b32.xlu0 %v282, 64
  %v5848 = vpop.permute.xlu0 %5847
  %5849 = vrot.lane.b32.xlu0 %v283, 64
  %v5850 = vpop.permute.xlu0 %5849
  %5851 = vrot.lane.b32.xlu0 %v284, 64
  %v5852 = vpop.permute.xlu0 %5851
  %5853 = vrot.lane.b32.xlu0 %v285, 64
  %v5854 = vpop.permute.xlu0 %5853
  %5855 = vrot.lane.b32.xlu0 %v286, 64
  %v5856 = vpop.permute.xlu0 %5855
  %5857 = vrot.lane.b32.xlu0 %v287, 64
  %v5858 = vpop.permute.xlu0 %5857
  %5859 = vrot.lane.b32.xlu0 %v288, 64
  %v5860 = vpop.permute.xlu0 %5859
  %5861 = vrot.lane.b32.xlu0 %v289, 64
  %v5862 = vpop.permute.xlu0 %5861
  %5863 = vrot.lane.b32.xlu0 %v290, 64
  %v5864 = vpop.permute.xlu0 %5863
  %v5865 = vsel %vm1626, %v5834, 0
  %v5867 = vsel %vm1626, %v5836, 0
  %v5869 = vsel %vm1626, %v5838, 0
  %v5871 = vsel %vm1626, %v5840, 0
  %v5873 = vsel %vm1626, %v5842, 0
  %v5875 = vsel %vm1626, %v5844, 0
  %v5877 = vsel %vm1626, %v5846, 0
  %v5879 = vsel %vm1626, %v5848, 0
  %v5881 = vsel %vm1626, %v5850, 0
  %v5883 = vsel %vm1626, %v5852, 0
  %v5885 = vsel %vm1626, %v5854, 0
  %v5887 = vsel %vm1626, %v5856, 0
  %v5889 = vsel %vm1626, %v5858, 0
  %v5891 = vsel %vm1626, %v5860, 0
  %v5893 = vsel %vm1626, %v5862, 0
  %v5895 = vsel %vm1626, %v5864, 0
  %5897 = vmatprep.subr.mxu0 0.0
  %5898 = vmatpush1.msra.mxu0 0.0
  %5899 = vmatprep.subr.mxu0 0.0
  %5900 = vmatpush1.msra.mxu0 0.0
  %5901 = vmatprep.subr.mxu0 0.0
  %5902 = vmatpush1.msra.mxu0 0.0
  %5903 = vmatprep.subr.mxu0 0.0
  %5904 = vmatpush1.msra.mxu0 0.0
  %5905 = vmatprep.subr.mxu0 0.0
  %5906 = vmatpush1.msra.mxu0 0.0
  %5907 = vmatprep.subr.mxu0 0.0
  %5908 = vmatpush1.msra.mxu0 0.0
  %5909 = vmatprep.subr.mxu0 0.0
  %5910 = vmatpush1.msra.mxu0 0.0
  %5911 = vmatprep.subr.mxu0 0.0
  %5912 = vmatpush1.msra.mxu0 0.0
  %5913 = vmatprep.subr.mxu0 0.0
  %5914 = vmatpush1.msra.mxu0 0.0
  %5915 = vmatprep.subr.mxu0 0.0
  %5916 = vmatpush1.msra.mxu0 0.0
  %5917 = vmatprep.subr.mxu0 0.0
  %5918 = vmatpush1.msra.mxu0 0.0
  %5919 = vmatprep.subr.mxu0 0.0
  %5920 = vmatpush1.msra.mxu0 0.0
  %5921 = vmatprep.subr.mxu0 %v1587
  %5922 = vmatpush1.msra.mxu0 %v1586
  %5923 = vmatprep.subr.mxu0 %v1579
  %5924 = vmatpush1.msra.mxu0 %v1578
  %5925 = vmatprep.subr.mxu0 %v1571
  %5926 = vmatpush1.msra.mxu0 %v1570
  %5927 = vmatprep.subr.mxu0 %v1563
  %5928 = vmatpush1.msra.mxu0 %v1562
  %5929 = vmatprep.subr.mxu0 0.0
  %5930 = vmatpush2.msra.mxu0 0.0
  %5931 = vmatprep.subr.mxu0 0.0
  %5932 = vmatpush2.msra.mxu0 0.0
  %5933 = vmatprep.subr.mxu0 0.0
  %5934 = vmatpush2.msra.mxu0 0.0
  %5935 = vmatprep.subr.mxu0 0.0
  %5936 = vmatpush2.msra.mxu0 0.0
  %5937 = vmatprep.subr.mxu0 0.0
  %5938 = vmatpush2.msra.mxu0 0.0
  %5939 = vmatprep.subr.mxu0 0.0
  %5940 = vmatpush2.msra.mxu0 0.0
  %5941 = vmatprep.subr.mxu0 0.0
  %5942 = vmatpush2.msra.mxu0 0.0
  %5943 = vmatprep.subr.mxu0 0.0
  %5944 = vmatpush2.msra.mxu0 0.0
  %5945 = vmatprep.subr.mxu0 0.0
  %5946 = vmatpush2.msra.mxu0 0.0
  %5947 = vmatprep.subr.mxu0 0.0
  %5948 = vmatpush2.msra.mxu0 0.0
  %5949 = vmatprep.subr.mxu0 0.0
  %5950 = vmatpush2.msra.mxu0 0.0
  %5951 = vmatprep.subr.mxu0 0.0
  %5952 = vmatpush2.msra.mxu0 0.0
  %5953 = vmatprep.subr.mxu0 0.0
  %5954 = vmatpush2.msra.mxu0 0.0
  %5955 = vmatprep.subr.mxu0 0.0
  %5956 = vmatpush2.msra.mxu0 0.0
  %5957 = vmatprep.subr.mxu0 0.0
  %5958 = vmatpush2.msra.mxu0 0.0
  %5959 = vmatprep.subr.mxu0 0.0
  %5960 = vmatpush2.msra.mxu0 0.0
  %5961 = vmatprep.mubr.f32.mxu0 0.0
  %5962 = vmatmul.mubr.f32.gmra.mxu0 %v5865
  %v5963 = vpop.f32.mrf.mxu0
  %v5964 = vadd.f32 0.0, %v5963
  %v5965 = vpop.f32.mrf.mxu0
  %v5966 = vadd.f32 0.0, %v5965
  %5967 = vmatprep.mubr.f32.mxu0 0.0
  %5968 = vmatmul.mubr.f32.gmra.mxu0 %v5867
  %v5969 = vpop.f32.mrf.mxu0
  %v5970 = vadd.f32 0.0, %v5969
  %v5971 = vpop.f32.mrf.mxu0
  %v5972 = vadd.f32 0.0, %v5971
  %5973 = vmatprep.mubr.f32.mxu0 0.0
  %5974 = vmatmul.mubr.f32.gmra.mxu0 %v5869
  %v5975 = vpop.f32.mrf.mxu0
  %v5976 = vadd.f32 0.0, %v5975
  %v5977 = vpop.f32.mrf.mxu0
  %v5978 = vadd.f32 0.0, %v5977
  %5979 = vmatprep.mubr.f32.mxu0 0.0
  %5980 = vmatmul.mubr.f32.gmra.mxu0 %v5871
  %v5981 = vpop.f32.mrf.mxu0
  %v5982 = vadd.f32 0.0, %v5981
  %v5983 = vpop.f32.mrf.mxu0
  %v5984 = vadd.f32 0.0, %v5983
  %5985 = vmatprep.mubr.f32.mxu0 0.0
  %5986 = vmatmul.mubr.f32.gmra.mxu0 %v5873
  %v5987 = vpop.f32.mrf.mxu0
  %v5988 = vadd.f32 0.0, %v5987
  %v5989 = vpop.f32.mrf.mxu0
  %v5990 = vadd.f32 0.0, %v5989
  %5991 = vmatprep.mubr.f32.mxu0 0.0
  %5992 = vmatmul.mubr.f32.gmra.mxu0 %v5875
  %v5993 = vpop.f32.mrf.mxu0
  %v5994 = vadd.f32 0.0, %v5993
  %v5995 = vpop.f32.mrf.mxu0
  %v5996 = vadd.f32 0.0, %v5995
  %5997 = vmatprep.mubr.f32.mxu0 0.0
  %5998 = vmatmul.mubr.f32.gmra.mxu0 %v5877
  %v5999 = vpop.f32.mrf.mxu0
  %v6000 = vadd.f32 0.0, %v5999
  %v6001 = vpop.f32.mrf.mxu0
  %v6002 = vadd.f32 0.0, %v6001
  %6003 = vmatprep.mubr.f32.mxu0 0.0
  %6004 = vmatmul.mubr.f32.gmra.mxu0 %v5879
  %v6005 = vpop.f32.mrf.mxu0
  %v6006 = vadd.f32 0.0, %v6005
  %v6007 = vpop.f32.mrf.mxu0
  %v6008 = vadd.f32 0.0, %v6007
  %6009 = vmatprep.mubr.f32.mxu0 0.0
  %6010 = vmatmul.mubr.f32.gmra.mxu0 %v5881
  %v6011 = vpop.f32.mrf.mxu0
  %v6012 = vadd.f32 0.0, %v6011
  %v6013 = vpop.f32.mrf.mxu0
  %v6014 = vadd.f32 0.0, %v6013
  %6015 = vmatprep.mubr.f32.mxu0 0.0
  %6016 = vmatmul.mubr.f32.gmra.mxu0 %v5883
  %v6017 = vpop.f32.mrf.mxu0
  %v6018 = vadd.f32 0.0, %v6017
  %v6019 = vpop.f32.mrf.mxu0
  %v6020 = vadd.f32 0.0, %v6019
  %6021 = vmatprep.mubr.f32.mxu0 0.0
  %6022 = vmatmul.mubr.f32.gmra.mxu0 %v5885
  %v6023 = vpop.f32.mrf.mxu0
  %v6024 = vadd.f32 0.0, %v6023
  %v6025 = vpop.f32.mrf.mxu0
  %v6026 = vadd.f32 0.0, %v6025
  %6027 = vmatprep.mubr.f32.mxu0 0.0
  %6028 = vmatmul.mubr.f32.gmra.mxu0 %v5887
  %v6029 = vpop.f32.mrf.mxu0
  %v6030 = vadd.f32 0.0, %v6029
  %v6031 = vpop.f32.mrf.mxu0
  %v6032 = vadd.f32 0.0, %v6031
  %6033 = vmatprep.mubr.f32.mxu0 0.0
  %6034 = vmatmul.mubr.f32.gmra.mxu0 %v5889
  %v6035 = vpop.f32.mrf.mxu0
  %v6036 = vadd.f32 0.0, %v6035
  %v6037 = vpop.f32.mrf.mxu0
  %v6038 = vadd.f32 0.0, %v6037
  %6039 = vmatprep.mubr.f32.mxu0 0.0
  %6040 = vmatmul.mubr.f32.gmra.mxu0 %v5891
  %v6041 = vpop.f32.mrf.mxu0
  %v6042 = vadd.f32 0.0, %v6041
  %v6043 = vpop.f32.mrf.mxu0
  %v6044 = vadd.f32 0.0, %v6043
  %6045 = vmatprep.mubr.f32.mxu0 0.0
  %6046 = vmatmul.mubr.f32.gmra.mxu0 %v5893
  %v6047 = vpop.f32.mrf.mxu0
  %v6048 = vadd.f32 0.0, %v6047
  %v6049 = vpop.f32.mrf.mxu0
  %v6050 = vadd.f32 0.0, %v6049
  %6051 = vmatprep.mubr.f32.mxu0 0.0
  %6052 = vmatmul.mubr.f32.gmra.mxu0 %v5895
  %v6053 = vpop.f32.mrf.mxu0
  %v6054 = vadd.f32 0.0, %v6053
  %v6055 = vpop.f32.mrf.mxu0
  %v6056 = vadd.f32 0.0, %v6055
  %6057 = vdwg.mxu0
  %6058 = vmatprep.subr.mxu0 0.0
  %6059 = vmatpush1.msra.mxu0 0.0
  %6060 = vmatprep.subr.mxu0 0.0
  %6061 = vmatpush1.msra.mxu0 0.0
  %6062 = vmatprep.subr.mxu0 0.0
  %6063 = vmatpush1.msra.mxu0 0.0
  %6064 = vmatprep.subr.mxu0 0.0
  %6065 = vmatpush1.msra.mxu0 0.0
  %6066 = vmatprep.subr.mxu0 0.0
  %6067 = vmatpush1.msra.mxu0 0.0
  %6068 = vmatprep.subr.mxu0 0.0
  %6069 = vmatpush1.msra.mxu0 0.0
  %6070 = vmatprep.subr.mxu0 0.0
  %6071 = vmatpush1.msra.mxu0 0.0
  %6072 = vmatprep.subr.mxu0 0.0
  %6073 = vmatpush1.msra.mxu0 0.0
  %6074 = vmatprep.subr.mxu0 0.0
  %6075 = vmatpush1.msra.mxu0 0.0
  %6076 = vmatprep.subr.mxu0 0.0
  %6077 = vmatpush1.msra.mxu0 0.0
  %6078 = vmatprep.subr.mxu0 0.0
  %6079 = vmatpush1.msra.mxu0 0.0
  %6080 = vmatprep.subr.mxu0 0.0
  %6081 = vmatpush1.msra.mxu0 0.0
  %6082 = vmatprep.subr.mxu0 %v1589
  %6083 = vmatpush1.msra.mxu0 %v1588
  %6084 = vmatprep.subr.mxu0 %v1581
  %6085 = vmatpush1.msra.mxu0 %v1580
  %6086 = vmatprep.subr.mxu0 %v1573
  %6087 = vmatpush1.msra.mxu0 %v1572
  %6088 = vmatprep.subr.mxu0 %v1565
  %6089 = vmatpush1.msra.mxu0 %v1564
  %6090 = vmatprep.subr.mxu0 0.0
  %6091 = vmatpush2.msra.mxu0 0.0
  %6092 = vmatprep.subr.mxu0 0.0
  %6093 = vmatpush2.msra.mxu0 0.0
  %6094 = vmatprep.subr.mxu0 0.0
  %6095 = vmatpush2.msra.mxu0 0.0
  %6096 = vmatprep.subr.mxu0 0.0
  %6097 = vmatpush2.msra.mxu0 0.0
  %6098 = vmatprep.subr.mxu0 0.0
  %6099 = vmatpush2.msra.mxu0 0.0
  %6100 = vmatprep.subr.mxu0 0.0
  %6101 = vmatpush2.msra.mxu0 0.0
  %6102 = vmatprep.subr.mxu0 0.0
  %6103 = vmatpush2.msra.mxu0 0.0
  %6104 = vmatprep.subr.mxu0 0.0
  %6105 = vmatpush2.msra.mxu0 0.0
  %6106 = vmatprep.subr.mxu0 0.0
  %6107 = vmatpush2.msra.mxu0 0.0
  %6108 = vmatprep.subr.mxu0 0.0
  %6109 = vmatpush2.msra.mxu0 0.0
  %6110 = vmatprep.subr.mxu0 0.0
  %6111 = vmatpush2.msra.mxu0 0.0
  %6112 = vmatprep.subr.mxu0 0.0
  %6113 = vmatpush2.msra.mxu0 0.0
  %6114 = vmatprep.subr.mxu0 0.0
  %6115 = vmatpush2.msra.mxu0 0.0
  %6116 = vmatprep.subr.mxu0 0.0
  %6117 = vmatpush2.msra.mxu0 0.0
  %6118 = vmatprep.subr.mxu0 0.0
  %6119 = vmatpush2.msra.mxu0 0.0
  %6120 = vmatprep.subr.mxu0 0.0
  %6121 = vmatpush2.msra.mxu0 0.0
  %6122 = vmatprep.mubr.f32.mxu0 0.0
  %6123 = vmatmul.mubr.f32.gmra.mxu0 %v5865
  %v6124 = vpop.f32.mrf.mxu0
  %v6125 = vadd.f32 0.0, %v6124
  %v6126 = vpop.f32.mrf.mxu0
  %v6127 = vadd.f32 0.0, %v6126
  %6128 = vmatprep.mubr.f32.mxu0 0.0
  %6129 = vmatmul.mubr.f32.gmra.mxu0 %v5867
  %v6130 = vpop.f32.mrf.mxu0
  %v6131 = vadd.f32 0.0, %v6130
  %v6132 = vpop.f32.mrf.mxu0
  %v6133 = vadd.f32 0.0, %v6132
  %6134 = vmatprep.mubr.f32.mxu0 0.0
  %6135 = vmatmul.mubr.f32.gmra.mxu0 %v5869
  %v6136 = vpop.f32.mrf.mxu0
  %v6137 = vadd.f32 0.0, %v6136
  %v6138 = vpop.f32.mrf.mxu0
  %v6139 = vadd.f32 0.0, %v6138
  %6140 = vmatprep.mubr.f32.mxu0 0.0
  %6141 = vmatmul.mubr.f32.gmra.mxu0 %v5871
  %v6142 = vpop.f32.mrf.mxu0
  %v6143 = vadd.f32 0.0, %v6142
  %v6144 = vpop.f32.mrf.mxu0
  %v6145 = vadd.f32 0.0, %v6144
  %6146 = vmatprep.mubr.f32.mxu0 0.0
  %6147 = vmatmul.mubr.f32.gmra.mxu0 %v5873
  %v6148 = vpop.f32.mrf.mxu0
  %v6149 = vadd.f32 0.0, %v6148
  %v6150 = vpop.f32.mrf.mxu0
  %v6151 = vadd.f32 0.0, %v6150
  %6152 = vmatprep.mubr.f32.mxu0 0.0
  %6153 = vmatmul.mubr.f32.gmra.mxu0 %v5875
  %v6154 = vpop.f32.mrf.mxu0
  %v6155 = vadd.f32 0.0, %v6154
  %v6156 = vpop.f32.mrf.mxu0
  %v6157 = vadd.f32 0.0, %v6156
  %6158 = vmatprep.mubr.f32.mxu0 0.0
  %6159 = vmatmul.mubr.f32.gmra.mxu0 %v5877
  %v6160 = vpop.f32.mrf.mxu0
  %v6161 = vadd.f32 0.0, %v6160
  %v6162 = vpop.f32.mrf.mxu0
  %v6163 = vadd.f32 0.0, %v6162
  %6164 = vmatprep.mubr.f32.mxu0 0.0
  %6165 = vmatmul.mubr.f32.gmra.mxu0 %v5879
  %v6166 = vpop.f32.mrf.mxu0
  %v6167 = vadd.f32 0.0, %v6166
  %v6168 = vpop.f32.mrf.mxu0
  %v6169 = vadd.f32 0.0, %v6168
  %6170 = vmatprep.mubr.f32.mxu0 0.0
  %6171 = vmatmul.mubr.f32.gmra.mxu0 %v5881
  %v6172 = vpop.f32.mrf.mxu0
  %v6173 = vadd.f32 0.0, %v6172
  %v6174 = vpop.f32.mrf.mxu0
  %v6175 = vadd.f32 0.0, %v6174
  %6176 = vmatprep.mubr.f32.mxu0 0.0
  %6177 = vmatmul.mubr.f32.gmra.mxu0 %v5883
  %v6178 = vpop.f32.mrf.mxu0
  %v6179 = vadd.f32 0.0, %v6178
  %v6180 = vpop.f32.mrf.mxu0
  %v6181 = vadd.f32 0.0, %v6180
  %6182 = vmatprep.mubr.f32.mxu0 0.0
  %6183 = vmatmul.mubr.f32.gmra.mxu0 %v5885
  %v6184 = vpop.f32.mrf.mxu0
  %v6185 = vadd.f32 0.0, %v6184
  %v6186 = vpop.f32.mrf.mxu0
  %v6187 = vadd.f32 0.0, %v6186
  %6188 = vmatprep.mubr.f32.mxu0 0.0
  %6189 = vmatmul.mubr.f32.gmra.mxu0 %v5887
  %v6190 = vpop.f32.mrf.mxu0
  %v6191 = vadd.f32 0.0, %v6190
  %v6192 = vpop.f32.mrf.mxu0
  %v6193 = vadd.f32 0.0, %v6192
  %6194 = vmatprep.mubr.f32.mxu0 0.0
  %6195 = vmatmul.mubr.f32.gmra.mxu0 %v5889
  %v6196 = vpop.f32.mrf.mxu0
  %v6197 = vadd.f32 0.0, %v6196
  %v6198 = vpop.f32.mrf.mxu0
  %v6199 = vadd.f32 0.0, %v6198
  %6200 = vmatprep.mubr.f32.mxu0 0.0
  %6201 = vmatmul.mubr.f32.gmra.mxu0 %v5891
  %v6202 = vpop.f32.mrf.mxu0
  %v6203 = vadd.f32 0.0, %v6202
  %v6204 = vpop.f32.mrf.mxu0
  %v6205 = vadd.f32 0.0, %v6204
  %6206 = vmatprep.mubr.f32.mxu0 0.0
  %6207 = vmatmul.mubr.f32.gmra.mxu0 %v5893
  %v6208 = vpop.f32.mrf.mxu0
  %v6209 = vadd.f32 0.0, %v6208
  %v6210 = vpop.f32.mrf.mxu0
  %v6211 = vadd.f32 0.0, %v6210
  %6212 = vmatprep.mubr.f32.mxu0 0.0
  %6213 = vmatmul.mubr.f32.gmra.mxu0 %v5895
  %v6214 = vpop.f32.mrf.mxu0
  %v6215 = vadd.f32 0.0, %v6214
  %v6216 = vpop.f32.mrf.mxu0
  %v6217 = vadd.f32 0.0, %v6216
  %6218 = vdwg.mxu0
  %6219 = vmatprep.subr.mxu0 0.0
  %6220 = vmatpush1.msra.mxu0 0.0
  %6221 = vmatprep.subr.mxu0 0.0
  %6222 = vmatpush1.msra.mxu0 0.0
  %6223 = vmatprep.subr.mxu0 0.0
  %6224 = vmatpush1.msra.mxu0 0.0
  %6225 = vmatprep.subr.mxu0 0.0
  %6226 = vmatpush1.msra.mxu0 0.0
  %6227 = vmatprep.subr.mxu0 0.0
  %6228 = vmatpush1.msra.mxu0 0.0
  %6229 = vmatprep.subr.mxu0 0.0
  %6230 = vmatpush1.msra.mxu0 0.0
  %6231 = vmatprep.subr.mxu0 0.0
  %6232 = vmatpush1.msra.mxu0 0.0
  %6233 = vmatprep.subr.mxu0 0.0
  %6234 = vmatpush1.msra.mxu0 0.0
  %6235 = vmatprep.subr.mxu0 0.0
  %6236 = vmatpush1.msra.mxu0 0.0
  %6237 = vmatprep.subr.mxu0 0.0
  %6238 = vmatpush1.msra.mxu0 0.0
  %6239 = vmatprep.subr.mxu0 0.0
  %6240 = vmatpush1.msra.mxu0 0.0
  %6241 = vmatprep.subr.mxu0 0.0
  %6242 = vmatpush1.msra.mxu0 0.0
  %6243 = vmatprep.subr.mxu0 %v1591
  %6244 = vmatpush1.msra.mxu0 %v1590
  %6245 = vmatprep.subr.mxu0 %v1583
  %6246 = vmatpush1.msra.mxu0 %v1582
  %6247 = vmatprep.subr.mxu0 %v1575
  %6248 = vmatpush1.msra.mxu0 %v1574
  %6249 = vmatprep.subr.mxu0 %v1567
  %6250 = vmatpush1.msra.mxu0 %v1566
  %6251 = vmatprep.subr.mxu0 0.0
  %6252 = vmatpush2.msra.mxu0 0.0
  %6253 = vmatprep.subr.mxu0 0.0
  %6254 = vmatpush2.msra.mxu0 0.0
  %6255 = vmatprep.subr.mxu0 0.0
  %6256 = vmatpush2.msra.mxu0 0.0
  %6257 = vmatprep.subr.mxu0 0.0
  %6258 = vmatpush2.msra.mxu0 0.0
  %6259 = vmatprep.subr.mxu0 0.0
  %6260 = vmatpush2.msra.mxu0 0.0
  %6261 = vmatprep.subr.mxu0 0.0
  %6262 = vmatpush2.msra.mxu0 0.0
  %6263 = vmatprep.subr.mxu0 0.0
  %6264 = vmatpush2.msra.mxu0 0.0
  %6265 = vmatprep.subr.mxu0 0.0
  %6266 = vmatpush2.msra.mxu0 0.0
  %6267 = vmatprep.subr.mxu0 0.0
  %6268 = vmatpush2.msra.mxu0 0.0
  %6269 = vmatprep.subr.mxu0 0.0
  %6270 = vmatpush2.msra.mxu0 0.0
  %6271 = vmatprep.subr.mxu0 0.0
  %6272 = vmatpush2.msra.mxu0 0.0
  %6273 = vmatprep.subr.mxu0 0.0
  %6274 = vmatpush2.msra.mxu0 0.0
  %6275 = vmatprep.subr.mxu0 0.0
  %6276 = vmatpush2.msra.mxu0 0.0
  %6277 = vmatprep.subr.mxu0 0.0
  %6278 = vmatpush2.msra.mxu0 0.0
  %6279 = vmatprep.subr.mxu0 0.0
  %6280 = vmatpush2.msra.mxu0 0.0
  %6281 = vmatprep.subr.mxu0 0.0
  %6282 = vmatpush2.msra.mxu0 0.0
  %6283 = vmatprep.mubr.f32.mxu0 0.0
  %6284 = vmatmul.mubr.f32.gmra.mxu0 %v5865
  %v6285 = vpop.f32.mrf.mxu0
  %v6286 = vadd.f32 0.0, %v6285
  %v6287 = vpop.f32.mrf.mxu0
  %v6288 = vadd.f32 0.0, %v6287
  %6289 = vmatprep.mubr.f32.mxu0 0.0
  %6290 = vmatmul.mubr.f32.gmra.mxu0 %v5867
  %v6291 = vpop.f32.mrf.mxu0
  %v6292 = vadd.f32 0.0, %v6291
  %v6293 = vpop.f32.mrf.mxu0
  %v6294 = vadd.f32 0.0, %v6293
  %6295 = vmatprep.mubr.f32.mxu0 0.0
  %6296 = vmatmul.mubr.f32.gmra.mxu0 %v5869
  %v6297 = vpop.f32.mrf.mxu0
  %v6298 = vadd.f32 0.0, %v6297
  %v6299 = vpop.f32.mrf.mxu0
  %v6300 = vadd.f32 0.0, %v6299
  %6301 = vmatprep.mubr.f32.mxu0 0.0
  %6302 = vmatmul.mubr.f32.gmra.mxu0 %v5871
  %v6303 = vpop.f32.mrf.mxu0
  %v6304 = vadd.f32 0.0, %v6303
  %v6305 = vpop.f32.mrf.mxu0
  %v6306 = vadd.f32 0.0, %v6305
  %6307 = vmatprep.mubr.f32.mxu0 0.0
  %6308 = vmatmul.mubr.f32.gmra.mxu0 %v5873
  %v6309 = vpop.f32.mrf.mxu0
  %v6310 = vadd.f32 0.0, %v6309
  %v6311 = vpop.f32.mrf.mxu0
  %v6312 = vadd.f32 0.0, %v6311
  %6313 = vmatprep.mubr.f32.mxu0 0.0
  %6314 = vmatmul.mubr.f32.gmra.mxu0 %v5875
  %v6315 = vpop.f32.mrf.mxu0
  %v6316 = vadd.f32 0.0, %v6315
  %v6317 = vpop.f32.mrf.mxu0
  %v6318 = vadd.f32 0.0, %v6317
  %6319 = vmatprep.mubr.f32.mxu0 0.0
  %6320 = vmatmul.mubr.f32.gmra.mxu0 %v5877
  %v6321 = vpop.f32.mrf.mxu0
  %v6322 = vadd.f32 0.0, %v6321
  %v6323 = vpop.f32.mrf.mxu0
  %v6324 = vadd.f32 0.0, %v6323
  %6325 = vmatprep.mubr.f32.mxu0 0.0
  %6326 = vmatmul.mubr.f32.gmra.mxu0 %v5879
  %v6327 = vpop.f32.mrf.mxu0
  %v6328 = vadd.f32 0.0, %v6327
  %v6329 = vpop.f32.mrf.mxu0
  %v6330 = vadd.f32 0.0, %v6329
  %6331 = vmatprep.mubr.f32.mxu0 0.0
  %6332 = vmatmul.mubr.f32.gmra.mxu0 %v5881
  %v6333 = vpop.f32.mrf.mxu0
  %v6334 = vadd.f32 0.0, %v6333
  %v6335 = vpop.f32.mrf.mxu0
  %v6336 = vadd.f32 0.0, %v6335
  %6337 = vmatprep.mubr.f32.mxu0 0.0
  %6338 = vmatmul.mubr.f32.gmra.mxu0 %v5883
  %v6339 = vpop.f32.mrf.mxu0
  %v6340 = vadd.f32 0.0, %v6339
  %v6341 = vpop.f32.mrf.mxu0
  %v6342 = vadd.f32 0.0, %v6341
  %6343 = vmatprep.mubr.f32.mxu0 0.0
  %6344 = vmatmul.mubr.f32.gmra.mxu0 %v5885
  %v6345 = vpop.f32.mrf.mxu0
  %v6346 = vadd.f32 0.0, %v6345
  %v6347 = vpop.f32.mrf.mxu0
  %v6348 = vadd.f32 0.0, %v6347
  %6349 = vmatprep.mubr.f32.mxu0 0.0
  %6350 = vmatmul.mubr.f32.gmra.mxu0 %v5887
  %v6351 = vpop.f32.mrf.mxu0
  %v6352 = vadd.f32 0.0, %v6351
  %v6353 = vpop.f32.mrf.mxu0
  %v6354 = vadd.f32 0.0, %v6353
  %6355 = vmatprep.mubr.f32.mxu0 0.0
  %6356 = vmatmul.mubr.f32.gmra.mxu0 %v5889
  %v6357 = vpop.f32.mrf.mxu0
  %v6358 = vadd.f32 0.0, %v6357
  %v6359 = vpop.f32.mrf.mxu0
  %v6360 = vadd.f32 0.0, %v6359
  %6361 = vmatprep.mubr.f32.mxu0 0.0
  %6362 = vmatmul.mubr.f32.gmra.mxu0 %v5891
  %v6363 = vpop.f32.mrf.mxu0
  %v6364 = vadd.f32 0.0, %v6363
  %v6365 = vpop.f32.mrf.mxu0
  %v6366 = vadd.f32 0.0, %v6365
  %6367 = vmatprep.mubr.f32.mxu0 0.0
  %6368 = vmatmul.mubr.f32.gmra.mxu0 %v5893
  %v6369 = vpop.f32.mrf.mxu0
  %v6370 = vadd.f32 0.0, %v6369
  %v6371 = vpop.f32.mrf.mxu0
  %v6372 = vadd.f32 0.0, %v6371
  %6373 = vmatprep.mubr.f32.mxu0 0.0
  %6374 = vmatmul.mubr.f32.gmra.mxu0 %v5895
  %v6375 = vpop.f32.mrf.mxu0
  %v6376 = vadd.f32 0.0, %v6375
  %v6377 = vpop.f32.mrf.mxu0
  %v6378 = vadd.f32 0.0, %v6377
  %6379 = vdwg.mxu0
  %6380 = vmatprep.subr.mxu0 0.0
  %6381 = vmatpush1.msra.mxu0 0.0
  %6382 = vmatprep.subr.mxu0 0.0
  %6383 = vmatpush1.msra.mxu0 0.0
  %6384 = vmatprep.subr.mxu0 0.0
  %6385 = vmatpush1.msra.mxu0 0.0
  %6386 = vmatprep.subr.mxu0 0.0
  %6387 = vmatpush1.msra.mxu0 0.0
  %6388 = vmatprep.subr.mxu0 0.0
  %6389 = vmatpush1.msra.mxu0 0.0
  %6390 = vmatprep.subr.mxu0 0.0
  %6391 = vmatpush1.msra.mxu0 0.0
  %6392 = vmatprep.subr.mxu0 0.0
  %6393 = vmatpush1.msra.mxu0 0.0
  %6394 = vmatprep.subr.mxu0 0.0
  %6395 = vmatpush1.msra.mxu0 0.0
  %6396 = vmatprep.subr.mxu0 0.0
  %6397 = vmatpush1.msra.mxu0 0.0
  %6398 = vmatprep.subr.mxu0 0.0
  %6399 = vmatpush1.msra.mxu0 0.0
  %6400 = vmatprep.subr.mxu0 0.0
  %6401 = vmatpush1.msra.mxu0 0.0
  %6402 = vmatprep.subr.mxu0 0.0
  %6403 = vmatpush1.msra.mxu0 0.0
  %6404 = vmatprep.subr.mxu0 %v1593
  %6405 = vmatpush1.msra.mxu0 %v1592
  %6406 = vmatprep.subr.mxu0 %v1585
  %6407 = vmatpush1.msra.mxu0 %v1584
  %6408 = vmatprep.subr.mxu0 %v1577
  %6409 = vmatpush1.msra.mxu0 %v1576
  %6410 = vmatprep.subr.mxu0 %v1569
  %6411 = vmatpush1.msra.mxu0 %v1568
  %6412 = vmatprep.subr.mxu0 0.0
  %6413 = vmatpush2.msra.mxu0 0.0
  %6414 = vmatprep.subr.mxu0 0.0
  %6415 = vmatpush2.msra.mxu0 0.0
  %6416 = vmatprep.subr.mxu0 0.0
  %6417 = vmatpush2.msra.mxu0 0.0
  %6418 = vmatprep.subr.mxu0 0.0
  %6419 = vmatpush2.msra.mxu0 0.0
  %6420 = vmatprep.subr.mxu0 0.0
  %6421 = vmatpush2.msra.mxu0 0.0
  %6422 = vmatprep.subr.mxu0 0.0
  %6423 = vmatpush2.msra.mxu0 0.0
  %6424 = vmatprep.subr.mxu0 0.0
  %6425 = vmatpush2.msra.mxu0 0.0
  %6426 = vmatprep.subr.mxu0 0.0
  %6427 = vmatpush2.msra.mxu0 0.0
  %6428 = vmatprep.subr.mxu0 0.0
  %6429 = vmatpush2.msra.mxu0 0.0
  %6430 = vmatprep.subr.mxu0 0.0
  %6431 = vmatpush2.msra.mxu0 0.0
  %6432 = vmatprep.subr.mxu0 0.0
  %6433 = vmatpush2.msra.mxu0 0.0
  %6434 = vmatprep.subr.mxu0 0.0
  %6435 = vmatpush2.msra.mxu0 0.0
  %6436 = vmatprep.subr.mxu0 0.0
  %6437 = vmatpush2.msra.mxu0 0.0
  %6438 = vmatprep.subr.mxu0 0.0
  %6439 = vmatpush2.msra.mxu0 0.0
  %6440 = vmatprep.subr.mxu0 0.0
  %6441 = vmatpush2.msra.mxu0 0.0
  %6442 = vmatprep.subr.mxu0 0.0
  %6443 = vmatpush2.msra.mxu0 0.0
  %6444 = vmatprep.mubr.f32.mxu0 0.0
  %6445 = vmatmul.mubr.f32.gmra.mxu0 %v5865
  %v6446 = vpop.f32.mrf.mxu0
  %v6447 = vadd.f32 0.0, %v6446
  %v6448 = vpop.f32.mrf.mxu0
  %v6449 = vadd.f32 0.0, %v6448
  %6450 = vmatprep.mubr.f32.mxu0 0.0
  %6451 = vmatmul.mubr.f32.gmra.mxu0 %v5867
  %v6452 = vpop.f32.mrf.mxu0
  %v6453 = vadd.f32 0.0, %v6452
  %v6454 = vpop.f32.mrf.mxu0
  %v6455 = vadd.f32 0.0, %v6454
  %6456 = vmatprep.mubr.f32.mxu0 0.0
  %6457 = vmatmul.mubr.f32.gmra.mxu0 %v5869
  %v6458 = vpop.f32.mrf.mxu0
  %v6459 = vadd.f32 0.0, %v6458
  %v6460 = vpop.f32.mrf.mxu0
  %v6461 = vadd.f32 0.0, %v6460
  %6462 = vmatprep.mubr.f32.mxu0 0.0
  %6463 = vmatmul.mubr.f32.gmra.mxu0 %v5871
  %v6464 = vpop.f32.mrf.mxu0
  %v6465 = vadd.f32 0.0, %v6464
  %v6466 = vpop.f32.mrf.mxu0
  %v6467 = vadd.f32 0.0, %v6466
  %6468 = vmatprep.mubr.f32.mxu0 0.0
  %6469 = vmatmul.mubr.f32.gmra.mxu0 %v5873
  %v6470 = vpop.f32.mrf.mxu0
  %v6471 = vadd.f32 0.0, %v6470
  %v6472 = vpop.f32.mrf.mxu0
  %v6473 = vadd.f32 0.0, %v6472
  %6474 = vmatprep.mubr.f32.mxu0 0.0
  %6475 = vmatmul.mubr.f32.gmra.mxu0 %v5875
  %v6476 = vpop.f32.mrf.mxu0
  %v6477 = vadd.f32 0.0, %v6476
  %v6478 = vpop.f32.mrf.mxu0
  %v6479 = vadd.f32 0.0, %v6478
  %6480 = vmatprep.mubr.f32.mxu0 0.0
  %6481 = vmatmul.mubr.f32.gmra.mxu0 %v5877
  %v6482 = vpop.f32.mrf.mxu0
  %v6483 = vadd.f32 0.0, %v6482
  %v6484 = vpop.f32.mrf.mxu0
  %v6485 = vadd.f32 0.0, %v6484
  %6486 = vmatprep.mubr.f32.mxu0 0.0
  %6487 = vmatmul.mubr.f32.gmra.mxu0 %v5879
  %v6488 = vpop.f32.mrf.mxu0
  %v6489 = vadd.f32 0.0, %v6488
  %v6490 = vpop.f32.mrf.mxu0
  %v6491 = vadd.f32 0.0, %v6490
  %6492 = vmatprep.mubr.f32.mxu0 0.0
  %6493 = vmatmul.mubr.f32.gmra.mxu0 %v5881
  %v6494 = vpop.f32.mrf.mxu0
  %v6495 = vadd.f32 0.0, %v6494
  %v6496 = vpop.f32.mrf.mxu0
  %v6497 = vadd.f32 0.0, %v6496
  %6498 = vmatprep.mubr.f32.mxu0 0.0
  %6499 = vmatmul.mubr.f32.gmra.mxu0 %v5883
  %v6500 = vpop.f32.mrf.mxu0
  %v6501 = vadd.f32 0.0, %v6500
  %v6502 = vpop.f32.mrf.mxu0
  %v6503 = vadd.f32 0.0, %v6502
  %6504 = vmatprep.mubr.f32.mxu0 0.0
  %6505 = vmatmul.mubr.f32.gmra.mxu0 %v5885
  %v6506 = vpop.f32.mrf.mxu0
  %v6507 = vadd.f32 0.0, %v6506
  %v6508 = vpop.f32.mrf.mxu0
  %v6509 = vadd.f32 0.0, %v6508
  %6510 = vmatprep.mubr.f32.mxu0 0.0
  %6511 = vmatmul.mubr.f32.gmra.mxu0 %v5887
  %v6512 = vpop.f32.mrf.mxu0
  %v6513 = vadd.f32 0.0, %v6512
  %v6514 = vpop.f32.mrf.mxu0
  %v6515 = vadd.f32 0.0, %v6514
  %6516 = vmatprep.mubr.f32.mxu0 0.0
  %6517 = vmatmul.mubr.f32.gmra.mxu0 %v5889
  %v6518 = vpop.f32.mrf.mxu0
  %v6519 = vadd.f32 0.0, %v6518
  %v6520 = vpop.f32.mrf.mxu0
  %v6521 = vadd.f32 0.0, %v6520
  %6522 = vmatprep.mubr.f32.mxu0 0.0
  %6523 = vmatmul.mubr.f32.gmra.mxu0 %v5891
  %v6524 = vpop.f32.mrf.mxu0
  %v6525 = vadd.f32 0.0, %v6524
  %v6526 = vpop.f32.mrf.mxu0
  %v6527 = vadd.f32 0.0, %v6526
  %6528 = vmatprep.mubr.f32.mxu0 0.0
  %6529 = vmatmul.mubr.f32.gmra.mxu0 %v5893
  %v6530 = vpop.f32.mrf.mxu0
  %v6531 = vadd.f32 0.0, %v6530
  %v6532 = vpop.f32.mrf.mxu0
  %v6533 = vadd.f32 0.0, %v6532
  %6534 = vmatprep.mubr.f32.mxu0 0.0
  %6535 = vmatmul.mubr.f32.gmra.mxu0 %v5895
  %v6536 = vpop.f32.mrf.mxu0
  %v6537 = vadd.f32 0.0, %v6536
  %v6538 = vpop.f32.mrf.mxu0
  %v6539 = vadd.f32 0.0, %v6538
  %6540 = vdwg.mxu0
  %v6542 = vsel %vm1626, %v5817, 0
  %v6545 = vsel %vm1626, %v5818, 0
  %v6548 = vsel %vm1626, %v5819, 0
  %v6551 = vsel %vm1626, %v5820, 0
  %v6554 = vsel %vm1626, %v5821, 0
  %v6557 = vsel %vm1626, %v5822, 0
  %v6560 = vsel %vm1626, %v5823, 0
  %v6563 = vsel %vm1626, %v5824, 0
  %v6566 = vsel %vm1626, %v5825, 0
  %v6569 = vsel %vm1626, %v5826, 0
  %v6572 = vsel %vm1626, %v5827, 0
  %v6575 = vsel %vm1626, %v5828, 0
  %v6578 = vsel %vm1626, %v5829, 0
  %v6581 = vsel %vm1626, %v5830, 0
  %v6584 = vsel %vm1626, %v5831, 0
  %v6587 = vsel %vm1626, %v5832, 0
  %6589 = vmatprep.subr.mxu0 0.0
  %6590 = vmatpush1.msra.mxu0 0.0
  %6591 = vmatprep.subr.mxu0 0.0
  %6592 = vmatpush1.msra.mxu0 0.0
  %6593 = vmatprep.subr.mxu0 0.0
  %6594 = vmatpush1.msra.mxu0 0.0
  %6595 = vmatprep.subr.mxu0 0.0
  %6596 = vmatpush1.msra.mxu0 0.0
  %6597 = vmatprep.subr.mxu0 0.0
  %6598 = vmatpush1.msra.mxu0 0.0
  %6599 = vmatprep.subr.mxu0 0.0
  %6600 = vmatpush1.msra.mxu0 0.0
  %6601 = vmatprep.subr.mxu0 0.0
  %6602 = vmatpush1.msra.mxu0 0.0
  %6603 = vmatprep.subr.mxu0 0.0
  %6604 = vmatpush1.msra.mxu0 0.0
  %6605 = vmatprep.subr.mxu0 0.0
  %6606 = vmatpush1.msra.mxu0 0.0
  %6607 = vmatprep.subr.mxu0 0.0
  %6608 = vmatpush1.msra.mxu0 0.0
  %6609 = vmatprep.subr.mxu0 0.0
  %6610 = vmatpush1.msra.mxu0 0.0
  %6611 = vmatprep.subr.mxu0 0.0
  %6612 = vmatpush1.msra.mxu0 0.0
  %6613 = vmatprep.subr.mxu0 %v1619
  %6614 = vmatpush1.msra.mxu0 %v1618
  %6615 = vmatprep.subr.mxu0 %v1611
  %6616 = vmatpush1.msra.mxu0 %v1610
  %6617 = vmatprep.subr.mxu0 %v1603
  %6618 = vmatpush1.msra.mxu0 %v1602
  %6619 = vmatprep.subr.mxu0 %v1595
  %6620 = vmatpush1.msra.mxu0 %v1594
  %6621 = vmatprep.subr.mxu0 0.0
  %6622 = vmatpush2.msra.mxu0 0.0
  %6623 = vmatprep.subr.mxu0 0.0
  %6624 = vmatpush2.msra.mxu0 0.0
  %6625 = vmatprep.subr.mxu0 0.0
  %6626 = vmatpush2.msra.mxu0 0.0
  %6627 = vmatprep.subr.mxu0 0.0
  %6628 = vmatpush2.msra.mxu0 0.0
  %6629 = vmatprep.subr.mxu0 0.0
  %6630 = vmatpush2.msra.mxu0 0.0
  %6631 = vmatprep.subr.mxu0 0.0
  %6632 = vmatpush2.msra.mxu0 0.0
  %6633 = vmatprep.subr.mxu0 0.0
  %6634 = vmatpush2.msra.mxu0 0.0
  %6635 = vmatprep.subr.mxu0 0.0
  %6636 = vmatpush2.msra.mxu0 0.0
  %6637 = vmatprep.subr.mxu0 0.0
  %6638 = vmatpush2.msra.mxu0 0.0
  %6639 = vmatprep.subr.mxu0 0.0
  %6640 = vmatpush2.msra.mxu0 0.0
  %6641 = vmatprep.subr.mxu0 0.0
  %6642 = vmatpush2.msra.mxu0 0.0
  %6643 = vmatprep.subr.mxu0 0.0
  %6644 = vmatpush2.msra.mxu0 0.0
  %6645 = vmatprep.subr.mxu0 0.0
  %6646 = vmatpush2.msra.mxu0 0.0
  %6647 = vmatprep.subr.mxu0 0.0
  %6648 = vmatpush2.msra.mxu0 0.0
  %6649 = vmatprep.subr.mxu0 0.0
  %6650 = vmatpush2.msra.mxu0 0.0
  %6651 = vmatprep.subr.mxu0 0.0
  %6652 = vmatpush2.msra.mxu0 0.0
  %6653 = vmatprep.mubr.f32.mxu0 0.0
  %6654 = vmatmul.mubr.f32.gmra.mxu0 %v6542
  %v6655 = vpop.f32.mrf.mxu0
  %v6656 = vadd.f32 0.0, %v6655
  %v6657 = vpop.f32.mrf.mxu0
  %v6658 = vadd.f32 0.0, %v6657
  %6659 = vmatprep.mubr.f32.mxu0 0.0
  %6660 = vmatmul.mubr.f32.gmra.mxu0 %v6545
  %v6661 = vpop.f32.mrf.mxu0
  %v6662 = vadd.f32 0.0, %v6661
  %v6663 = vpop.f32.mrf.mxu0
  %v6664 = vadd.f32 0.0, %v6663
  %6665 = vmatprep.mubr.f32.mxu0 0.0
  %6666 = vmatmul.mubr.f32.gmra.mxu0 %v6548
  %v6667 = vpop.f32.mrf.mxu0
  %v6668 = vadd.f32 0.0, %v6667
  %v6669 = vpop.f32.mrf.mxu0
  %v6670 = vadd.f32 0.0, %v6669
  %6671 = vmatprep.mubr.f32.mxu0 0.0
  %6672 = vmatmul.mubr.f32.gmra.mxu0 %v6551
  %v6673 = vpop.f32.mrf.mxu0
  %v6674 = vadd.f32 0.0, %v6673
  %v6675 = vpop.f32.mrf.mxu0
  %v6676 = vadd.f32 0.0, %v6675
  %6677 = vmatprep.mubr.f32.mxu0 0.0
  %6678 = vmatmul.mubr.f32.gmra.mxu0 %v6554
  %v6679 = vpop.f32.mrf.mxu0
  %v6680 = vadd.f32 0.0, %v6679
  %v6681 = vpop.f32.mrf.mxu0
  %v6682 = vadd.f32 0.0, %v6681
  %6683 = vmatprep.mubr.f32.mxu0 0.0
  %6684 = vmatmul.mubr.f32.gmra.mxu0 %v6557
  %v6685 = vpop.f32.mrf.mxu0
  %v6686 = vadd.f32 0.0, %v6685
  %v6687 = vpop.f32.mrf.mxu0
  %v6688 = vadd.f32 0.0, %v6687
  %6689 = vmatprep.mubr.f32.mxu0 0.0
  %6690 = vmatmul.mubr.f32.gmra.mxu0 %v6560
  %v6691 = vpop.f32.mrf.mxu0
  %v6692 = vadd.f32 0.0, %v6691
  %v6693 = vpop.f32.mrf.mxu0
  %v6694 = vadd.f32 0.0, %v6693
  %6695 = vmatprep.mubr.f32.mxu0 0.0
  %6696 = vmatmul.mubr.f32.gmra.mxu0 %v6563
  %v6697 = vpop.f32.mrf.mxu0
  %v6698 = vadd.f32 0.0, %v6697
  %v6699 = vpop.f32.mrf.mxu0
  %v6700 = vadd.f32 0.0, %v6699
  %6701 = vmatprep.mubr.f32.mxu0 0.0
  %6702 = vmatmul.mubr.f32.gmra.mxu0 %v6566
  %v6703 = vpop.f32.mrf.mxu0
  %v6704 = vadd.f32 0.0, %v6703
  %v6705 = vpop.f32.mrf.mxu0
  %v6706 = vadd.f32 0.0, %v6705
  %6707 = vmatprep.mubr.f32.mxu0 0.0
  %6708 = vmatmul.mubr.f32.gmra.mxu0 %v6569
  %v6709 = vpop.f32.mrf.mxu0
  %v6710 = vadd.f32 0.0, %v6709
  %v6711 = vpop.f32.mrf.mxu0
  %v6712 = vadd.f32 0.0, %v6711
  %6713 = vmatprep.mubr.f32.mxu0 0.0
  %6714 = vmatmul.mubr.f32.gmra.mxu0 %v6572
  %v6715 = vpop.f32.mrf.mxu0
  %v6716 = vadd.f32 0.0, %v6715
  %v6717 = vpop.f32.mrf.mxu0
  %v6718 = vadd.f32 0.0, %v6717
  %6719 = vmatprep.mubr.f32.mxu0 0.0
  %6720 = vmatmul.mubr.f32.gmra.mxu0 %v6575
  %v6721 = vpop.f32.mrf.mxu0
  %v6722 = vadd.f32 0.0, %v6721
  %v6723 = vpop.f32.mrf.mxu0
  %v6724 = vadd.f32 0.0, %v6723
  %6725 = vmatprep.mubr.f32.mxu0 0.0
  %6726 = vmatmul.mubr.f32.gmra.mxu0 %v6578
  %v6727 = vpop.f32.mrf.mxu0
  %v6728 = vadd.f32 0.0, %v6727
  %v6729 = vpop.f32.mrf.mxu0
  %v6730 = vadd.f32 0.0, %v6729
  %6731 = vmatprep.mubr.f32.mxu0 0.0
  %6732 = vmatmul.mubr.f32.gmra.mxu0 %v6581
  %v6733 = vpop.f32.mrf.mxu0
  %v6734 = vadd.f32 0.0, %v6733
  %v6735 = vpop.f32.mrf.mxu0
  %v6736 = vadd.f32 0.0, %v6735
  %6737 = vmatprep.mubr.f32.mxu0 0.0
  %6738 = vmatmul.mubr.f32.gmra.mxu0 %v6584
  %v6739 = vpop.f32.mrf.mxu0
  %v6740 = vadd.f32 0.0, %v6739
  %v6741 = vpop.f32.mrf.mxu0
  %v6742 = vadd.f32 0.0, %v6741
  %6743 = vmatprep.mubr.f32.mxu0 0.0
  %6744 = vmatmul.mubr.f32.gmra.mxu0 %v6587
  %v6745 = vpop.f32.mrf.mxu0
  %v6746 = vadd.f32 0.0, %v6745
  %v6747 = vpop.f32.mrf.mxu0
  %v6748 = vadd.f32 0.0, %v6747
  %6749 = vdwg.mxu0
  %6750 = vmatprep.subr.mxu0 0.0
  %6751 = vmatpush1.msra.mxu0 0.0
  %6752 = vmatprep.subr.mxu0 0.0
  %6753 = vmatpush1.msra.mxu0 0.0
  %6754 = vmatprep.subr.mxu0 0.0
  %6755 = vmatpush1.msra.mxu0 0.0
  %6756 = vmatprep.subr.mxu0 0.0
  %6757 = vmatpush1.msra.mxu0 0.0
  %6758 = vmatprep.subr.mxu0 0.0
  %6759 = vmatpush1.msra.mxu0 0.0
  %6760 = vmatprep.subr.mxu0 0.0
  %6761 = vmatpush1.msra.mxu0 0.0
  %6762 = vmatprep.subr.mxu0 0.0
  %6763 = vmatpush1.msra.mxu0 0.0
  %6764 = vmatprep.subr.mxu0 0.0
  %6765 = vmatpush1.msra.mxu0 0.0
  %6766 = vmatprep.subr.mxu0 0.0
  %6767 = vmatpush1.msra.mxu0 0.0
  %6768 = vmatprep.subr.mxu0 0.0
  %6769 = vmatpush1.msra.mxu0 0.0
  %6770 = vmatprep.subr.mxu0 0.0
  %6771 = vmatpush1.msra.mxu0 0.0
  %6772 = vmatprep.subr.mxu0 0.0
  %6773 = vmatpush1.msra.mxu0 0.0
  %6774 = vmatprep.subr.mxu0 %v1621
  %6775 = vmatpush1.msra.mxu0 %v1620
  %6776 = vmatprep.subr.mxu0 %v1613
  %6777 = vmatpush1.msra.mxu0 %v1612
  %6778 = vmatprep.subr.mxu0 %v1605
  %6779 = vmatpush1.msra.mxu0 %v1604
  %6780 = vmatprep.subr.mxu0 %v1597
  %6781 = vmatpush1.msra.mxu0 %v1596
  %6782 = vmatprep.subr.mxu0 0.0
  %6783 = vmatpush2.msra.mxu0 0.0
  %6784 = vmatprep.subr.mxu0 0.0
  %6785 = vmatpush2.msra.mxu0 0.0
  %6786 = vmatprep.subr.mxu0 0.0
  %6787 = vmatpush2.msra.mxu0 0.0
  %6788 = vmatprep.subr.mxu0 0.0
  %6789 = vmatpush2.msra.mxu0 0.0
  %6790 = vmatprep.subr.mxu0 0.0
  %6791 = vmatpush2.msra.mxu0 0.0
  %6792 = vmatprep.subr.mxu0 0.0
  %6793 = vmatpush2.msra.mxu0 0.0
  %6794 = vmatprep.subr.mxu0 0.0
  %6795 = vmatpush2.msra.mxu0 0.0
  %6796 = vmatprep.subr.mxu0 0.0
  %6797 = vmatpush2.msra.mxu0 0.0
  %6798 = vmatprep.subr.mxu0 0.0
  %6799 = vmatpush2.msra.mxu0 0.0
  %6800 = vmatprep.subr.mxu0 0.0
  %6801 = vmatpush2.msra.mxu0 0.0
  %6802 = vmatprep.subr.mxu0 0.0
  %6803 = vmatpush2.msra.mxu0 0.0
  %6804 = vmatprep.subr.mxu0 0.0
  %6805 = vmatpush2.msra.mxu0 0.0
  %6806 = vmatprep.subr.mxu0 0.0
  %6807 = vmatpush2.msra.mxu0 0.0
  %6808 = vmatprep.subr.mxu0 0.0
  %6809 = vmatpush2.msra.mxu0 0.0
  %6810 = vmatprep.subr.mxu0 0.0
  %6811 = vmatpush2.msra.mxu0 0.0
  %6812 = vmatprep.subr.mxu0 0.0
  %6813 = vmatpush2.msra.mxu0 0.0
  %6814 = vmatprep.mubr.f32.mxu0 0.0
  %6815 = vmatmul.mubr.f32.gmra.mxu0 %v6542
  %v6816 = vpop.f32.mrf.mxu0
  %v6817 = vadd.f32 0.0, %v6816
  %v6818 = vpop.f32.mrf.mxu0
  %v6819 = vadd.f32 0.0, %v6818
  %6820 = vmatprep.mubr.f32.mxu0 0.0
  %6821 = vmatmul.mubr.f32.gmra.mxu0 %v6545
  %v6822 = vpop.f32.mrf.mxu0
  %v6823 = vadd.f32 0.0, %v6822
  %v6824 = vpop.f32.mrf.mxu0
  %v6825 = vadd.f32 0.0, %v6824
  %6826 = vmatprep.mubr.f32.mxu0 0.0
  %6827 = vmatmul.mubr.f32.gmra.mxu0 %v6548
  %v6828 = vpop.f32.mrf.mxu0
  %v6829 = vadd.f32 0.0, %v6828
  %v6830 = vpop.f32.mrf.mxu0
  %v6831 = vadd.f32 0.0, %v6830
  %6832 = vmatprep.mubr.f32.mxu0 0.0
  %6833 = vmatmul.mubr.f32.gmra.mxu0 %v6551
  %v6834 = vpop.f32.mrf.mxu0
  %v6835 = vadd.f32 0.0, %v6834
  %v6836 = vpop.f32.mrf.mxu0
  %v6837 = vadd.f32 0.0, %v6836
  %6838 = vmatprep.mubr.f32.mxu0 0.0
  %6839 = vmatmul.mubr.f32.gmra.mxu0 %v6554
  %v6840 = vpop.f32.mrf.mxu0
  %v6841 = vadd.f32 0.0, %v6840
  %v6842 = vpop.f32.mrf.mxu0
  %v6843 = vadd.f32 0.0, %v6842
  %6844 = vmatprep.mubr.f32.mxu0 0.0
  %6845 = vmatmul.mubr.f32.gmra.mxu0 %v6557
  %v6846 = vpop.f32.mrf.mxu0
  %v6847 = vadd.f32 0.0, %v6846
  %v6848 = vpop.f32.mrf.mxu0
  %v6849 = vadd.f32 0.0, %v6848
  %6850 = vmatprep.mubr.f32.mxu0 0.0
  %6851 = vmatmul.mubr.f32.gmra.mxu0 %v6560
  %v6852 = vpop.f32.mrf.mxu0
  %v6853 = vadd.f32 0.0, %v6852
  %v6854 = vpop.f32.mrf.mxu0
  %v6855 = vadd.f32 0.0, %v6854
  %6856 = vmatprep.mubr.f32.mxu0 0.0
  %6857 = vmatmul.mubr.f32.gmra.mxu0 %v6563
  %v6858 = vpop.f32.mrf.mxu0
  %v6859 = vadd.f32 0.0, %v6858
  %v6860 = vpop.f32.mrf.mxu0
  %v6861 = vadd.f32 0.0, %v6860
  %6862 = vmatprep.mubr.f32.mxu0 0.0
  %6863 = vmatmul.mubr.f32.gmra.mxu0 %v6566
  %v6864 = vpop.f32.mrf.mxu0
  %v6865 = vadd.f32 0.0, %v6864
  %v6866 = vpop.f32.mrf.mxu0
  %v6867 = vadd.f32 0.0, %v6866
  %6868 = vmatprep.mubr.f32.mxu0 0.0
  %6869 = vmatmul.mubr.f32.gmra.mxu0 %v6569
  %v6870 = vpop.f32.mrf.mxu0
  %v6871 = vadd.f32 0.0, %v6870
  %v6872 = vpop.f32.mrf.mxu0
  %v6873 = vadd.f32 0.0, %v6872
  %6874 = vmatprep.mubr.f32.mxu0 0.0
  %6875 = vmatmul.mubr.f32.gmra.mxu0 %v6572
  %v6876 = vpop.f32.mrf.mxu0
  %v6877 = vadd.f32 0.0, %v6876
  %v6878 = vpop.f32.mrf.mxu0
  %v6879 = vadd.f32 0.0, %v6878
  %6880 = vmatprep.mubr.f32.mxu0 0.0
  %6881 = vmatmul.mubr.f32.gmra.mxu0 %v6575
  %v6882 = vpop.f32.mrf.mxu0
  %v6883 = vadd.f32 0.0, %v6882
  %v6884 = vpop.f32.mrf.mxu0
  %v6885 = vadd.f32 0.0, %v6884
  %6886 = vmatprep.mubr.f32.mxu0 0.0
  %6887 = vmatmul.mubr.f32.gmra.mxu0 %v6578
  %v6888 = vpop.f32.mrf.mxu0
  %v6889 = vadd.f32 0.0, %v6888
  %v6890 = vpop.f32.mrf.mxu0
  %v6891 = vadd.f32 0.0, %v6890
  %6892 = vmatprep.mubr.f32.mxu0 0.0
  %6893 = vmatmul.mubr.f32.gmra.mxu0 %v6581
  %v6894 = vpop.f32.mrf.mxu0
  %v6895 = vadd.f32 0.0, %v6894
  %v6896 = vpop.f32.mrf.mxu0
  %v6897 = vadd.f32 0.0, %v6896
  %6898 = vmatprep.mubr.f32.mxu0 0.0
  %6899 = vmatmul.mubr.f32.gmra.mxu0 %v6584
  %v6900 = vpop.f32.mrf.mxu0
  %v6901 = vadd.f32 0.0, %v6900
  %v6902 = vpop.f32.mrf.mxu0
  %v6903 = vadd.f32 0.0, %v6902
  %6904 = vmatprep.mubr.f32.mxu0 0.0
  %6905 = vmatmul.mubr.f32.gmra.mxu0 %v6587
  %v6906 = vpop.f32.mrf.mxu0
  %v6907 = vadd.f32 0.0, %v6906
  %v6908 = vpop.f32.mrf.mxu0
  %v6909 = vadd.f32 0.0, %v6908
  %6910 = vdwg.mxu0
  %6911 = vmatprep.subr.mxu0 0.0
  %6912 = vmatpush1.msra.mxu0 0.0
  %6913 = vmatprep.subr.mxu0 0.0
  %6914 = vmatpush1.msra.mxu0 0.0
  %6915 = vmatprep.subr.mxu0 0.0
  %6916 = vmatpush1.msra.mxu0 0.0
  %6917 = vmatprep.subr.mxu0 0.0
  %6918 = vmatpush1.msra.mxu0 0.0
  %6919 = vmatprep.subr.mxu0 0.0
  %6920 = vmatpush1.msra.mxu0 0.0
  %6921 = vmatprep.subr.mxu0 0.0
  %6922 = vmatpush1.msra.mxu0 0.0
  %6923 = vmatprep.subr.mxu0 0.0
  %6924 = vmatpush1.msra.mxu0 0.0
  %6925 = vmatprep.subr.mxu0 0.0
  %6926 = vmatpush1.msra.mxu0 0.0
  %6927 = vmatprep.subr.mxu0 0.0
  %6928 = vmatpush1.msra.mxu0 0.0
  %6929 = vmatprep.subr.mxu0 0.0
  %6930 = vmatpush1.msra.mxu0 0.0
  %6931 = vmatprep.subr.mxu0 0.0
  %6932 = vmatpush1.msra.mxu0 0.0
  %6933 = vmatprep.subr.mxu0 0.0
  %6934 = vmatpush1.msra.mxu0 0.0
  %6935 = vmatprep.subr.mxu0 %v1623
  %6936 = vmatpush1.msra.mxu0 %v1622
  %6937 = vmatprep.subr.mxu0 %v1615
  %6938 = vmatpush1.msra.mxu0 %v1614
  %6939 = vmatprep.subr.mxu0 %v1607
  %6940 = vmatpush1.msra.mxu0 %v1606
  %6941 = vmatprep.subr.mxu0 %v1599
  %6942 = vmatpush1.msra.mxu0 %v1598
  %6943 = vmatprep.subr.mxu0 0.0
  %6944 = vmatpush2.msra.mxu0 0.0
  %6945 = vmatprep.subr.mxu0 0.0
  %6946 = vmatpush2.msra.mxu0 0.0
  %6947 = vmatprep.subr.mxu0 0.0
  %6948 = vmatpush2.msra.mxu0 0.0
  %6949 = vmatprep.subr.mxu0 0.0
  %6950 = vmatpush2.msra.mxu0 0.0
  %6951 = vmatprep.subr.mxu0 0.0
  %6952 = vmatpush2.msra.mxu0 0.0
  %6953 = vmatprep.subr.mxu0 0.0
  %6954 = vmatpush2.msra.mxu0 0.0
  %6955 = vmatprep.subr.mxu0 0.0
  %6956 = vmatpush2.msra.mxu0 0.0
  %6957 = vmatprep.subr.mxu0 0.0
  %6958 = vmatpush2.msra.mxu0 0.0
  %6959 = vmatprep.subr.mxu0 0.0
  %6960 = vmatpush2.msra.mxu0 0.0
  %6961 = vmatprep.subr.mxu0 0.0
  %6962 = vmatpush2.msra.mxu0 0.0
  %6963 = vmatprep.subr.mxu0 0.0
  %6964 = vmatpush2.msra.mxu0 0.0
  %6965 = vmatprep.subr.mxu0 0.0
  %6966 = vmatpush2.msra.mxu0 0.0
  %6967 = vmatprep.subr.mxu0 0.0
  %6968 = vmatpush2.msra.mxu0 0.0
  %6969 = vmatprep.subr.mxu0 0.0
  %6970 = vmatpush2.msra.mxu0 0.0
  %6971 = vmatprep.subr.mxu0 0.0
  %6972 = vmatpush2.msra.mxu0 0.0
  %6973 = vmatprep.subr.mxu0 0.0
  %6974 = vmatpush2.msra.mxu0 0.0
  %6975 = vmatprep.mubr.f32.mxu0 0.0
  %6976 = vmatmul.mubr.f32.gmra.mxu0 %v6542
  %v6977 = vpop.f32.mrf.mxu0
  %v6978 = vadd.f32 0.0, %v6977
  %v6979 = vpop.f32.mrf.mxu0
  %v6980 = vadd.f32 0.0, %v6979
  %6981 = vmatprep.mubr.f32.mxu0 0.0
  %6982 = vmatmul.mubr.f32.gmra.mxu0 %v6545
  %v6983 = vpop.f32.mrf.mxu0
  %v6984 = vadd.f32 0.0, %v6983
  %v6985 = vpop.f32.mrf.mxu0
  %v6986 = vadd.f32 0.0, %v6985
  %6987 = vmatprep.mubr.f32.mxu0 0.0
  %6988 = vmatmul.mubr.f32.gmra.mxu0 %v6548
  %v6989 = vpop.f32.mrf.mxu0
  %v6990 = vadd.f32 0.0, %v6989
  %v6991 = vpop.f32.mrf.mxu0
  %v6992 = vadd.f32 0.0, %v6991
  %6993 = vmatprep.mubr.f32.mxu0 0.0
  %6994 = vmatmul.mubr.f32.gmra.mxu0 %v6551
  %v6995 = vpop.f32.mrf.mxu0
  %v6996 = vadd.f32 0.0, %v6995
  %v6997 = vpop.f32.mrf.mxu0
  %v6998 = vadd.f32 0.0, %v6997
  %6999 = vmatprep.mubr.f32.mxu0 0.0
  %7000 = vmatmul.mubr.f32.gmra.mxu0 %v6554
  %v7001 = vpop.f32.mrf.mxu0
  %v7002 = vadd.f32 0.0, %v7001
  %v7003 = vpop.f32.mrf.mxu0
  %v7004 = vadd.f32 0.0, %v7003
  %7005 = vmatprep.mubr.f32.mxu0 0.0
  %7006 = vmatmul.mubr.f32.gmra.mxu0 %v6557
  %v7007 = vpop.f32.mrf.mxu0
  %v7008 = vadd.f32 0.0, %v7007
  %v7009 = vpop.f32.mrf.mxu0
  %v7010 = vadd.f32 0.0, %v7009
  %7011 = vmatprep.mubr.f32.mxu0 0.0
  %7012 = vmatmul.mubr.f32.gmra.mxu0 %v6560
  %v7013 = vpop.f32.mrf.mxu0
  %v7014 = vadd.f32 0.0, %v7013
  %v7015 = vpop.f32.mrf.mxu0
  %v7016 = vadd.f32 0.0, %v7015
  %7017 = vmatprep.mubr.f32.mxu0 0.0
  %7018 = vmatmul.mubr.f32.gmra.mxu0 %v6563
  %v7019 = vpop.f32.mrf.mxu0
  %v7020 = vadd.f32 0.0, %v7019
  %v7021 = vpop.f32.mrf.mxu0
  %v7022 = vadd.f32 0.0, %v7021
  %7023 = vmatprep.mubr.f32.mxu0 0.0
  %7024 = vmatmul.mubr.f32.gmra.mxu0 %v6566
  %v7025 = vpop.f32.mrf.mxu0
  %v7026 = vadd.f32 0.0, %v7025
  %v7027 = vpop.f32.mrf.mxu0
  %v7028 = vadd.f32 0.0, %v7027
  %7029 = vmatprep.mubr.f32.mxu0 0.0
  %7030 = vmatmul.mubr.f32.gmra.mxu0 %v6569
  %v7031 = vpop.f32.mrf.mxu0
  %v7032 = vadd.f32 0.0, %v7031
  %v7033 = vpop.f32.mrf.mxu0
  %v7034 = vadd.f32 0.0, %v7033
  %7035 = vmatprep.mubr.f32.mxu0 0.0
  %7036 = vmatmul.mubr.f32.gmra.mxu0 %v6572
  %v7037 = vpop.f32.mrf.mxu0
  %v7038 = vadd.f32 0.0, %v7037
  %v7039 = vpop.f32.mrf.mxu0
  %v7040 = vadd.f32 0.0, %v7039
  %7041 = vmatprep.mubr.f32.mxu0 0.0
  %7042 = vmatmul.mubr.f32.gmra.mxu0 %v6575
  %v7043 = vpop.f32.mrf.mxu0
  %v7044 = vadd.f32 0.0, %v7043
  %v7045 = vpop.f32.mrf.mxu0
  %v7046 = vadd.f32 0.0, %v7045
  %7047 = vmatprep.mubr.f32.mxu0 0.0
  %7048 = vmatmul.mubr.f32.gmra.mxu0 %v6578
  %v7049 = vpop.f32.mrf.mxu0
  %v7050 = vadd.f32 0.0, %v7049
  %v7051 = vpop.f32.mrf.mxu0
  %v7052 = vadd.f32 0.0, %v7051
  %7053 = vmatprep.mubr.f32.mxu0 0.0
  %7054 = vmatmul.mubr.f32.gmra.mxu0 %v6581
  %v7055 = vpop.f32.mrf.mxu0
  %v7056 = vadd.f32 0.0, %v7055
  %v7057 = vpop.f32.mrf.mxu0
  %v7058 = vadd.f32 0.0, %v7057
  %7059 = vmatprep.mubr.f32.mxu0 0.0
  %7060 = vmatmul.mubr.f32.gmra.mxu0 %v6584
  %v7061 = vpop.f32.mrf.mxu0
  %v7062 = vadd.f32 0.0, %v7061
  %v7063 = vpop.f32.mrf.mxu0
  %v7064 = vadd.f32 0.0, %v7063
  %7065 = vmatprep.mubr.f32.mxu0 0.0
  %7066 = vmatmul.mubr.f32.gmra.mxu0 %v6587
  %v7067 = vpop.f32.mrf.mxu0
  %v7068 = vadd.f32 0.0, %v7067
  %v7069 = vpop.f32.mrf.mxu0
  %v7070 = vadd.f32 0.0, %v7069
  %7071 = vdwg.mxu0
  %7072 = vmatprep.subr.mxu0 0.0
  %7073 = vmatpush1.msra.mxu0 0.0
  %7074 = vmatprep.subr.mxu0 0.0
  %7075 = vmatpush1.msra.mxu0 0.0
  %7076 = vmatprep.subr.mxu0 0.0
  %7077 = vmatpush1.msra.mxu0 0.0
  %7078 = vmatprep.subr.mxu0 0.0
  %7079 = vmatpush1.msra.mxu0 0.0
  %7080 = vmatprep.subr.mxu0 0.0
  %7081 = vmatpush1.msra.mxu0 0.0
  %7082 = vmatprep.subr.mxu0 0.0
  %7083 = vmatpush1.msra.mxu0 0.0
  %7084 = vmatprep.subr.mxu0 0.0
  %7085 = vmatpush1.msra.mxu0 0.0
  %7086 = vmatprep.subr.mxu0 0.0
  %7087 = vmatpush1.msra.mxu0 0.0
  %7088 = vmatprep.subr.mxu0 0.0
  %7089 = vmatpush1.msra.mxu0 0.0
  %7090 = vmatprep.subr.mxu0 0.0
  %7091 = vmatpush1.msra.mxu0 0.0
  %7092 = vmatprep.subr.mxu0 0.0
  %7093 = vmatpush1.msra.mxu0 0.0
  %7094 = vmatprep.subr.mxu0 0.0
  %7095 = vmatpush1.msra.mxu0 0.0
  %7096 = vmatprep.subr.mxu0 %v1625
  %7097 = vmatpush1.msra.mxu0 %v1624
  %7098 = vmatprep.subr.mxu0 %v1617
  %7099 = vmatpush1.msra.mxu0 %v1616
  %7100 = vmatprep.subr.mxu0 %v1609
  %7101 = vmatpush1.msra.mxu0 %v1608
  %7102 = vmatprep.subr.mxu0 %v1601
  %7103 = vmatpush1.msra.mxu0 %v1600
  %7104 = vmatprep.subr.mxu0 0.0
  %7105 = vmatpush2.msra.mxu0 0.0
  %7106 = vmatprep.subr.mxu0 0.0
  %7107 = vmatpush2.msra.mxu0 0.0
  %7108 = vmatprep.subr.mxu0 0.0
  %7109 = vmatpush2.msra.mxu0 0.0
  %7110 = vmatprep.subr.mxu0 0.0
  %7111 = vmatpush2.msra.mxu0 0.0
  %7112 = vmatprep.subr.mxu0 0.0
  %7113 = vmatpush2.msra.mxu0 0.0
  %7114 = vmatprep.subr.mxu0 0.0
  %7115 = vmatpush2.msra.mxu0 0.0
  %7116 = vmatprep.subr.mxu0 0.0
  %7117 = vmatpush2.msra.mxu0 0.0
  %7118 = vmatprep.subr.mxu0 0.0
  %7119 = vmatpush2.msra.mxu0 0.0
  %7120 = vmatprep.subr.mxu0 0.0
  %7121 = vmatpush2.msra.mxu0 0.0
  %7122 = vmatprep.subr.mxu0 0.0
  %7123 = vmatpush2.msra.mxu0 0.0
  %7124 = vmatprep.subr.mxu0 0.0
  %7125 = vmatpush2.msra.mxu0 0.0
  %7126 = vmatprep.subr.mxu0 0.0
  %7127 = vmatpush2.msra.mxu0 0.0
  %7128 = vmatprep.subr.mxu0 0.0
  %7129 = vmatpush2.msra.mxu0 0.0
  %7130 = vmatprep.subr.mxu0 0.0
  %7131 = vmatpush2.msra.mxu0 0.0
  %7132 = vmatprep.subr.mxu0 0.0
  %7133 = vmatpush2.msra.mxu0 0.0
  %7134 = vmatprep.subr.mxu0 0.0
  %7135 = vmatpush2.msra.mxu0 0.0
  %7136 = vmatprep.mubr.f32.mxu0 0.0
  %7137 = vmatmul.mubr.f32.gmra.mxu0 %v6542
  %v7138 = vpop.f32.mrf.mxu0
  %v7139 = vadd.f32 0.0, %v7138
  %v7140 = vpop.f32.mrf.mxu0
  %v7141 = vadd.f32 0.0, %v7140
  %7142 = vmatprep.mubr.f32.mxu0 0.0
  %7143 = vmatmul.mubr.f32.gmra.mxu0 %v6545
  %v7144 = vpop.f32.mrf.mxu0
  %v7145 = vadd.f32 0.0, %v7144
  %v7146 = vpop.f32.mrf.mxu0
  %v7147 = vadd.f32 0.0, %v7146
  %7148 = vmatprep.mubr.f32.mxu0 0.0
  %7149 = vmatmul.mubr.f32.gmra.mxu0 %v6548
  %v7150 = vpop.f32.mrf.mxu0
  %v7151 = vadd.f32 0.0, %v7150
  %v7152 = vpop.f32.mrf.mxu0
  %v7153 = vadd.f32 0.0, %v7152
  %7154 = vmatprep.mubr.f32.mxu0 0.0
  %7155 = vmatmul.mubr.f32.gmra.mxu0 %v6551
  %v7156 = vpop.f32.mrf.mxu0
  %v7157 = vadd.f32 0.0, %v7156
  %v7158 = vpop.f32.mrf.mxu0
  %v7159 = vadd.f32 0.0, %v7158
  %7160 = vmatprep.mubr.f32.mxu0 0.0
  %7161 = vmatmul.mubr.f32.gmra.mxu0 %v6554
  %v7162 = vpop.f32.mrf.mxu0
  %v7163 = vadd.f32 0.0, %v7162
  %v7164 = vpop.f32.mrf.mxu0
  %v7165 = vadd.f32 0.0, %v7164
  %7166 = vmatprep.mubr.f32.mxu0 0.0
  %7167 = vmatmul.mubr.f32.gmra.mxu0 %v6557
  %v7168 = vpop.f32.mrf.mxu0
  %v7169 = vadd.f32 0.0, %v7168
  %v7170 = vpop.f32.mrf.mxu0
  %v7171 = vadd.f32 0.0, %v7170
  %7172 = vmatprep.mubr.f32.mxu0 0.0
  %7173 = vmatmul.mubr.f32.gmra.mxu0 %v6560
  %v7174 = vpop.f32.mrf.mxu0
  %v7175 = vadd.f32 0.0, %v7174
  %v7176 = vpop.f32.mrf.mxu0
  %v7177 = vadd.f32 0.0, %v7176
  %7178 = vmatprep.mubr.f32.mxu0 0.0
  %7179 = vmatmul.mubr.f32.gmra.mxu0 %v6563
  %v7180 = vpop.f32.mrf.mxu0
  %v7181 = vadd.f32 0.0, %v7180
  %v7182 = vpop.f32.mrf.mxu0
  %v7183 = vadd.f32 0.0, %v7182
  %7184 = vmatprep.mubr.f32.mxu0 0.0
  %7185 = vmatmul.mubr.f32.gmra.mxu0 %v6566
  %v7186 = vpop.f32.mrf.mxu0
  %v7187 = vadd.f32 0.0, %v7186
  %v7188 = vpop.f32.mrf.mxu0
  %v7189 = vadd.f32 0.0, %v7188
  %7190 = vmatprep.mubr.f32.mxu0 0.0
  %7191 = vmatmul.mubr.f32.gmra.mxu0 %v6569
  %v7192 = vpop.f32.mrf.mxu0
  %v7193 = vadd.f32 0.0, %v7192
  %v7194 = vpop.f32.mrf.mxu0
  %v7195 = vadd.f32 0.0, %v7194
  %7196 = vmatprep.mubr.f32.mxu0 0.0
  %7197 = vmatmul.mubr.f32.gmra.mxu0 %v6572
  %v7198 = vpop.f32.mrf.mxu0
  %v7199 = vadd.f32 0.0, %v7198
  %v7200 = vpop.f32.mrf.mxu0
  %v7201 = vadd.f32 0.0, %v7200
  %7202 = vmatprep.mubr.f32.mxu0 0.0
  %7203 = vmatmul.mubr.f32.gmra.mxu0 %v6575
  %v7204 = vpop.f32.mrf.mxu0
  %v7205 = vadd.f32 0.0, %v7204
  %v7206 = vpop.f32.mrf.mxu0
  %v7207 = vadd.f32 0.0, %v7206
  %7208 = vmatprep.mubr.f32.mxu0 0.0
  %7209 = vmatmul.mubr.f32.gmra.mxu0 %v6578
  %v7210 = vpop.f32.mrf.mxu0
  %v7211 = vadd.f32 0.0, %v7210
  %v7212 = vpop.f32.mrf.mxu0
  %v7213 = vadd.f32 0.0, %v7212
  %7214 = vmatprep.mubr.f32.mxu0 0.0
  %7215 = vmatmul.mubr.f32.gmra.mxu0 %v6581
  %v7216 = vpop.f32.mrf.mxu0
  %v7217 = vadd.f32 0.0, %v7216
  %v7218 = vpop.f32.mrf.mxu0
  %v7219 = vadd.f32 0.0, %v7218
  %7220 = vmatprep.mubr.f32.mxu0 0.0
  %7221 = vmatmul.mubr.f32.gmra.mxu0 %v6584
  %v7222 = vpop.f32.mrf.mxu0
  %v7223 = vadd.f32 0.0, %v7222
  %v7224 = vpop.f32.mrf.mxu0
  %v7225 = vadd.f32 0.0, %v7224
  %7226 = vmatprep.mubr.f32.mxu0 0.0
  %7227 = vmatmul.mubr.f32.gmra.mxu0 %v6587
  %v7228 = vpop.f32.mrf.mxu0
  %v7229 = vadd.f32 0.0, %v7228
  %v7230 = vpop.f32.mrf.mxu0
  %v7231 = vadd.f32 0.0, %v7230
  %7232 = vdwg.mxu0
  %v7233 = vmul.f32 %v5964, %v6656
  %v7234 = vmul.f32 %v5966, %v6658
  %v7235 = vmul.f32 %v6125, %v6817
  %v7236 = vmul.f32 %v6127, %v6819
  %v7237 = vmul.f32 %v6286, %v6978
  %v7238 = vmul.f32 %v6288, %v6980
  %v7239 = vmul.f32 %v6447, %v7139
  %v7240 = vmul.f32 %v6449, %v7141
  %v7241 = vmul.f32 %v5970, %v6662
  %v7242 = vmul.f32 %v5972, %v6664
  %v7243 = vmul.f32 %v6131, %v6823
  %v7244 = vmul.f32 %v6133, %v6825
  %v7245 = vmul.f32 %v6292, %v6984
  %v7246 = vmul.f32 %v6294, %v6986
  %v7247 = vmul.f32 %v6453, %v7145
  %v7248 = vmul.f32 %v6455, %v7147
  %v7249 = vmul.f32 %v5976, %v6668
  %v7250 = vmul.f32 %v5978, %v6670
  %v7251 = vmul.f32 %v6137, %v6829
  %v7252 = vmul.f32 %v6139, %v6831
  %v7253 = vmul.f32 %v6298, %v6990
  %v7254 = vmul.f32 %v6300, %v6992
  %v7255 = vmul.f32 %v6459, %v7151
  %v7256 = vmul.f32 %v6461, %v7153
  %v7257 = vmul.f32 %v5982, %v6674
  %v7258 = vmul.f32 %v5984, %v6676
  %v7259 = vmul.f32 %v6143, %v6835
  %v7260 = vmul.f32 %v6145, %v6837
  %v7261 = vmul.f32 %v6304, %v6996
  %v7262 = vmul.f32 %v6306, %v6998
  %v7263 = vmul.f32 %v6465, %v7157
  %v7264 = vmul.f32 %v6467, %v7159
  %v7265 = vmul.f32 %v5988, %v6680
  %v7266 = vmul.f32 %v5990, %v6682
  %v7267 = vmul.f32 %v6149, %v6841
  %v7268 = vmul.f32 %v6151, %v6843
  %v7269 = vmul.f32 %v6310, %v7002
  %v7270 = vmul.f32 %v6312, %v7004
  %v7271 = vmul.f32 %v6471, %v7163
  %v7272 = vmul.f32 %v6473, %v7165
  %v7273 = vmul.f32 %v5994, %v6686
  %v7274 = vmul.f32 %v5996, %v6688
  %v7275 = vmul.f32 %v6155, %v6847
  %v7276 = vmul.f32 %v6157, %v6849
  %v7277 = vmul.f32 %v6316, %v7008
  %v7278 = vmul.f32 %v6318, %v7010
  %v7279 = vmul.f32 %v6477, %v7169
  %v7280 = vmul.f32 %v6479, %v7171
  %v7281 = vmul.f32 %v6000, %v6692
  %v7282 = vmul.f32 %v6002, %v6694
  %v7283 = vmul.f32 %v6161, %v6853
  %v7284 = vmul.f32 %v6163, %v6855
  %v7285 = vmul.f32 %v6322, %v7014
  %v7286 = vmul.f32 %v6324, %v7016
  %v7287 = vmul.f32 %v6483, %v7175
  %v7288 = vmul.f32 %v6485, %v7177
  %v7289 = vmul.f32 %v6006, %v6698
  %v7290 = vmul.f32 %v6008, %v6700
  %v7291 = vmul.f32 %v6167, %v6859
  %v7292 = vmul.f32 %v6169, %v6861
  %v7293 = vmul.f32 %v6328, %v7020
  %v7294 = vmul.f32 %v6330, %v7022
  %v7295 = vmul.f32 %v6489, %v7181
  %v7296 = vmul.f32 %v6491, %v7183
  %v7297 = vmul.f32 %v6012, %v6704
  %v7298 = vmul.f32 %v6014, %v6706
  %v7299 = vmul.f32 %v6173, %v6865
  %v7300 = vmul.f32 %v6175, %v6867
  %v7301 = vmul.f32 %v6334, %v7026
  %v7302 = vmul.f32 %v6336, %v7028
  %v7303 = vmul.f32 %v6495, %v7187
  %v7304 = vmul.f32 %v6497, %v7189
  %v7305 = vmul.f32 %v6018, %v6710
  %v7306 = vmul.f32 %v6020, %v6712
  %v7307 = vmul.f32 %v6179, %v6871
  %v7308 = vmul.f32 %v6181, %v6873
  %v7309 = vmul.f32 %v6340, %v7032
  %v7310 = vmul.f32 %v6342, %v7034
  %v7311 = vmul.f32 %v6501, %v7193
  %v7312 = vmul.f32 %v6503, %v7195
  %v7313 = vmul.f32 %v6024, %v6716
  %v7314 = vmul.f32 %v6026, %v6718
  %v7315 = vmul.f32 %v6185, %v6877
  %v7316 = vmul.f32 %v6187, %v6879
  %v7317 = vmul.f32 %v6346, %v7038
  %v7318 = vmul.f32 %v6348, %v7040
  %v7319 = vmul.f32 %v6507, %v7199
  %v7320 = vmul.f32 %v6509, %v7201
  %v7321 = vmul.f32 %v6030, %v6722
  %v7322 = vmul.f32 %v6032, %v6724
  %v7323 = vmul.f32 %v6191, %v6883
  %v7324 = vmul.f32 %v6193, %v6885
  %v7325 = vmul.f32 %v6352, %v7044
  %v7326 = vmul.f32 %v6354, %v7046
  %v7327 = vmul.f32 %v6513, %v7205
  %v7328 = vmul.f32 %v6515, %v7207
  %v7329 = vmul.f32 %v6036, %v6728
  %v7330 = vmul.f32 %v6038, %v6730
  %v7331 = vmul.f32 %v6197, %v6889
  %v7332 = vmul.f32 %v6199, %v6891
  %v7333 = vmul.f32 %v6358, %v7050
  %v7334 = vmul.f32 %v6360, %v7052
  %v7335 = vmul.f32 %v6519, %v7211
  %v7336 = vmul.f32 %v6521, %v7213
  %v7337 = vmul.f32 %v6042, %v6734
  %v7338 = vmul.f32 %v6044, %v6736
  %v7339 = vmul.f32 %v6203, %v6895
  %v7340 = vmul.f32 %v6205, %v6897
  %v7341 = vmul.f32 %v6364, %v7056
  %v7342 = vmul.f32 %v6366, %v7058
  %v7343 = vmul.f32 %v6525, %v7217
  %v7344 = vmul.f32 %v6527, %v7219
  %v7345 = vmul.f32 %v6048, %v6740
  %v7346 = vmul.f32 %v6050, %v6742
  %v7347 = vmul.f32 %v6209, %v6901
  %v7348 = vmul.f32 %v6211, %v6903
  %v7349 = vmul.f32 %v6370, %v7062
  %v7350 = vmul.f32 %v6372, %v7064
  %v7351 = vmul.f32 %v6531, %v7223
  %v7352 = vmul.f32 %v6533, %v7225
  %v7353 = vmul.f32 %v6054, %v6746
  %v7354 = vmul.f32 %v6056, %v6748
  %v7355 = vmul.f32 %v6215, %v6907
  %v7356 = vmul.f32 %v6217, %v6909
  %v7357 = vmul.f32 %v6376, %v7068
  %v7358 = vmul.f32 %v6378, %v7070
  %v7359 = vmul.f32 %v6537, %v7229
  %v7360 = vmul.f32 %v6539, %v7231
  %v7361 = vld [vmem:[%s8] sm:$0xff]
  %v7362 = vld [vmem:[%s8 + $0x8] sm:$0xff]
  %v7363 = vld [vmem:[%s8 + $0x10] sm:$0xff]
  %v7364 = vld [vmem:[%s8 + $0x18] sm:$0xff]
  %v7365 = vld [vmem:[%s8 + $0x20] sm:$0xff]
  %v7366 = vld [vmem:[%s8 + $0x28] sm:$0xff]
  %v7367 = vld [vmem:[%s8 + $0x30] sm:$0xff]
  %v7368 = vld [vmem:[%s8 + $0x38] sm:$0xff]
  %v7369 = vld [vmem:[%s8 + $0x40] sm:$0xff]
  %v7370 = vld [vmem:[%s8 + $0x48] sm:$0xff]
  %v7371 = vld [vmem:[%s8 + $0x50] sm:$0xff]
  %v7372 = vld [vmem:[%s8 + $0x58] sm:$0xff]
  %v7373 = vld [vmem:[%s8 + $0x60] sm:$0xff]
  %v7374 = vld [vmem:[%s8 + $0x68] sm:$0xff]
  %v7375 = vld [vmem:[%s8 + $0x70] sm:$0xff]
  %v7376 = vld [vmem:[%s8 + $0x78] sm:$0xff]
  %v7377 = vld [vmem:[%s8 + $0x80] sm:$0xff]
  %v7378 = vld [vmem:[%s8 + $0x88] sm:$0xff]
  %v7379 = vld [vmem:[%s8 + $0x90] sm:$0xff]
  %v7380 = vld [vmem:[%s8 + $0x98] sm:$0xff]
  %v7381 = vld [vmem:[%s8 + $0xa0] sm:$0xff]
  %v7382 = vld [vmem:[%s8 + $0xa8] sm:$0xff]
  %v7383 = vld [vmem:[%s8 + $0xb0] sm:$0xff]
  %v7384 = vld [vmem:[%s8 + $0xb8] sm:$0xff]
  %v7385 = vld [vmem:[%s8 + $0xc0] sm:$0xff]
  %v7386 = vld [vmem:[%s8 + $0xc8] sm:$0xff]
  %v7387 = vld [vmem:[%s8 + $0xd0] sm:$0xff]
  %v7388 = vld [vmem:[%s8 + $0xd8] sm:$0xff]
  %v7389 = vld [vmem:[%s8 + $0xe0] sm:$0xff]
  %v7390 = vld [vmem:[%s8 + $0xe8] sm:$0xff]
  %v7391 = vld [vmem:[%s8 + $0xf0] sm:$0xff]
  %v7392 = vld [vmem:[%s8 + $0xf8] sm:$0xff]
  %v7393 = vld [vmem:[%s8 + $0x100] sm:$0xff]
  %v7394 = vld [vmem:[%s8 + $0x108] sm:$0xff]
  %v7395 = vld [vmem:[%s8 + $0x110] sm:$0xff]
  %v7396 = vld [vmem:[%s8 + $0x118] sm:$0xff]
  %v7397 = vld [vmem:[%s8 + $0x120] sm:$0xff]
  %v7398 = vld [vmem:[%s8 + $0x128] sm:$0xff]
  %v7399 = vld [vmem:[%s8 + $0x130] sm:$0xff]
  %v7400 = vld [vmem:[%s8 + $0x138] sm:$0xff]
  %v7401 = vld [vmem:[%s8 + $0x140] sm:$0xff]
  %v7402 = vld [vmem:[%s8 + $0x148] sm:$0xff]
  %v7403 = vld [vmem:[%s8 + $0x150] sm:$0xff]
  %v7404 = vld [vmem:[%s8 + $0x158] sm:$0xff]
  %v7405 = vld [vmem:[%s8 + $0x160] sm:$0xff]
  %v7406 = vld [vmem:[%s8 + $0x168] sm:$0xff]
  %v7407 = vld [vmem:[%s8 + $0x170] sm:$0xff]
  %v7408 = vld [vmem:[%s8 + $0x178] sm:$0xff]
  %v7409 = vld [vmem:[%s8 + $0x180] sm:$0xff]
  %v7410 = vld [vmem:[%s8 + $0x188] sm:$0xff]
  %v7411 = vld [vmem:[%s8 + $0x190] sm:$0xff]
  %v7412 = vld [vmem:[%s8 + $0x198] sm:$0xff]
  %v7413 = vld [vmem:[%s8 + $0x1a0] sm:$0xff]
  %v7414 = vld [vmem:[%s8 + $0x1a8] sm:$0xff]
  %v7415 = vld [vmem:[%s8 + $0x1b0] sm:$0xff]
  %v7416 = vld [vmem:[%s8 + $0x1b8] sm:$0xff]
  %v7417 = vld [vmem:[%s8 + $0x1c0] sm:$0xff]
  %v7418 = vld [vmem:[%s8 + $0x1c8] sm:$0xff]
  %v7419 = vld [vmem:[%s8 + $0x1d0] sm:$0xff]
  %v7420 = vld [vmem:[%s8 + $0x1d8] sm:$0xff]
  %v7421 = vld [vmem:[%s8 + $0x1e0] sm:$0xff]
  %v7422 = vld [vmem:[%s8 + $0x1e8] sm:$0xff]
  %v7423 = vld [vmem:[%s8 + $0x1f0] sm:$0xff]
  %v7424 = vld [vmem:[%s8 + $0x1f8] sm:$0xff]
  %v7425 = vld [vmem:[%s8 + $0x200] sm:$0xff]
  %v7426 = vld [vmem:[%s8 + $0x208] sm:$0xff]
  %v7427 = vld [vmem:[%s8 + $0x210] sm:$0xff]
  %v7428 = vld [vmem:[%s8 + $0x218] sm:$0xff]
  %v7429 = vld [vmem:[%s8 + $0x220] sm:$0xff]
  %v7430 = vld [vmem:[%s8 + $0x228] sm:$0xff]
  %v7431 = vld [vmem:[%s8 + $0x230] sm:$0xff]
  %v7432 = vld [vmem:[%s8 + $0x238] sm:$0xff]
  %v7433 = vld [vmem:[%s8 + $0x240] sm:$0xff]
  %v7434 = vld [vmem:[%s8 + $0x248] sm:$0xff]
  %v7435 = vld [vmem:[%s8 + $0x250] sm:$0xff]
  %v7436 = vld [vmem:[%s8 + $0x258] sm:$0xff]
  %v7437 = vld [vmem:[%s8 + $0x260] sm:$0xff]
  %v7438 = vld [vmem:[%s8 + $0x268] sm:$0xff]
  %v7439 = vld [vmem:[%s8 + $0x270] sm:$0xff]
  %v7440 = vld [vmem:[%s8 + $0x278] sm:$0xff]
  %v7441 = vld [vmem:[%s8 + $0x280] sm:$0xff]
  %v7442 = vld [vmem:[%s8 + $0x288] sm:$0xff]
  %v7443 = vld [vmem:[%s8 + $0x290] sm:$0xff]
  %v7444 = vld [vmem:[%s8 + $0x298] sm:$0xff]
  %v7445 = vld [vmem:[%s8 + $0x2a0] sm:$0xff]
  %v7446 = vld [vmem:[%s8 + $0x2a8] sm:$0xff]
  %v7447 = vld [vmem:[%s8 + $0x2b0] sm:$0xff]
  %v7448 = vld [vmem:[%s8 + $0x2b8] sm:$0xff]
  %v7449 = vld [vmem:[%s8 + $0x2c0] sm:$0xff]
  %v7450 = vld [vmem:[%s8 + $0x2c8] sm:$0xff]
  %v7451 = vld [vmem:[%s8 + $0x2d0] sm:$0xff]
  %v7452 = vld [vmem:[%s8 + $0x2d8] sm:$0xff]
  %v7453 = vld [vmem:[%s8 + $0x2e0] sm:$0xff]
  %v7454 = vld [vmem:[%s8 + $0x2e8] sm:$0xff]
  %v7455 = vld [vmem:[%s8 + $0x2f0] sm:$0xff]
  %v7456 = vld [vmem:[%s8 + $0x2f8] sm:$0xff]
  %v7457 = vld [vmem:[%s8 + $0x300] sm:$0xff]
  %v7458 = vld [vmem:[%s8 + $0x308] sm:$0xff]
  %v7459 = vld [vmem:[%s8 + $0x310] sm:$0xff]
  %v7460 = vld [vmem:[%s8 + $0x318] sm:$0xff]
  %v7461 = vld [vmem:[%s8 + $0x320] sm:$0xff]
  %v7462 = vld [vmem:[%s8 + $0x328] sm:$0xff]
  %v7463 = vld [vmem:[%s8 + $0x330] sm:$0xff]
  %v7464 = vld [vmem:[%s8 + $0x338] sm:$0xff]
  %v7465 = vld [vmem:[%s8 + $0x340] sm:$0xff]
  %v7466 = vld [vmem:[%s8 + $0x348] sm:$0xff]
  %v7467 = vld [vmem:[%s8 + $0x350] sm:$0xff]
  %v7468 = vld [vmem:[%s8 + $0x358] sm:$0xff]
  %v7469 = vld [vmem:[%s8 + $0x360] sm:$0xff]
  %v7470 = vld [vmem:[%s8 + $0x368] sm:$0xff]
  %v7471 = vld [vmem:[%s8 + $0x370] sm:$0xff]
  %v7472 = vld [vmem:[%s8 + $0x378] sm:$0xff]
  %v7473 = vld [vmem:[%s8 + $0x380] sm:$0xff]
  %v7474 = vld [vmem:[%s8 + $0x388] sm:$0xff]
  %v7475 = vld [vmem:[%s8 + $0x390] sm:$0xff]
  %v7476 = vld [vmem:[%s8 + $0x398] sm:$0xff]
  %v7477 = vld [vmem:[%s8 + $0x3a0] sm:$0xff]
  %v7478 = vld [vmem:[%s8 + $0x3a8] sm:$0xff]
  %v7479 = vld [vmem:[%s8 + $0x3b0] sm:$0xff]
  %v7480 = vld [vmem:[%s8 + $0x3b8] sm:$0xff]
  %v7481 = vld [vmem:[%s8 + $0x3c0] sm:$0xff]
  %v7482 = vld [vmem:[%s8 + $0x3c8] sm:$0xff]
  %v7483 = vld [vmem:[%s8 + $0x3d0] sm:$0xff]
  %v7484 = vld [vmem:[%s8 + $0x3d8] sm:$0xff]
  %v7485 = vld [vmem:[%s8 + $0x3e0] sm:$0xff]
  %v7486 = vld [vmem:[%s8 + $0x3e8] sm:$0xff]
  %v7487 = vld [vmem:[%s8 + $0x3f0] sm:$0xff]
  %v7488 = vld [vmem:[%s8 + $0x3f8] sm:$0xff]
  %v7489 = vld [vmem:[%s8 + $0x400] sm:$0xff]
  %v7490 = vld [vmem:[%s8 + $0x408] sm:$0xff]
  %v7491 = vld [vmem:[%s8 + $0x410] sm:$0xff]
  %v7492 = vld [vmem:[%s8 + $0x418] sm:$0xff]
  %7509 = vrot.lane.b32.xlu0 %v183, 96
  %v7510 = vpop.permute.xlu0 %7509
  %7511 = vrot.lane.b32.xlu0 %v189, 96
  %v7512 = vpop.permute.xlu0 %7511
  %7513 = vrot.lane.b32.xlu0 %v195, 96
  %v7514 = vpop.permute.xlu0 %7513
  %7515 = vrot.lane.b32.xlu0 %v201, 96
  %v7516 = vpop.permute.xlu0 %7515
  %7517 = vrot.lane.b32.xlu0 %v207, 96
  %v7518 = vpop.permute.xlu0 %7517
  %7519 = vrot.lane.b32.xlu0 %v213, 96
  %v7520 = vpop.permute.xlu0 %7519
  %7521 = vrot.lane.b32.xlu0 %v219, 96
  %v7522 = vpop.permute.xlu0 %7521
  %7523 = vrot.lane.b32.xlu0 %v225, 96
  %v7524 = vpop.permute.xlu0 %7523
  %7525 = vrot.lane.b32.xlu0 %v231, 96
  %v7526 = vpop.permute.xlu0 %7525
  %7527 = vrot.lane.b32.xlu0 %v237, 96
  %v7528 = vpop.permute.xlu0 %7527
  %7529 = vrot.lane.b32.xlu0 %v243, 96
  %v7530 = vpop.permute.xlu0 %7529
  %7531 = vrot.lane.b32.xlu0 %v249, 96
  %v7532 = vpop.permute.xlu0 %7531
  %7533 = vrot.lane.b32.xlu0 %v255, 96
  %v7534 = vpop.permute.xlu0 %7533
  %7535 = vrot.lane.b32.xlu0 %v261, 96
  %v7536 = vpop.permute.xlu0 %7535
  %7537 = vrot.lane.b32.xlu0 %v267, 96
  %v7538 = vpop.permute.xlu0 %7537
  %7539 = vrot.lane.b32.xlu0 %v273, 96
  %v7540 = vpop.permute.xlu0 %7539
  %7557 = vmatprep.subr.mxu0 0.0
  %7558 = vmatpush1.msra.mxu0 %v7376
  %7559 = vmatprep.subr.mxu0 0.0
  %7560 = vmatpush1.msra.mxu0 %v7375
  %7561 = vmatprep.subr.mxu0 0.0
  %7562 = vmatpush1.msra.mxu0 %v7374
  %7563 = vmatprep.subr.mxu0 0.0
  %7564 = vmatpush1.msra.mxu0 %v7373
  %7565 = vmatprep.subr.mxu0 0.0
  %7566 = vmatpush1.msra.mxu0 %v7372
  %7567 = vmatprep.subr.mxu0 0.0
  %7568 = vmatpush1.msra.mxu0 %v7371
  %7569 = vmatprep.subr.mxu0 0.0
  %7570 = vmatpush1.msra.mxu0 %v7370
  %7571 = vmatprep.subr.mxu0 0.0
  %7572 = vmatpush1.msra.mxu0 %v7369
  %7573 = vmatprep.subr.mxu0 0.0
  %7574 = vmatpush1.msra.mxu0 %v7368
  %7575 = vmatprep.subr.mxu0 0.0
  %7576 = vmatpush1.msra.mxu0 %v7367
  %7577 = vmatprep.subr.mxu0 0.0
  %7578 = vmatpush1.msra.mxu0 %v7366
  %7579 = vmatprep.subr.mxu0 0.0
  %7580 = vmatpush1.msra.mxu0 %v7365
  %7581 = vmatprep.subr.mxu0 0.0
  %7582 = vmatpush1.msra.mxu0 %v7364
  %7583 = vmatprep.subr.mxu0 0.0
  %7584 = vmatpush1.msra.mxu0 %v7363
  %7585 = vmatprep.subr.mxu0 0.0
  %7586 = vmatpush1.msra.mxu0 %v7362
  %7587 = vmatprep.subr.mxu0 0.0
  %7588 = vmatpush1.msra.mxu0 %v7361
  %7589 = vmatprep.subr.mxu0 0.0
  %7590 = vmatpush2.msra.mxu0 %v7392
  %7591 = vmatprep.subr.mxu0 0.0
  %7592 = vmatpush2.msra.mxu0 %v7391
  %7593 = vmatprep.subr.mxu0 0.0
  %7594 = vmatpush2.msra.mxu0 %v7390
  %7595 = vmatprep.subr.mxu0 0.0
  %7596 = vmatpush2.msra.mxu0 %v7389
  %7597 = vmatprep.subr.mxu0 0.0
  %7598 = vmatpush2.msra.mxu0 %v7388
  %7599 = vmatprep.subr.mxu0 0.0
  %7600 = vmatpush2.msra.mxu0 %v7387
  %7601 = vmatprep.subr.mxu0 0.0
  %7602 = vmatpush2.msra.mxu0 %v7386
  %7603 = vmatprep.subr.mxu0 0.0
  %7604 = vmatpush2.msra.mxu0 %v7385
  %7605 = vmatprep.subr.mxu0 0.0
  %7606 = vmatpush2.msra.mxu0 %v7384
  %7607 = vmatprep.subr.mxu0 0.0
  %7608 = vmatpush2.msra.mxu0 %v7383
  %7609 = vmatprep.subr.mxu0 0.0
  %7610 = vmatpush2.msra.mxu0 %v7382
  %7611 = vmatprep.subr.mxu0 0.0
  %7612 = vmatpush2.msra.mxu0 %v7381
  %7613 = vmatprep.subr.mxu0 0.0
  %7614 = vmatpush2.msra.mxu0 %v7380
  %7615 = vmatprep.subr.mxu0 0.0
  %7616 = vmatpush2.msra.mxu0 %v7379
  %7617 = vmatprep.subr.mxu0 0.0
  %7618 = vmatpush2.msra.mxu0 %v7378
  %7619 = vmatprep.subr.mxu0 0.0
  %7620 = vmatpush2.msra.mxu0 %v7377
  %7621 = vmatprep.mubr.f32.mxu0 %v7234
  %7622 = vmatmul.mubr.f32.gmra.mxu0 %v7233
  %v7623 = vpop.f32.mrf.mxu0
  %v7624 = vadd.f32 %v7510, %v7623
  %v7625 = vpop.f32.mrf.mxu0
  %7626 = vmatprep.mubr.f32.mxu0 %v7242
  %7627 = vmatmul.mubr.f32.gmra.mxu0 %v7241
  %v7628 = vpop.f32.mrf.mxu0
  %v7629 = vadd.f32 %v7512, %v7628
  %v7630 = vpop.f32.mrf.mxu0
  %7631 = vmatprep.mubr.f32.mxu0 %v7250
  %7632 = vmatmul.mubr.f32.gmra.mxu0 %v7249
  %v7633 = vpop.f32.mrf.mxu0
  %v7634 = vadd.f32 %v7514, %v7633
  %v7635 = vpop.f32.mrf.mxu0
  %7636 = vmatprep.mubr.f32.mxu0 %v7258
  %7637 = vmatmul.mubr.f32.gmra.mxu0 %v7257
  %v7638 = vpop.f32.mrf.mxu0
  %v7639 = vadd.f32 %v7516, %v7638
  %v7640 = vpop.f32.mrf.mxu0
  %7641 = vmatprep.mubr.f32.mxu0 %v7266
  %7642 = vmatmul.mubr.f32.gmra.mxu0 %v7265
  %v7643 = vpop.f32.mrf.mxu0
  %v7644 = vadd.f32 %v7518, %v7643
  %v7645 = vpop.f32.mrf.mxu0
  %7646 = vmatprep.mubr.f32.mxu0 %v7274
  %7647 = vmatmul.mubr.f32.gmra.mxu0 %v7273
  %v7648 = vpop.f32.mrf.mxu0
  %v7649 = vadd.f32 %v7520, %v7648
  %v7650 = vpop.f32.mrf.mxu0
  %7651 = vmatprep.mubr.f32.mxu0 %v7282
  %7652 = vmatmul.mubr.f32.gmra.mxu0 %v7281
  %v7653 = vpop.f32.mrf.mxu0
  %v7654 = vadd.f32 %v7522, %v7653
  %v7655 = vpop.f32.mrf.mxu0
  %7656 = vmatprep.mubr.f32.mxu0 %v7290
  %7657 = vmatmul.mubr.f32.gmra.mxu0 %v7289
  %v7658 = vpop.f32.mrf.mxu0
  %v7659 = vadd.f32 %v7524, %v7658
  %v7660 = vpop.f32.mrf.mxu0
  %7661 = vmatprep.mubr.f32.mxu0 %v7298
  %7662 = vmatmul.mubr.f32.gmra.mxu0 %v7297
  %v7663 = vpop.f32.mrf.mxu0
  %v7664 = vadd.f32 %v7526, %v7663
  %v7665 = vpop.f32.mrf.mxu0
  %7666 = vmatprep.mubr.f32.mxu0 %v7306
  %7667 = vmatmul.mubr.f32.gmra.mxu0 %v7305
  %v7668 = vpop.f32.mrf.mxu0
  %v7669 = vadd.f32 %v7528, %v7668
  %v7670 = vpop.f32.mrf.mxu0
  %7671 = vmatprep.mubr.f32.mxu0 %v7314
  %7672 = vmatmul.mubr.f32.gmra.mxu0 %v7313
  %v7673 = vpop.f32.mrf.mxu0
  %v7674 = vadd.f32 %v7530, %v7673
  %v7675 = vpop.f32.mrf.mxu0
  %7676 = vmatprep.mubr.f32.mxu0 %v7322
  %7677 = vmatmul.mubr.f32.gmra.mxu0 %v7321
  %v7678 = vpop.f32.mrf.mxu0
  %v7679 = vadd.f32 %v7532, %v7678
  %v7680 = vpop.f32.mrf.mxu0
  %7681 = vmatprep.mubr.f32.mxu0 %v7330
  %7682 = vmatmul.mubr.f32.gmra.mxu0 %v7329
  %v7683 = vpop.f32.mrf.mxu0
  %v7684 = vadd.f32 %v7534, %v7683
  %v7685 = vpop.f32.mrf.mxu0
  %7686 = vmatprep.mubr.f32.mxu0 %v7338
  %7687 = vmatmul.mubr.f32.gmra.mxu0 %v7337
  %v7688 = vpop.f32.mrf.mxu0
  %v7689 = vadd.f32 %v7536, %v7688
  %v7690 = vpop.f32.mrf.mxu0
  %7691 = vmatprep.mubr.f32.mxu0 %v7346
  %7692 = vmatmul.mubr.f32.gmra.mxu0 %v7345
  %v7693 = vpop.f32.mrf.mxu0
  %v7694 = vadd.f32 %v7538, %v7693
  %v7695 = vpop.f32.mrf.mxu0
  %7696 = vmatprep.mubr.f32.mxu0 %v7354
  %7697 = vmatmul.mubr.f32.gmra.mxu0 %v7353
  %v7698 = vpop.f32.mrf.mxu0
  %v7699 = vadd.f32 %v7540, %v7698
  %v7700 = vpop.f32.mrf.mxu0
  %7701 = vdwg.mxu0
  %7702 = vmatprep.subr.mxu0 0.0
  %7703 = vmatpush1.msra.mxu0 %v7408
  %7704 = vmatprep.subr.mxu0 0.0
  %7705 = vmatpush1.msra.mxu0 %v7407
  %7706 = vmatprep.subr.mxu0 0.0
  %7707 = vmatpush1.msra.mxu0 %v7406
  %7708 = vmatprep.subr.mxu0 0.0
  %7709 = vmatpush1.msra.mxu0 %v7405
  %7710 = vmatprep.subr.mxu0 0.0
  %7711 = vmatpush1.msra.mxu0 %v7404
  %7712 = vmatprep.subr.mxu0 0.0
  %7713 = vmatpush1.msra.mxu0 %v7403
  %7714 = vmatprep.subr.mxu0 0.0
  %7715 = vmatpush1.msra.mxu0 %v7402
  %7716 = vmatprep.subr.mxu0 0.0
  %7717 = vmatpush1.msra.mxu0 %v7401
  %7718 = vmatprep.subr.mxu0 0.0
  %7719 = vmatpush1.msra.mxu0 %v7400
  %7720 = vmatprep.subr.mxu0 0.0
  %7721 = vmatpush1.msra.mxu0 %v7399
  %7722 = vmatprep.subr.mxu0 0.0
  %7723 = vmatpush1.msra.mxu0 %v7398
  %7724 = vmatprep.subr.mxu0 0.0
  %7725 = vmatpush1.msra.mxu0 %v7397
  %7726 = vmatprep.subr.mxu0 0.0
  %7727 = vmatpush1.msra.mxu0 %v7396
  %7728 = vmatprep.subr.mxu0 0.0
  %7729 = vmatpush1.msra.mxu0 %v7395
  %7730 = vmatprep.subr.mxu0 0.0
  %7731 = vmatpush1.msra.mxu0 %v7394
  %7732 = vmatprep.subr.mxu0 0.0
  %7733 = vmatpush1.msra.mxu0 %v7393
  %7734 = vmatprep.subr.mxu0 0.0
  %7735 = vmatpush2.msra.mxu0 %v7424
  %7736 = vmatprep.subr.mxu0 0.0
  %7737 = vmatpush2.msra.mxu0 %v7423
  %7738 = vmatprep.subr.mxu0 0.0
  %7739 = vmatpush2.msra.mxu0 %v7422
  %7740 = vmatprep.subr.mxu0 0.0
  %7741 = vmatpush2.msra.mxu0 %v7421
  %7742 = vmatprep.subr.mxu0 0.0
  %7743 = vmatpush2.msra.mxu0 %v7420
  %7744 = vmatprep.subr.mxu0 0.0
  %7745 = vmatpush2.msra.mxu0 %v7419
  %7746 = vmatprep.subr.mxu0 0.0
  %7747 = vmatpush2.msra.mxu0 %v7418
  %7748 = vmatprep.subr.mxu0 0.0
  %7749 = vmatpush2.msra.mxu0 %v7417
  %7750 = vmatprep.subr.mxu0 0.0
  %7751 = vmatpush2.msra.mxu0 %v7416
  %7752 = vmatprep.subr.mxu0 0.0
  %7753 = vmatpush2.msra.mxu0 %v7415
  %7754 = vmatprep.subr.mxu0 0.0
  %7755 = vmatpush2.msra.mxu0 %v7414
  %7756 = vmatprep.subr.mxu0 0.0
  %7757 = vmatpush2.msra.mxu0 %v7413
  %7758 = vmatprep.subr.mxu0 0.0
  %7759 = vmatpush2.msra.mxu0 %v7412
  %7760 = vmatprep.subr.mxu0 0.0
  %7761 = vmatpush2.msra.mxu0 %v7411
  %7762 = vmatprep.subr.mxu0 0.0
  %7763 = vmatpush2.msra.mxu0 %v7410
  %7764 = vmatprep.subr.mxu0 0.0
  %7765 = vmatpush2.msra.mxu0 %v7409
  %7766 = vmatprep.mubr.f32.mxu0 %v7236
  %7767 = vmatmul.mubr.f32.gmra.mxu0 %v7235
  %v7768 = vpop.f32.mrf.mxu0
  %v7769 = vadd.f32 %v7624, %v7768
  %v7770 = vpop.f32.mrf.mxu0
  %7771 = vmatprep.mubr.f32.mxu0 %v7244
  %7772 = vmatmul.mubr.f32.gmra.mxu0 %v7243
  %v7773 = vpop.f32.mrf.mxu0
  %v7774 = vadd.f32 %v7629, %v7773
  %v7775 = vpop.f32.mrf.mxu0
  %7776 = vmatprep.mubr.f32.mxu0 %v7252
  %7777 = vmatmul.mubr.f32.gmra.mxu0 %v7251
  %v7778 = vpop.f32.mrf.mxu0
  %v7779 = vadd.f32 %v7634, %v7778
  %v7780 = vpop.f32.mrf.mxu0
  %7781 = vmatprep.mubr.f32.mxu0 %v7260
  %7782 = vmatmul.mubr.f32.gmra.mxu0 %v7259
  %v7783 = vpop.f32.mrf.mxu0
  %v7784 = vadd.f32 %v7639, %v7783
  %v7785 = vpop.f32.mrf.mxu0
  %7786 = vmatprep.mubr.f32.mxu0 %v7268
  %7787 = vmatmul.mubr.f32.gmra.mxu0 %v7267
  %v7788 = vpop.f32.mrf.mxu0
  %v7789 = vadd.f32 %v7644, %v7788
  %v7790 = vpop.f32.mrf.mxu0
  %7791 = vmatprep.mubr.f32.mxu0 %v7276
  %7792 = vmatmul.mubr.f32.gmra.mxu0 %v7275
  %v7793 = vpop.f32.mrf.mxu0
  %v7794 = vadd.f32 %v7649, %v7793
  %v7795 = vpop.f32.mrf.mxu0
  %7796 = vmatprep.mubr.f32.mxu0 %v7284
  %7797 = vmatmul.mubr.f32.gmra.mxu0 %v7283
  %v7798 = vpop.f32.mrf.mxu0
  %v7799 = vadd.f32 %v7654, %v7798
  %v7800 = vpop.f32.mrf.mxu0
  %7801 = vmatprep.mubr.f32.mxu0 %v7292
  %7802 = vmatmul.mubr.f32.gmra.mxu0 %v7291
  %v7803 = vpop.f32.mrf.mxu0
  %v7804 = vadd.f32 %v7659, %v7803
  %v7805 = vpop.f32.mrf.mxu0
  %7806 = vmatprep.mubr.f32.mxu0 %v7300
  %7807 = vmatmul.mubr.f32.gmra.mxu0 %v7299
  %v7808 = vpop.f32.mrf.mxu0
  %v7809 = vadd.f32 %v7664, %v7808
  %v7810 = vpop.f32.mrf.mxu0
  %7811 = vmatprep.mubr.f32.mxu0 %v7308
  %7812 = vmatmul.mubr.f32.gmra.mxu0 %v7307
  %v7813 = vpop.f32.mrf.mxu0
  %v7814 = vadd.f32 %v7669, %v7813
  %v7815 = vpop.f32.mrf.mxu0
  %7816 = vmatprep.mubr.f32.mxu0 %v7316
  %7817 = vmatmul.mubr.f32.gmra.mxu0 %v7315
  %v7818 = vpop.f32.mrf.mxu0
  %v7819 = vadd.f32 %v7674, %v7818
  %v7820 = vpop.f32.mrf.mxu0
  %7821 = vmatprep.mubr.f32.mxu0 %v7324
  %7822 = vmatmul.mubr.f32.gmra.mxu0 %v7323
  %v7823 = vpop.f32.mrf.mxu0
  %v7824 = vadd.f32 %v7679, %v7823
  %v7825 = vpop.f32.mrf.mxu0
  %7826 = vmatprep.mubr.f32.mxu0 %v7332
  %7827 = vmatmul.mubr.f32.gmra.mxu0 %v7331
  %v7828 = vpop.f32.mrf.mxu0
  %v7829 = vadd.f32 %v7684, %v7828
  %v7830 = vpop.f32.mrf.mxu0
  %7831 = vmatprep.mubr.f32.mxu0 %v7340
  %7832 = vmatmul.mubr.f32.gmra.mxu0 %v7339
  %v7833 = vpop.f32.mrf.mxu0
  %v7834 = vadd.f32 %v7689, %v7833
  %v7835 = vpop.f32.mrf.mxu0
  %7836 = vmatprep.mubr.f32.mxu0 %v7348
  %7837 = vmatmul.mubr.f32.gmra.mxu0 %v7347
  %v7838 = vpop.f32.mrf.mxu0
  %v7839 = vadd.f32 %v7694, %v7838
  %v7840 = vpop.f32.mrf.mxu0
  %7841 = vmatprep.mubr.f32.mxu0 %v7356
  %7842 = vmatmul.mubr.f32.gmra.mxu0 %v7355
  %v7843 = vpop.f32.mrf.mxu0
  %v7844 = vadd.f32 %v7699, %v7843
  %v7845 = vpop.f32.mrf.mxu0
  %7846 = vdwg.mxu0
  %7847 = vmatprep.subr.mxu0 0.0
  %7848 = vmatpush1.msra.mxu0 %v7440
  %7849 = vmatprep.subr.mxu0 0.0
  %7850 = vmatpush1.msra.mxu0 %v7439
  %7851 = vmatprep.subr.mxu0 0.0
  %7852 = vmatpush1.msra.mxu0 %v7438
  %7853 = vmatprep.subr.mxu0 0.0
  %7854 = vmatpush1.msra.mxu0 %v7437
  %7855 = vmatprep.subr.mxu0 0.0
  %7856 = vmatpush1.msra.mxu0 %v7436
  %7857 = vmatprep.subr.mxu0 0.0
  %7858 = vmatpush1.msra.mxu0 %v7435
  %7859 = vmatprep.subr.mxu0 0.0
  %7860 = vmatpush1.msra.mxu0 %v7434
  %7861 = vmatprep.subr.mxu0 0.0
  %7862 = vmatpush1.msra.mxu0 %v7433
  %7863 = vmatprep.subr.mxu0 0.0
  %7864 = vmatpush1.msra.mxu0 %v7432
  %7865 = vmatprep.subr.mxu0 0.0
  %7866 = vmatpush1.msra.mxu0 %v7431
  %7867 = vmatprep.subr.mxu0 0.0
  %7868 = vmatpush1.msra.mxu0 %v7430
  %7869 = vmatprep.subr.mxu0 0.0
  %7870 = vmatpush1.msra.mxu0 %v7429
  %7871 = vmatprep.subr.mxu0 0.0
  %7872 = vmatpush1.msra.mxu0 %v7428
  %7873 = vmatprep.subr.mxu0 0.0
  %7874 = vmatpush1.msra.mxu0 %v7427
  %7875 = vmatprep.subr.mxu0 0.0
  %7876 = vmatpush1.msra.mxu0 %v7426
  %7877 = vmatprep.subr.mxu0 0.0
  %7878 = vmatpush1.msra.mxu0 %v7425
  %7879 = vmatprep.subr.mxu0 0.0
  %7880 = vmatpush2.msra.mxu0 %v7456
  %7881 = vmatprep.subr.mxu0 0.0
  %7882 = vmatpush2.msra.mxu0 %v7455
  %7883 = vmatprep.subr.mxu0 0.0
  %7884 = vmatpush2.msra.mxu0 %v7454
  %7885 = vmatprep.subr.mxu0 0.0
  %7886 = vmatpush2.msra.mxu0 %v7453
  %7887 = vmatprep.subr.mxu0 0.0
  %7888 = vmatpush2.msra.mxu0 %v7452
  %7889 = vmatprep.subr.mxu0 0.0
  %7890 = vmatpush2.msra.mxu0 %v7451
  %7891 = vmatprep.subr.mxu0 0.0
  %7892 = vmatpush2.msra.mxu0 %v7450
  %7893 = vmatprep.subr.mxu0 0.0
  %7894 = vmatpush2.msra.mxu0 %v7449
  %7895 = vmatprep.subr.mxu0 0.0
  %7896 = vmatpush2.msra.mxu0 %v7448
  %7897 = vmatprep.subr.mxu0 0.0
  %7898 = vmatpush2.msra.mxu0 %v7447
  %7899 = vmatprep.subr.mxu0 0.0
  %7900 = vmatpush2.msra.mxu0 %v7446
  %7901 = vmatprep.subr.mxu0 0.0
  %7902 = vmatpush2.msra.mxu0 %v7445
  %7903 = vmatprep.subr.mxu0 0.0
  %7904 = vmatpush2.msra.mxu0 %v7444
  %7905 = vmatprep.subr.mxu0 0.0
  %7906 = vmatpush2.msra.mxu0 %v7443
  %7907 = vmatprep.subr.mxu0 0.0
  %7908 = vmatpush2.msra.mxu0 %v7442
  %7909 = vmatprep.subr.mxu0 0.0
  %7910 = vmatpush2.msra.mxu0 %v7441
  %7911 = vmatprep.mubr.f32.mxu0 %v7238
  %7912 = vmatmul.mubr.f32.gmra.mxu0 %v7237
  %v7913 = vpop.f32.mrf.mxu0
  %v7914 = vadd.f32 %v7769, %v7913
  %v7915 = vpop.f32.mrf.mxu0
  %7916 = vmatprep.mubr.f32.mxu0 %v7246
  %7917 = vmatmul.mubr.f32.gmra.mxu0 %v7245
  %v7918 = vpop.f32.mrf.mxu0
  %v7919 = vadd.f32 %v7774, %v7918
  %v7920 = vpop.f32.mrf.mxu0
  %7921 = vmatprep.mubr.f32.mxu0 %v7254
  %7922 = vmatmul.mubr.f32.gmra.mxu0 %v7253
  %v7923 = vpop.f32.mrf.mxu0
  %v7924 = vadd.f32 %v7779, %v7923
  %v7925 = vpop.f32.mrf.mxu0
  %7926 = vmatprep.mubr.f32.mxu0 %v7262
  %7927 = vmatmul.mubr.f32.gmra.mxu0 %v7261
  %v7928 = vpop.f32.mrf.mxu0
  %v7929 = vadd.f32 %v7784, %v7928
  %v7930 = vpop.f32.mrf.mxu0
  %7931 = vmatprep.mubr.f32.mxu0 %v7270
  %7932 = vmatmul.mubr.f32.gmra.mxu0 %v7269
  %v7933 = vpop.f32.mrf.mxu0
  %v7934 = vadd.f32 %v7789, %v7933
  %v7935 = vpop.f32.mrf.mxu0
  %7936 = vmatprep.mubr.f32.mxu0 %v7278
  %7937 = vmatmul.mubr.f32.gmra.mxu0 %v7277
  %v7938 = vpop.f32.mrf.mxu0
  %v7939 = vadd.f32 %v7794, %v7938
  %v7940 = vpop.f32.mrf.mxu0
  %7941 = vmatprep.mubr.f32.mxu0 %v7286
  %7942 = vmatmul.mubr.f32.gmra.mxu0 %v7285
  %v7943 = vpop.f32.mrf.mxu0
  %v7944 = vadd.f32 %v7799, %v7943
  %v7945 = vpop.f32.mrf.mxu0
  %7946 = vmatprep.mubr.f32.mxu0 %v7294
  %7947 = vmatmul.mubr.f32.gmra.mxu0 %v7293
  %v7948 = vpop.f32.mrf.mxu0
  %v7949 = vadd.f32 %v7804, %v7948
  %v7950 = vpop.f32.mrf.mxu0
  %7951 = vmatprep.mubr.f32.mxu0 %v7302
  %7952 = vmatmul.mubr.f32.gmra.mxu0 %v7301
  %v7953 = vpop.f32.mrf.mxu0
  %v7954 = vadd.f32 %v7809, %v7953
  %v7955 = vpop.f32.mrf.mxu0
  %7956 = vmatprep.mubr.f32.mxu0 %v7310
  %7957 = vmatmul.mubr.f32.gmra.mxu0 %v7309
  %v7958 = vpop.f32.mrf.mxu0
  %v7959 = vadd.f32 %v7814, %v7958
  %v7960 = vpop.f32.mrf.mxu0
  %7961 = vmatprep.mubr.f32.mxu0 %v7318
  %7962 = vmatmul.mubr.f32.gmra.mxu0 %v7317
  %v7963 = vpop.f32.mrf.mxu0
  %v7964 = vadd.f32 %v7819, %v7963
  %v7965 = vpop.f32.mrf.mxu0
  %7966 = vmatprep.mubr.f32.mxu0 %v7326
  %7967 = vmatmul.mubr.f32.gmra.mxu0 %v7325
  %v7968 = vpop.f32.mrf.mxu0
  %v7969 = vadd.f32 %v7824, %v7968
  %v7970 = vpop.f32.mrf.mxu0
  %7971 = vmatprep.mubr.f32.mxu0 %v7334
  %7972 = vmatmul.mubr.f32.gmra.mxu0 %v7333
  %v7973 = vpop.f32.mrf.mxu0
  %v7974 = vadd.f32 %v7829, %v7973
  %v7975 = vpop.f32.mrf.mxu0
  %7976 = vmatprep.mubr.f32.mxu0 %v7342
  %7977 = vmatmul.mubr.f32.gmra.mxu0 %v7341
  %v7978 = vpop.f32.mrf.mxu0
  %v7979 = vadd.f32 %v7834, %v7978
  %v7980 = vpop.f32.mrf.mxu0
  %7981 = vmatprep.mubr.f32.mxu0 %v7350
  %7982 = vmatmul.mubr.f32.gmra.mxu0 %v7349
  %v7983 = vpop.f32.mrf.mxu0
  %v7984 = vadd.f32 %v7839, %v7983
  %v7985 = vpop.f32.mrf.mxu0
  %7986 = vmatprep.mubr.f32.mxu0 %v7358
  %7987 = vmatmul.mubr.f32.gmra.mxu0 %v7357
  %v7988 = vpop.f32.mrf.mxu0
  %v7989 = vadd.f32 %v7844, %v7988
  %v7990 = vpop.f32.mrf.mxu0
  %7991 = vdwg.mxu0
  %7992 = vmatprep.subr.mxu0 0.0
  %7993 = vmatpush1.msra.mxu0 %v7472
  %7994 = vmatprep.subr.mxu0 0.0
  %7995 = vmatpush1.msra.mxu0 %v7471
  %7996 = vmatprep.subr.mxu0 0.0
  %7997 = vmatpush1.msra.mxu0 %v7470
  %7998 = vmatprep.subr.mxu0 0.0
  %7999 = vmatpush1.msra.mxu0 %v7469
  %8000 = vmatprep.subr.mxu0 0.0
  %8001 = vmatpush1.msra.mxu0 %v7468
  %8002 = vmatprep.subr.mxu0 0.0
  %8003 = vmatpush1.msra.mxu0 %v7467
  %8004 = vmatprep.subr.mxu0 0.0
  %8005 = vmatpush1.msra.mxu0 %v7466
  %8006 = vmatprep.subr.mxu0 0.0
  %8007 = vmatpush1.msra.mxu0 %v7465
  %8008 = vmatprep.subr.mxu0 0.0
  %8009 = vmatpush1.msra.mxu0 %v7464
  %8010 = vmatprep.subr.mxu0 0.0
  %8011 = vmatpush1.msra.mxu0 %v7463
  %8012 = vmatprep.subr.mxu0 0.0
  %8013 = vmatpush1.msra.mxu0 %v7462
  %8014 = vmatprep.subr.mxu0 0.0
  %8015 = vmatpush1.msra.mxu0 %v7461
  %8016 = vmatprep.subr.mxu0 0.0
  %8017 = vmatpush1.msra.mxu0 %v7460
  %8018 = vmatprep.subr.mxu0 0.0
  %8019 = vmatpush1.msra.mxu0 %v7459
  %8020 = vmatprep.subr.mxu0 0.0
  %8021 = vmatpush1.msra.mxu0 %v7458
  %8022 = vmatprep.subr.mxu0 0.0
  %8023 = vmatpush1.msra.mxu0 %v7457
  %8024 = vmatprep.subr.mxu0 0.0
  %8025 = vmatpush2.msra.mxu0 %v7488
  %8026 = vmatprep.subr.mxu0 0.0
  %8027 = vmatpush2.msra.mxu0 %v7487
  %8028 = vmatprep.subr.mxu0 0.0
  %8029 = vmatpush2.msra.mxu0 %v7486
  %8030 = vmatprep.subr.mxu0 0.0
  %8031 = vmatpush2.msra.mxu0 %v7485
  %8032 = vmatprep.subr.mxu0 0.0
  %8033 = vmatpush2.msra.mxu0 %v7484
  %8034 = vmatprep.subr.mxu0 0.0
  %8035 = vmatpush2.msra.mxu0 %v7483
  %8036 = vmatprep.subr.mxu0 0.0
  %8037 = vmatpush2.msra.mxu0 %v7482
  %8038 = vmatprep.subr.mxu0 0.0
  %8039 = vmatpush2.msra.mxu0 %v7481
  %8040 = vmatprep.subr.mxu0 0.0
  %8041 = vmatpush2.msra.mxu0 %v7480
  %8042 = vmatprep.subr.mxu0 0.0
  %8043 = vmatpush2.msra.mxu0 %v7479
  %8044 = vmatprep.subr.mxu0 0.0
  %8045 = vmatpush2.msra.mxu0 %v7478
  %8046 = vmatprep.subr.mxu0 0.0
  %8047 = vmatpush2.msra.mxu0 %v7477
  %8048 = vmatprep.subr.mxu0 0.0
  %8049 = vmatpush2.msra.mxu0 %v7476
  %8050 = vmatprep.subr.mxu0 0.0
  %8051 = vmatpush2.msra.mxu0 %v7475
  %8052 = vmatprep.subr.mxu0 0.0
  %8053 = vmatpush2.msra.mxu0 %v7474
  %8054 = vmatprep.subr.mxu0 0.0
  %8055 = vmatpush2.msra.mxu0 %v7473
  %8056 = vmatprep.mubr.f32.mxu0 %v7240
  %8057 = vmatmul.mubr.f32.gmra.mxu0 %v7239
  %v8058 = vpop.f32.mrf.mxu0
  %v8059 = vadd.f32 %v7914, %v8058
  %v8060 = vpop.f32.mrf.mxu0
  %8061 = vmatprep.mubr.f32.mxu0 %v7248
  %8062 = vmatmul.mubr.f32.gmra.mxu0 %v7247
  %v8063 = vpop.f32.mrf.mxu0
  %v8064 = vadd.f32 %v7919, %v8063
  %v8065 = vpop.f32.mrf.mxu0
  %8066 = vmatprep.mubr.f32.mxu0 %v7256
  %8067 = vmatmul.mubr.f32.gmra.mxu0 %v7255
  %v8068 = vpop.f32.mrf.mxu0
  %v8069 = vadd.f32 %v7924, %v8068
  %v8070 = vpop.f32.mrf.mxu0
  %8071 = vmatprep.mubr.f32.mxu0 %v7264
  %8072 = vmatmul.mubr.f32.gmra.mxu0 %v7263
  %v8073 = vpop.f32.mrf.mxu0
  %v8074 = vadd.f32 %v7929, %v8073
  %v8075 = vpop.f32.mrf.mxu0
  %8076 = vmatprep.mubr.f32.mxu0 %v7272
  %8077 = vmatmul.mubr.f32.gmra.mxu0 %v7271
  %v8078 = vpop.f32.mrf.mxu0
  %v8079 = vadd.f32 %v7934, %v8078
  %v8080 = vpop.f32.mrf.mxu0
  %8081 = vmatprep.mubr.f32.mxu0 %v7280
  %8082 = vmatmul.mubr.f32.gmra.mxu0 %v7279
  %v8083 = vpop.f32.mrf.mxu0
  %v8084 = vadd.f32 %v7939, %v8083
  %v8085 = vpop.f32.mrf.mxu0
  %8086 = vmatprep.mubr.f32.mxu0 %v7288
  %8087 = vmatmul.mubr.f32.gmra.mxu0 %v7287
  %v8088 = vpop.f32.mrf.mxu0
  %v8089 = vadd.f32 %v7944, %v8088
  %v8090 = vpop.f32.mrf.mxu0
  %8091 = vmatprep.mubr.f32.mxu0 %v7296
  %8092 = vmatmul.mubr.f32.gmra.mxu0 %v7295
  %v8093 = vpop.f32.mrf.mxu0
  %v8094 = vadd.f32 %v7949, %v8093
  %v8095 = vpop.f32.mrf.mxu0
  %8096 = vmatprep.mubr.f32.mxu0 %v7304
  %8097 = vmatmul.mubr.f32.gmra.mxu0 %v7303
  %v8098 = vpop.f32.mrf.mxu0
  %v8099 = vadd.f32 %v7954, %v8098
  %v8100 = vpop.f32.mrf.mxu0
  %8101 = vmatprep.mubr.f32.mxu0 %v7312
  %8102 = vmatmul.mubr.f32.gmra.mxu0 %v7311
  %v8103 = vpop.f32.mrf.mxu0
  %v8104 = vadd.f32 %v7959, %v8103
  %v8105 = vpop.f32.mrf.mxu0
  %8106 = vmatprep.mubr.f32.mxu0 %v7320
  %8107 = vmatmul.mubr.f32.gmra.mxu0 %v7319
  %v8108 = vpop.f32.mrf.mxu0
  %v8109 = vadd.f32 %v7964, %v8108
  %v8110 = vpop.f32.mrf.mxu0
  %8111 = vmatprep.mubr.f32.mxu0 %v7328
  %8112 = vmatmul.mubr.f32.gmra.mxu0 %v7327
  %v8113 = vpop.f32.mrf.mxu0
  %v8114 = vadd.f32 %v7969, %v8113
  %v8115 = vpop.f32.mrf.mxu0
  %8116 = vmatprep.mubr.f32.mxu0 %v7336
  %8117 = vmatmul.mubr.f32.gmra.mxu0 %v7335
  %v8118 = vpop.f32.mrf.mxu0
  %v8119 = vadd.f32 %v7974, %v8118
  %v8120 = vpop.f32.mrf.mxu0
  %8121 = vmatprep.mubr.f32.mxu0 %v7344
  %8122 = vmatmul.mubr.f32.gmra.mxu0 %v7343
  %v8123 = vpop.f32.mrf.mxu0
  %v8124 = vadd.f32 %v7979, %v8123
  %v8125 = vpop.f32.mrf.mxu0
  %8126 = vmatprep.mubr.f32.mxu0 %v7352
  %8127 = vmatmul.mubr.f32.gmra.mxu0 %v7351
  %v8128 = vpop.f32.mrf.mxu0
  %v8129 = vadd.f32 %v7984, %v8128
  %v8130 = vpop.f32.mrf.mxu0
  %8131 = vmatprep.mubr.f32.mxu0 %v7360
  %8132 = vmatmul.mubr.f32.gmra.mxu0 %v7359
  %v8133 = vpop.f32.mrf.mxu0
  %v8134 = vadd.f32 %v7989, %v8133
  %v8135 = vpop.f32.mrf.mxu0
  %8136 = vdwg.mxu0
  %8137 = vmatprep.subr.mxu0 0.0
  %8138 = vmatpush1.msra.mxu0 0.0
  %8139 = vmatprep.subr.mxu0 0.0
  %8140 = vmatpush1.msra.mxu0 0.0
  %8141 = vmatprep.subr.mxu0 0.0
  %8142 = vmatpush1.msra.mxu0 0.0
  %8143 = vmatprep.subr.mxu0 0.0
  %8144 = vmatpush1.msra.mxu0 0.0
  %8145 = vmatprep.subr.mxu0 0.0
  %8146 = vmatpush1.msra.mxu0 0.0
  %8147 = vmatprep.subr.mxu0 0.0
  %8148 = vmatpush1.msra.mxu0 0.0
  %8149 = vmatprep.subr.mxu0 0.0
  %8150 = vmatpush1.msra.mxu0 0.0
  %8151 = vmatprep.subr.mxu0 0.0
  %8152 = vmatpush1.msra.mxu0 0.0
  %8153 = vmatprep.subr.mxu0 0.0
  %8154 = vmatpush1.msra.mxu0 0.0
  %8155 = vmatprep.subr.mxu0 0.0
  %8156 = vmatpush1.msra.mxu0 0.0
  %8157 = vmatprep.subr.mxu0 0.0
  %8158 = vmatpush1.msra.mxu0 0.0
  %8159 = vmatprep.subr.mxu0 0.0
  %8160 = vmatpush1.msra.mxu0 0.0
  %8161 = vmatprep.subr.mxu0 0.0
  %8162 = vmatpush1.msra.mxu0 %v7492
  %8163 = vmatprep.subr.mxu0 0.0
  %8164 = vmatpush1.msra.mxu0 %v7491
  %8165 = vmatprep.subr.mxu0 0.0
  %8166 = vmatpush1.msra.mxu0 %v7490
  %8167 = vmatprep.subr.mxu0 0.0
  %8168 = vmatpush1.msra.mxu0 %v7489
  %8169 = vmatprep.subr.mxu0 0.0
  %8170 = vmatpush2.msra.mxu0 0.0
  %8171 = vmatprep.subr.mxu0 0.0
  %8172 = vmatpush2.msra.mxu0 0.0
  %8173 = vmatprep.subr.mxu0 0.0
  %8174 = vmatpush2.msra.mxu0 0.0
  %8175 = vmatprep.subr.mxu0 0.0
  %8176 = vmatpush2.msra.mxu0 0.0
  %8177 = vmatprep.subr.mxu0 0.0
  %8178 = vmatpush2.msra.mxu0 0.0
  %8179 = vmatprep.subr.mxu0 0.0
  %8180 = vmatpush2.msra.mxu0 0.0
  %8181 = vmatprep.subr.mxu0 0.0
  %8182 = vmatpush2.msra.mxu0 0.0
  %8183 = vmatprep.subr.mxu0 0.0
  %8184 = vmatpush2.msra.mxu0 0.0
  %8185 = vmatprep.subr.mxu0 0.0
  %8186 = vmatpush2.msra.mxu0 0.0
  %8187 = vmatprep.subr.mxu0 0.0
  %8188 = vmatpush2.msra.mxu0 0.0
  %8189 = vmatprep.subr.mxu0 0.0
  %8190 = vmatpush2.msra.mxu0 0.0
  %8191 = vmatprep.subr.mxu0 0.0
  %8192 = vmatpush2.msra.mxu0 0.0
  %8193 = vmatprep.subr.mxu0 0.0
  %8194 = vmatpush2.msra.mxu0 0.0
  %8195 = vmatprep.subr.mxu0 0.0
  %8196 = vmatpush2.msra.mxu0 0.0
  %8197 = vmatprep.subr.mxu0 0.0
  %8198 = vmatpush2.msra.mxu0 0.0
  %8199 = vmatprep.subr.mxu0 0.0
  %8200 = vmatpush2.msra.mxu0 0.0
  %8201 = vmatprep.mubr.f32.mxu0 0.0
  %8202 = vmatmul.mubr.f32.gmra.mxu0 %v6542
  %v8203 = vpop.f32.mrf.mxu0
  %v8204 = vadd.f32 %v8059, %v8203
  %v8205 = vpop.f32.mrf.mxu0
  %8206 = vmatprep.mubr.f32.mxu0 0.0
  %8207 = vmatmul.mubr.f32.gmra.mxu0 %v6545
  %v8208 = vpop.f32.mrf.mxu0
  %v8209 = vadd.f32 %v8064, %v8208
  %v8210 = vpop.f32.mrf.mxu0
  %8211 = vmatprep.mubr.f32.mxu0 0.0
  %8212 = vmatmul.mubr.f32.gmra.mxu0 %v6548
  %v8213 = vpop.f32.mrf.mxu0
  %v8214 = vadd.f32 %v8069, %v8213
  %v8215 = vpop.f32.mrf.mxu0
  %8216 = vmatprep.mubr.f32.mxu0 0.0
  %8217 = vmatmul.mubr.f32.gmra.mxu0 %v6551
  %v8218 = vpop.f32.mrf.mxu0
  %v8219 = vadd.f32 %v8074, %v8218
  %v8220 = vpop.f32.mrf.mxu0
  %8221 = vmatprep.mubr.f32.mxu0 0.0
  %8222 = vmatmul.mubr.f32.gmra.mxu0 %v6554
  %v8223 = vpop.f32.mrf.mxu0
  %v8224 = vadd.f32 %v8079, %v8223
  %v8225 = vpop.f32.mrf.mxu0
  %8226 = vmatprep.mubr.f32.mxu0 0.0
  %8227 = vmatmul.mubr.f32.gmra.mxu0 %v6557
  %v8228 = vpop.f32.mrf.mxu0
  %v8229 = vadd.f32 %v8084, %v8228
  %v8230 = vpop.f32.mrf.mxu0
  %8231 = vmatprep.mubr.f32.mxu0 0.0
  %8232 = vmatmul.mubr.f32.gmra.mxu0 %v6560
  %v8233 = vpop.f32.mrf.mxu0
  %v8234 = vadd.f32 %v8089, %v8233
  %v8235 = vpop.f32.mrf.mxu0
  %8236 = vmatprep.mubr.f32.mxu0 0.0
  %8237 = vmatmul.mubr.f32.gmra.mxu0 %v6563
  %v8238 = vpop.f32.mrf.mxu0
  %v8239 = vadd.f32 %v8094, %v8238
  %v8240 = vpop.f32.mrf.mxu0
  %8241 = vmatprep.mubr.f32.mxu0 0.0
  %8242 = vmatmul.mubr.f32.gmra.mxu0 %v6566
  %v8243 = vpop.f32.mrf.mxu0
  %v8244 = vadd.f32 %v8099, %v8243
  %v8245 = vpop.f32.mrf.mxu0
  %8246 = vmatprep.mubr.f32.mxu0 0.0
  %8247 = vmatmul.mubr.f32.gmra.mxu0 %v6569
  %v8248 = vpop.f32.mrf.mxu0
  %v8249 = vadd.f32 %v8104, %v8248
  %v8250 = vpop.f32.mrf.mxu0
  %8251 = vmatprep.mubr.f32.mxu0 0.0
  %8252 = vmatmul.mubr.f32.gmra.mxu0 %v6572
  %v8253 = vpop.f32.mrf.mxu0
  %v8254 = vadd.f32 %v8109, %v8253
  %v8255 = vpop.f32.mrf.mxu0
  %8256 = vmatprep.mubr.f32.mxu0 0.0
  %8257 = vmatmul.mubr.f32.gmra.mxu0 %v6575
  %v8258 = vpop.f32.mrf.mxu0
  %v8259 = vadd.f32 %v8114, %v8258
  %v8260 = vpop.f32.mrf.mxu0
  %8261 = vmatprep.mubr.f32.mxu0 0.0
  %8262 = vmatmul.mubr.f32.gmra.mxu0 %v6578
  %v8263 = vpop.f32.mrf.mxu0
  %v8264 = vadd.f32 %v8119, %v8263
  %v8265 = vpop.f32.mrf.mxu0
  %8266 = vmatprep.mubr.f32.mxu0 0.0
  %8267 = vmatmul.mubr.f32.gmra.mxu0 %v6581
  %v8268 = vpop.f32.mrf.mxu0
  %v8269 = vadd.f32 %v8124, %v8268
  %v8270 = vpop.f32.mrf.mxu0
  %8271 = vmatprep.mubr.f32.mxu0 0.0
  %8272 = vmatmul.mubr.f32.gmra.mxu0 %v6584
  %v8273 = vpop.f32.mrf.mxu0
  %v8274 = vadd.f32 %v8129, %v8273
  %v8275 = vpop.f32.mrf.mxu0
  %8276 = vmatprep.mubr.f32.mxu0 0.0
  %8277 = vmatmul.mubr.f32.gmra.mxu0 %v6587
  %v8278 = vpop.f32.mrf.mxu0
  %v8279 = vadd.f32 %v8134, %v8278
  %v8280 = vpop.f32.mrf.mxu0
  %8281 = vdwg.mxu0
  %vm8282 = vcmask 130048
  %8283 = vst.msk [vmem:[%s9] sm:$0xff] %vm8282, %v8204
  %8284 = vst.msk [vmem:[%s9 + $0x8] sm:$0xff] %vm8282, %v8209
  %8285 = vst.msk [vmem:[%s9 + $0x10] sm:$0xff] %vm8282, %v8214
  %8286 = vst.msk [vmem:[%s9 + $0x18] sm:$0xff] %vm8282, %v8219
  %8287 = vst.msk [vmem:[%s9 + $0x20] sm:$0xff] %vm8282, %v8224
  %8288 = vst.msk [vmem:[%s9 + $0x28] sm:$0xff] %vm8282, %v8229
  %8289 = vst.msk [vmem:[%s9 + $0x30] sm:$0xff] %vm8282, %v8234
  %8290 = vst.msk [vmem:[%s9 + $0x38] sm:$0xff] %vm8282, %v8239
  %8291 = vst.msk [vmem:[%s9 + $0x40] sm:$0xff] %vm8282, %v8244
  %8292 = vst.msk [vmem:[%s9 + $0x48] sm:$0xff] %vm8282, %v8249
  %8293 = vst.msk [vmem:[%s9 + $0x50] sm:$0xff] %vm8282, %v8254
  %8294 = vst.msk [vmem:[%s9 + $0x58] sm:$0xff] %vm8282, %v8259
  %8295 = vst.msk [vmem:[%s9 + $0x60] sm:$0xff] %vm8282, %v8264
  %8296 = vst.msk [vmem:[%s9 + $0x68] sm:$0xff] %vm8282, %v8269
  %8297 = vst.msk [vmem:[%s9 + $0x70] sm:$0xff] %vm8282, %v8274
  %8298 = vst.msk [vmem:[%s9 + $0x78] sm:$0xff] %vm8282, %v8279
  // Predicated region
  $region38: #{tpu_custom_call.1} parent=0 // pred_check
    _
  $region39: #{tpu_custom_call.1} parent=0 // pred_check_branch
    %8300 = sbr.rel (0) target = $region41
  $region40: #{tpu_custom_call.1} parent=0 // pred_region
    _
  $region41: #{tpu_custom_call.1} parent=0 // pred_fallthru
    _
  // Predicated region
  $region42: #{tpu_custom_call.1} parent=0 // pred_check
    _
  $region43: #{tpu_custom_call.1} parent=0 // pred_check_branch
    %8302 = sbr.rel (0) target = $region45
  $region44: #{tpu_custom_call.1} parent=0 // pred_region
    _
  $region45: #{tpu_custom_call.1} parent=0 // pred_fallthru
    _

</llo_original>
